<compile_context>
chip_gen: v7x
topology: tpu7x:2x2x1
jax: 0.10.0
libtpu: 0.0.40
codegen_flags: <defaults>
</compile_context>

<pallas_src>
import functools

import jax
import jax.numpy as jnp
from jax.experimental import pallas as pl
from jax.experimental.pallas import tpu as pltpu

# Logical / lane-padded feature widths.
F_IN, F_H, F_Z = 784, 400, 20
P_IN, P_H, P_Z = 896, 512, 128        # 128-multiples


def _ae_kernel(x_ref,
               w1_ref, b1_ref,
               w2_ref, b2_ref,
               w3_ref, b3_ref,
               w4_ref, b4_ref,
               o_ref):
    x = x_ref[...]                                                   # (TB, 896) bf16

    # encoder: Linear(784, 400) + ReLU
    h1 = jnp.dot(x, w1_ref[...], preferred_element_type=jnp.float32) + b1_ref[...]
    h1 = jnp.maximum(h1, 0.0).astype(jnp.bfloat16)                   # (TB, 512)

    # encoder: Linear(400, 20) + ReLU
    z = jnp.dot(h1, w2_ref[...], preferred_element_type=jnp.float32) + b2_ref[...]
    z = jnp.maximum(z, 0.0).astype(jnp.bfloat16)                     # (TB, 128)

    # decoder: Linear(20, 400) + ReLU
    h2 = jnp.dot(z, w3_ref[...], preferred_element_type=jnp.float32) + b3_ref[...]
    h2 = jnp.maximum(h2, 0.0).astype(jnp.bfloat16)                   # (TB, 512)

    # decoder: Linear(400, 784) + Sigmoid
    y = jnp.dot(h2, w4_ref[...], preferred_element_type=jnp.float32) + b4_ref[...]
    o_ref[...] = jax.nn.sigmoid(y).astype(o_ref.dtype)               # (TB, 896) fp32


def _pad_last(a, target):
    pad = target - a.shape[-1]
    if pad == 0:
        return a
    widths = [(0, 0)] * (a.ndim - 1) + [(0, pad)]
    return jnp.pad(a, widths)


def _pad2(a, t0, t1):
    return jnp.pad(a, ((0, t0 - a.shape[0]), (0, t1 - a.shape[1])))


@functools.partial(jax.jit, static_argnames=("block_b",))
def autoencoder_forward(x, params, block_b=256):
    """x: (B, 784) float32.  params: w1..w4 stored as (in, out), b1..b4 as (1, out)."""
    B, f_in = x.shape
    assert f_in == F_IN

    # ---- wrapper glue: lane-pad + cast to bf16 (matmul operands only) ----
    xp = _pad_last(x, P_IN).astype(jnp.bfloat16)
    w1 = _pad2(params["w1"], P_IN, P_H).astype(jnp.bfloat16)
    w2 = _pad2(params["w2"], P_H, P_Z).astype(jnp.bfloat16)
    w3 = _pad2(params["w3"], P_Z, P_H).astype(jnp.bfloat16)
    w4 = _pad2(params["w4"], P_H, P_IN).astype(jnp.bfloat16)
    b1 = _pad_last(params["b1"], P_H).astype(jnp.float32)
    b2 = _pad_last(params["b2"], P_Z).astype(jnp.float32)
    b3 = _pad_last(params["b3"], P_H).astype(jnp.float32)
    b4 = _pad_last(params["b4"], P_IN).astype(jnp.float32)

    # ---- pad ragged batch to a multiple of the batch tile ----
    Bp = ((B + block_b - 1) // block_b) * block_b
    if Bp != B:
        xp = jnp.pad(xp, ((0, Bp - B), (0, 0)))

    # Weights / biases are VMEM-resident across the whole grid (constant index_map).
    def full(shape):
        nd = len(shape)
        return pl.BlockSpec(shape, lambda i, _nd=nd: (0,) * _nd)

    in_specs = [
        pl.BlockSpec((block_b, P_IN), lambda i: (i, 0)),   # x, tiled over batch
        full(w1.shape), full(b1.shape),
        full(w2.shape), full(b2.shape),
        full(w3.shape), full(b3.shape),
        full(w4.shape), full(b4.shape),
    ]
    out_spec = pl.BlockSpec((block_b, P_IN), lambda i: (i, 0))  # lane-dense 896-wide

    out_padded = pl.pallas_call(
        _ae_kernel,
        out_shape=jax.ShapeDtypeStruct((Bp, P_IN), jnp.float32),
        grid_spec=pltpu.PrefetchScalarGridSpec(
            num_scalar_prefetch=0,
            grid=(Bp // block_b,),
            in_specs=in_specs,
            out_specs=out_spec,
        ),
        compiler_params=pltpu.CompilerParams(
            dimension_semantics=("parallel",),
            vmem_limit_bytes=64 << 20,
        ),
    )(xp,
      w1, b1,
      w2, b2,
      w3, b3,
      w4, b4)

    # Strip batch + lane padding back to the logical shape.
    return out_padded[:B, :F_IN]


def init_params(key):
    """PyTorch nn.Linear-style init (uniform +/- 1/sqrt(fan_in)), fp32.
    Weights are stored pre-transposed as (in_features, out_features)."""
    dims = [(F_IN, F_H), (F_H, F_Z), (F_Z, F_H), (F_H, F_IN)]
    params = {}
    for idx, (fan_in, fan_out) in enumerate(dims, start=1):
        key, kw, kb = jax.random.split(key, 3)
        bound = 1.0 / (fan_in ** 0.5)
        params[f"w{idx}"] = jax.random.uniform(
            kw, (fan_in, fan_out), jnp.float32, minval=-bound, maxval=bound)
        params[f"b{idx}"] = jax.random.uniform(
            kb, (1, fan_out), jnp.float32, minval=-bound, maxval=bound)
    return params


def _reference_forward(x, params):
    h = jnp.maximum(x @ params["w1"] + params["b1"], 0.0)
    z = jnp.maximum(h @ params["w2"] + params["b2"], 0.0)
    d = jnp.maximum(z @ params["w3"] + params["b3"], 0.0)
    return jax.nn.sigmoid(d @ params["w4"] + params["b4"])


if __name__ == "__main__":
    key = jax.random.PRNGKey(0)
    key, kx = jax.random.split(key)

    # Ragged batch (not a multiple of block_b) to exercise the padding path.
    # Pads to 512 rows -> grid of 2 steps (keeps both v7x TensorCores busy).
    B = 300
    x = jax.random.normal(kx, (B, F_IN), jnp.float32)

    params = init_params(key)

    out = autoencoder_forward(x, params, block_b=256)
    out = jax.block_until_ready(out)

    ref = _reference_forward(x, params)  # fp32 reference
    assert out.shape == (B, F_IN)
    # bf16 matmul operands with fp32 accumulation: loosened tolerance vs fp32 ref.
    assert jnp.allclose(out, ref, atol=5e-2, rtol=0.0), float(jnp.max(jnp.abs(out - ref)))

    print("KERNEL_OK")
</pallas_src>

<mosaic_0001>
module attributes {stable_mosaic.version = 11 : i64} {
  func.func @_ae_kernel(%arg0: i32, %arg1: memref<256x896xbf16, #tpu.memory_space<vmem>>, %arg2: memref<896x512xbf16, #tpu.memory_space<vmem>>, %arg3: memref<1x512xf32, #tpu.memory_space<vmem>>, %arg4: memref<512x128xbf16, #tpu.memory_space<vmem>>, %arg5: memref<1x128xf32, #tpu.memory_space<vmem>>, %arg6: memref<128x512xbf16, #tpu.memory_space<vmem>>, %arg7: memref<1x512xf32, #tpu.memory_space<vmem>>, %arg8: memref<512x896xbf16, #tpu.memory_space<vmem>>, %arg9: memref<1x896xf32, #tpu.memory_space<vmem>>, %arg10: memref<256x896xf32, #tpu.memory_space<vmem>>) attributes {dimension_semantics = [#tpu.dimension_semantics<parallel>], iteration_bounds = array<i64: 2>, scalar_prefetch = 0 : i64, scratch_operands = 0 : i64, tpu.core_type = #tpu.core_type<tc>, window_params = [{transform_indices = @transform_0, window_bounds = array<i64: 256, 896>}, {pipeline_mode = #tpu.pipeline_mode<synchronous>, transform_indices = @transform_1, window_bounds = array<i64: 896, 512>}, {pipeline_mode = #tpu.pipeline_mode<synchronous>, transform_indices = @transform_2, window_bounds = array<i64: 1, 512>}, {pipeline_mode = #tpu.pipeline_mode<synchronous>, transform_indices = @transform_3, window_bounds = array<i64: 512, 128>}, {pipeline_mode = #tpu.pipeline_mode<synchronous>, transform_indices = @transform_4, window_bounds = array<i64: 1, 128>}, {pipeline_mode = #tpu.pipeline_mode<synchronous>, transform_indices = @transform_5, window_bounds = array<i64: 128, 512>}, {pipeline_mode = #tpu.pipeline_mode<synchronous>, transform_indices = @transform_6, window_bounds = array<i64: 1, 512>}, {pipeline_mode = #tpu.pipeline_mode<synchronous>, transform_indices = @transform_7, window_bounds = array<i64: 512, 896>}, {pipeline_mode = #tpu.pipeline_mode<synchronous>, transform_indices = @transform_8, window_bounds = array<i64: 1, 896>}, {transform_indices = @transform_9, window_bounds = array<i64: 256, 896>}]} {
    %c0 = arith.constant 0 : index
    %c0_0 = arith.constant 0 : index
    %0 = vector.load %arg1[%c0, %c0_0] : memref<256x896xbf16, #tpu.memory_space<vmem>>, vector<256x896xbf16>
    %c0_1 = arith.constant 0 : index
    %c0_2 = arith.constant 0 : index
    %1 = vector.load %arg2[%c0_1, %c0_2] : memref<896x512xbf16, #tpu.memory_space<vmem>>, vector<896x512xbf16>
    %cst = arith.constant dense<0.000000e+00> : vector<256x512xf32>
    %2 = tpu.matmul %0, %1, %cst {dimension_numbers = #tpu.dot_dimension_numbers<[1], [0], [0], [1], [0, 0, 1, 1], [], []>} : vector<256x896xbf16>, vector<896x512xbf16>, vector<256x512xf32> -> vector<256x512xf32>
    %c0_3 = arith.constant 0 : index
    %c0_4 = arith.constant 0 : index
    %3 = vector.load %arg3[%c0_3, %c0_4] : memref<1x512xf32, #tpu.memory_space<vmem>>, vector<1x512xf32>
    %4 = vector.broadcast %3 : vector<1x512xf32> to vector<256x512xf32>
    %5 = arith.addf %2, %4 : vector<256x512xf32>
    %cst_5 = arith.constant 0.000000e+00 : f32
    %6 = vector.broadcast %cst_5 : f32 to vector<256x512xf32>
    %7 = arith.maximumf %5, %6 : vector<256x512xf32>
    %8 = arith.truncf %7 : vector<256x512xf32> to vector<256x512xbf16>
    %c0_6 = arith.constant 0 : index
    %c0_7 = arith.constant 0 : index
    %9 = vector.load %arg4[%c0_6, %c0_7] : memref<512x128xbf16, #tpu.memory_space<vmem>>, vector<512x128xbf16>
    %cst_8 = arith.constant dense<0.000000e+00> : vector<256x128xf32>
    %10 = tpu.matmul %8, %9, %cst_8 {dimension_numbers = #tpu.dot_dimension_numbers<[1], [0], [0], [1], [0, 0, 1, 1], [], []>} : vector<256x512xbf16>, vector<512x128xbf16>, vector<256x128xf32> -> vector<256x128xf32>
    %c0_9 = arith.constant 0 : index
    %c0_10 = arith.constant 0 : index
    %11 = vector.load %arg5[%c0_9, %c0_10] : memref<1x128xf32, #tpu.memory_space<vmem>>, vector<1x128xf32>
    %12 = vector.broadcast %11 : vector<1x128xf32> to vector<256x128xf32>
    %13 = arith.addf %10, %12 : vector<256x128xf32>
    %cst_11 = arith.constant 0.000000e+00 : f32
    %14 = vector.broadcast %cst_11 : f32 to vector<256x128xf32>
    %15 = arith.maximumf %13, %14 : vector<256x128xf32>
    %16 = arith.truncf %15 : vector<256x128xf32> to vector<256x128xbf16>
    %c0_12 = arith.constant 0 : index
    %c0_13 = arith.constant 0 : index
    %17 = vector.load %arg6[%c0_12, %c0_13] : memref<128x512xbf16, #tpu.memory_space<vmem>>, vector<128x512xbf16>
    %cst_14 = arith.constant dense<0.000000e+00> : vector<256x512xf32>
    %18 = tpu.matmul %16, %17, %cst_14 {dimension_numbers = #tpu.dot_dimension_numbers<[1], [0], [0], [1], [0, 0, 1, 1], [], []>} : vector<256x128xbf16>, vector<128x512xbf16>, vector<256x512xf32> -> vector<256x512xf32>
    %c0_15 = arith.constant 0 : index
    %c0_16 = arith.constant 0 : index
    %19 = vector.load %arg7[%c0_15, %c0_16] : memref<1x512xf32, #tpu.memory_space<vmem>>, vector<1x512xf32>
    %20 = vector.broadcast %19 : vector<1x512xf32> to vector<256x512xf32>
    %21 = arith.addf %18, %20 : vector<256x512xf32>
    %cst_17 = arith.constant 0.000000e+00 : f32
    %22 = vector.broadcast %cst_17 : f32 to vector<256x512xf32>
    %23 = arith.maximumf %21, %22 : vector<256x512xf32>
    %24 = arith.truncf %23 : vector<256x512xf32> to vector<256x512xbf16>
    %c0_18 = arith.constant 0 : index
    %c0_19 = arith.constant 0 : index
    %25 = vector.load %arg8[%c0_18, %c0_19] : memref<512x896xbf16, #tpu.memory_space<vmem>>, vector<512x896xbf16>
    %cst_20 = arith.constant dense<0.000000e+00> : vector<256x896xf32>
    %26 = tpu.matmul %24, %25, %cst_20 {dimension_numbers = #tpu.dot_dimension_numbers<[1], [0], [0], [1], [0, 0, 1, 1], [], []>} : vector<256x512xbf16>, vector<512x896xbf16>, vector<256x896xf32> -> vector<256x896xf32>
    %c0_21 = arith.constant 0 : index
    %c0_22 = arith.constant 0 : index
    %27 = vector.load %arg9[%c0_21, %c0_22] : memref<1x896xf32, #tpu.memory_space<vmem>>, vector<1x896xf32>
    %28 = vector.broadcast %27 : vector<1x896xf32> to vector<256x896xf32>
    %29 = arith.addf %26, %28 : vector<256x896xf32>
    %30 = arith.negf %29 : vector<256x896xf32>
    %31 = math.exp %30 : vector<256x896xf32>
    %cst_23 = arith.constant 1.000000e+00 : f32
    %32 = vector.broadcast %cst_23 : f32 to vector<256x896xf32>
    %33 = arith.addf %32, %31 : vector<256x896xf32>
    %34 = arith.divf %32, %33 : vector<256x896xf32>
    %c0_24 = arith.constant 0 : index
    %c0_25 = arith.constant 0 : index
    %35 = vector.load %arg10[%c0_24, %c0_25] : memref<256x896xf32, #tpu.memory_space<vmem>>, vector<256x896xf32>
    tpu.vector_store %arg10[%c0_24, %c0_25], %34 {strides = array<i32>} : memref<256x896xf32, #tpu.memory_space<vmem>>, vector<256x896xf32>,
    return
  }
  func.func @transform_0(%arg0: i32) -> (i32, i32) {
    %c0_i32 = arith.constant 0 : i32
    %c0_i32_0 = arith.constant 0 : i32
    return %arg0, %c0_i32 : i32, i32
  }
  func.func @transform_1(%arg0: i32) -> (i32, i32) {
    %c0_i32 = arith.constant 0 : i32
    %c0_i32_0 = arith.constant 0 : i32
    %c0_i32_1 = arith.constant 0 : i32
    return %c0_i32, %c0_i32_0 : i32, i32
  }
  func.func @transform_2(%arg0: i32) -> (i32, i32) {
    %c0_i32 = arith.constant 0 : i32
    %c0_i32_0 = arith.constant 0 : i32
    %c0_i32_1 = arith.constant 0 : i32
    return %c0_i32, %c0_i32_0 : i32, i32
  }
  func.func @transform_3(%arg0: i32) -> (i32, i32) {
    %c0_i32 = arith.constant 0 : i32
    %c0_i32_0 = arith.constant 0 : i32
    %c0_i32_1 = arith.constant 0 : i32
    return %c0_i32, %c0_i32_0 : i32, i32
  }
  func.func @transform_4(%arg0: i32) -> (i32, i32) {
    %c0_i32 = arith.constant 0 : i32
    %c0_i32_0 = arith.constant 0 : i32
    %c0_i32_1 = arith.constant 0 : i32
    return %c0_i32, %c0_i32_0 : i32, i32
  }
  func.func @transform_5(%arg0: i32) -> (i32, i32) {
    %c0_i32 = arith.constant 0 : i32
    %c0_i32_0 = arith.constant 0 : i32
    %c0_i32_1 = arith.constant 0 : i32
    return %c0_i32, %c0_i32_0 : i32, i32
  }
  func.func @transform_6(%arg0: i32) -> (i32, i32) {
    %c0_i32 = arith.constant 0 : i32
    %c0_i32_0 = arith.constant 0 : i32
    %c0_i32_1 = arith.constant 0 : i32
    return %c0_i32, %c0_i32_0 : i32, i32
  }
  func.func @transform_7(%arg0: i32) -> (i32, i32) {
    %c0_i32 = arith.constant 0 : i32
    %c0_i32_0 = arith.constant 0 : i32
    %c0_i32_1 = arith.constant 0 : i32
    return %c0_i32, %c0_i32_0 : i32, i32
  }
  func.func @transform_8(%arg0: i32) -> (i32, i32) {
    %c0_i32 = arith.constant 0 : i32
    %c0_i32_0 = arith.constant 0 : i32
    %c0_i32_1 = arith.constant 0 : i32
    return %c0_i32, %c0_i32_0 : i32, i32
  }
  func.func @transform_9(%arg0: i32) -> (i32, i32) {
    %c0_i32 = arith.constant 0 : i32
    %c0_i32_0 = arith.constant 0 : i32
    return %arg0, %c0_i32 : i32, i32
  }
}

</mosaic_0001>

<llo_original>
// kernel: autoencoder_forward.1
$region0: #{autoencoder_forward.1}
  #allocation0 [shape = 'u32[]', space=smem, size = 0x4, offset = 0x4, fixed_abs, tag = 'smem constant byte address 0x4 - core index']
  #allocation1 [shape = 'u32[144,128]{1,0:T(1,128)}', space=vmem, size = 0x12000, scoped, tag = 'internal scratch']
  %s0 = inlined_call_operand.hbm [shape: bf16[512,896], index: 0, kind: input, shape index: {}]
  %s1 = inlined_call_operand.hbm [shape: bf16[896,512], index: 1, kind: input, shape index: {}]
  %s2 = inlined_call_operand.hbm [shape: f32[1,512], index: 2, kind: input, shape index: {}]
  %s3 = inlined_call_operand.hbm [shape: bf16[512,128], index: 3, kind: input, shape index: {}]
  %s4 = inlined_call_operand.hbm [shape: f32[1,128], index: 4, kind: input, shape index: {}]
  %s5 = inlined_call_operand.hbm [shape: bf16[128,512], index: 5, kind: input, shape index: {}]
  %s6 = inlined_call_operand.hbm [shape: f32[1,512], index: 6, kind: input, shape index: {}]
  %s7 = inlined_call_operand.hbm [shape: bf16[512,896], index: 7, kind: input, shape index: {}]
  %s8 = inlined_call_operand.hbm [shape: f32[1,896], index: 8, kind: input, shape index: {}]
  %s9 = inlined_call_operand.hbm [shape: f32[512,896], index: 9, kind: output, shape index: {}]
  %s10 = sld [smem:[#allocation0]]
  $region105: #{autoencoder_forward.1} parent=0
    _
  %s12 = ssub.s32 1, %s10
  %s13 = scalar_select 0, %s12, %s10
  $region1: #{autoencoder_forward.1} parent=0
    #allocation2 [shape = 'u8[917504]{0}', space=vmem, size = 0xe0000, scoped, tag = 'input window, operand 0']
    #allocation3 [shape = 's32[2]{0}', space=sflag, size = 0x8, scoped, tag = 'scoped memory for autoencoder_forward.1']
    #allocation4 [shape = 's32[2]{0}', space=sflag, size = 0x8, scoped, tag = 'scoped memory for autoencoder_forward.1']
    #allocation5 [shape = 'u8[917504]{0}', space=vmem, size = 0xe0000, scoped, tag = 'input window, operand 1, single buffered']
    #allocation6 [shape = 's32[1]{0}', space=sflag, size = 0x4, scoped, tag = 'scoped memory for autoencoder_forward.1']
    #allocation7 [shape = 'u8[2048]{0}', space=vmem, size = 0x800, scoped, tag = 'input window, operand 2, single buffered']
    #allocation8 [shape = 'u8[131072]{0}', space=vmem, size = 0x20000, scoped, tag = 'input window, operand 3, single buffered']
    #allocation9 [shape = 's32[1]{0}', space=sflag, size = 0x4, scoped, tag = 'scoped memory for autoencoder_forward.1']
    #allocation10 [shape = 'u8[512]{0}', space=vmem, size = 0x400, scoped, tag = 'input window, operand 4, single buffered']
    #allocation11 [shape = 'u8[131072]{0}', space=vmem, size = 0x20000, scoped, tag = 'input window, operand 5, single buffered']
    #allocation12 [shape = 's32[1]{0}', space=sflag, size = 0x4, scoped, tag = 'scoped memory for autoencoder_forward.1']
    #allocation13 [shape = 'u8[2048]{0}', space=vmem, size = 0x800, scoped, tag = 'input window, operand 6, single buffered']
    #allocation14 [shape = 'u8[917504]{0}', space=vmem, size = 0xe0000, scoped, tag = 'input window, operand 7, single buffered']
    #allocation15 [shape = 's32[1]{0}', space=sflag, size = 0x4, scoped, tag = 'scoped memory for autoencoder_forward.1']
    #allocation16 [shape = 'u8[3584]{0}', space=vmem, size = 0x1000, scoped, tag = 'input window, operand 8, single buffered']
    #allocation17 [shape = 'u8[1835008]{0}', space=vmem, size = 0x1c0000, scoped, tag = 'output window, operand 0']
    %14 = vsyncpa [#allocation3], 0
    %s15 = scalar_lea.sflag [#allocation3], 1
    %16 = vsyncpa %s15, 0
    %17 = vsyncpa [#allocation6], 0
    %18 = vsyncpa [#allocation9], 0
    %19 = vsyncpa [#allocation12], 0
    %20 = vsyncpa [#allocation15], 0
    %21 = vsyncpa [#allocation4], 0
    %s22 = scalar_lea.sflag [#allocation4], 1
    %23 = vsyncpa %s22, 0
    loop: start=0, step=1, limit=4
    $region2: #{autoencoder_forward.1} parent=1 // loop_pre_header
      _
    $region3: #{autoencoder_forward.1} parent=1 // loop_header
      %s25 = sphi 0, %s29
      %p26 = scmp.ge.s32.totalorder %s25, 4
      %s35 = sphi 0, %s37
      %s38 = sphi 0, %s35
      %s39 = sphi 0, %s38
      %s55 = sphi 0, %s39
      %s59 = sphi 0, %s59
      %s61 = sphi 0, %s59
      %s62 = sphi 0, %s61
      %s76 = sphi 0, %s62
      %s80 = sphi 0, %s80
      %s82 = sphi 0, %s80
      %s83 = sphi 0, %s82
      %s97 = sphi 0, %s83
      %s101 = sphi 0, %s101
      %s103 = sphi 0, %s101
      %s104 = sphi 0, %s103
      %s118 = sphi 0, %s104
      %s122 = sphi 0, %s122
      %s124 = sphi 0, %s122
      %s125 = sphi 0, %s124
      %s139 = sphi 0, %s125
      %s143 = sphi 0, %s143
      %s145 = sphi 0, %s143
      %s146 = sphi 0, %s145
      %s160 = sphi 0, %s146
      %s164 = sphi 0, %s164
      %s166 = sphi 0, %s164
      %s167 = sphi 0, %s166
      %s181 = sphi 0, %s167
      %s185 = sphi 0, %s185
      %s187 = sphi 0, %s185
      %s188 = sphi 0, %s187
      %s202 = sphi 0, %s188
      %s206 = sphi 0, %s206
      %s208 = sphi 0, %s206
      %s209 = sphi 0, %s208
      %s223 = sphi 0, %s209
      %s229 = sphi 0, %s231
      %s232 = sphi 0, %s229
      %s233 = sphi 0, %s232
      %s249 = sphi 0, %s233
    $region4: #{autoencoder_forward.1} parent=1 // loop_header_branch
      %28 = sbr.rel (%p26) target = $region8
    $region5: #{autoencoder_forward.1} parent=1 // loop_body
      %s30 = ssub.s32 %s25, 1
      %s31 = ssub.s32 %s25, 2
      %s32 = sadd.s32 %s25, 1
      %s33 = ssub.s32 %s25, %s32
      %p34 = scmp.eq.s32.totalorder %s33, 0
      %s36 = sadd.s32 %s35, 1
      %s37 = scalar_select %p34, %s35, %s36
      %p40 = pneg %p34
      %p41 = scmp.eq.s32.totalorder %s25, 1
      %p42 = por %p40, %p41
      %p43 = scmp.ne.s32.totalorder %s35, %s38
      %p44 = scmp.eq.s32.totalorder %s25, 0
      %p45 = por %p43, %p44
      %p46 = scmp.ne.s32.totalorder %s35, %s38
      %p47 = scmp.eq.s32.totalorder %s30, 1
      %p48 = por %p46, %p47
      %p49 = scmp.ne.s32.totalorder %s38, %s39
      %p50 = scmp.eq.s32.totalorder %s30, 0
      %p51 = por %p49, %p50
      %p52 = scmp.ne.s32.totalorder %s38, %s39
      %p53 = scmp.eq.s32.totalorder %s31, 1
      %p54 = por %p52, %p53
      %p56 = scmp.ne.s32.totalorder %s39, %s55
      %p57 = scmp.eq.s32.totalorder %s31, 0
      %p58 = por %p56, %p57
      %s60 = sadd.s32 %s59, 1
      %p63 = scmp.eq.s32.totalorder %s25, 1
      %p64 = scmp.ne.s32.totalorder %s59, %s61
      %p65 = scmp.eq.s32.totalorder %s25, 0
      %p66 = por %p64, %p65
      %p67 = scmp.ne.s32.totalorder %s59, %s61
      %p68 = scmp.eq.s32.totalorder %s30, 1
      %p69 = por %p67, %p68
      %p70 = scmp.ne.s32.totalorder %s61, %s62
      %p71 = scmp.eq.s32.totalorder %s30, 0
      %p72 = por %p70, %p71
      %p73 = scmp.ne.s32.totalorder %s61, %s62
      %p74 = scmp.eq.s32.totalorder %s31, 1
      %p75 = por %p73, %p74
      %p77 = scmp.ne.s32.totalorder %s62, %s76
      %p78 = scmp.eq.s32.totalorder %s31, 0
      %p79 = por %p77, %p78
      %s81 = sadd.s32 %s80, 1
      %p84 = scmp.eq.s32.totalorder %s25, 1
      %p85 = scmp.ne.s32.totalorder %s80, %s82
      %p86 = scmp.eq.s32.totalorder %s25, 0
      %p87 = por %p85, %p86
      %p88 = scmp.ne.s32.totalorder %s80, %s82
      %p89 = scmp.eq.s32.totalorder %s30, 1
      %p90 = por %p88, %p89
      %p91 = scmp.ne.s32.totalorder %s82, %s83
      %p92 = scmp.eq.s32.totalorder %s30, 0
      %p93 = por %p91, %p92
      %p94 = scmp.ne.s32.totalorder %s82, %s83
      %p95 = scmp.eq.s32.totalorder %s31, 1
      %p96 = por %p94, %p95
      %p98 = scmp.ne.s32.totalorder %s83, %s97
      %p99 = scmp.eq.s32.totalorder %s31, 0
      %p100 = por %p98, %p99
      %s102 = sadd.s32 %s101, 1
      %p105 = scmp.eq.s32.totalorder %s25, 1
      %p106 = scmp.ne.s32.totalorder %s101, %s103
      %p107 = scmp.eq.s32.totalorder %s25, 0
      %p108 = por %p106, %p107
      %p109 = scmp.ne.s32.totalorder %s101, %s103
      %p110 = scmp.eq.s32.totalorder %s30, 1
      %p111 = por %p109, %p110
      %p112 = scmp.ne.s32.totalorder %s103, %s104
      %p113 = scmp.eq.s32.totalorder %s30, 0
      %p114 = por %p112, %p113
      %p115 = scmp.ne.s32.totalorder %s103, %s104
      %p116 = scmp.eq.s32.totalorder %s31, 1
      %p117 = por %p115, %p116
      %p119 = scmp.ne.s32.totalorder %s104, %s118
      %p120 = scmp.eq.s32.totalorder %s31, 0
      %p121 = por %p119, %p120
      %s123 = sadd.s32 %s122, 1
      %p126 = scmp.eq.s32.totalorder %s25, 1
      %p127 = scmp.ne.s32.totalorder %s122, %s124
      %p128 = scmp.eq.s32.totalorder %s25, 0
      %p129 = por %p127, %p128
      %p130 = scmp.ne.s32.totalorder %s122, %s124
      %p131 = scmp.eq.s32.totalorder %s30, 1
      %p132 = por %p130, %p131
      %p133 = scmp.ne.s32.totalorder %s124, %s125
      %p134 = scmp.eq.s32.totalorder %s30, 0
      %p135 = por %p133, %p134
      %p136 = scmp.ne.s32.totalorder %s124, %s125
      %p137 = scmp.eq.s32.totalorder %s31, 1
      %p138 = por %p136, %p137
      %p140 = scmp.ne.s32.totalorder %s125, %s139
      %p141 = scmp.eq.s32.totalorder %s31, 0
      %p142 = por %p140, %p141
      %s144 = sadd.s32 %s143, 1
      %p147 = scmp.eq.s32.totalorder %s25, 1
      %p148 = scmp.ne.s32.totalorder %s143, %s145
      %p149 = scmp.eq.s32.totalorder %s25, 0
      %p150 = por %p148, %p149
      %p151 = scmp.ne.s32.totalorder %s143, %s145
      %p152 = scmp.eq.s32.totalorder %s30, 1
      %p153 = por %p151, %p152
      %p154 = scmp.ne.s32.totalorder %s145, %s146
      %p155 = scmp.eq.s32.totalorder %s30, 0
      %p156 = por %p154, %p155
      %p157 = scmp.ne.s32.totalorder %s145, %s146
      %p158 = scmp.eq.s32.totalorder %s31, 1
      %p159 = por %p157, %p158
      %p161 = scmp.ne.s32.totalorder %s146, %s160
      %p162 = scmp.eq.s32.totalorder %s31, 0
      %p163 = por %p161, %p162
      %s165 = sadd.s32 %s164, 1
      %p168 = scmp.eq.s32.totalorder %s25, 1
      %p169 = scmp.ne.s32.totalorder %s164, %s166
      %p170 = scmp.eq.s32.totalorder %s25, 0
      %p171 = por %p169, %p170
      %p172 = scmp.ne.s32.totalorder %s164, %s166
      %p173 = scmp.eq.s32.totalorder %s30, 1
      %p174 = por %p172, %p173
      %p175 = scmp.ne.s32.totalorder %s166, %s167
      %p176 = scmp.eq.s32.totalorder %s30, 0
      %p177 = por %p175, %p176
      %p178 = scmp.ne.s32.totalorder %s166, %s167
      %p179 = scmp.eq.s32.totalorder %s31, 1
      %p180 = por %p178, %p179
      %p182 = scmp.ne.s32.totalorder %s167, %s181
      %p183 = scmp.eq.s32.totalorder %s31, 0
      %p184 = por %p182, %p183
      %s186 = sadd.s32 %s185, 1
      %p189 = scmp.eq.s32.totalorder %s25, 1
      %p190 = scmp.ne.s32.totalorder %s185, %s187
      %p191 = scmp.eq.s32.totalorder %s25, 0
      %p192 = por %p190, %p191
      %p193 = scmp.ne.s32.totalorder %s185, %s187
      %p194 = scmp.eq.s32.totalorder %s30, 1
      %p195 = por %p193, %p194
      %p196 = scmp.ne.s32.totalorder %s187, %s188
      %p197 = scmp.eq.s32.totalorder %s30, 0
      %p198 = por %p196, %p197
      %p199 = scmp.ne.s32.totalorder %s187, %s188
      %p200 = scmp.eq.s32.totalorder %s31, 1
      %p201 = por %p199, %p200
      %p203 = scmp.ne.s32.totalorder %s188, %s202
      %p204 = scmp.eq.s32.totalorder %s31, 0
      %p205 = por %p203, %p204
      %s207 = sadd.s32 %s206, 1
      %p210 = scmp.eq.s32.totalorder %s25, 1
      %p211 = scmp.ne.s32.totalorder %s206, %s208
      %p212 = scmp.eq.s32.totalorder %s25, 0
      %p213 = por %p211, %p212
      %p214 = scmp.ne.s32.totalorder %s206, %s208
      %p215 = scmp.eq.s32.totalorder %s30, 1
      %p216 = por %p214, %p215
      %p217 = scmp.ne.s32.totalorder %s208, %s209
      %p218 = scmp.eq.s32.totalorder %s30, 0
      %p219 = por %p217, %p218
      %p220 = scmp.ne.s32.totalorder %s208, %s209
      %p221 = scmp.eq.s32.totalorder %s31, 1
      %p222 = por %p220, %p221
      %p224 = scmp.ne.s32.totalorder %s209, %s223
      %p225 = scmp.eq.s32.totalorder %s31, 0
      %p226 = por %p224, %p225
      %s227 = ssub.s32 %s25, %s32
      %p228 = scmp.eq.s32.totalorder %s227, 0
      %s230 = sadd.s32 %s229, 1
      %s231 = scalar_select %p228, %s229, %s230
      %p234 = pneg %p228
      %p235 = scmp.eq.s32.totalorder %s25, 1
      %p236 = por %p234, %p235
      %p237 = scmp.ne.s32.totalorder %s229, %s232
      %p238 = scmp.eq.s32.totalorder %s25, 0
      %p239 = por %p237, %p238
      %p240 = scmp.ne.s32.totalorder %s229, %s232
      %p241 = scmp.eq.s32.totalorder %s30, 1
      %p242 = por %p240, %p241
      %p243 = scmp.ne.s32.totalorder %s232, %s233
      %p244 = scmp.eq.s32.totalorder %s30, 0
      %p245 = por %p243, %p244
      %p246 = scmp.ne.s32.totalorder %s232, %s233
      %p247 = scmp.eq.s32.totalorder %s31, 1
      %p248 = por %p246, %p247
      %p250 = scmp.ne.s32.totalorder %s233, %s249
      %p251 = scmp.eq.s32.totalorder %s31, 0
      %p252 = por %p250, %p251
      %p253 = scmp.le.s32.totalorder 1, %s25
      %p254 = scmp.lt.s32.totalorder %s25, 3
      %p255 = pnand %p253, %p254
      %p256 = pneg %p255
      // Predicated region
      $region9: #{autoencoder_forward.1} parent=5 // pred_check
        _
      $region10: #{autoencoder_forward.1} parent=5 // pred_check_branch
        %258 = sbr.rel (%p255) target = $region12
      $region11: #{autoencoder_forward.1} parent=5 // pred_region
        %s259 = ssub.s32 %s25, 1
        // Predicated region
        $region13: #{autoencoder_forward.1} parent=11 // pred_check
          %p260 = pneg %p72
        $region14: #{autoencoder_forward.1} parent=11 // pred_check_branch
          %262 = sbr.rel (%p260) target = $region16
        $region15: #{autoencoder_forward.1} parent=11 // pred_region
          %s264 = ssub.s32 28672, 28672
          %265 = vsyncadd [#allocation6], %s264
          %s266 = sshll.u32 [#allocation5], 4
          %s267 = int_to_ptr.vmem [resolvable:$true] %s266
          %272 = dma.hbm_to_vmem [thread:$0]  %s1, 28672, %s267, [#allocation6], 256, 256, 16
        $region16: #{autoencoder_forward.1} parent=11 // pred_fallthru
          _
        // Predicated region
        $region17: #{autoencoder_forward.1} parent=11 // pred_check
          %p273 = pneg %p93
        $region18: #{autoencoder_forward.1} parent=11 // pred_check_branch
          %275 = sbr.rel (%p273) target = $region20
        $region19: #{autoencoder_forward.1} parent=11 // pred_region
          %s277 = ssub.s32 64, 64
          %278 = vsyncadd [#allocation6], %s277
          %s280 = sshll.u32 [#allocation7], 4
          %s281 = int_to_ptr.vmem [resolvable:$true] %s280
          %283 = dma.hbm_to_vmem [thread:$0]  %s2, 64, %s281, [#allocation6]
        $region20: #{autoencoder_forward.1} parent=11 // pred_fallthru
          _
        // Predicated region
        $region21: #{autoencoder_forward.1} parent=11 // pred_check
          %p284 = pneg %p114
        $region22: #{autoencoder_forward.1} parent=11 // pred_check_branch
          %286 = sbr.rel (%p284) target = $region24
        $region23: #{autoencoder_forward.1} parent=11 // pred_region
          %s288 = ssub.s32 4096, 4096
          %289 = vsyncadd [#allocation9], %s288
          %s290 = sshll.u32 [#allocation8], 4
          %s291 = int_to_ptr.vmem [resolvable:$true] %s290
          %296 = dma.hbm_to_vmem [thread:$0]  %s3, 4096, %s291, [#allocation9], 64, 64, 4
        $region24: #{autoencoder_forward.1} parent=11 // pred_fallthru
          _
        // Predicated region
        $region25: #{autoencoder_forward.1} parent=11 // pred_check
          %p297 = pneg %p135
        $region26: #{autoencoder_forward.1} parent=11 // pred_check_branch
          %299 = sbr.rel (%p297) target = $region28
        $region27: #{autoencoder_forward.1} parent=11 // pred_region
          %s301 = ssub.s32 16, 16
          %302 = vsyncadd [#allocation9], %s301
          %s304 = sshll.u32 [#allocation10], 4
          %s305 = int_to_ptr.vmem [resolvable:$true] %s304
          %307 = dma.hbm_to_vmem [thread:$0]  %s4, 16, %s305, [#allocation9]
        $region28: #{autoencoder_forward.1} parent=11 // pred_fallthru
          _
        // Predicated region
        $region29: #{autoencoder_forward.1} parent=11 // pred_check
          %p308 = pneg %p156
        $region30: #{autoencoder_forward.1} parent=11 // pred_check_branch
          %310 = sbr.rel (%p308) target = $region32
        $region31: #{autoencoder_forward.1} parent=11 // pred_region
          %s312 = ssub.s32 4096, 4096
          %313 = vsyncadd [#allocation12], %s312
          %s314 = sshll.u32 [#allocation11], 4
          %s315 = int_to_ptr.vmem [resolvable:$true] %s314
          %320 = dma.hbm_to_vmem [thread:$0]  %s5, 4096, %s315, [#allocation12], 256, 256, 16
        $region32: #{autoencoder_forward.1} parent=11 // pred_fallthru
          _
        // Predicated region
        $region33: #{autoencoder_forward.1} parent=11 // pred_check
          %p321 = pneg %p177
        $region34: #{autoencoder_forward.1} parent=11 // pred_check_branch
          %323 = sbr.rel (%p321) target = $region36
        $region35: #{autoencoder_forward.1} parent=11 // pred_region
          %s325 = ssub.s32 64, 64
          %326 = vsyncadd [#allocation12], %s325
          %s328 = sshll.u32 [#allocation13], 4
          %s329 = int_to_ptr.vmem [resolvable:$true] %s328
          %331 = dma.hbm_to_vmem [thread:$0]  %s6, 64, %s329, [#allocation12]
        $region36: #{autoencoder_forward.1} parent=11 // pred_fallthru
          _
        // Predicated region
        $region37: #{autoencoder_forward.1} parent=11 // pred_check
          %p332 = pneg %p198
        $region38: #{autoencoder_forward.1} parent=11 // pred_check_branch
          %334 = sbr.rel (%p332) target = $region40
        $region39: #{autoencoder_forward.1} parent=11 // pred_region
          %s336 = ssub.s32 28672, 28672
          %337 = vsyncadd [#allocation15], %s336
          %s338 = sshll.u32 [#allocation14], 4
          %s339 = int_to_ptr.vmem [resolvable:$true] %s338
          %344 = dma.hbm_to_vmem [thread:$0]  %s7, 28672, %s339, [#allocation15], 448, 448, 28
        $region40: #{autoencoder_forward.1} parent=11 // pred_fallthru
          _
        // Predicated region
        $region41: #{autoencoder_forward.1} parent=11 // pred_check
          %p345 = pneg %p219
        $region42: #{autoencoder_forward.1} parent=11 // pred_check_branch
          %347 = sbr.rel (%p345) target = $region44
        $region43: #{autoencoder_forward.1} parent=11 // pred_region
          %s349 = ssub.s32 112, 112
          %350 = vsyncadd [#allocation15], %s349
          %s352 = sshll.u32 [#allocation16], 4
          %s353 = int_to_ptr.vmem [resolvable:$true] %s352
          %355 = dma.hbm_to_vmem [thread:$0]  %s8, 112, %s353, [#allocation15]
        $region44: #{autoencoder_forward.1} parent=11 // pred_fallthru
          _
      $region12: #{autoencoder_forward.1} parent=5 // pred_fallthru
        _
      %p356 = scmp.lt.s32.totalorder %s25, 2
      // Predicated region
      $region45: #{autoencoder_forward.1} parent=5 // pred_check
        %p357 = pneg %p356
      $region46: #{autoencoder_forward.1} parent=5 // pred_check_branch
        %359 = sbr.rel (%p357) target = $region48
      $region47: #{autoencoder_forward.1} parent=5 // pred_region
        // Predicated region
        $region49: #{autoencoder_forward.1} parent=47 // pred_check
          %p360 = pneg %p45
        $region50: #{autoencoder_forward.1} parent=47 // pred_check_branch
          %362 = sbr.rel (%p360) target = $region52
        $region51: #{autoencoder_forward.1} parent=47 // pred_region
          %s363 = sand.u32 %s35, 1
          %s364 = scalar_lea.sflag [#allocation3], %s363
          %s365 = sand.u32 %s35, 1
          %s366 = smul.addr %s365, 896
          %s367 = scalar_lea.vmem [#allocation2], %s366
          %s368 = smul.u32 32, %s25
          %s370 = ssub.s32 14336, 14336
          %371 = vsyncadd %s364, %s370
          %s372 = smul.addr %s368, 7
          %s373 = smul.addr %s372, 64
          %s374 = scalar_lea.hbm %s0, %s373
          %s375 = sshll.u32 %s367, 4
          %s376 = int_to_ptr.vmem [resolvable:$true] %s375
          %381 = dma.hbm_to_vmem [thread:$0]  %s374, 14336, %s376, %s364, 448, 448, 28
        $region52: #{autoencoder_forward.1} parent=47 // pred_fallthru
          _
      $region48: #{autoencoder_forward.1} parent=5 // pred_fallthru
        _
      %p382 = scmp.le.s32.totalorder 1, %s25
      %p383 = scmp.lt.s32.totalorder %s25, 3
      %p384 = pnand %p382, %p383
      %p385 = pneg %p384
      // Predicated region
      $region53: #{autoencoder_forward.1} parent=5 // pred_check
        _
      $region54: #{autoencoder_forward.1} parent=5 // pred_check_branch
        %387 = sbr.rel (%p384) target = $region56
      $region55: #{autoencoder_forward.1} parent=5 // pred_region
        %s388 = ssub.s32 %s25, 1
        %s389 = sand.u32 %s38, 1
        %s390 = scalar_lea.sflag [#allocation3], %s389
        %s391 = sand.u32 %s38, 1
        %s392 = smul.addr %s391, 896
        %s393 = scalar_lea.vmem [#allocation2], %s392
        // Predicated region
        $region57: #{autoencoder_forward.1} parent=55 // pred_check
          %p394 = pneg %p51
        $region58: #{autoencoder_forward.1} parent=55 // pred_check_branch
          %396 = sbr.rel (%p394) target = $region60
        $region59: #{autoencoder_forward.1} parent=55 // pred_region
          %397 = dma.done %s390, 14336
        $region60: #{autoencoder_forward.1} parent=55 // pred_fallthru
          _
        // Predicated region
        $region61: #{autoencoder_forward.1} parent=55 // pred_check
          %p398 = pneg %p72
        $region62: #{autoencoder_forward.1} parent=55 // pred_check_branch
          %400 = sbr.rel (%p398) target = $region64
        $region63: #{autoencoder_forward.1} parent=55 // pred_region
          %401 = dma.done [#allocation6], 28672
        $region64: #{autoencoder_forward.1} parent=55 // pred_fallthru
          _
        // Predicated region
        $region65: #{autoencoder_forward.1} parent=55 // pred_check
          %p402 = pneg %p93
        $region66: #{autoencoder_forward.1} parent=55 // pred_check_branch
          %404 = sbr.rel (%p402) target = $region68
        $region67: #{autoencoder_forward.1} parent=55 // pred_region
          %405 = dma.done [#allocation6], 64
        $region68: #{autoencoder_forward.1} parent=55 // pred_fallthru
          _
        // Predicated region
        $region69: #{autoencoder_forward.1} parent=55 // pred_check
          %p406 = pneg %p114
        $region70: #{autoencoder_forward.1} parent=55 // pred_check_branch
          %408 = sbr.rel (%p406) target = $region72
        $region71: #{autoencoder_forward.1} parent=55 // pred_region
          %409 = dma.done [#allocation9], 4096
        $region72: #{autoencoder_forward.1} parent=55 // pred_fallthru
          _
        // Predicated region
        $region73: #{autoencoder_forward.1} parent=55 // pred_check
          %p410 = pneg %p135
        $region74: #{autoencoder_forward.1} parent=55 // pred_check_branch
          %412 = sbr.rel (%p410) target = $region76
        $region75: #{autoencoder_forward.1} parent=55 // pred_region
          %413 = dma.done [#allocation9], 16
        $region76: #{autoencoder_forward.1} parent=55 // pred_fallthru
          _
        // Predicated region
        $region77: #{autoencoder_forward.1} parent=55 // pred_check
          %p414 = pneg %p156
        $region78: #{autoencoder_forward.1} parent=55 // pred_check_branch
          %416 = sbr.rel (%p414) target = $region80
        $region79: #{autoencoder_forward.1} parent=55 // pred_region
          %417 = dma.done [#allocation12], 4096
        $region80: #{autoencoder_forward.1} parent=55 // pred_fallthru
          _
        // Predicated region
        $region81: #{autoencoder_forward.1} parent=55 // pred_check
          %p418 = pneg %p177
        $region82: #{autoencoder_forward.1} parent=55 // pred_check_branch
          %420 = sbr.rel (%p418) target = $region84
        $region83: #{autoencoder_forward.1} parent=55 // pred_region
          %421 = dma.done [#allocation12], 64
        $region84: #{autoencoder_forward.1} parent=55 // pred_fallthru
          _
        // Predicated region
        $region85: #{autoencoder_forward.1} parent=55 // pred_check
          %p422 = pneg %p198
        $region86: #{autoencoder_forward.1} parent=55 // pred_check_branch
          %424 = sbr.rel (%p422) target = $region88
        $region87: #{autoencoder_forward.1} parent=55 // pred_region
          %425 = dma.done [#allocation15], 28672
        $region88: #{autoencoder_forward.1} parent=55 // pred_fallthru
          _
        // Predicated region
        $region89: #{autoencoder_forward.1} parent=55 // pred_check
          %p426 = pneg %p219
        $region90: #{autoencoder_forward.1} parent=55 // pred_check_branch
          %428 = sbr.rel (%p426) target = $region92
        $region91: #{autoencoder_forward.1} parent=55 // pred_region
          %429 = dma.done [#allocation15], 112
        $region92: #{autoencoder_forward.1} parent=55 // pred_fallthru
          _
        %s430 = sand.u32 %s38, 1
        %s431 = scalar_lea.sflag [#allocation3], %s430
        %s432 = sand.u32 %s38, 1
        %s433 = smul.addr %s432, 896
        %s434 = scalar_lea.vmem [#allocation2], %s433
        %p435 = pneg %p51
        %p436 = pneg %p48
        %p437 = pneg %p72
        %p438 = pneg %p69
        %p439 = pneg %p93
        %p440 = pneg %p90
        %p441 = pneg %p114
        %p442 = pneg %p111
        %p443 = pneg %p135
        %p444 = pneg %p132
        %p445 = pneg %p156
        %p446 = pneg %p153
        %p447 = pneg %p177
        %p448 = pneg %p174
        %p449 = pneg %p198
        %p450 = pneg %p195
        %p451 = pneg %p219
        %p452 = pneg %p216
        %p453 = pneg %p245
        %p454 = pneg %p242
        %s455 = sand.u32 %s232, 1
        %s456 = scalar_lea.sflag [#allocation4], %s455
        %s457 = sand.u32 %s232, 1
        %s458 = smul.addr %s457, 1792
        %s459 = scalar_lea.vmem [#allocation17], %s458
        %s460 = smul.u32 32, %s30
        %s461 = smul.u32 32, %s30
        %v463 = vld [vmem:[%s393] sm:$0xff]
        %v464 = vld [vmem:[%s393 + $0x8] sm:$0xff]
        %v465 = vld [vmem:[%s393 + $0x10] sm:$0xff]
        %v466 = vld [vmem:[%s393 + $0x18] sm:$0xf]
        %v467 = vld [vmem:[%s393 + $0x1c] sm:$0xff]
        %v468 = vld [vmem:[%s393 + $0x24] sm:$0xff]
        %v469 = vld [vmem:[%s393 + $0x2c] sm:$0xff]
        %v470 = vld [vmem:[%s393 + $0x34] sm:$0xf]
        %v471 = vld [vmem:[%s393 + $0x38] sm:$0xff]
        %v472 = vld [vmem:[%s393 + $0x40] sm:$0xff]
        %v473 = vld [vmem:[%s393 + $0x48] sm:$0xff]
        %v474 = vld [vmem:[%s393 + $0x50] sm:$0xf]
        %v475 = vld [vmem:[%s393 + $0x54] sm:$0xff]
        %v476 = vld [vmem:[%s393 + $0x5c] sm:$0xff]
        %v477 = vld [vmem:[%s393 + $0x64] sm:$0xff]
        %v478 = vld [vmem:[%s393 + $0x6c] sm:$0xf]
        %v479 = vld [vmem:[%s393 + $0x70] sm:$0xff]
        %v480 = vld [vmem:[%s393 + $0x78] sm:$0xff]
        %v481 = vld [vmem:[%s393 + $0x80] sm:$0xff]
        %v482 = vld [vmem:[%s393 + $0x88] sm:$0xf]
        %v483 = vld [vmem:[%s393 + $0x8c] sm:$0xff]
        %v484 = vld [vmem:[%s393 + $0x94] sm:$0xff]
        %v485 = vld [vmem:[%s393 + $0x9c] sm:$0xff]
        %v486 = vld [vmem:[%s393 + $0xa4] sm:$0xf]
        %v487 = vld [vmem:[%s393 + $0xa8] sm:$0xff]
        %v488 = vld [vmem:[%s393 + $0xb0] sm:$0xff]
        %v489 = vld [vmem:[%s393 + $0xb8] sm:$0xff]
        %v490 = vld [vmem:[%s393 + $0xc0] sm:$0xf]
        %v491 = vld [vmem:[%s393 + $0xc4] sm:$0xff]
        %v492 = vld [vmem:[%s393 + $0xcc] sm:$0xff]
        %v493 = vld [vmem:[%s393 + $0xd4] sm:$0xff]
        %v494 = vld [vmem:[%s393 + $0xdc] sm:$0xf]
        %v495 = vld [vmem:[%s393 + $0xe0] sm:$0xff]
        %v496 = vld [vmem:[%s393 + $0xe8] sm:$0xff]
        %v497 = vld [vmem:[%s393 + $0xf0] sm:$0xff]
        %v498 = vld [vmem:[%s393 + $0xf8] sm:$0xf]
        %v499 = vld [vmem:[%s393 + $0xfc] sm:$0xff]
        %v500 = vld [vmem:[%s393 + $0x104] sm:$0xff]
        %v501 = vld [vmem:[%s393 + $0x10c] sm:$0xff]
        %v502 = vld [vmem:[%s393 + $0x114] sm:$0xf]
        %v503 = vld [vmem:[%s393 + $0x118] sm:$0xff]
        %v504 = vld [vmem:[%s393 + $0x120] sm:$0xff]
        %v505 = vld [vmem:[%s393 + $0x128] sm:$0xff]
        %v506 = vld [vmem:[%s393 + $0x130] sm:$0xf]
        %v507 = vld [vmem:[%s393 + $0x134] sm:$0xff]
        %v508 = vld [vmem:[%s393 + $0x13c] sm:$0xff]
        %v509 = vld [vmem:[%s393 + $0x144] sm:$0xff]
        %v510 = vld [vmem:[%s393 + $0x14c] sm:$0xf]
        %v511 = vld [vmem:[%s393 + $0x150] sm:$0xff]
        %v512 = vld [vmem:[%s393 + $0x158] sm:$0xff]
        %v513 = vld [vmem:[%s393 + $0x160] sm:$0xff]
        %v514 = vld [vmem:[%s393 + $0x168] sm:$0xf]
        %v515 = vld [vmem:[%s393 + $0x16c] sm:$0xff]
        %v516 = vld [vmem:[%s393 + $0x174] sm:$0xff]
        %v517 = vld [vmem:[%s393 + $0x17c] sm:$0xff]
        %v518 = vld [vmem:[%s393 + $0x184] sm:$0xf]
        %v519 = vld [vmem:[%s393 + $0x188] sm:$0xff]
        %v520 = vld [vmem:[%s393 + $0x190] sm:$0xff]
        %v521 = vld [vmem:[%s393 + $0x198] sm:$0xff]
        %v522 = vld [vmem:[%s393 + $0x1a0] sm:$0xf]
        %v523 = vld [vmem:[%s393 + $0x1a4] sm:$0xff]
        %v524 = vld [vmem:[%s393 + $0x1ac] sm:$0xff]
        %v525 = vld [vmem:[%s393 + $0x1b4] sm:$0xff]
        %v526 = vld [vmem:[%s393 + $0x1bc] sm:$0xf]
        %v527 = vld [vmem:[%s393 + $0x1c0] sm:$0xff]
        %v528 = vld [vmem:[%s393 + $0x1c8] sm:$0xff]
        %v529 = vld [vmem:[%s393 + $0x1d0] sm:$0xff]
        %v530 = vld [vmem:[%s393 + $0x1d8] sm:$0xf]
        %v531 = vld [vmem:[%s393 + $0x1dc] sm:$0xff]
        %v532 = vld [vmem:[%s393 + $0x1e4] sm:$0xff]
        %v533 = vld [vmem:[%s393 + $0x1ec] sm:$0xff]
        %v534 = vld [vmem:[%s393 + $0x1f4] sm:$0xf]
        %v535 = vld [vmem:[%s393 + $0x1f8] sm:$0xff]
        %v536 = vld [vmem:[%s393 + $0x200] sm:$0xff]
        %v537 = vld [vmem:[%s393 + $0x208] sm:$0xff]
        %v538 = vld [vmem:[%s393 + $0x210] sm:$0xf]
        %v539 = vld [vmem:[%s393 + $0x214] sm:$0xff]
        %v540 = vld [vmem:[%s393 + $0x21c] sm:$0xff]
        %v541 = vld [vmem:[%s393 + $0x224] sm:$0xff]
        %v542 = vld [vmem:[%s393 + $0x22c] sm:$0xf]
        %v543 = vld [vmem:[%s393 + $0x230] sm:$0xff]
        %v544 = vld [vmem:[%s393 + $0x238] sm:$0xff]
        %v545 = vld [vmem:[%s393 + $0x240] sm:$0xff]
        %v546 = vld [vmem:[%s393 + $0x248] sm:$0xf]
        %v547 = vld [vmem:[%s393 + $0x24c] sm:$0xff]
        %v548 = vld [vmem:[%s393 + $0x254] sm:$0xff]
        %v549 = vld [vmem:[%s393 + $0x25c] sm:$0xff]
        %v550 = vld [vmem:[%s393 + $0x264] sm:$0xf]
        %v551 = vld [vmem:[%s393 + $0x268] sm:$0xff]
        %v552 = vld [vmem:[%s393 + $0x270] sm:$0xff]
        %v553 = vld [vmem:[%s393 + $0x278] sm:$0xff]
        %v554 = vld [vmem:[%s393 + $0x280] sm:$0xf]
        %v555 = vld [vmem:[%s393 + $0x284] sm:$0xff]
        %v556 = vld [vmem:[%s393 + $0x28c] sm:$0xff]
        %v557 = vld [vmem:[%s393 + $0x294] sm:$0xff]
        %v558 = vld [vmem:[%s393 + $0x29c] sm:$0xf]
        %v559 = vld [vmem:[%s393 + $0x2a0] sm:$0xff]
        %v560 = vld [vmem:[%s393 + $0x2a8] sm:$0xff]
        %v561 = vld [vmem:[%s393 + $0x2b0] sm:$0xff]
        %v562 = vld [vmem:[%s393 + $0x2b8] sm:$0xf]
        %v563 = vld [vmem:[%s393 + $0x2bc] sm:$0xff]
        %v564 = vld [vmem:[%s393 + $0x2c4] sm:$0xff]
        %v565 = vld [vmem:[%s393 + $0x2cc] sm:$0xff]
        %v566 = vld [vmem:[%s393 + $0x2d4] sm:$0xf]
        %v567 = vld [vmem:[%s393 + $0x2d8] sm:$0xff]
        %v568 = vld [vmem:[%s393 + $0x2e0] sm:$0xff]
        %v569 = vld [vmem:[%s393 + $0x2e8] sm:$0xff]
        %v570 = vld [vmem:[%s393 + $0x2f0] sm:$0xf]
        %v571 = vld [vmem:[%s393 + $0x2f4] sm:$0xff]
        %v572 = vld [vmem:[%s393 + $0x2fc] sm:$0xff]
        %v573 = vld [vmem:[%s393 + $0x304] sm:$0xff]
        %v574 = vld [vmem:[%s393 + $0x30c] sm:$0xf]
        %v575 = vld [vmem:[%s393 + $0x310] sm:$0xff]
        %v576 = vld [vmem:[%s393 + $0x318] sm:$0xff]
        %v577 = vld [vmem:[%s393 + $0x320] sm:$0xff]
        %v578 = vld [vmem:[%s393 + $0x328] sm:$0xf]
        %v579 = vld [vmem:[%s393 + $0x32c] sm:$0xff]
        %v580 = vld [vmem:[%s393 + $0x334] sm:$0xff]
        %v581 = vld [vmem:[%s393 + $0x33c] sm:$0xff]
        %v582 = vld [vmem:[%s393 + $0x344] sm:$0xf]
        %v583 = vld [vmem:[%s393 + $0x348] sm:$0xff]
        %v584 = vld [vmem:[%s393 + $0x350] sm:$0xff]
        %v585 = vld [vmem:[%s393 + $0x358] sm:$0xff]
        %v586 = vld [vmem:[%s393 + $0x360] sm:$0xf]
        %v587 = vld [vmem:[%s393 + $0x364] sm:$0xff]
        %v588 = vld [vmem:[%s393 + $0x36c] sm:$0xff]
        %v589 = vld [vmem:[%s393 + $0x374] sm:$0xff]
        %v590 = vld [vmem:[%s393 + $0x37c] sm:$0xf]
        %v591 = vld [vmem:[#allocation5] sm:$0xff]
        %v592 = vld [vmem:[#allocation5 + $0x8] sm:$0xff]
        %v593 = vld [vmem:[#allocation5 + $0x10] sm:$0xff]
        %v594 = vld [vmem:[#allocation5 + $0x18] sm:$0xff]
        %v595 = vld [vmem:[#allocation5 + $0x20] sm:$0xff]
        %v596 = vld [vmem:[#allocation5 + $0x28] sm:$0xff]
        %v597 = vld [vmem:[#allocation5 + $0x30] sm:$0xff]
        %v598 = vld [vmem:[#allocation5 + $0x38] sm:$0xff]
        %v599 = vld [vmem:[#allocation5 + $0x40] sm:$0xff]
        %v600 = vld [vmem:[#allocation5 + $0x48] sm:$0xff]
        %v601 = vld [vmem:[#allocation5 + $0x50] sm:$0xff]
        %v602 = vld [vmem:[#allocation5 + $0x58] sm:$0xff]
        %v603 = vld [vmem:[#allocation5 + $0x60] sm:$0xff]
        %v604 = vld [vmem:[#allocation5 + $0x68] sm:$0xff]
        %v605 = vld [vmem:[#allocation5 + $0x70] sm:$0xff]
        %v606 = vld [vmem:[#allocation5 + $0x78] sm:$0xff]
        %v607 = vld [vmem:[#allocation5 + $0x80] sm:$0xff]
        %v608 = vld [vmem:[#allocation5 + $0x88] sm:$0xff]
        %v609 = vld [vmem:[#allocation5 + $0x90] sm:$0xff]
        %v610 = vld [vmem:[#allocation5 + $0x98] sm:$0xff]
        %v611 = vld [vmem:[#allocation5 + $0xa0] sm:$0xff]
        %v612 = vld [vmem:[#allocation5 + $0xa8] sm:$0xff]
        %v613 = vld [vmem:[#allocation5 + $0xb0] sm:$0xff]
        %v614 = vld [vmem:[#allocation5 + $0xb8] sm:$0xff]
        %v615 = vld [vmem:[#allocation5 + $0xc0] sm:$0xff]
        %v616 = vld [vmem:[#allocation5 + $0xc8] sm:$0xff]
        %v617 = vld [vmem:[#allocation5 + $0xd0] sm:$0xff]
        %v618 = vld [vmem:[#allocation5 + $0xd8] sm:$0xff]
        %v619 = vld [vmem:[#allocation5 + $0xe0] sm:$0xff]
        %v620 = vld [vmem:[#allocation5 + $0xe8] sm:$0xff]
        %v621 = vld [vmem:[#allocation5 + $0xf0] sm:$0xff]
        %v622 = vld [vmem:[#allocation5 + $0xf8] sm:$0xff]
        %v623 = vld [vmem:[#allocation5 + $0x100] sm:$0xff]
        %v624 = vld [vmem:[#allocation5 + $0x108] sm:$0xff]
        %v625 = vld [vmem:[#allocation5 + $0x110] sm:$0xff]
        %v626 = vld [vmem:[#allocation5 + $0x118] sm:$0xff]
        %v627 = vld [vmem:[#allocation5 + $0x120] sm:$0xff]
        %v628 = vld [vmem:[#allocation5 + $0x128] sm:$0xff]
        %v629 = vld [vmem:[#allocation5 + $0x130] sm:$0xff]
        %v630 = vld [vmem:[#allocation5 + $0x138] sm:$0xff]
        %v631 = vld [vmem:[#allocation5 + $0x140] sm:$0xff]
        %v632 = vld [vmem:[#allocation5 + $0x148] sm:$0xff]
        %v633 = vld [vmem:[#allocation5 + $0x150] sm:$0xff]
        %v634 = vld [vmem:[#allocation5 + $0x158] sm:$0xff]
        %v635 = vld [vmem:[#allocation5 + $0x160] sm:$0xff]
        %v636 = vld [vmem:[#allocation5 + $0x168] sm:$0xff]
        %v637 = vld [vmem:[#allocation5 + $0x170] sm:$0xff]
        %v638 = vld [vmem:[#allocation5 + $0x178] sm:$0xff]
        %v639 = vld [vmem:[#allocation5 + $0x180] sm:$0xff]
        %v640 = vld [vmem:[#allocation5 + $0x188] sm:$0xff]
        %v641 = vld [vmem:[#allocation5 + $0x190] sm:$0xff]
        %v642 = vld [vmem:[#allocation5 + $0x198] sm:$0xff]
        %v643 = vld [vmem:[#allocation5 + $0x1a0] sm:$0xff]
        %v644 = vld [vmem:[#allocation5 + $0x1a8] sm:$0xff]
        %v645 = vld [vmem:[#allocation5 + $0x1b0] sm:$0xff]
        %v646 = vld [vmem:[#allocation5 + $0x1b8] sm:$0xff]
        %v647 = vld [vmem:[#allocation5 + $0x1c0] sm:$0xff]
        %v648 = vld [vmem:[#allocation5 + $0x1c8] sm:$0xff]
        %v649 = vld [vmem:[#allocation5 + $0x1d0] sm:$0xff]
        %v650 = vld [vmem:[#allocation5 + $0x1d8] sm:$0xff]
        %v651 = vld [vmem:[#allocation5 + $0x1e0] sm:$0xff]
        %v652 = vld [vmem:[#allocation5 + $0x1e8] sm:$0xff]
        %v653 = vld [vmem:[#allocation5 + $0x1f0] sm:$0xff]
        %v654 = vld [vmem:[#allocation5 + $0x1f8] sm:$0xff]
        %v655 = vld [vmem:[#allocation5 + $0x200] sm:$0xff]
        %v656 = vld [vmem:[#allocation5 + $0x208] sm:$0xff]
        %v657 = vld [vmem:[#allocation5 + $0x210] sm:$0xff]
        %v658 = vld [vmem:[#allocation5 + $0x218] sm:$0xff]
        %v659 = vld [vmem:[#allocation5 + $0x220] sm:$0xff]
        %v660 = vld [vmem:[#allocation5 + $0x228] sm:$0xff]
        %v661 = vld [vmem:[#allocation5 + $0x230] sm:$0xff]
        %v662 = vld [vmem:[#allocation5 + $0x238] sm:$0xff]
        %v663 = vld [vmem:[#allocation5 + $0x240] sm:$0xff]
        %v664 = vld [vmem:[#allocation5 + $0x248] sm:$0xff]
        %v665 = vld [vmem:[#allocation5 + $0x250] sm:$0xff]
        %v666 = vld [vmem:[#allocation5 + $0x258] sm:$0xff]
        %v667 = vld [vmem:[#allocation5 + $0x260] sm:$0xff]
        %v668 = vld [vmem:[#allocation5 + $0x268] sm:$0xff]
        %v669 = vld [vmem:[#allocation5 + $0x270] sm:$0xff]
        %v670 = vld [vmem:[#allocation5 + $0x278] sm:$0xff]
        %v671 = vld [vmem:[#allocation5 + $0x280] sm:$0xff]
        %v672 = vld [vmem:[#allocation5 + $0x288] sm:$0xff]
        %v673 = vld [vmem:[#allocation5 + $0x290] sm:$0xff]
        %v674 = vld [vmem:[#allocation5 + $0x298] sm:$0xff]
        %v675 = vld [vmem:[#allocation5 + $0x2a0] sm:$0xff]
        %v676 = vld [vmem:[#allocation5 + $0x2a8] sm:$0xff]
        %v677 = vld [vmem:[#allocation5 + $0x2b0] sm:$0xff]
        %v678 = vld [vmem:[#allocation5 + $0x2b8] sm:$0xff]
        %v679 = vld [vmem:[#allocation5 + $0x2c0] sm:$0xff]
        %v680 = vld [vmem:[#allocation5 + $0x2c8] sm:$0xff]
        %v681 = vld [vmem:[#allocation5 + $0x2d0] sm:$0xff]
        %v682 = vld [vmem:[#allocation5 + $0x2d8] sm:$0xff]
        %v683 = vld [vmem:[#allocation5 + $0x2e0] sm:$0xff]
        %v684 = vld [vmem:[#allocation5 + $0x2e8] sm:$0xff]
        %v685 = vld [vmem:[#allocation5 + $0x2f0] sm:$0xff]
        %v686 = vld [vmem:[#allocation5 + $0x2f8] sm:$0xff]
        %v687 = vld [vmem:[#allocation5 + $0x300] sm:$0xff]
        %v688 = vld [vmem:[#allocation5 + $0x308] sm:$0xff]
        %v689 = vld [vmem:[#allocation5 + $0x310] sm:$0xff]
        %v690 = vld [vmem:[#allocation5 + $0x318] sm:$0xff]
        %v691 = vld [vmem:[#allocation5 + $0x320] sm:$0xff]
        %v692 = vld [vmem:[#allocation5 + $0x328] sm:$0xff]
        %v693 = vld [vmem:[#allocation5 + $0x330] sm:$0xff]
        %v694 = vld [vmem:[#allocation5 + $0x338] sm:$0xff]
        %v695 = vld [vmem:[#allocation5 + $0x340] sm:$0xff]
        %v696 = vld [vmem:[#allocation5 + $0x348] sm:$0xff]
        %v697 = vld [vmem:[#allocation5 + $0x350] sm:$0xff]
        %v698 = vld [vmem:[#allocation5 + $0x358] sm:$0xff]
        %v699 = vld [vmem:[#allocation5 + $0x360] sm:$0xff]
        %v700 = vld [vmem:[#allocation5 + $0x368] sm:$0xff]
        %v701 = vld [vmem:[#allocation5 + $0x370] sm:$0xff]
        %v702 = vld [vmem:[#allocation5 + $0x378] sm:$0xff]
        %v703 = vld [vmem:[#allocation5 + $0x380] sm:$0xff]
        %v704 = vld [vmem:[#allocation5 + $0x388] sm:$0xff]
        %v705 = vld [vmem:[#allocation5 + $0x390] sm:$0xff]
        %v706 = vld [vmem:[#allocation5 + $0x398] sm:$0xff]
        %v707 = vld [vmem:[#allocation5 + $0x3a0] sm:$0xff]
        %v708 = vld [vmem:[#allocation5 + $0x3a8] sm:$0xff]
        %v709 = vld [vmem:[#allocation5 + $0x3b0] sm:$0xff]
        %v710 = vld [vmem:[#allocation5 + $0x3b8] sm:$0xff]
        %v711 = vld [vmem:[#allocation5 + $0x3c0] sm:$0xff]
        %v712 = vld [vmem:[#allocation5 + $0x3c8] sm:$0xff]
        %v713 = vld [vmem:[#allocation5 + $0x3d0] sm:$0xff]
        %v714 = vld [vmem:[#allocation5 + $0x3d8] sm:$0xff]
        %v715 = vld [vmem:[#allocation5 + $0x3e0] sm:$0xff]
        %v716 = vld [vmem:[#allocation5 + $0x3e8] sm:$0xff]
        %v717 = vld [vmem:[#allocation5 + $0x3f0] sm:$0xff]
        %v718 = vld [vmem:[#allocation5 + $0x3f8] sm:$0xff]
        %v719 = vld [vmem:[#allocation5 + $0x400] sm:$0xff]
        %v720 = vld [vmem:[#allocation5 + $0x408] sm:$0xff]
        %v721 = vld [vmem:[#allocation5 + $0x410] sm:$0xff]
        %v722 = vld [vmem:[#allocation5 + $0x418] sm:$0xff]
        %v723 = vld [vmem:[#allocation5 + $0x420] sm:$0xff]
        %v724 = vld [vmem:[#allocation5 + $0x428] sm:$0xff]
        %v725 = vld [vmem:[#allocation5 + $0x430] sm:$0xff]
        %v726 = vld [vmem:[#allocation5 + $0x438] sm:$0xff]
        %v727 = vld [vmem:[#allocation5 + $0x440] sm:$0xff]
        %v728 = vld [vmem:[#allocation5 + $0x448] sm:$0xff]
        %v729 = vld [vmem:[#allocation5 + $0x450] sm:$0xff]
        %v730 = vld [vmem:[#allocation5 + $0x458] sm:$0xff]
        %v731 = vld [vmem:[#allocation5 + $0x460] sm:$0xff]
        %v732 = vld [vmem:[#allocation5 + $0x468] sm:$0xff]
        %v733 = vld [vmem:[#allocation5 + $0x470] sm:$0xff]
        %v734 = vld [vmem:[#allocation5 + $0x478] sm:$0xff]
        %v735 = vld [vmem:[#allocation5 + $0x480] sm:$0xff]
        %v736 = vld [vmem:[#allocation5 + $0x488] sm:$0xff]
        %v737 = vld [vmem:[#allocation5 + $0x490] sm:$0xff]
        %v738 = vld [vmem:[#allocation5 + $0x498] sm:$0xff]
        %v739 = vld [vmem:[#allocation5 + $0x4a0] sm:$0xff]
        %v740 = vld [vmem:[#allocation5 + $0x4a8] sm:$0xff]
        %v741 = vld [vmem:[#allocation5 + $0x4b0] sm:$0xff]
        %v742 = vld [vmem:[#allocation5 + $0x4b8] sm:$0xff]
        %v743 = vld [vmem:[#allocation5 + $0x4c0] sm:$0xff]
        %v744 = vld [vmem:[#allocation5 + $0x4c8] sm:$0xff]
        %v745 = vld [vmem:[#allocation5 + $0x4d0] sm:$0xff]
        %v746 = vld [vmem:[#allocation5 + $0x4d8] sm:$0xff]
        %v747 = vld [vmem:[#allocation5 + $0x4e0] sm:$0xff]
        %v748 = vld [vmem:[#allocation5 + $0x4e8] sm:$0xff]
        %v749 = vld [vmem:[#allocation5 + $0x4f0] sm:$0xff]
        %v750 = vld [vmem:[#allocation5 + $0x4f8] sm:$0xff]
        %v751 = vld [vmem:[#allocation5 + $0x500] sm:$0xff]
        %v752 = vld [vmem:[#allocation5 + $0x508] sm:$0xff]
        %v753 = vld [vmem:[#allocation5 + $0x510] sm:$0xff]
        %v754 = vld [vmem:[#allocation5 + $0x518] sm:$0xff]
        %v755 = vld [vmem:[#allocation5 + $0x520] sm:$0xff]
        %v756 = vld [vmem:[#allocation5 + $0x528] sm:$0xff]
        %v757 = vld [vmem:[#allocation5 + $0x530] sm:$0xff]
        %v758 = vld [vmem:[#allocation5 + $0x538] sm:$0xff]
        %v759 = vld [vmem:[#allocation5 + $0x540] sm:$0xff]
        %v760 = vld [vmem:[#allocation5 + $0x548] sm:$0xff]
        %v761 = vld [vmem:[#allocation5 + $0x550] sm:$0xff]
        %v762 = vld [vmem:[#allocation5 + $0x558] sm:$0xff]
        %v763 = vld [vmem:[#allocation5 + $0x560] sm:$0xff]
        %v764 = vld [vmem:[#allocation5 + $0x568] sm:$0xff]
        %v765 = vld [vmem:[#allocation5 + $0x570] sm:$0xff]
        %v766 = vld [vmem:[#allocation5 + $0x578] sm:$0xff]
        %v767 = vld [vmem:[#allocation5 + $0x580] sm:$0xff]
        %v768 = vld [vmem:[#allocation5 + $0x588] sm:$0xff]
        %v769 = vld [vmem:[#allocation5 + $0x590] sm:$0xff]
        %v770 = vld [vmem:[#allocation5 + $0x598] sm:$0xff]
        %v771 = vld [vmem:[#allocation5 + $0x5a0] sm:$0xff]
        %v772 = vld [vmem:[#allocation5 + $0x5a8] sm:$0xff]
        %v773 = vld [vmem:[#allocation5 + $0x5b0] sm:$0xff]
        %v774 = vld [vmem:[#allocation5 + $0x5b8] sm:$0xff]
        %v775 = vld [vmem:[#allocation5 + $0x5c0] sm:$0xff]
        %v776 = vld [vmem:[#allocation5 + $0x5c8] sm:$0xff]
        %v777 = vld [vmem:[#allocation5 + $0x5d0] sm:$0xff]
        %v778 = vld [vmem:[#allocation5 + $0x5d8] sm:$0xff]
        %v779 = vld [vmem:[#allocation5 + $0x5e0] sm:$0xff]
        %v780 = vld [vmem:[#allocation5 + $0x5e8] sm:$0xff]
        %v781 = vld [vmem:[#allocation5 + $0x5f0] sm:$0xff]
        %v782 = vld [vmem:[#allocation5 + $0x5f8] sm:$0xff]
        %v783 = vld [vmem:[#allocation5 + $0x600] sm:$0xff]
        %v784 = vld [vmem:[#allocation5 + $0x608] sm:$0xff]
        %v785 = vld [vmem:[#allocation5 + $0x610] sm:$0xff]
        %v786 = vld [vmem:[#allocation5 + $0x618] sm:$0xff]
        %v787 = vld [vmem:[#allocation5 + $0x620] sm:$0xff]
        %v788 = vld [vmem:[#allocation5 + $0x628] sm:$0xff]
        %v789 = vld [vmem:[#allocation5 + $0x630] sm:$0xff]
        %v790 = vld [vmem:[#allocation5 + $0x638] sm:$0xff]
        %v791 = vld [vmem:[#allocation5 + $0x640] sm:$0xff]
        %v792 = vld [vmem:[#allocation5 + $0x648] sm:$0xff]
        %v793 = vld [vmem:[#allocation5 + $0x650] sm:$0xff]
        %v794 = vld [vmem:[#allocation5 + $0x658] sm:$0xff]
        %v795 = vld [vmem:[#allocation5 + $0x660] sm:$0xff]
        %v796 = vld [vmem:[#allocation5 + $0x668] sm:$0xff]
        %v797 = vld [vmem:[#allocation5 + $0x670] sm:$0xff]
        %v798 = vld [vmem:[#allocation5 + $0x678] sm:$0xff]
        %v799 = vld [vmem:[#allocation5 + $0x680] sm:$0xff]
        %v800 = vld [vmem:[#allocation5 + $0x688] sm:$0xff]
        %v801 = vld [vmem:[#allocation5 + $0x690] sm:$0xff]
        %v802 = vld [vmem:[#allocation5 + $0x698] sm:$0xff]
        %v803 = vld [vmem:[#allocation5 + $0x6a0] sm:$0xff]
        %v804 = vld [vmem:[#allocation5 + $0x6a8] sm:$0xff]
        %v805 = vld [vmem:[#allocation5 + $0x6b0] sm:$0xff]
        %v806 = vld [vmem:[#allocation5 + $0x6b8] sm:$0xff]
        %v807 = vld [vmem:[#allocation5 + $0x6c0] sm:$0xff]
        %v808 = vld [vmem:[#allocation5 + $0x6c8] sm:$0xff]
        %v809 = vld [vmem:[#allocation5 + $0x6d0] sm:$0xff]
        %v810 = vld [vmem:[#allocation5 + $0x6d8] sm:$0xff]
        %v811 = vld [vmem:[#allocation5 + $0x6e0] sm:$0xff]
        %v812 = vld [vmem:[#allocation5 + $0x6e8] sm:$0xff]
        %v813 = vld [vmem:[#allocation5 + $0x6f0] sm:$0xff]
        %v814 = vld [vmem:[#allocation5 + $0x6f8] sm:$0xff]
        %v815 = vld [vmem:[#allocation7] sm:$0xf]
        %v817 = vlaneseq
        %v818 = vshrl.u32 %v817, 7
        %v819 = vsub.s32 0, %v818
        %v820 = vrot.slane %v815, %v819
        %v821 = vlaneseq
        %v822 = vshrl.u32 %v821, 7
        %v823 = vsub.s32 1, %v822
        %v824 = vrot.slane %v815, %v823
        %v825 = vlaneseq
        %v826 = vshrl.u32 %v825, 7
        %v827 = vsub.s32 2, %v826
        %v828 = vrot.slane %v815, %v827
        %v829 = vlaneseq
        %v830 = vshrl.u32 %v829, 7
        %v831 = vsub.s32 3, %v830
        %v832 = vrot.slane %v815, %v831
        %v965 = vunpack.c.l.b16 %v463
        %v966 = vunpack.c.h.b16 %v463
        %v967 = vunpack.c.l.b16 %v464
        %v968 = vunpack.c.h.b16 %v464
        %v969 = vunpack.c.l.b16 %v465
        %v970 = vunpack.c.h.b16 %v465
        %v971 = vunpack.c.l.b16 %v466
        %v972 = vunpack.c.l.b16 %v467
        %v973 = vunpack.c.h.b16 %v467
        %v974 = vunpack.c.l.b16 %v468
        %v975 = vunpack.c.h.b16 %v468
        %v976 = vunpack.c.l.b16 %v469
        %v977 = vunpack.c.h.b16 %v469
        %v978 = vunpack.c.l.b16 %v470
        %v979 = vunpack.c.l.b16 %v471
        %v980 = vunpack.c.h.b16 %v471
        %v981 = vunpack.c.l.b16 %v472
        %v982 = vunpack.c.h.b16 %v472
        %v983 = vunpack.c.l.b16 %v473
        %v984 = vunpack.c.h.b16 %v473
        %v985 = vunpack.c.l.b16 %v474
        %v986 = vunpack.c.l.b16 %v475
        %v987 = vunpack.c.h.b16 %v475
        %v988 = vunpack.c.l.b16 %v476
        %v989 = vunpack.c.h.b16 %v476
        %v990 = vunpack.c.l.b16 %v477
        %v991 = vunpack.c.h.b16 %v477
        %v992 = vunpack.c.l.b16 %v478
        %v993 = vunpack.c.l.b16 %v479
        %v994 = vunpack.c.h.b16 %v479
        %v995 = vunpack.c.l.b16 %v480
        %v996 = vunpack.c.h.b16 %v480
        %v997 = vunpack.c.l.b16 %v481
        %v998 = vunpack.c.h.b16 %v481
        %v999 = vunpack.c.l.b16 %v482
        %v1000 = vunpack.c.l.b16 %v483
        %v1001 = vunpack.c.h.b16 %v483
        %v1002 = vunpack.c.l.b16 %v484
        %v1003 = vunpack.c.h.b16 %v484
        %v1004 = vunpack.c.l.b16 %v485
        %v1005 = vunpack.c.h.b16 %v485
        %v1006 = vunpack.c.l.b16 %v486
        %v1007 = vunpack.c.l.b16 %v487
        %v1008 = vunpack.c.h.b16 %v487
        %v1009 = vunpack.c.l.b16 %v488
        %v1010 = vunpack.c.h.b16 %v488
        %v1011 = vunpack.c.l.b16 %v489
        %v1012 = vunpack.c.h.b16 %v489
        %v1013 = vunpack.c.l.b16 %v490
        %v1014 = vunpack.c.l.b16 %v491
        %v1015 = vunpack.c.h.b16 %v491
        %v1016 = vunpack.c.l.b16 %v492
        %v1017 = vunpack.c.h.b16 %v492
        %v1018 = vunpack.c.l.b16 %v493
        %v1019 = vunpack.c.h.b16 %v493
        %v1020 = vunpack.c.l.b16 %v494
        %v1021 = vunpack.c.l.b16 %v495
        %v1022 = vunpack.c.h.b16 %v495
        %v1023 = vunpack.c.l.b16 %v496
        %v1024 = vunpack.c.h.b16 %v496
        %v1025 = vunpack.c.l.b16 %v497
        %v1026 = vunpack.c.h.b16 %v497
        %v1027 = vunpack.c.l.b16 %v498
        %v1028 = vunpack.c.l.b16 %v499
        %v1029 = vunpack.c.h.b16 %v499
        %v1030 = vunpack.c.l.b16 %v500
        %v1031 = vunpack.c.h.b16 %v500
        %v1032 = vunpack.c.l.b16 %v501
        %v1033 = vunpack.c.h.b16 %v501
        %v1034 = vunpack.c.l.b16 %v502
        %v1035 = vunpack.c.l.b16 %v503
        %v1036 = vunpack.c.h.b16 %v503
        %v1037 = vunpack.c.l.b16 %v504
        %v1038 = vunpack.c.h.b16 %v504
        %v1039 = vunpack.c.l.b16 %v505
        %v1040 = vunpack.c.h.b16 %v505
        %v1041 = vunpack.c.l.b16 %v506
        %v1042 = vunpack.c.l.b16 %v507
        %v1043 = vunpack.c.h.b16 %v507
        %v1044 = vunpack.c.l.b16 %v508
        %v1045 = vunpack.c.h.b16 %v508
        %v1046 = vunpack.c.l.b16 %v509
        %v1047 = vunpack.c.h.b16 %v509
        %v1048 = vunpack.c.l.b16 %v510
        %v1049 = vunpack.c.l.b16 %v511
        %v1050 = vunpack.c.h.b16 %v511
        %v1051 = vunpack.c.l.b16 %v512
        %v1052 = vunpack.c.h.b16 %v512
        %v1053 = vunpack.c.l.b16 %v513
        %v1054 = vunpack.c.h.b16 %v513
        %v1055 = vunpack.c.l.b16 %v514
        %v1056 = vunpack.c.l.b16 %v515
        %v1057 = vunpack.c.h.b16 %v515
        %v1058 = vunpack.c.l.b16 %v516
        %v1059 = vunpack.c.h.b16 %v516
        %v1060 = vunpack.c.l.b16 %v517
        %v1061 = vunpack.c.h.b16 %v517
        %v1062 = vunpack.c.l.b16 %v518
        %v1063 = vunpack.c.l.b16 %v519
        %v1064 = vunpack.c.h.b16 %v519
        %v1065 = vunpack.c.l.b16 %v520
        %v1066 = vunpack.c.h.b16 %v520
        %v1067 = vunpack.c.l.b16 %v521
        %v1068 = vunpack.c.h.b16 %v521
        %v1069 = vunpack.c.l.b16 %v522
        %v1070 = vunpack.c.l.b16 %v523
        %v1071 = vunpack.c.h.b16 %v523
        %v1072 = vunpack.c.l.b16 %v524
        %v1073 = vunpack.c.h.b16 %v524
        %v1074 = vunpack.c.l.b16 %v525
        %v1075 = vunpack.c.h.b16 %v525
        %v1076 = vunpack.c.l.b16 %v526
        %v1077 = vunpack.c.l.b16 %v527
        %v1078 = vunpack.c.h.b16 %v527
        %v1079 = vunpack.c.l.b16 %v528
        %v1080 = vunpack.c.h.b16 %v528
        %v1081 = vunpack.c.l.b16 %v529
        %v1082 = vunpack.c.h.b16 %v529
        %v1083 = vunpack.c.l.b16 %v530
        %v1084 = vunpack.c.l.b16 %v531
        %v1085 = vunpack.c.h.b16 %v531
        %v1086 = vunpack.c.l.b16 %v532
        %v1087 = vunpack.c.h.b16 %v532
        %v1088 = vunpack.c.l.b16 %v533
        %v1089 = vunpack.c.h.b16 %v533
        %v1090 = vunpack.c.l.b16 %v534
        %v1091 = vunpack.c.l.b16 %v535
        %v1092 = vunpack.c.h.b16 %v535
        %v1093 = vunpack.c.l.b16 %v536
        %v1094 = vunpack.c.h.b16 %v536
        %v1095 = vunpack.c.l.b16 %v537
        %v1096 = vunpack.c.h.b16 %v537
        %v1097 = vunpack.c.l.b16 %v538
        %v1098 = vunpack.c.l.b16 %v539
        %v1099 = vunpack.c.h.b16 %v539
        %v1100 = vunpack.c.l.b16 %v540
        %v1101 = vunpack.c.h.b16 %v540
        %v1102 = vunpack.c.l.b16 %v541
        %v1103 = vunpack.c.h.b16 %v541
        %v1104 = vunpack.c.l.b16 %v542
        %v1105 = vunpack.c.l.b16 %v543
        %v1106 = vunpack.c.h.b16 %v543
        %v1107 = vunpack.c.l.b16 %v544
        %v1108 = vunpack.c.h.b16 %v544
        %v1109 = vunpack.c.l.b16 %v545
        %v1110 = vunpack.c.h.b16 %v545
        %v1111 = vunpack.c.l.b16 %v546
        %v1112 = vunpack.c.l.b16 %v547
        %v1113 = vunpack.c.h.b16 %v547
        %v1114 = vunpack.c.l.b16 %v548
        %v1115 = vunpack.c.h.b16 %v548
        %v1116 = vunpack.c.l.b16 %v549
        %v1117 = vunpack.c.h.b16 %v549
        %v1118 = vunpack.c.l.b16 %v550
        %v1119 = vunpack.c.l.b16 %v551
        %v1120 = vunpack.c.h.b16 %v551
        %v1121 = vunpack.c.l.b16 %v552
        %v1122 = vunpack.c.h.b16 %v552
        %v1123 = vunpack.c.l.b16 %v553
        %v1124 = vunpack.c.h.b16 %v553
        %v1125 = vunpack.c.l.b16 %v554
        %v1126 = vunpack.c.l.b16 %v555
        %v1127 = vunpack.c.h.b16 %v555
        %v1128 = vunpack.c.l.b16 %v556
        %v1129 = vunpack.c.h.b16 %v556
        %v1130 = vunpack.c.l.b16 %v557
        %v1131 = vunpack.c.h.b16 %v557
        %v1132 = vunpack.c.l.b16 %v558
        %v1133 = vunpack.c.l.b16 %v559
        %v1134 = vunpack.c.h.b16 %v559
        %v1135 = vunpack.c.l.b16 %v560
        %v1136 = vunpack.c.h.b16 %v560
        %v1137 = vunpack.c.l.b16 %v561
        %v1138 = vunpack.c.h.b16 %v561
        %v1139 = vunpack.c.l.b16 %v562
        %v1140 = vunpack.c.l.b16 %v563
        %v1141 = vunpack.c.h.b16 %v563
        %v1142 = vunpack.c.l.b16 %v564
        %v1143 = vunpack.c.h.b16 %v564
        %v1144 = vunpack.c.l.b16 %v565
        %v1145 = vunpack.c.h.b16 %v565
        %v1146 = vunpack.c.l.b16 %v566
        %v1147 = vunpack.c.l.b16 %v567
        %v1148 = vunpack.c.h.b16 %v567
        %v1149 = vunpack.c.l.b16 %v568
        %v1150 = vunpack.c.h.b16 %v568
        %v1151 = vunpack.c.l.b16 %v569
        %v1152 = vunpack.c.h.b16 %v569
        %v1153 = vunpack.c.l.b16 %v570
        %v1154 = vunpack.c.l.b16 %v571
        %v1155 = vunpack.c.h.b16 %v571
        %v1156 = vunpack.c.l.b16 %v572
        %v1157 = vunpack.c.h.b16 %v572
        %v1158 = vunpack.c.l.b16 %v573
        %v1159 = vunpack.c.h.b16 %v573
        %v1160 = vunpack.c.l.b16 %v574
        %v1161 = vunpack.c.l.b16 %v575
        %v1162 = vunpack.c.h.b16 %v575
        %v1163 = vunpack.c.l.b16 %v576
        %v1164 = vunpack.c.h.b16 %v576
        %v1165 = vunpack.c.l.b16 %v577
        %v1166 = vunpack.c.h.b16 %v577
        %v1167 = vunpack.c.l.b16 %v578
        %v1168 = vunpack.c.l.b16 %v579
        %v1169 = vunpack.c.h.b16 %v579
        %v1170 = vunpack.c.l.b16 %v580
        %v1171 = vunpack.c.h.b16 %v580
        %v1172 = vunpack.c.l.b16 %v581
        %v1173 = vunpack.c.h.b16 %v581
        %v1174 = vunpack.c.l.b16 %v582
        %v1175 = vunpack.c.l.b16 %v583
        %v1176 = vunpack.c.h.b16 %v583
        %v1177 = vunpack.c.l.b16 %v584
        %v1178 = vunpack.c.h.b16 %v584
        %v1179 = vunpack.c.l.b16 %v585
        %v1180 = vunpack.c.h.b16 %v585
        %v1181 = vunpack.c.l.b16 %v586
        %v1182 = vunpack.c.l.b16 %v587
        %v1183 = vunpack.c.h.b16 %v587
        %v1184 = vunpack.c.l.b16 %v588
        %v1185 = vunpack.c.h.b16 %v588
        %v1186 = vunpack.c.l.b16 %v589
        %v1187 = vunpack.c.h.b16 %v589
        %v1188 = vunpack.c.l.b16 %v590
        %v1189 = vpack.c.b16 %v972, %v965
        %v1190 = vpack.c.b16 %v973, %v966
        %v1191 = vpack.c.b16 %v974, %v967
        %v1192 = vpack.c.b16 %v975, %v968
        %v1193 = vpack.c.b16 %v976, %v969
        %v1194 = vpack.c.b16 %v977, %v970
        %v1195 = vpack.c.b16 %v978, %v971
        %v1196 = vpack.c.b16 %v986, %v979
        %v1197 = vpack.c.b16 %v987, %v980
        %v1198 = vpack.c.b16 %v988, %v981
        %v1199 = vpack.c.b16 %v989, %v982
        %v1200 = vpack.c.b16 %v990, %v983
        %v1201 = vpack.c.b16 %v991, %v984
        %v1202 = vpack.c.b16 %v992, %v985
        %v1203 = vpack.c.b16 %v1000, %v993
        %v1204 = vpack.c.b16 %v1001, %v994
        %v1205 = vpack.c.b16 %v1002, %v995
        %v1206 = vpack.c.b16 %v1003, %v996
        %v1207 = vpack.c.b16 %v1004, %v997
        %v1208 = vpack.c.b16 %v1005, %v998
        %v1209 = vpack.c.b16 %v1006, %v999
        %v1210 = vpack.c.b16 %v1014, %v1007
        %v1211 = vpack.c.b16 %v1015, %v1008
        %v1212 = vpack.c.b16 %v1016, %v1009
        %v1213 = vpack.c.b16 %v1017, %v1010
        %v1214 = vpack.c.b16 %v1018, %v1011
        %v1215 = vpack.c.b16 %v1019, %v1012
        %v1216 = vpack.c.b16 %v1020, %v1013
        %v1217 = vpack.c.b16 %v1028, %v1021
        %v1218 = vpack.c.b16 %v1029, %v1022
        %v1219 = vpack.c.b16 %v1030, %v1023
        %v1220 = vpack.c.b16 %v1031, %v1024
        %v1221 = vpack.c.b16 %v1032, %v1025
        %v1222 = vpack.c.b16 %v1033, %v1026
        %v1223 = vpack.c.b16 %v1034, %v1027
        %v1224 = vpack.c.b16 %v1042, %v1035
        %v1225 = vpack.c.b16 %v1043, %v1036
        %v1226 = vpack.c.b16 %v1044, %v1037
        %v1227 = vpack.c.b16 %v1045, %v1038
        %v1228 = vpack.c.b16 %v1046, %v1039
        %v1229 = vpack.c.b16 %v1047, %v1040
        %v1230 = vpack.c.b16 %v1048, %v1041
        %v1231 = vpack.c.b16 %v1056, %v1049
        %v1232 = vpack.c.b16 %v1057, %v1050
        %v1233 = vpack.c.b16 %v1058, %v1051
        %v1234 = vpack.c.b16 %v1059, %v1052
        %v1235 = vpack.c.b16 %v1060, %v1053
        %v1236 = vpack.c.b16 %v1061, %v1054
        %v1237 = vpack.c.b16 %v1062, %v1055
        %v1238 = vpack.c.b16 %v1070, %v1063
        %v1239 = vpack.c.b16 %v1071, %v1064
        %v1240 = vpack.c.b16 %v1072, %v1065
        %v1241 = vpack.c.b16 %v1073, %v1066
        %v1242 = vpack.c.b16 %v1074, %v1067
        %v1243 = vpack.c.b16 %v1075, %v1068
        %v1244 = vpack.c.b16 %v1076, %v1069
        %v1245 = vpack.c.b16 %v1084, %v1077
        %v1246 = vpack.c.b16 %v1085, %v1078
        %v1247 = vpack.c.b16 %v1086, %v1079
        %v1248 = vpack.c.b16 %v1087, %v1080
        %v1249 = vpack.c.b16 %v1088, %v1081
        %v1250 = vpack.c.b16 %v1089, %v1082
        %v1251 = vpack.c.b16 %v1090, %v1083
        %v1252 = vpack.c.b16 %v1098, %v1091
        %v1253 = vpack.c.b16 %v1099, %v1092
        %v1254 = vpack.c.b16 %v1100, %v1093
        %v1255 = vpack.c.b16 %v1101, %v1094
        %v1256 = vpack.c.b16 %v1102, %v1095
        %v1257 = vpack.c.b16 %v1103, %v1096
        %v1258 = vpack.c.b16 %v1104, %v1097
        %v1259 = vpack.c.b16 %v1112, %v1105
        %v1260 = vpack.c.b16 %v1113, %v1106
        %v1261 = vpack.c.b16 %v1114, %v1107
        %v1262 = vpack.c.b16 %v1115, %v1108
        %v1263 = vpack.c.b16 %v1116, %v1109
        %v1264 = vpack.c.b16 %v1117, %v1110
        %v1265 = vpack.c.b16 %v1118, %v1111
        %v1266 = vpack.c.b16 %v1126, %v1119
        %v1267 = vpack.c.b16 %v1127, %v1120
        %v1268 = vpack.c.b16 %v1128, %v1121
        %v1269 = vpack.c.b16 %v1129, %v1122
        %v1270 = vpack.c.b16 %v1130, %v1123
        %v1271 = vpack.c.b16 %v1131, %v1124
        %v1272 = vpack.c.b16 %v1132, %v1125
        %v1273 = vpack.c.b16 %v1140, %v1133
        %v1274 = vpack.c.b16 %v1141, %v1134
        %v1275 = vpack.c.b16 %v1142, %v1135
        %v1276 = vpack.c.b16 %v1143, %v1136
        %v1277 = vpack.c.b16 %v1144, %v1137
        %v1278 = vpack.c.b16 %v1145, %v1138
        %v1279 = vpack.c.b16 %v1146, %v1139
        %v1280 = vpack.c.b16 %v1154, %v1147
        %v1281 = vpack.c.b16 %v1155, %v1148
        %v1282 = vpack.c.b16 %v1156, %v1149
        %v1283 = vpack.c.b16 %v1157, %v1150
        %v1284 = vpack.c.b16 %v1158, %v1151
        %v1285 = vpack.c.b16 %v1159, %v1152
        %v1286 = vpack.c.b16 %v1160, %v1153
        %v1287 = vpack.c.b16 %v1168, %v1161
        %v1288 = vpack.c.b16 %v1169, %v1162
        %v1289 = vpack.c.b16 %v1170, %v1163
        %v1290 = vpack.c.b16 %v1171, %v1164
        %v1291 = vpack.c.b16 %v1172, %v1165
        %v1292 = vpack.c.b16 %v1173, %v1166
        %v1293 = vpack.c.b16 %v1174, %v1167
        %v1294 = vpack.c.b16 %v1182, %v1175
        %v1295 = vpack.c.b16 %v1183, %v1176
        %v1296 = vpack.c.b16 %v1184, %v1177
        %v1297 = vpack.c.b16 %v1185, %v1178
        %v1298 = vpack.c.b16 %v1186, %v1179
        %v1299 = vpack.c.b16 %v1187, %v1180
        %v1300 = vpack.c.b16 %v1188, %v1181
        %v1637 = vunpack.c.l.b16 %v591
        %v1638 = vunpack.c.h.b16 %v591
        %v1639 = vunpack.c.l.b16 %v592
        %v1640 = vunpack.c.h.b16 %v592
        %v1641 = vunpack.c.l.b16 %v593
        %v1642 = vunpack.c.h.b16 %v593
        %v1643 = vunpack.c.l.b16 %v594
        %v1644 = vunpack.c.h.b16 %v594
        %v1645 = vunpack.c.l.b16 %v595
        %v1646 = vunpack.c.h.b16 %v595
        %v1647 = vunpack.c.l.b16 %v596
        %v1648 = vunpack.c.h.b16 %v596
        %v1649 = vunpack.c.l.b16 %v597
        %v1650 = vunpack.c.h.b16 %v597
        %v1651 = vunpack.c.l.b16 %v598
        %v1652 = vunpack.c.h.b16 %v598
        %v1653 = vunpack.c.l.b16 %v599
        %v1654 = vunpack.c.h.b16 %v599
        %v1655 = vunpack.c.l.b16 %v600
        %v1656 = vunpack.c.h.b16 %v600
        %v1657 = vunpack.c.l.b16 %v601
        %v1658 = vunpack.c.h.b16 %v601
        %v1659 = vunpack.c.l.b16 %v602
        %v1660 = vunpack.c.h.b16 %v602
        %v1661 = vunpack.c.l.b16 %v603
        %v1662 = vunpack.c.h.b16 %v603
        %v1663 = vunpack.c.l.b16 %v604
        %v1664 = vunpack.c.h.b16 %v604
        %v1665 = vunpack.c.l.b16 %v605
        %v1666 = vunpack.c.h.b16 %v605
        %v1667 = vunpack.c.l.b16 %v606
        %v1668 = vunpack.c.h.b16 %v606
        %v1669 = vunpack.c.l.b16 %v607
        %v1670 = vunpack.c.h.b16 %v607
        %v1671 = vunpack.c.l.b16 %v608
        %v1672 = vunpack.c.h.b16 %v608
        %v1673 = vunpack.c.l.b16 %v609
        %v1674 = vunpack.c.h.b16 %v609
        %v1675 = vunpack.c.l.b16 %v610
        %v1676 = vunpack.c.h.b16 %v610
        %v1677 = vunpack.c.l.b16 %v611
        %v1678 = vunpack.c.h.b16 %v611
        %v1679 = vunpack.c.l.b16 %v612
        %v1680 = vunpack.c.h.b16 %v612
        %v1681 = vunpack.c.l.b16 %v613
        %v1682 = vunpack.c.h.b16 %v613
        %v1683 = vunpack.c.l.b16 %v614
        %v1684 = vunpack.c.h.b16 %v614
        %v1685 = vunpack.c.l.b16 %v615
        %v1686 = vunpack.c.h.b16 %v615
        %v1687 = vunpack.c.l.b16 %v616
        %v1688 = vunpack.c.h.b16 %v616
        %v1689 = vunpack.c.l.b16 %v617
        %v1690 = vunpack.c.h.b16 %v617
        %v1691 = vunpack.c.l.b16 %v618
        %v1692 = vunpack.c.h.b16 %v618
        %v1693 = vunpack.c.l.b16 %v619
        %v1694 = vunpack.c.h.b16 %v619
        %v1695 = vunpack.c.l.b16 %v620
        %v1696 = vunpack.c.h.b16 %v620
        %v1697 = vunpack.c.l.b16 %v621
        %v1698 = vunpack.c.h.b16 %v621
        %v1699 = vunpack.c.l.b16 %v622
        %v1700 = vunpack.c.h.b16 %v622
        %v1701 = vunpack.c.l.b16 %v623
        %v1702 = vunpack.c.h.b16 %v623
        %v1703 = vunpack.c.l.b16 %v624
        %v1704 = vunpack.c.h.b16 %v624
        %v1705 = vunpack.c.l.b16 %v625
        %v1706 = vunpack.c.h.b16 %v625
        %v1707 = vunpack.c.l.b16 %v626
        %v1708 = vunpack.c.h.b16 %v626
        %v1709 = vunpack.c.l.b16 %v627
        %v1710 = vunpack.c.h.b16 %v627
        %v1711 = vunpack.c.l.b16 %v628
        %v1712 = vunpack.c.h.b16 %v628
        %v1713 = vunpack.c.l.b16 %v629
        %v1714 = vunpack.c.h.b16 %v629
        %v1715 = vunpack.c.l.b16 %v630
        %v1716 = vunpack.c.h.b16 %v630
        %v1717 = vunpack.c.l.b16 %v631
        %v1718 = vunpack.c.h.b16 %v631
        %v1719 = vunpack.c.l.b16 %v632
        %v1720 = vunpack.c.h.b16 %v632
        %v1721 = vunpack.c.l.b16 %v633
        %v1722 = vunpack.c.h.b16 %v633
        %v1723 = vunpack.c.l.b16 %v634
        %v1724 = vunpack.c.h.b16 %v634
        %v1725 = vunpack.c.l.b16 %v635
        %v1726 = vunpack.c.h.b16 %v635
        %v1727 = vunpack.c.l.b16 %v636
        %v1728 = vunpack.c.h.b16 %v636
        %v1729 = vunpack.c.l.b16 %v637
        %v1730 = vunpack.c.h.b16 %v637
        %v1731 = vunpack.c.l.b16 %v638
        %v1732 = vunpack.c.h.b16 %v638
        %v1733 = vunpack.c.l.b16 %v639
        %v1734 = vunpack.c.h.b16 %v639
        %v1735 = vunpack.c.l.b16 %v640
        %v1736 = vunpack.c.h.b16 %v640
        %v1737 = vunpack.c.l.b16 %v641
        %v1738 = vunpack.c.h.b16 %v641
        %v1739 = vunpack.c.l.b16 %v642
        %v1740 = vunpack.c.h.b16 %v642
        %v1741 = vunpack.c.l.b16 %v643
        %v1742 = vunpack.c.h.b16 %v643
        %v1743 = vunpack.c.l.b16 %v644
        %v1744 = vunpack.c.h.b16 %v644
        %v1745 = vunpack.c.l.b16 %v645
        %v1746 = vunpack.c.h.b16 %v645
        %v1747 = vunpack.c.l.b16 %v646
        %v1748 = vunpack.c.h.b16 %v646
        %v1749 = vunpack.c.l.b16 %v647
        %v1750 = vunpack.c.h.b16 %v647
        %v1751 = vunpack.c.l.b16 %v648
        %v1752 = vunpack.c.h.b16 %v648
        %v1753 = vunpack.c.l.b16 %v649
        %v1754 = vunpack.c.h.b16 %v649
        %v1755 = vunpack.c.l.b16 %v650
        %v1756 = vunpack.c.h.b16 %v650
        %v1757 = vunpack.c.l.b16 %v651
        %v1758 = vunpack.c.h.b16 %v651
        %v1759 = vunpack.c.l.b16 %v652
        %v1760 = vunpack.c.h.b16 %v652
        %v1761 = vunpack.c.l.b16 %v653
        %v1762 = vunpack.c.h.b16 %v653
        %v1763 = vunpack.c.l.b16 %v654
        %v1764 = vunpack.c.h.b16 %v654
        %v1765 = vunpack.c.l.b16 %v655
        %v1766 = vunpack.c.h.b16 %v655
        %v1767 = vunpack.c.l.b16 %v656
        %v1768 = vunpack.c.h.b16 %v656
        %v1769 = vunpack.c.l.b16 %v657
        %v1770 = vunpack.c.h.b16 %v657
        %v1771 = vunpack.c.l.b16 %v658
        %v1772 = vunpack.c.h.b16 %v658
        %v1773 = vunpack.c.l.b16 %v659
        %v1774 = vunpack.c.h.b16 %v659
        %v1775 = vunpack.c.l.b16 %v660
        %v1776 = vunpack.c.h.b16 %v660
        %v1777 = vunpack.c.l.b16 %v661
        %v1778 = vunpack.c.h.b16 %v661
        %v1779 = vunpack.c.l.b16 %v662
        %v1780 = vunpack.c.h.b16 %v662
        %v1781 = vunpack.c.l.b16 %v663
        %v1782 = vunpack.c.h.b16 %v663
        %v1783 = vunpack.c.l.b16 %v664
        %v1784 = vunpack.c.h.b16 %v664
        %v1785 = vunpack.c.l.b16 %v665
        %v1786 = vunpack.c.h.b16 %v665
        %v1787 = vunpack.c.l.b16 %v666
        %v1788 = vunpack.c.h.b16 %v666
        %v1789 = vunpack.c.l.b16 %v667
        %v1790 = vunpack.c.h.b16 %v667
        %v1791 = vunpack.c.l.b16 %v668
        %v1792 = vunpack.c.h.b16 %v668
        %v1793 = vunpack.c.l.b16 %v669
        %v1794 = vunpack.c.h.b16 %v669
        %v1795 = vunpack.c.l.b16 %v670
        %v1796 = vunpack.c.h.b16 %v670
        %v1797 = vunpack.c.l.b16 %v671
        %v1798 = vunpack.c.h.b16 %v671
        %v1799 = vunpack.c.l.b16 %v672
        %v1800 = vunpack.c.h.b16 %v672
        %v1801 = vunpack.c.l.b16 %v673
        %v1802 = vunpack.c.h.b16 %v673
        %v1803 = vunpack.c.l.b16 %v674
        %v1804 = vunpack.c.h.b16 %v674
        %v1805 = vunpack.c.l.b16 %v675
        %v1806 = vunpack.c.h.b16 %v675
        %v1807 = vunpack.c.l.b16 %v676
        %v1808 = vunpack.c.h.b16 %v676
        %v1809 = vunpack.c.l.b16 %v677
        %v1810 = vunpack.c.h.b16 %v677
        %v1811 = vunpack.c.l.b16 %v678
        %v1812 = vunpack.c.h.b16 %v678
        %v1813 = vunpack.c.l.b16 %v679
        %v1814 = vunpack.c.h.b16 %v679
        %v1815 = vunpack.c.l.b16 %v680
        %v1816 = vunpack.c.h.b16 %v680
        %v1817 = vunpack.c.l.b16 %v681
        %v1818 = vunpack.c.h.b16 %v681
        %v1819 = vunpack.c.l.b16 %v682
        %v1820 = vunpack.c.h.b16 %v682
        %v1821 = vunpack.c.l.b16 %v683
        %v1822 = vunpack.c.h.b16 %v683
        %v1823 = vunpack.c.l.b16 %v684
        %v1824 = vunpack.c.h.b16 %v684
        %v1825 = vunpack.c.l.b16 %v685
        %v1826 = vunpack.c.h.b16 %v685
        %v1827 = vunpack.c.l.b16 %v686
        %v1828 = vunpack.c.h.b16 %v686
        %v1829 = vunpack.c.l.b16 %v687
        %v1830 = vunpack.c.h.b16 %v687
        %v1831 = vunpack.c.l.b16 %v688
        %v1832 = vunpack.c.h.b16 %v688
        %v1833 = vunpack.c.l.b16 %v689
        %v1834 = vunpack.c.h.b16 %v689
        %v1835 = vunpack.c.l.b16 %v690
        %v1836 = vunpack.c.h.b16 %v690
        %v1837 = vunpack.c.l.b16 %v691
        %v1838 = vunpack.c.h.b16 %v691
        %v1839 = vunpack.c.l.b16 %v692
        %v1840 = vunpack.c.h.b16 %v692
        %v1841 = vunpack.c.l.b16 %v693
        %v1842 = vunpack.c.h.b16 %v693
        %v1843 = vunpack.c.l.b16 %v694
        %v1844 = vunpack.c.h.b16 %v694
        %v1845 = vunpack.c.l.b16 %v695
        %v1846 = vunpack.c.h.b16 %v695
        %v1847 = vunpack.c.l.b16 %v696
        %v1848 = vunpack.c.h.b16 %v696
        %v1849 = vunpack.c.l.b16 %v697
        %v1850 = vunpack.c.h.b16 %v697
        %v1851 = vunpack.c.l.b16 %v698
        %v1852 = vunpack.c.h.b16 %v698
        %v1853 = vunpack.c.l.b16 %v699
        %v1854 = vunpack.c.h.b16 %v699
        %v1855 = vunpack.c.l.b16 %v700
        %v1856 = vunpack.c.h.b16 %v700
        %v1857 = vunpack.c.l.b16 %v701
        %v1858 = vunpack.c.h.b16 %v701
        %v1859 = vunpack.c.l.b16 %v702
        %v1860 = vunpack.c.h.b16 %v702
        %v1861 = vunpack.c.l.b16 %v703
        %v1862 = vunpack.c.h.b16 %v703
        %v1863 = vunpack.c.l.b16 %v704
        %v1864 = vunpack.c.h.b16 %v704
        %v1865 = vunpack.c.l.b16 %v705
        %v1866 = vunpack.c.h.b16 %v705
        %v1867 = vunpack.c.l.b16 %v706
        %v1868 = vunpack.c.h.b16 %v706
        %v1869 = vunpack.c.l.b16 %v707
        %v1870 = vunpack.c.h.b16 %v707
        %v1871 = vunpack.c.l.b16 %v708
        %v1872 = vunpack.c.h.b16 %v708
        %v1873 = vunpack.c.l.b16 %v709
        %v1874 = vunpack.c.h.b16 %v709
        %v1875 = vunpack.c.l.b16 %v710
        %v1876 = vunpack.c.h.b16 %v710
        %v1877 = vunpack.c.l.b16 %v711
        %v1878 = vunpack.c.h.b16 %v711
        %v1879 = vunpack.c.l.b16 %v712
        %v1880 = vunpack.c.h.b16 %v712
        %v1881 = vunpack.c.l.b16 %v713
        %v1882 = vunpack.c.h.b16 %v713
        %v1883 = vunpack.c.l.b16 %v714
        %v1884 = vunpack.c.h.b16 %v714
        %v1885 = vunpack.c.l.b16 %v715
        %v1886 = vunpack.c.h.b16 %v715
        %v1887 = vunpack.c.l.b16 %v716
        %v1888 = vunpack.c.h.b16 %v716
        %v1889 = vunpack.c.l.b16 %v717
        %v1890 = vunpack.c.h.b16 %v717
        %v1891 = vunpack.c.l.b16 %v718
        %v1892 = vunpack.c.h.b16 %v718
        %v1893 = vunpack.c.l.b16 %v719
        %v1894 = vunpack.c.h.b16 %v719
        %v1895 = vunpack.c.l.b16 %v720
        %v1896 = vunpack.c.h.b16 %v720
        %v1897 = vunpack.c.l.b16 %v721
        %v1898 = vunpack.c.h.b16 %v721
        %v1899 = vunpack.c.l.b16 %v722
        %v1900 = vunpack.c.h.b16 %v722
        %v1901 = vunpack.c.l.b16 %v723
        %v1902 = vunpack.c.h.b16 %v723
        %v1903 = vunpack.c.l.b16 %v724
        %v1904 = vunpack.c.h.b16 %v724
        %v1905 = vunpack.c.l.b16 %v725
        %v1906 = vunpack.c.h.b16 %v725
        %v1907 = vunpack.c.l.b16 %v726
        %v1908 = vunpack.c.h.b16 %v726
        %v1909 = vunpack.c.l.b16 %v727
        %v1910 = vunpack.c.h.b16 %v727
        %v1911 = vunpack.c.l.b16 %v728
        %v1912 = vunpack.c.h.b16 %v728
        %v1913 = vunpack.c.l.b16 %v729
        %v1914 = vunpack.c.h.b16 %v729
        %v1915 = vunpack.c.l.b16 %v730
        %v1916 = vunpack.c.h.b16 %v730
        %v1917 = vunpack.c.l.b16 %v731
        %v1918 = vunpack.c.h.b16 %v731
        %v1919 = vunpack.c.l.b16 %v732
        %v1920 = vunpack.c.h.b16 %v732
        %v1921 = vunpack.c.l.b16 %v733
        %v1922 = vunpack.c.h.b16 %v733
        %v1923 = vunpack.c.l.b16 %v734
        %v1924 = vunpack.c.h.b16 %v734
        %v1925 = vunpack.c.l.b16 %v735
        %v1926 = vunpack.c.h.b16 %v735
        %v1927 = vunpack.c.l.b16 %v736
        %v1928 = vunpack.c.h.b16 %v736
        %v1929 = vunpack.c.l.b16 %v737
        %v1930 = vunpack.c.h.b16 %v737
        %v1931 = vunpack.c.l.b16 %v738
        %v1932 = vunpack.c.h.b16 %v738
        %v1933 = vunpack.c.l.b16 %v739
        %v1934 = vunpack.c.h.b16 %v739
        %v1935 = vunpack.c.l.b16 %v740
        %v1936 = vunpack.c.h.b16 %v740
        %v1937 = vunpack.c.l.b16 %v741
        %v1938 = vunpack.c.h.b16 %v741
        %v1939 = vunpack.c.l.b16 %v742
        %v1940 = vunpack.c.h.b16 %v742
        %v1941 = vunpack.c.l.b16 %v743
        %v1942 = vunpack.c.h.b16 %v743
        %v1943 = vunpack.c.l.b16 %v744
        %v1944 = vunpack.c.h.b16 %v744
        %v1945 = vunpack.c.l.b16 %v745
        %v1946 = vunpack.c.h.b16 %v745
        %v1947 = vunpack.c.l.b16 %v746
        %v1948 = vunpack.c.h.b16 %v746
        %v1949 = vunpack.c.l.b16 %v747
        %v1950 = vunpack.c.h.b16 %v747
        %v1951 = vunpack.c.l.b16 %v748
        %v1952 = vunpack.c.h.b16 %v748
        %v1953 = vunpack.c.l.b16 %v749
        %v1954 = vunpack.c.h.b16 %v749
        %v1955 = vunpack.c.l.b16 %v750
        %v1956 = vunpack.c.h.b16 %v750
        %v1957 = vunpack.c.l.b16 %v751
        %v1958 = vunpack.c.h.b16 %v751
        %v1959 = vunpack.c.l.b16 %v752
        %v1960 = vunpack.c.h.b16 %v752
        %v1961 = vunpack.c.l.b16 %v753
        %v1962 = vunpack.c.h.b16 %v753
        %v1963 = vunpack.c.l.b16 %v754
        %v1964 = vunpack.c.h.b16 %v754
        %v1965 = vunpack.c.l.b16 %v755
        %v1966 = vunpack.c.h.b16 %v755
        %v1967 = vunpack.c.l.b16 %v756
        %v1968 = vunpack.c.h.b16 %v756
        %v1969 = vunpack.c.l.b16 %v757
        %v1970 = vunpack.c.h.b16 %v757
        %v1971 = vunpack.c.l.b16 %v758
        %v1972 = vunpack.c.h.b16 %v758
        %v1973 = vunpack.c.l.b16 %v759
        %v1974 = vunpack.c.h.b16 %v759
        %v1975 = vunpack.c.l.b16 %v760
        %v1976 = vunpack.c.h.b16 %v760
        %v1977 = vunpack.c.l.b16 %v761
        %v1978 = vunpack.c.h.b16 %v761
        %v1979 = vunpack.c.l.b16 %v762
        %v1980 = vunpack.c.h.b16 %v762
        %v1981 = vunpack.c.l.b16 %v763
        %v1982 = vunpack.c.h.b16 %v763
        %v1983 = vunpack.c.l.b16 %v764
        %v1984 = vunpack.c.h.b16 %v764
        %v1985 = vunpack.c.l.b16 %v765
        %v1986 = vunpack.c.h.b16 %v765
        %v1987 = vunpack.c.l.b16 %v766
        %v1988 = vunpack.c.h.b16 %v766
        %v1989 = vunpack.c.l.b16 %v767
        %v1990 = vunpack.c.h.b16 %v767
        %v1991 = vunpack.c.l.b16 %v768
        %v1992 = vunpack.c.h.b16 %v768
        %v1993 = vunpack.c.l.b16 %v769
        %v1994 = vunpack.c.h.b16 %v769
        %v1995 = vunpack.c.l.b16 %v770
        %v1996 = vunpack.c.h.b16 %v770
        %v1997 = vunpack.c.l.b16 %v771
        %v1998 = vunpack.c.h.b16 %v771
        %v1999 = vunpack.c.l.b16 %v772
        %v2000 = vunpack.c.h.b16 %v772
        %v2001 = vunpack.c.l.b16 %v773
        %v2002 = vunpack.c.h.b16 %v773
        %v2003 = vunpack.c.l.b16 %v774
        %v2004 = vunpack.c.h.b16 %v774
        %v2005 = vunpack.c.l.b16 %v775
        %v2006 = vunpack.c.h.b16 %v775
        %v2007 = vunpack.c.l.b16 %v776
        %v2008 = vunpack.c.h.b16 %v776
        %v2009 = vunpack.c.l.b16 %v777
        %v2010 = vunpack.c.h.b16 %v777
        %v2011 = vunpack.c.l.b16 %v778
        %v2012 = vunpack.c.h.b16 %v778
        %v2013 = vunpack.c.l.b16 %v779
        %v2014 = vunpack.c.h.b16 %v779
        %v2015 = vunpack.c.l.b16 %v780
        %v2016 = vunpack.c.h.b16 %v780
        %v2017 = vunpack.c.l.b16 %v781
        %v2018 = vunpack.c.h.b16 %v781
        %v2019 = vunpack.c.l.b16 %v782
        %v2020 = vunpack.c.h.b16 %v782
        %v2021 = vunpack.c.l.b16 %v783
        %v2022 = vunpack.c.h.b16 %v783
        %v2023 = vunpack.c.l.b16 %v784
        %v2024 = vunpack.c.h.b16 %v784
        %v2025 = vunpack.c.l.b16 %v785
        %v2026 = vunpack.c.h.b16 %v785
        %v2027 = vunpack.c.l.b16 %v786
        %v2028 = vunpack.c.h.b16 %v786
        %v2029 = vunpack.c.l.b16 %v787
        %v2030 = vunpack.c.h.b16 %v787
        %v2031 = vunpack.c.l.b16 %v788
        %v2032 = vunpack.c.h.b16 %v788
        %v2033 = vunpack.c.l.b16 %v789
        %v2034 = vunpack.c.h.b16 %v789
        %v2035 = vunpack.c.l.b16 %v790
        %v2036 = vunpack.c.h.b16 %v790
        %v2037 = vunpack.c.l.b16 %v791
        %v2038 = vunpack.c.h.b16 %v791
        %v2039 = vunpack.c.l.b16 %v792
        %v2040 = vunpack.c.h.b16 %v792
        %v2041 = vunpack.c.l.b16 %v793
        %v2042 = vunpack.c.h.b16 %v793
        %v2043 = vunpack.c.l.b16 %v794
        %v2044 = vunpack.c.h.b16 %v794
        %v2045 = vunpack.c.l.b16 %v795
        %v2046 = vunpack.c.h.b16 %v795
        %v2047 = vunpack.c.l.b16 %v796
        %v2048 = vunpack.c.h.b16 %v796
        %v2049 = vunpack.c.l.b16 %v797
        %v2050 = vunpack.c.h.b16 %v797
        %v2051 = vunpack.c.l.b16 %v798
        %v2052 = vunpack.c.h.b16 %v798
        %v2053 = vunpack.c.l.b16 %v799
        %v2054 = vunpack.c.h.b16 %v799
        %v2055 = vunpack.c.l.b16 %v800
        %v2056 = vunpack.c.h.b16 %v800
        %v2057 = vunpack.c.l.b16 %v801
        %v2058 = vunpack.c.h.b16 %v801
        %v2059 = vunpack.c.l.b16 %v802
        %v2060 = vunpack.c.h.b16 %v802
        %v2061 = vunpack.c.l.b16 %v803
        %v2062 = vunpack.c.h.b16 %v803
        %v2063 = vunpack.c.l.b16 %v804
        %v2064 = vunpack.c.h.b16 %v804
        %v2065 = vunpack.c.l.b16 %v805
        %v2066 = vunpack.c.h.b16 %v805
        %v2067 = vunpack.c.l.b16 %v806
        %v2068 = vunpack.c.h.b16 %v806
        %v2069 = vunpack.c.l.b16 %v807
        %v2070 = vunpack.c.h.b16 %v807
        %v2071 = vunpack.c.l.b16 %v808
        %v2072 = vunpack.c.h.b16 %v808
        %v2073 = vunpack.c.l.b16 %v809
        %v2074 = vunpack.c.h.b16 %v809
        %v2075 = vunpack.c.l.b16 %v810
        %v2076 = vunpack.c.h.b16 %v810
        %v2077 = vunpack.c.l.b16 %v811
        %v2078 = vunpack.c.h.b16 %v811
        %v2079 = vunpack.c.l.b16 %v812
        %v2080 = vunpack.c.h.b16 %v812
        %v2081 = vunpack.c.l.b16 %v813
        %v2082 = vunpack.c.h.b16 %v813
        %v2083 = vunpack.c.l.b16 %v814
        %v2084 = vunpack.c.h.b16 %v814
        %v2085 = vpack.c.b16 %v1641, %v1637
        %v2086 = vpack.c.b16 %v1642, %v1638
        %v2087 = vpack.c.b16 %v1643, %v1639
        %v2088 = vpack.c.b16 %v1644, %v1640
        %v2089 = vpack.c.b16 %v1649, %v1645
        %v2090 = vpack.c.b16 %v1650, %v1646
        %v2091 = vpack.c.b16 %v1651, %v1647
        %v2092 = vpack.c.b16 %v1652, %v1648
        %v2093 = vpack.c.b16 %v1657, %v1653
        %v2094 = vpack.c.b16 %v1658, %v1654
        %v2095 = vpack.c.b16 %v1659, %v1655
        %v2096 = vpack.c.b16 %v1660, %v1656
        %v2097 = vpack.c.b16 %v1665, %v1661
        %v2098 = vpack.c.b16 %v1666, %v1662
        %v2099 = vpack.c.b16 %v1667, %v1663
        %v2100 = vpack.c.b16 %v1668, %v1664
        %v2101 = vpack.c.b16 %v1673, %v1669
        %v2102 = vpack.c.b16 %v1674, %v1670
        %v2103 = vpack.c.b16 %v1675, %v1671
        %v2104 = vpack.c.b16 %v1676, %v1672
        %v2105 = vpack.c.b16 %v1681, %v1677
        %v2106 = vpack.c.b16 %v1682, %v1678
        %v2107 = vpack.c.b16 %v1683, %v1679
        %v2108 = vpack.c.b16 %v1684, %v1680
        %v2109 = vpack.c.b16 %v1689, %v1685
        %v2110 = vpack.c.b16 %v1690, %v1686
        %v2111 = vpack.c.b16 %v1691, %v1687
        %v2112 = vpack.c.b16 %v1692, %v1688
        %v2113 = vpack.c.b16 %v1697, %v1693
        %v2114 = vpack.c.b16 %v1698, %v1694
        %v2115 = vpack.c.b16 %v1699, %v1695
        %v2116 = vpack.c.b16 %v1700, %v1696
        %v2117 = vpack.c.b16 %v1705, %v1701
        %v2118 = vpack.c.b16 %v1706, %v1702
        %v2119 = vpack.c.b16 %v1707, %v1703
        %v2120 = vpack.c.b16 %v1708, %v1704
        %v2121 = vpack.c.b16 %v1713, %v1709
        %v2122 = vpack.c.b16 %v1714, %v1710
        %v2123 = vpack.c.b16 %v1715, %v1711
        %v2124 = vpack.c.b16 %v1716, %v1712
        %v2125 = vpack.c.b16 %v1721, %v1717
        %v2126 = vpack.c.b16 %v1722, %v1718
        %v2127 = vpack.c.b16 %v1723, %v1719
        %v2128 = vpack.c.b16 %v1724, %v1720
        %v2129 = vpack.c.b16 %v1729, %v1725
        %v2130 = vpack.c.b16 %v1730, %v1726
        %v2131 = vpack.c.b16 %v1731, %v1727
        %v2132 = vpack.c.b16 %v1732, %v1728
        %v2133 = vpack.c.b16 %v1737, %v1733
        %v2134 = vpack.c.b16 %v1738, %v1734
        %v2135 = vpack.c.b16 %v1739, %v1735
        %v2136 = vpack.c.b16 %v1740, %v1736
        %v2137 = vpack.c.b16 %v1745, %v1741
        %v2138 = vpack.c.b16 %v1746, %v1742
        %v2139 = vpack.c.b16 %v1747, %v1743
        %v2140 = vpack.c.b16 %v1748, %v1744
        %v2141 = vpack.c.b16 %v1753, %v1749
        %v2142 = vpack.c.b16 %v1754, %v1750
        %v2143 = vpack.c.b16 %v1755, %v1751
        %v2144 = vpack.c.b16 %v1756, %v1752
        %v2145 = vpack.c.b16 %v1761, %v1757
        %v2146 = vpack.c.b16 %v1762, %v1758
        %v2147 = vpack.c.b16 %v1763, %v1759
        %v2148 = vpack.c.b16 %v1764, %v1760
        %v2149 = vpack.c.b16 %v1769, %v1765
        %v2150 = vpack.c.b16 %v1770, %v1766
        %v2151 = vpack.c.b16 %v1771, %v1767
        %v2152 = vpack.c.b16 %v1772, %v1768
        %v2153 = vpack.c.b16 %v1777, %v1773
        %v2154 = vpack.c.b16 %v1778, %v1774
        %v2155 = vpack.c.b16 %v1779, %v1775
        %v2156 = vpack.c.b16 %v1780, %v1776
        %v2157 = vpack.c.b16 %v1785, %v1781
        %v2158 = vpack.c.b16 %v1786, %v1782
        %v2159 = vpack.c.b16 %v1787, %v1783
        %v2160 = vpack.c.b16 %v1788, %v1784
        %v2161 = vpack.c.b16 %v1793, %v1789
        %v2162 = vpack.c.b16 %v1794, %v1790
        %v2163 = vpack.c.b16 %v1795, %v1791
        %v2164 = vpack.c.b16 %v1796, %v1792
        %v2165 = vpack.c.b16 %v1801, %v1797
        %v2166 = vpack.c.b16 %v1802, %v1798
        %v2167 = vpack.c.b16 %v1803, %v1799
        %v2168 = vpack.c.b16 %v1804, %v1800
        %v2169 = vpack.c.b16 %v1809, %v1805
        %v2170 = vpack.c.b16 %v1810, %v1806
        %v2171 = vpack.c.b16 %v1811, %v1807
        %v2172 = vpack.c.b16 %v1812, %v1808
        %v2173 = vpack.c.b16 %v1817, %v1813
        %v2174 = vpack.c.b16 %v1818, %v1814
        %v2175 = vpack.c.b16 %v1819, %v1815
        %v2176 = vpack.c.b16 %v1820, %v1816
        %v2177 = vpack.c.b16 %v1825, %v1821
        %v2178 = vpack.c.b16 %v1826, %v1822
        %v2179 = vpack.c.b16 %v1827, %v1823
        %v2180 = vpack.c.b16 %v1828, %v1824
        %v2181 = vpack.c.b16 %v1833, %v1829
        %v2182 = vpack.c.b16 %v1834, %v1830
        %v2183 = vpack.c.b16 %v1835, %v1831
        %v2184 = vpack.c.b16 %v1836, %v1832
        %v2185 = vpack.c.b16 %v1841, %v1837
        %v2186 = vpack.c.b16 %v1842, %v1838
        %v2187 = vpack.c.b16 %v1843, %v1839
        %v2188 = vpack.c.b16 %v1844, %v1840
        %v2189 = vpack.c.b16 %v1849, %v1845
        %v2190 = vpack.c.b16 %v1850, %v1846
        %v2191 = vpack.c.b16 %v1851, %v1847
        %v2192 = vpack.c.b16 %v1852, %v1848
        %v2193 = vpack.c.b16 %v1857, %v1853
        %v2194 = vpack.c.b16 %v1858, %v1854
        %v2195 = vpack.c.b16 %v1859, %v1855
        %v2196 = vpack.c.b16 %v1860, %v1856
        %v2197 = vpack.c.b16 %v1865, %v1861
        %v2198 = vpack.c.b16 %v1866, %v1862
        %v2199 = vpack.c.b16 %v1867, %v1863
        %v2200 = vpack.c.b16 %v1868, %v1864
        %v2201 = vpack.c.b16 %v1873, %v1869
        %v2202 = vpack.c.b16 %v1874, %v1870
        %v2203 = vpack.c.b16 %v1875, %v1871
        %v2204 = vpack.c.b16 %v1876, %v1872
        %v2205 = vpack.c.b16 %v1881, %v1877
        %v2206 = vpack.c.b16 %v1882, %v1878
        %v2207 = vpack.c.b16 %v1883, %v1879
        %v2208 = vpack.c.b16 %v1884, %v1880
        %v2209 = vpack.c.b16 %v1889, %v1885
        %v2210 = vpack.c.b16 %v1890, %v1886
        %v2211 = vpack.c.b16 %v1891, %v1887
        %v2212 = vpack.c.b16 %v1892, %v1888
        %v2213 = vpack.c.b16 %v1897, %v1893
        %v2214 = vpack.c.b16 %v1898, %v1894
        %v2215 = vpack.c.b16 %v1899, %v1895
        %v2216 = vpack.c.b16 %v1900, %v1896
        %v2217 = vpack.c.b16 %v1905, %v1901
        %v2218 = vpack.c.b16 %v1906, %v1902
        %v2219 = vpack.c.b16 %v1907, %v1903
        %v2220 = vpack.c.b16 %v1908, %v1904
        %v2221 = vpack.c.b16 %v1913, %v1909
        %v2222 = vpack.c.b16 %v1914, %v1910
        %v2223 = vpack.c.b16 %v1915, %v1911
        %v2224 = vpack.c.b16 %v1916, %v1912
        %v2225 = vpack.c.b16 %v1921, %v1917
        %v2226 = vpack.c.b16 %v1922, %v1918
        %v2227 = vpack.c.b16 %v1923, %v1919
        %v2228 = vpack.c.b16 %v1924, %v1920
        %v2229 = vpack.c.b16 %v1929, %v1925
        %v2230 = vpack.c.b16 %v1930, %v1926
        %v2231 = vpack.c.b16 %v1931, %v1927
        %v2232 = vpack.c.b16 %v1932, %v1928
        %v2233 = vpack.c.b16 %v1937, %v1933
        %v2234 = vpack.c.b16 %v1938, %v1934
        %v2235 = vpack.c.b16 %v1939, %v1935
        %v2236 = vpack.c.b16 %v1940, %v1936
        %v2237 = vpack.c.b16 %v1945, %v1941
        %v2238 = vpack.c.b16 %v1946, %v1942
        %v2239 = vpack.c.b16 %v1947, %v1943
        %v2240 = vpack.c.b16 %v1948, %v1944
        %v2241 = vpack.c.b16 %v1953, %v1949
        %v2242 = vpack.c.b16 %v1954, %v1950
        %v2243 = vpack.c.b16 %v1955, %v1951
        %v2244 = vpack.c.b16 %v1956, %v1952
        %v2245 = vpack.c.b16 %v1961, %v1957
        %v2246 = vpack.c.b16 %v1962, %v1958
        %v2247 = vpack.c.b16 %v1963, %v1959
        %v2248 = vpack.c.b16 %v1964, %v1960
        %v2249 = vpack.c.b16 %v1969, %v1965
        %v2250 = vpack.c.b16 %v1970, %v1966
        %v2251 = vpack.c.b16 %v1971, %v1967
        %v2252 = vpack.c.b16 %v1972, %v1968
        %v2253 = vpack.c.b16 %v1977, %v1973
        %v2254 = vpack.c.b16 %v1978, %v1974
        %v2255 = vpack.c.b16 %v1979, %v1975
        %v2256 = vpack.c.b16 %v1980, %v1976
        %v2257 = vpack.c.b16 %v1985, %v1981
        %v2258 = vpack.c.b16 %v1986, %v1982
        %v2259 = vpack.c.b16 %v1987, %v1983
        %v2260 = vpack.c.b16 %v1988, %v1984
        %v2261 = vpack.c.b16 %v1993, %v1989
        %v2262 = vpack.c.b16 %v1994, %v1990
        %v2263 = vpack.c.b16 %v1995, %v1991
        %v2264 = vpack.c.b16 %v1996, %v1992
        %v2265 = vpack.c.b16 %v2001, %v1997
        %v2266 = vpack.c.b16 %v2002, %v1998
        %v2267 = vpack.c.b16 %v2003, %v1999
        %v2268 = vpack.c.b16 %v2004, %v2000
        %v2269 = vpack.c.b16 %v2009, %v2005
        %v2270 = vpack.c.b16 %v2010, %v2006
        %v2271 = vpack.c.b16 %v2011, %v2007
        %v2272 = vpack.c.b16 %v2012, %v2008
        %v2273 = vpack.c.b16 %v2017, %v2013
        %v2274 = vpack.c.b16 %v2018, %v2014
        %v2275 = vpack.c.b16 %v2019, %v2015
        %v2276 = vpack.c.b16 %v2020, %v2016
        %v2277 = vpack.c.b16 %v2025, %v2021
        %v2278 = vpack.c.b16 %v2026, %v2022
        %v2279 = vpack.c.b16 %v2027, %v2023
        %v2280 = vpack.c.b16 %v2028, %v2024
        %v2281 = vpack.c.b16 %v2033, %v2029
        %v2282 = vpack.c.b16 %v2034, %v2030
        %v2283 = vpack.c.b16 %v2035, %v2031
        %v2284 = vpack.c.b16 %v2036, %v2032
        %v2285 = vpack.c.b16 %v2041, %v2037
        %v2286 = vpack.c.b16 %v2042, %v2038
        %v2287 = vpack.c.b16 %v2043, %v2039
        %v2288 = vpack.c.b16 %v2044, %v2040
        %v2289 = vpack.c.b16 %v2049, %v2045
        %v2290 = vpack.c.b16 %v2050, %v2046
        %v2291 = vpack.c.b16 %v2051, %v2047
        %v2292 = vpack.c.b16 %v2052, %v2048
        %v2293 = vpack.c.b16 %v2057, %v2053
        %v2294 = vpack.c.b16 %v2058, %v2054
        %v2295 = vpack.c.b16 %v2059, %v2055
        %v2296 = vpack.c.b16 %v2060, %v2056
        %v2297 = vpack.c.b16 %v2065, %v2061
        %v2298 = vpack.c.b16 %v2066, %v2062
        %v2299 = vpack.c.b16 %v2067, %v2063
        %v2300 = vpack.c.b16 %v2068, %v2064
        %v2301 = vpack.c.b16 %v2073, %v2069
        %v2302 = vpack.c.b16 %v2074, %v2070
        %v2303 = vpack.c.b16 %v2075, %v2071
        %v2304 = vpack.c.b16 %v2076, %v2072
        %v2305 = vpack.c.b16 %v2081, %v2077
        %v2306 = vpack.c.b16 %v2082, %v2078
        %v2307 = vpack.c.b16 %v2083, %v2079
        %v2308 = vpack.c.b16 %v2084, %v2080
        %2533 = vmatprep.subr.bf16.mxu0 %v2086
        %2534 = vmatpush1.bf16.msra.mxu0 %v2085
        %2535 = vmatprep.subr.bf16.mxu0 %v2090
        %2536 = vmatpush1.bf16.msra.mxu0 %v2089
        %2537 = vmatprep.subr.bf16.mxu0 %v2094
        %2538 = vmatpush1.bf16.msra.mxu0 %v2093
        %2539 = vmatprep.subr.bf16.mxu0 %v2098
        %2540 = vmatpush1.bf16.msra.mxu0 %v2097
        %2541 = vmatprep.subr.bf16.mxu0 %v2102
        %2542 = vmatpush1.bf16.msra.mxu0 %v2101
        %2543 = vmatprep.subr.bf16.mxu0 %v2106
        %2544 = vmatpush1.bf16.msra.mxu0 %v2105
        %2545 = vmatprep.subr.bf16.mxu0 %v2110
        %2546 = vmatpush1.bf16.msra.mxu0 %v2109
        %2547 = vmatprep.subr.bf16.mxu0 %v2114
        %2548 = vmatpush1.bf16.msra.mxu0 %v2113
        %2549 = vmatprep.subr.bf16.mxu0 %v2118
        %2550 = vmatpush1.bf16.msra.mxu0 %v2117
        %2551 = vmatprep.subr.bf16.mxu0 %v2122
        %2552 = vmatpush1.bf16.msra.mxu0 %v2121
        %2553 = vmatprep.subr.bf16.mxu0 %v2126
        %2554 = vmatpush1.bf16.msra.mxu0 %v2125
        %2555 = vmatprep.subr.bf16.mxu0 %v2130
        %2556 = vmatpush1.bf16.msra.mxu0 %v2129
        %2557 = vmatprep.subr.bf16.mxu0 %v2134
        %2558 = vmatpush1.bf16.msra.mxu0 %v2133
        %2559 = vmatprep.subr.bf16.mxu0 %v2138
        %2560 = vmatpush1.bf16.msra.mxu0 %v2137
        %2561 = vmatprep.subr.bf16.mxu0 %v2142
        %2562 = vmatpush1.bf16.msra.mxu0 %v2141
        %2563 = vmatprep.subr.bf16.mxu0 %v2146
        %2564 = vmatpush1.bf16.msra.mxu0 %v2145
        %2565 = vmatprep.mubr.bf16.mxu0 %v1190
        %2566 = vmatmul.mubr.bf16.gmra.mrb[0].mxu0 %v1189
        %v2567 = vpop.f32.mrb[0].mxu0
        %v2568 = vadd.f32 %v820, %v2567
        %v2569 = vpop.f32.mrb[0].mxu0
        %v2570 = vadd.f32 %v824, %v2569
        %v2571 = vpop.f32.mrb[0].mxu0
        %v2572 = vadd.f32 %v820, %v2571
        %v2573 = vpop.f32.mrb[0].mxu0
        %v2574 = vadd.f32 %v824, %v2573
        %2575 = vmatprep.mubr.bf16.mxu0 %v1197
        %2576 = vmatmul.mubr.bf16.gmra.mrb[0].mxu0 %v1196
        %v2577 = vpop.f32.mrb[0].mxu0
        %v2578 = vadd.f32 %v820, %v2577
        %v2579 = vpop.f32.mrb[0].mxu0
        %v2580 = vadd.f32 %v824, %v2579
        %v2581 = vpop.f32.mrb[0].mxu0
        %v2582 = vadd.f32 %v820, %v2581
        %v2583 = vpop.f32.mrb[0].mxu0
        %v2584 = vadd.f32 %v824, %v2583
        %2585 = vmatprep.mubr.bf16.mxu0 %v1204
        %2586 = vmatmul.mubr.bf16.gmra.mrb[0].mxu0 %v1203
        %v2587 = vpop.f32.mrb[0].mxu0
        %v2588 = vadd.f32 %v820, %v2587
        %v2589 = vpop.f32.mrb[0].mxu0
        %v2590 = vadd.f32 %v824, %v2589
        %v2591 = vpop.f32.mrb[0].mxu0
        %v2592 = vadd.f32 %v820, %v2591
        %v2593 = vpop.f32.mrb[0].mxu0
        %v2594 = vadd.f32 %v824, %v2593
        %2595 = vmatprep.mubr.bf16.mxu0 %v1211
        %2596 = vmatmul.mubr.bf16.gmra.mrb[0].mxu0 %v1210
        %v2597 = vpop.f32.mrb[0].mxu0
        %v2598 = vadd.f32 %v820, %v2597
        %v2599 = vpop.f32.mrb[0].mxu0
        %v2600 = vadd.f32 %v824, %v2599
        %v2601 = vpop.f32.mrb[0].mxu0
        %v2602 = vadd.f32 %v820, %v2601
        %v2603 = vpop.f32.mrb[0].mxu0
        %v2604 = vadd.f32 %v824, %v2603
        %2605 = vmatprep.mubr.bf16.mxu0 %v1218
        %2606 = vmatmul.mubr.bf16.gmra.mrb[0].mxu0 %v1217
        %v2607 = vpop.f32.mrb[0].mxu0
        %v2608 = vadd.f32 %v820, %v2607
        %v2609 = vpop.f32.mrb[0].mxu0
        %v2610 = vadd.f32 %v824, %v2609
        %v2611 = vpop.f32.mrb[0].mxu0
        %v2612 = vadd.f32 %v820, %v2611
        %v2613 = vpop.f32.mrb[0].mxu0
        %v2614 = vadd.f32 %v824, %v2613
        %2615 = vmatprep.mubr.bf16.mxu0 %v1225
        %2616 = vmatmul.mubr.bf16.gmra.mrb[0].mxu0 %v1224
        %v2617 = vpop.f32.mrb[0].mxu0
        %v2618 = vadd.f32 %v820, %v2617
        %v2619 = vpop.f32.mrb[0].mxu0
        %v2620 = vadd.f32 %v824, %v2619
        %v2621 = vpop.f32.mrb[0].mxu0
        %v2622 = vadd.f32 %v820, %v2621
        %v2623 = vpop.f32.mrb[0].mxu0
        %v2624 = vadd.f32 %v824, %v2623
        %2625 = vmatprep.mubr.bf16.mxu0 %v1232
        %2626 = vmatmul.mubr.bf16.gmra.mrb[0].mxu0 %v1231
        %v2627 = vpop.f32.mrb[0].mxu0
        %v2628 = vadd.f32 %v820, %v2627
        %v2629 = vpop.f32.mrb[0].mxu0
        %v2630 = vadd.f32 %v824, %v2629
        %v2631 = vpop.f32.mrb[0].mxu0
        %v2632 = vadd.f32 %v820, %v2631
        %v2633 = vpop.f32.mrb[0].mxu0
        %v2634 = vadd.f32 %v824, %v2633
        %2635 = vmatprep.mubr.bf16.mxu0 %v1239
        %2636 = vmatmul.mubr.bf16.gmra.mrb[0].mxu0 %v1238
        %v2637 = vpop.f32.mrb[0].mxu0
        %v2638 = vadd.f32 %v820, %v2637
        %v2639 = vpop.f32.mrb[0].mxu0
        %v2640 = vadd.f32 %v824, %v2639
        %v2641 = vpop.f32.mrb[0].mxu0
        %v2642 = vadd.f32 %v820, %v2641
        %v2643 = vpop.f32.mrb[0].mxu0
        %v2644 = vadd.f32 %v824, %v2643
        %2645 = vmatprep.mubr.bf16.mxu0 %v1246
        %2646 = vmatmul.mubr.bf16.gmra.mrb[0].mxu0 %v1245
        %v2647 = vpop.f32.mrb[0].mxu0
        %v2648 = vadd.f32 %v820, %v2647
        %v2649 = vpop.f32.mrb[0].mxu0
        %v2650 = vadd.f32 %v824, %v2649
        %v2651 = vpop.f32.mrb[0].mxu0
        %v2652 = vadd.f32 %v820, %v2651
        %v2653 = vpop.f32.mrb[0].mxu0
        %v2654 = vadd.f32 %v824, %v2653
        %2655 = vmatprep.mubr.bf16.mxu0 %v1253
        %2656 = vmatmul.mubr.bf16.gmra.mrb[0].mxu0 %v1252
        %v2657 = vpop.f32.mrb[0].mxu0
        %v2658 = vadd.f32 %v820, %v2657
        %v2659 = vpop.f32.mrb[0].mxu0
        %v2660 = vadd.f32 %v824, %v2659
        %v2661 = vpop.f32.mrb[0].mxu0
        %v2662 = vadd.f32 %v820, %v2661
        %v2663 = vpop.f32.mrb[0].mxu0
        %v2664 = vadd.f32 %v824, %v2663
        %2665 = vmatprep.mubr.bf16.mxu0 %v1260
        %2666 = vmatmul.mubr.bf16.gmra.mrb[0].mxu0 %v1259
        %v2667 = vpop.f32.mrb[0].mxu0
        %v2668 = vadd.f32 %v820, %v2667
        %v2669 = vpop.f32.mrb[0].mxu0
        %v2670 = vadd.f32 %v824, %v2669
        %v2671 = vpop.f32.mrb[0].mxu0
        %v2672 = vadd.f32 %v820, %v2671
        %v2673 = vpop.f32.mrb[0].mxu0
        %v2674 = vadd.f32 %v824, %v2673
        %2675 = vmatprep.mubr.bf16.mxu0 %v1267
        %2676 = vmatmul.mubr.bf16.gmra.mrb[0].mxu0 %v1266
        %v2677 = vpop.f32.mrb[0].mxu0
        %v2678 = vadd.f32 %v820, %v2677
        %v2679 = vpop.f32.mrb[0].mxu0
        %v2680 = vadd.f32 %v824, %v2679
        %v2681 = vpop.f32.mrb[0].mxu0
        %v2682 = vadd.f32 %v820, %v2681
        %v2683 = vpop.f32.mrb[0].mxu0
        %v2684 = vadd.f32 %v824, %v2683
        %2685 = vmatprep.mubr.bf16.mxu0 %v1274
        %2686 = vmatmul.mubr.bf16.gmra.mrb[0].mxu0 %v1273
        %v2687 = vpop.f32.mrb[0].mxu0
        %v2688 = vadd.f32 %v820, %v2687
        %v2689 = vpop.f32.mrb[0].mxu0
        %v2690 = vadd.f32 %v824, %v2689
        %v2691 = vpop.f32.mrb[0].mxu0
        %v2692 = vadd.f32 %v820, %v2691
        %v2693 = vpop.f32.mrb[0].mxu0
        %v2694 = vadd.f32 %v824, %v2693
        %2695 = vmatprep.mubr.bf16.mxu0 %v1281
        %2696 = vmatmul.mubr.bf16.gmra.mrb[0].mxu0 %v1280
        %v2697 = vpop.f32.mrb[0].mxu0
        %v2698 = vadd.f32 %v820, %v2697
        %v2699 = vpop.f32.mrb[0].mxu0
        %v2700 = vadd.f32 %v824, %v2699
        %v2701 = vpop.f32.mrb[0].mxu0
        %v2702 = vadd.f32 %v820, %v2701
        %v2703 = vpop.f32.mrb[0].mxu0
        %v2704 = vadd.f32 %v824, %v2703
        %2705 = vmatprep.mubr.bf16.mxu0 %v1288
        %2706 = vmatmul.mubr.bf16.gmra.mrb[0].mxu0 %v1287
        %v2707 = vpop.f32.mrb[0].mxu0
        %v2708 = vadd.f32 %v820, %v2707
        %v2709 = vpop.f32.mrb[0].mxu0
        %v2710 = vadd.f32 %v824, %v2709
        %v2711 = vpop.f32.mrb[0].mxu0
        %v2712 = vadd.f32 %v820, %v2711
        %v2713 = vpop.f32.mrb[0].mxu0
        %v2714 = vadd.f32 %v824, %v2713
        %2715 = vmatprep.mubr.bf16.mxu0 %v1295
        %2716 = vmatmul.mubr.bf16.gmra.mrb[0].mxu0 %v1294
        %v2717 = vpop.f32.mrb[0].mxu0
        %v2718 = vadd.f32 %v820, %v2717
        %v2719 = vpop.f32.mrb[0].mxu0
        %v2720 = vadd.f32 %v824, %v2719
        %v2721 = vpop.f32.mrb[0].mxu0
        %v2722 = vadd.f32 %v820, %v2721
        %v2723 = vpop.f32.mrb[0].mxu0
        %v2724 = vadd.f32 %v824, %v2723
        %2725 = vdwg.mxu0
        %2726 = vmatprep.subr.bf16.mxu0 %v2150
        %2727 = vmatpush1.bf16.msra.mxu0 %v2149
        %2728 = vmatprep.subr.bf16.mxu0 %v2154
        %2729 = vmatpush1.bf16.msra.mxu0 %v2153
        %2730 = vmatprep.subr.bf16.mxu0 %v2158
        %2731 = vmatpush1.bf16.msra.mxu0 %v2157
        %2732 = vmatprep.subr.bf16.mxu0 %v2162
        %2733 = vmatpush1.bf16.msra.mxu0 %v2161
        %2734 = vmatprep.subr.bf16.mxu0 %v2166
        %2735 = vmatpush1.bf16.msra.mxu0 %v2165
        %2736 = vmatprep.subr.bf16.mxu0 %v2170
        %2737 = vmatpush1.bf16.msra.mxu0 %v2169
        %2738 = vmatprep.subr.bf16.mxu0 %v2174
        %2739 = vmatpush1.bf16.msra.mxu0 %v2173
        %2740 = vmatprep.subr.bf16.mxu0 %v2178
        %2741 = vmatpush1.bf16.msra.mxu0 %v2177
        %2742 = vmatprep.subr.bf16.mxu0 %v2182
        %2743 = vmatpush1.bf16.msra.mxu0 %v2181
        %2744 = vmatprep.subr.bf16.mxu0 %v2186
        %2745 = vmatpush1.bf16.msra.mxu0 %v2185
        %2746 = vmatprep.subr.bf16.mxu0 %v2190
        %2747 = vmatpush1.bf16.msra.mxu0 %v2189
        %2748 = vmatprep.subr.bf16.mxu0 %v2194
        %2749 = vmatpush1.bf16.msra.mxu0 %v2193
        %2750 = vmatprep.subr.bf16.mxu0 %v2198
        %2751 = vmatpush1.bf16.msra.mxu0 %v2197
        %2752 = vmatprep.subr.bf16.mxu0 %v2202
        %2753 = vmatpush1.bf16.msra.mxu0 %v2201
        %2754 = vmatprep.subr.bf16.mxu0 %v2206
        %2755 = vmatpush1.bf16.msra.mxu0 %v2205
        %2756 = vmatprep.subr.bf16.mxu0 %v2210
        %2757 = vmatpush1.bf16.msra.mxu0 %v2209
        %2758 = vmatprep.mubr.bf16.mxu0 %v1192
        %2759 = vmatmul.mubr.bf16.gmra.mrb[0].mxu0 %v1191
        %v2760 = vpop.f32.mrb[0].mxu0
        %v2761 = vadd.f32 %v2568, %v2760
        %v2762 = vpop.f32.mrb[0].mxu0
        %v2763 = vadd.f32 %v2570, %v2762
        %v2764 = vpop.f32.mrb[0].mxu0
        %v2765 = vadd.f32 %v2572, %v2764
        %v2766 = vpop.f32.mrb[0].mxu0
        %v2767 = vadd.f32 %v2574, %v2766
        %2768 = vmatprep.mubr.bf16.mxu0 %v1199
        %2769 = vmatmul.mubr.bf16.gmra.mrb[0].mxu0 %v1198
        %v2770 = vpop.f32.mrb[0].mxu0
        %v2771 = vadd.f32 %v2578, %v2770
        %v2772 = vpop.f32.mrb[0].mxu0
        %v2773 = vadd.f32 %v2580, %v2772
        %v2774 = vpop.f32.mrb[0].mxu0
        %v2775 = vadd.f32 %v2582, %v2774
        %v2776 = vpop.f32.mrb[0].mxu0
        %v2777 = vadd.f32 %v2584, %v2776
        %2778 = vmatprep.mubr.bf16.mxu0 %v1206
        %2779 = vmatmul.mubr.bf16.gmra.mrb[0].mxu0 %v1205
        %v2780 = vpop.f32.mrb[0].mxu0
        %v2781 = vadd.f32 %v2588, %v2780
        %v2782 = vpop.f32.mrb[0].mxu0
        %v2783 = vadd.f32 %v2590, %v2782
        %v2784 = vpop.f32.mrb[0].mxu0
        %v2785 = vadd.f32 %v2592, %v2784
        %v2786 = vpop.f32.mrb[0].mxu0
        %v2787 = vadd.f32 %v2594, %v2786
        %2788 = vmatprep.mubr.bf16.mxu0 %v1213
        %2789 = vmatmul.mubr.bf16.gmra.mrb[0].mxu0 %v1212
        %v2790 = vpop.f32.mrb[0].mxu0
        %v2791 = vadd.f32 %v2598, %v2790
        %v2792 = vpop.f32.mrb[0].mxu0
        %v2793 = vadd.f32 %v2600, %v2792
        %v2794 = vpop.f32.mrb[0].mxu0
        %v2795 = vadd.f32 %v2602, %v2794
        %v2796 = vpop.f32.mrb[0].mxu0
        %v2797 = vadd.f32 %v2604, %v2796
        %2798 = vmatprep.mubr.bf16.mxu0 %v1220
        %2799 = vmatmul.mubr.bf16.gmra.mrb[0].mxu0 %v1219
        %v2800 = vpop.f32.mrb[0].mxu0
        %v2801 = vadd.f32 %v2608, %v2800
        %v2802 = vpop.f32.mrb[0].mxu0
        %v2803 = vadd.f32 %v2610, %v2802
        %v2804 = vpop.f32.mrb[0].mxu0
        %v2805 = vadd.f32 %v2612, %v2804
        %v2806 = vpop.f32.mrb[0].mxu0
        %v2807 = vadd.f32 %v2614, %v2806
        %2808 = vmatprep.mubr.bf16.mxu0 %v1227
        %2809 = vmatmul.mubr.bf16.gmra.mrb[0].mxu0 %v1226
        %v2810 = vpop.f32.mrb[0].mxu0
        %v2811 = vadd.f32 %v2618, %v2810
        %v2812 = vpop.f32.mrb[0].mxu0
        %v2813 = vadd.f32 %v2620, %v2812
        %v2814 = vpop.f32.mrb[0].mxu0
        %v2815 = vadd.f32 %v2622, %v2814
        %v2816 = vpop.f32.mrb[0].mxu0
        %v2817 = vadd.f32 %v2624, %v2816
        %2818 = vmatprep.mubr.bf16.mxu0 %v1234
        %2819 = vmatmul.mubr.bf16.gmra.mrb[0].mxu0 %v1233
        %v2820 = vpop.f32.mrb[0].mxu0
        %v2821 = vadd.f32 %v2628, %v2820
        %v2822 = vpop.f32.mrb[0].mxu0
        %v2823 = vadd.f32 %v2630, %v2822
        %v2824 = vpop.f32.mrb[0].mxu0
        %v2825 = vadd.f32 %v2632, %v2824
        %v2826 = vpop.f32.mrb[0].mxu0
        %v2827 = vadd.f32 %v2634, %v2826
        %2828 = vmatprep.mubr.bf16.mxu0 %v1241
        %2829 = vmatmul.mubr.bf16.gmra.mrb[0].mxu0 %v1240
        %v2830 = vpop.f32.mrb[0].mxu0
        %v2831 = vadd.f32 %v2638, %v2830
        %v2832 = vpop.f32.mrb[0].mxu0
        %v2833 = vadd.f32 %v2640, %v2832
        %v2834 = vpop.f32.mrb[0].mxu0
        %v2835 = vadd.f32 %v2642, %v2834
        %v2836 = vpop.f32.mrb[0].mxu0
        %v2837 = vadd.f32 %v2644, %v2836
        %2838 = vmatprep.mubr.bf16.mxu0 %v1248
        %2839 = vmatmul.mubr.bf16.gmra.mrb[0].mxu0 %v1247
        %v2840 = vpop.f32.mrb[0].mxu0
        %v2841 = vadd.f32 %v2648, %v2840
        %v2842 = vpop.f32.mrb[0].mxu0
        %v2843 = vadd.f32 %v2650, %v2842
        %v2844 = vpop.f32.mrb[0].mxu0
        %v2845 = vadd.f32 %v2652, %v2844
        %v2846 = vpop.f32.mrb[0].mxu0
        %v2847 = vadd.f32 %v2654, %v2846
        %2848 = vmatprep.mubr.bf16.mxu0 %v1255
        %2849 = vmatmul.mubr.bf16.gmra.mrb[0].mxu0 %v1254
        %v2850 = vpop.f32.mrb[0].mxu0
        %v2851 = vadd.f32 %v2658, %v2850
        %v2852 = vpop.f32.mrb[0].mxu0
        %v2853 = vadd.f32 %v2660, %v2852
        %v2854 = vpop.f32.mrb[0].mxu0
        %v2855 = vadd.f32 %v2662, %v2854
        %v2856 = vpop.f32.mrb[0].mxu0
        %v2857 = vadd.f32 %v2664, %v2856
        %2858 = vmatprep.mubr.bf16.mxu0 %v1262
        %2859 = vmatmul.mubr.bf16.gmra.mrb[0].mxu0 %v1261
        %v2860 = vpop.f32.mrb[0].mxu0
        %v2861 = vadd.f32 %v2668, %v2860
        %v2862 = vpop.f32.mrb[0].mxu0
        %v2863 = vadd.f32 %v2670, %v2862
        %v2864 = vpop.f32.mrb[0].mxu0
        %v2865 = vadd.f32 %v2672, %v2864
        %v2866 = vpop.f32.mrb[0].mxu0
        %v2867 = vadd.f32 %v2674, %v2866
        %2868 = vmatprep.mubr.bf16.mxu0 %v1269
        %2869 = vmatmul.mubr.bf16.gmra.mrb[0].mxu0 %v1268
        %v2870 = vpop.f32.mrb[0].mxu0
        %v2871 = vadd.f32 %v2678, %v2870
        %v2872 = vpop.f32.mrb[0].mxu0
        %v2873 = vadd.f32 %v2680, %v2872
        %v2874 = vpop.f32.mrb[0].mxu0
        %v2875 = vadd.f32 %v2682, %v2874
        %v2876 = vpop.f32.mrb[0].mxu0
        %v2877 = vadd.f32 %v2684, %v2876
        %2878 = vmatprep.mubr.bf16.mxu0 %v1276
        %2879 = vmatmul.mubr.bf16.gmra.mrb[0].mxu0 %v1275
        %v2880 = vpop.f32.mrb[0].mxu0
        %v2881 = vadd.f32 %v2688, %v2880
        %v2882 = vpop.f32.mrb[0].mxu0
        %v2883 = vadd.f32 %v2690, %v2882
        %v2884 = vpop.f32.mrb[0].mxu0
        %v2885 = vadd.f32 %v2692, %v2884
        %v2886 = vpop.f32.mrb[0].mxu0
        %v2887 = vadd.f32 %v2694, %v2886
        %2888 = vmatprep.mubr.bf16.mxu0 %v1283
        %2889 = vmatmul.mubr.bf16.gmra.mrb[0].mxu0 %v1282
        %v2890 = vpop.f32.mrb[0].mxu0
        %v2891 = vadd.f32 %v2698, %v2890
        %v2892 = vpop.f32.mrb[0].mxu0
        %v2893 = vadd.f32 %v2700, %v2892
        %v2894 = vpop.f32.mrb[0].mxu0
        %v2895 = vadd.f32 %v2702, %v2894
        %v2896 = vpop.f32.mrb[0].mxu0
        %v2897 = vadd.f32 %v2704, %v2896
        %2898 = vmatprep.mubr.bf16.mxu0 %v1290
        %2899 = vmatmul.mubr.bf16.gmra.mrb[0].mxu0 %v1289
        %v2900 = vpop.f32.mrb[0].mxu0
        %v2901 = vadd.f32 %v2708, %v2900
        %v2902 = vpop.f32.mrb[0].mxu0
        %v2903 = vadd.f32 %v2710, %v2902
        %v2904 = vpop.f32.mrb[0].mxu0
        %v2905 = vadd.f32 %v2712, %v2904
        %v2906 = vpop.f32.mrb[0].mxu0
        %v2907 = vadd.f32 %v2714, %v2906
        %2908 = vmatprep.mubr.bf16.mxu0 %v1297
        %2909 = vmatmul.mubr.bf16.gmra.mrb[0].mxu0 %v1296
        %v2910 = vpop.f32.mrb[0].mxu0
        %v2911 = vadd.f32 %v2718, %v2910
        %v2912 = vpop.f32.mrb[0].mxu0
        %v2913 = vadd.f32 %v2720, %v2912
        %v2914 = vpop.f32.mrb[0].mxu0
        %v2915 = vadd.f32 %v2722, %v2914
        %v2916 = vpop.f32.mrb[0].mxu0
        %v2917 = vadd.f32 %v2724, %v2916
        %2918 = vdwg.mxu0
        %2919 = vmatprep.subr.bf16.mxu0 %v2214
        %2920 = vmatpush1.bf16.msra.mxu0 %v2213
        %2921 = vmatprep.subr.bf16.mxu0 %v2218
        %2922 = vmatpush1.bf16.msra.mxu0 %v2217
        %2923 = vmatprep.subr.bf16.mxu0 %v2222
        %2924 = vmatpush1.bf16.msra.mxu0 %v2221
        %2925 = vmatprep.subr.bf16.mxu0 %v2226
        %2926 = vmatpush1.bf16.msra.mxu0 %v2225
        %2927 = vmatprep.subr.bf16.mxu0 %v2230
        %2928 = vmatpush1.bf16.msra.mxu0 %v2229
        %2929 = vmatprep.subr.bf16.mxu0 %v2234
        %2930 = vmatpush1.bf16.msra.mxu0 %v2233
        %2931 = vmatprep.subr.bf16.mxu0 %v2238
        %2932 = vmatpush1.bf16.msra.mxu0 %v2237
        %2933 = vmatprep.subr.bf16.mxu0 %v2242
        %2934 = vmatpush1.bf16.msra.mxu0 %v2241
        %2935 = vmatprep.subr.bf16.mxu0 %v2246
        %2936 = vmatpush1.bf16.msra.mxu0 %v2245
        %2937 = vmatprep.subr.bf16.mxu0 %v2250
        %2938 = vmatpush1.bf16.msra.mxu0 %v2249
        %2939 = vmatprep.subr.bf16.mxu0 %v2254
        %2940 = vmatpush1.bf16.msra.mxu0 %v2253
        %2941 = vmatprep.subr.bf16.mxu0 %v2258
        %2942 = vmatpush1.bf16.msra.mxu0 %v2257
        %2943 = vmatprep.subr.bf16.mxu0 %v2262
        %2944 = vmatpush1.bf16.msra.mxu0 %v2261
        %2945 = vmatprep.subr.bf16.mxu0 %v2266
        %2946 = vmatpush1.bf16.msra.mxu0 %v2265
        %2947 = vmatprep.subr.bf16.mxu0 %v2270
        %2948 = vmatpush1.bf16.msra.mxu0 %v2269
        %2949 = vmatprep.subr.bf16.mxu0 %v2274
        %2950 = vmatpush1.bf16.msra.mxu0 %v2273
        %2951 = vmatprep.mubr.bf16.mxu0 %v1194
        %2952 = vmatmul.mubr.bf16.gmra.mrb[0].mxu0 %v1193
        %v2953 = vpop.f32.mrb[0].mxu0
        %v2954 = vadd.f32 %v2761, %v2953
        %v2955 = vpop.f32.mrb[0].mxu0
        %v2956 = vadd.f32 %v2763, %v2955
        %v2957 = vpop.f32.mrb[0].mxu0
        %v2958 = vadd.f32 %v2765, %v2957
        %v2959 = vpop.f32.mrb[0].mxu0
        %v2960 = vadd.f32 %v2767, %v2959
        %2961 = vmatprep.mubr.bf16.mxu0 %v1201
        %2962 = vmatmul.mubr.bf16.gmra.mrb[0].mxu0 %v1200
        %v2963 = vpop.f32.mrb[0].mxu0
        %v2964 = vadd.f32 %v2771, %v2963
        %v2965 = vpop.f32.mrb[0].mxu0
        %v2966 = vadd.f32 %v2773, %v2965
        %v2967 = vpop.f32.mrb[0].mxu0
        %v2968 = vadd.f32 %v2775, %v2967
        %v2969 = vpop.f32.mrb[0].mxu0
        %v2970 = vadd.f32 %v2777, %v2969
        %2971 = vmatprep.mubr.bf16.mxu0 %v1208
        %2972 = vmatmul.mubr.bf16.gmra.mrb[0].mxu0 %v1207
        %v2973 = vpop.f32.mrb[0].mxu0
        %v2974 = vadd.f32 %v2781, %v2973
        %v2975 = vpop.f32.mrb[0].mxu0
        %v2976 = vadd.f32 %v2783, %v2975
        %v2977 = vpop.f32.mrb[0].mxu0
        %v2978 = vadd.f32 %v2785, %v2977
        %v2979 = vpop.f32.mrb[0].mxu0
        %v2980 = vadd.f32 %v2787, %v2979
        %2981 = vmatprep.mubr.bf16.mxu0 %v1215
        %2982 = vmatmul.mubr.bf16.gmra.mrb[0].mxu0 %v1214
        %v2983 = vpop.f32.mrb[0].mxu0
        %v2984 = vadd.f32 %v2791, %v2983
        %v2985 = vpop.f32.mrb[0].mxu0
        %v2986 = vadd.f32 %v2793, %v2985
        %v2987 = vpop.f32.mrb[0].mxu0
        %v2988 = vadd.f32 %v2795, %v2987
        %v2989 = vpop.f32.mrb[0].mxu0
        %v2990 = vadd.f32 %v2797, %v2989
        %2991 = vmatprep.mubr.bf16.mxu0 %v1222
        %2992 = vmatmul.mubr.bf16.gmra.mrb[0].mxu0 %v1221
        %v2993 = vpop.f32.mrb[0].mxu0
        %v2994 = vadd.f32 %v2801, %v2993
        %v2995 = vpop.f32.mrb[0].mxu0
        %v2996 = vadd.f32 %v2803, %v2995
        %v2997 = vpop.f32.mrb[0].mxu0
        %v2998 = vadd.f32 %v2805, %v2997
        %v2999 = vpop.f32.mrb[0].mxu0
        %v3000 = vadd.f32 %v2807, %v2999
        %3001 = vmatprep.mubr.bf16.mxu0 %v1229
        %3002 = vmatmul.mubr.bf16.gmra.mrb[0].mxu0 %v1228
        %v3003 = vpop.f32.mrb[0].mxu0
        %v3004 = vadd.f32 %v2811, %v3003
        %v3005 = vpop.f32.mrb[0].mxu0
        %v3006 = vadd.f32 %v2813, %v3005
        %v3007 = vpop.f32.mrb[0].mxu0
        %v3008 = vadd.f32 %v2815, %v3007
        %v3009 = vpop.f32.mrb[0].mxu0
        %v3010 = vadd.f32 %v2817, %v3009
        %3011 = vmatprep.mubr.bf16.mxu0 %v1236
        %3012 = vmatmul.mubr.bf16.gmra.mrb[0].mxu0 %v1235
        %v3013 = vpop.f32.mrb[0].mxu0
        %v3014 = vadd.f32 %v2821, %v3013
        %v3015 = vpop.f32.mrb[0].mxu0
        %v3016 = vadd.f32 %v2823, %v3015
        %v3017 = vpop.f32.mrb[0].mxu0
        %v3018 = vadd.f32 %v2825, %v3017
        %v3019 = vpop.f32.mrb[0].mxu0
        %v3020 = vadd.f32 %v2827, %v3019
        %3021 = vmatprep.mubr.bf16.mxu0 %v1243
        %3022 = vmatmul.mubr.bf16.gmra.mrb[0].mxu0 %v1242
        %v3023 = vpop.f32.mrb[0].mxu0
        %v3024 = vadd.f32 %v2831, %v3023
        %v3025 = vpop.f32.mrb[0].mxu0
        %v3026 = vadd.f32 %v2833, %v3025
        %v3027 = vpop.f32.mrb[0].mxu0
        %v3028 = vadd.f32 %v2835, %v3027
        %v3029 = vpop.f32.mrb[0].mxu0
        %v3030 = vadd.f32 %v2837, %v3029
        %3031 = vmatprep.mubr.bf16.mxu0 %v1250
        %3032 = vmatmul.mubr.bf16.gmra.mrb[0].mxu0 %v1249
        %v3033 = vpop.f32.mrb[0].mxu0
        %v3034 = vadd.f32 %v2841, %v3033
        %v3035 = vpop.f32.mrb[0].mxu0
        %v3036 = vadd.f32 %v2843, %v3035
        %v3037 = vpop.f32.mrb[0].mxu0
        %v3038 = vadd.f32 %v2845, %v3037
        %v3039 = vpop.f32.mrb[0].mxu0
        %v3040 = vadd.f32 %v2847, %v3039
        %3041 = vmatprep.mubr.bf16.mxu0 %v1257
        %3042 = vmatmul.mubr.bf16.gmra.mrb[0].mxu0 %v1256
        %v3043 = vpop.f32.mrb[0].mxu0
        %v3044 = vadd.f32 %v2851, %v3043
        %v3045 = vpop.f32.mrb[0].mxu0
        %v3046 = vadd.f32 %v2853, %v3045
        %v3047 = vpop.f32.mrb[0].mxu0
        %v3048 = vadd.f32 %v2855, %v3047
        %v3049 = vpop.f32.mrb[0].mxu0
        %v3050 = vadd.f32 %v2857, %v3049
        %3051 = vmatprep.mubr.bf16.mxu0 %v1264
        %3052 = vmatmul.mubr.bf16.gmra.mrb[0].mxu0 %v1263
        %v3053 = vpop.f32.mrb[0].mxu0
        %v3054 = vadd.f32 %v2861, %v3053
        %v3055 = vpop.f32.mrb[0].mxu0
        %v3056 = vadd.f32 %v2863, %v3055
        %v3057 = vpop.f32.mrb[0].mxu0
        %v3058 = vadd.f32 %v2865, %v3057
        %v3059 = vpop.f32.mrb[0].mxu0
        %v3060 = vadd.f32 %v2867, %v3059
        %3061 = vmatprep.mubr.bf16.mxu0 %v1271
        %3062 = vmatmul.mubr.bf16.gmra.mrb[0].mxu0 %v1270
        %v3063 = vpop.f32.mrb[0].mxu0
        %v3064 = vadd.f32 %v2871, %v3063
        %v3065 = vpop.f32.mrb[0].mxu0
        %v3066 = vadd.f32 %v2873, %v3065
        %v3067 = vpop.f32.mrb[0].mxu0
        %v3068 = vadd.f32 %v2875, %v3067
        %v3069 = vpop.f32.mrb[0].mxu0
        %v3070 = vadd.f32 %v2877, %v3069
        %3071 = vmatprep.mubr.bf16.mxu0 %v1278
        %3072 = vmatmul.mubr.bf16.gmra.mrb[0].mxu0 %v1277
        %v3073 = vpop.f32.mrb[0].mxu0
        %v3074 = vadd.f32 %v2881, %v3073
        %v3075 = vpop.f32.mrb[0].mxu0
        %v3076 = vadd.f32 %v2883, %v3075
        %v3077 = vpop.f32.mrb[0].mxu0
        %v3078 = vadd.f32 %v2885, %v3077
        %v3079 = vpop.f32.mrb[0].mxu0
        %v3080 = vadd.f32 %v2887, %v3079
        %3081 = vmatprep.mubr.bf16.mxu0 %v1285
        %3082 = vmatmul.mubr.bf16.gmra.mrb[0].mxu0 %v1284
        %v3083 = vpop.f32.mrb[0].mxu0
        %v3084 = vadd.f32 %v2891, %v3083
        %v3085 = vpop.f32.mrb[0].mxu0
        %v3086 = vadd.f32 %v2893, %v3085
        %v3087 = vpop.f32.mrb[0].mxu0
        %v3088 = vadd.f32 %v2895, %v3087
        %v3089 = vpop.f32.mrb[0].mxu0
        %v3090 = vadd.f32 %v2897, %v3089
        %3091 = vmatprep.mubr.bf16.mxu0 %v1292
        %3092 = vmatmul.mubr.bf16.gmra.mrb[0].mxu0 %v1291
        %v3093 = vpop.f32.mrb[0].mxu0
        %v3094 = vadd.f32 %v2901, %v3093
        %v3095 = vpop.f32.mrb[0].mxu0
        %v3096 = vadd.f32 %v2903, %v3095
        %v3097 = vpop.f32.mrb[0].mxu0
        %v3098 = vadd.f32 %v2905, %v3097
        %v3099 = vpop.f32.mrb[0].mxu0
        %v3100 = vadd.f32 %v2907, %v3099
        %3101 = vmatprep.mubr.bf16.mxu0 %v1299
        %3102 = vmatmul.mubr.bf16.gmra.mrb[0].mxu0 %v1298
        %v3103 = vpop.f32.mrb[0].mxu0
        %v3104 = vadd.f32 %v2911, %v3103
        %v3105 = vpop.f32.mrb[0].mxu0
        %v3106 = vadd.f32 %v2913, %v3105
        %v3107 = vpop.f32.mrb[0].mxu0
        %v3108 = vadd.f32 %v2915, %v3107
        %v3109 = vpop.f32.mrb[0].mxu0
        %v3110 = vadd.f32 %v2917, %v3109
        %3111 = vdwg.mxu0
        %3112 = vmatprep.subr.bf16.mxu0 %v2278
        %3113 = vmatpush1.bf16.msra.mxu0 %v2277
        %3114 = vmatprep.subr.bf16.mxu0 %v2282
        %3115 = vmatpush1.bf16.msra.mxu0 %v2281
        %3116 = vmatprep.subr.bf16.mxu0 %v2286
        %3117 = vmatpush1.bf16.msra.mxu0 %v2285
        %3118 = vmatprep.subr.bf16.mxu0 %v2290
        %3119 = vmatpush1.bf16.msra.mxu0 %v2289
        %3120 = vmatprep.subr.bf16.mxu0 %v2294
        %3121 = vmatpush1.bf16.msra.mxu0 %v2293
        %3122 = vmatprep.subr.bf16.mxu0 %v2298
        %3123 = vmatpush1.bf16.msra.mxu0 %v2297
        %3124 = vmatprep.subr.bf16.mxu0 %v2302
        %3125 = vmatpush1.bf16.msra.mxu0 %v2301
        %3126 = vmatprep.subr.bf16.mxu0 %v2306
        %3127 = vmatpush1.bf16.msra.mxu0 %v2305
        %3128 = vmatprep.subr.bf16.mxu0 0
        %3129 = vmatpush1.bf16.msra.mxu0 0
        %3130 = vmatprep.subr.bf16.mxu0 0
        %3131 = vmatpush1.bf16.msra.mxu0 0
        %3132 = vmatprep.subr.bf16.mxu0 0
        %3133 = vmatpush1.bf16.msra.mxu0 0
        %3134 = vmatprep.subr.bf16.mxu0 0
        %3135 = vmatpush1.bf16.msra.mxu0 0
        %3136 = vmatprep.subr.bf16.mxu0 0
        %3137 = vmatpush1.bf16.msra.mxu0 0
        %3138 = vmatprep.subr.bf16.mxu0 0
        %3139 = vmatpush1.bf16.msra.mxu0 0
        %3140 = vmatprep.subr.bf16.mxu0 0
        %3141 = vmatpush1.bf16.msra.mxu0 0
        %3142 = vmatprep.subr.bf16.mxu0 0
        %3143 = vmatpush1.bf16.msra.mxu0 0
        %3144 = vmatprep.mubr.bf16.mxu0 0
        %3145 = vmatmul.mubr.bf16.gmra.mrb[0].mxu0 %v1195
        %v3146 = vpop.f32.mrb[0].mxu0
        %v3147 = vadd.f32 %v2954, %v3146
        %v3148 = vpop.f32.mrb[0].mxu0
        %v3149 = vadd.f32 %v2956, %v3148
        %v3150 = vpop.f32.mrb[0].mxu0
        %v3151 = vadd.f32 %v2958, %v3150
        %v3152 = vpop.f32.mrb[0].mxu0
        %v3153 = vadd.f32 %v2960, %v3152
        %3154 = vmatprep.mubr.bf16.mxu0 0
        %3155 = vmatmul.mubr.bf16.gmra.mrb[0].mxu0 %v1202
        %v3156 = vpop.f32.mrb[0].mxu0
        %v3157 = vadd.f32 %v2964, %v3156
        %v3158 = vpop.f32.mrb[0].mxu0
        %v3159 = vadd.f32 %v2966, %v3158
        %v3160 = vpop.f32.mrb[0].mxu0
        %v3161 = vadd.f32 %v2968, %v3160
        %v3162 = vpop.f32.mrb[0].mxu0
        %v3163 = vadd.f32 %v2970, %v3162
        %3164 = vmatprep.mubr.bf16.mxu0 0
        %3165 = vmatmul.mubr.bf16.gmra.mrb[0].mxu0 %v1209
        %v3166 = vpop.f32.mrb[0].mxu0
        %v3167 = vadd.f32 %v2974, %v3166
        %v3168 = vpop.f32.mrb[0].mxu0
        %v3169 = vadd.f32 %v2976, %v3168
        %v3170 = vpop.f32.mrb[0].mxu0
        %v3171 = vadd.f32 %v2978, %v3170
        %v3172 = vpop.f32.mrb[0].mxu0
        %v3173 = vadd.f32 %v2980, %v3172
        %3174 = vmatprep.mubr.bf16.mxu0 0
        %3175 = vmatmul.mubr.bf16.gmra.mrb[0].mxu0 %v1216
        %v3176 = vpop.f32.mrb[0].mxu0
        %v3177 = vadd.f32 %v2984, %v3176
        %v3178 = vpop.f32.mrb[0].mxu0
        %v3179 = vadd.f32 %v2986, %v3178
        %v3180 = vpop.f32.mrb[0].mxu0
        %v3181 = vadd.f32 %v2988, %v3180
        %v3182 = vpop.f32.mrb[0].mxu0
        %v3183 = vadd.f32 %v2990, %v3182
        %3184 = vmatprep.mubr.bf16.mxu0 0
        %3185 = vmatmul.mubr.bf16.gmra.mrb[0].mxu0 %v1223
        %v3186 = vpop.f32.mrb[0].mxu0
        %v3187 = vadd.f32 %v2994, %v3186
        %v3188 = vpop.f32.mrb[0].mxu0
        %v3189 = vadd.f32 %v2996, %v3188
        %v3190 = vpop.f32.mrb[0].mxu0
        %v3191 = vadd.f32 %v2998, %v3190
        %v3192 = vpop.f32.mrb[0].mxu0
        %v3193 = vadd.f32 %v3000, %v3192
        %3194 = vmatprep.mubr.bf16.mxu0 0
        %3195 = vmatmul.mubr.bf16.gmra.mrb[0].mxu0 %v1230
        %v3196 = vpop.f32.mrb[0].mxu0
        %v3197 = vadd.f32 %v3004, %v3196
        %v3198 = vpop.f32.mrb[0].mxu0
        %v3199 = vadd.f32 %v3006, %v3198
        %v3200 = vpop.f32.mrb[0].mxu0
        %v3201 = vadd.f32 %v3008, %v3200
        %v3202 = vpop.f32.mrb[0].mxu0
        %v3203 = vadd.f32 %v3010, %v3202
        %3204 = vmatprep.mubr.bf16.mxu0 0
        %3205 = vmatmul.mubr.bf16.gmra.mrb[0].mxu0 %v1237
        %v3206 = vpop.f32.mrb[0].mxu0
        %v3207 = vadd.f32 %v3014, %v3206
        %v3208 = vpop.f32.mrb[0].mxu0
        %v3209 = vadd.f32 %v3016, %v3208
        %v3210 = vpop.f32.mrb[0].mxu0
        %v3211 = vadd.f32 %v3018, %v3210
        %v3212 = vpop.f32.mrb[0].mxu0
        %v3213 = vadd.f32 %v3020, %v3212
        %3214 = vmatprep.mubr.bf16.mxu0 0
        %3215 = vmatmul.mubr.bf16.gmra.mrb[0].mxu0 %v1244
        %v3216 = vpop.f32.mrb[0].mxu0
        %v3217 = vadd.f32 %v3024, %v3216
        %v3218 = vpop.f32.mrb[0].mxu0
        %v3219 = vadd.f32 %v3026, %v3218
        %v3220 = vpop.f32.mrb[0].mxu0
        %v3221 = vadd.f32 %v3028, %v3220
        %v3222 = vpop.f32.mrb[0].mxu0
        %v3223 = vadd.f32 %v3030, %v3222
        %3224 = vmatprep.mubr.bf16.mxu0 0
        %3225 = vmatmul.mubr.bf16.gmra.mrb[0].mxu0 %v1251
        %v3226 = vpop.f32.mrb[0].mxu0
        %v3227 = vadd.f32 %v3034, %v3226
        %v3228 = vpop.f32.mrb[0].mxu0
        %v3229 = vadd.f32 %v3036, %v3228
        %v3230 = vpop.f32.mrb[0].mxu0
        %v3231 = vadd.f32 %v3038, %v3230
        %v3232 = vpop.f32.mrb[0].mxu0
        %v3233 = vadd.f32 %v3040, %v3232
        %3234 = vmatprep.mubr.bf16.mxu0 0
        %3235 = vmatmul.mubr.bf16.gmra.mrb[0].mxu0 %v1258
        %v3236 = vpop.f32.mrb[0].mxu0
        %v3237 = vadd.f32 %v3044, %v3236
        %v3238 = vpop.f32.mrb[0].mxu0
        %v3239 = vadd.f32 %v3046, %v3238
        %v3240 = vpop.f32.mrb[0].mxu0
        %v3241 = vadd.f32 %v3048, %v3240
        %v3242 = vpop.f32.mrb[0].mxu0
        %v3243 = vadd.f32 %v3050, %v3242
        %3244 = vmatprep.mubr.bf16.mxu0 0
        %3245 = vmatmul.mubr.bf16.gmra.mrb[0].mxu0 %v1265
        %v3246 = vpop.f32.mrb[0].mxu0
        %v3247 = vadd.f32 %v3054, %v3246
        %v3248 = vpop.f32.mrb[0].mxu0
        %v3249 = vadd.f32 %v3056, %v3248
        %v3250 = vpop.f32.mrb[0].mxu0
        %v3251 = vadd.f32 %v3058, %v3250
        %v3252 = vpop.f32.mrb[0].mxu0
        %v3253 = vadd.f32 %v3060, %v3252
        %3254 = vmatprep.mubr.bf16.mxu0 0
        %3255 = vmatmul.mubr.bf16.gmra.mrb[0].mxu0 %v1272
        %v3256 = vpop.f32.mrb[0].mxu0
        %v3257 = vadd.f32 %v3064, %v3256
        %v3258 = vpop.f32.mrb[0].mxu0
        %v3259 = vadd.f32 %v3066, %v3258
        %v3260 = vpop.f32.mrb[0].mxu0
        %v3261 = vadd.f32 %v3068, %v3260
        %v3262 = vpop.f32.mrb[0].mxu0
        %v3263 = vadd.f32 %v3070, %v3262
        %3264 = vmatprep.mubr.bf16.mxu0 0
        %3265 = vmatmul.mubr.bf16.gmra.mrb[0].mxu0 %v1279
        %v3266 = vpop.f32.mrb[0].mxu0
        %v3267 = vadd.f32 %v3074, %v3266
        %v3268 = vpop.f32.mrb[0].mxu0
        %v3269 = vadd.f32 %v3076, %v3268
        %v3270 = vpop.f32.mrb[0].mxu0
        %v3271 = vadd.f32 %v3078, %v3270
        %v3272 = vpop.f32.mrb[0].mxu0
        %v3273 = vadd.f32 %v3080, %v3272
        %3274 = vmatprep.mubr.bf16.mxu0 0
        %3275 = vmatmul.mubr.bf16.gmra.mrb[0].mxu0 %v1286
        %v3276 = vpop.f32.mrb[0].mxu0
        %v3277 = vadd.f32 %v3084, %v3276
        %v3278 = vpop.f32.mrb[0].mxu0
        %v3279 = vadd.f32 %v3086, %v3278
        %v3280 = vpop.f32.mrb[0].mxu0
        %v3281 = vadd.f32 %v3088, %v3280
        %v3282 = vpop.f32.mrb[0].mxu0
        %v3283 = vadd.f32 %v3090, %v3282
        %3284 = vmatprep.mubr.bf16.mxu0 0
        %3285 = vmatmul.mubr.bf16.gmra.mrb[0].mxu0 %v1293
        %v3286 = vpop.f32.mrb[0].mxu0
        %v3287 = vadd.f32 %v3094, %v3286
        %v3288 = vpop.f32.mrb[0].mxu0
        %v3289 = vadd.f32 %v3096, %v3288
        %v3290 = vpop.f32.mrb[0].mxu0
        %v3291 = vadd.f32 %v3098, %v3290
        %v3292 = vpop.f32.mrb[0].mxu0
        %v3293 = vadd.f32 %v3100, %v3292
        %3294 = vmatprep.mubr.bf16.mxu0 0
        %3295 = vmatmul.mubr.bf16.gmra.mrb[0].mxu0 %v1300
        %v3296 = vpop.f32.mrb[0].mxu0
        %v3297 = vadd.f32 %v3104, %v3296
        %v3298 = vpop.f32.mrb[0].mxu0
        %v3299 = vadd.f32 %v3106, %v3298
        %v3300 = vpop.f32.mrb[0].mxu0
        %v3301 = vadd.f32 %v3108, %v3300
        %v3302 = vpop.f32.mrb[0].mxu0
        %v3303 = vadd.f32 %v3110, %v3302
        %3304 = vdwg.mxu0
        %3305 = vmatprep.subr.bf16.mxu0 %v2088
        %3306 = vmatpush1.bf16.msra.mxu0 %v2087
        %3307 = vmatprep.subr.bf16.mxu0 %v2092
        %3308 = vmatpush1.bf16.msra.mxu0 %v2091
        %3309 = vmatprep.subr.bf16.mxu0 %v2096
        %3310 = vmatpush1.bf16.msra.mxu0 %v2095
        %3311 = vmatprep.subr.bf16.mxu0 %v2100
        %3312 = vmatpush1.bf16.msra.mxu0 %v2099
        %3313 = vmatprep.subr.bf16.mxu0 %v2104
        %3314 = vmatpush1.bf16.msra.mxu0 %v2103
        %3315 = vmatprep.subr.bf16.mxu0 %v2108
        %3316 = vmatpush1.bf16.msra.mxu0 %v2107
        %3317 = vmatprep.subr.bf16.mxu0 %v2112
        %3318 = vmatpush1.bf16.msra.mxu0 %v2111
        %3319 = vmatprep.subr.bf16.mxu0 %v2116
        %3320 = vmatpush1.bf16.msra.mxu0 %v2115
        %3321 = vmatprep.subr.bf16.mxu0 %v2120
        %3322 = vmatpush1.bf16.msra.mxu0 %v2119
        %3323 = vmatprep.subr.bf16.mxu0 %v2124
        %3324 = vmatpush1.bf16.msra.mxu0 %v2123
        %3325 = vmatprep.subr.bf16.mxu0 %v2128
        %3326 = vmatpush1.bf16.msra.mxu0 %v2127
        %3327 = vmatprep.subr.bf16.mxu0 %v2132
        %3328 = vmatpush1.bf16.msra.mxu0 %v2131
        %3329 = vmatprep.subr.bf16.mxu0 %v2136
        %3330 = vmatpush1.bf16.msra.mxu0 %v2135
        %3331 = vmatprep.subr.bf16.mxu0 %v2140
        %3332 = vmatpush1.bf16.msra.mxu0 %v2139
        %3333 = vmatprep.subr.bf16.mxu0 %v2144
        %3334 = vmatpush1.bf16.msra.mxu0 %v2143
        %3335 = vmatprep.subr.bf16.mxu0 %v2148
        %3336 = vmatpush1.bf16.msra.mxu0 %v2147
        %3337 = vmatprep.mubr.bf16.mxu0 %v1190
        %3338 = vmatmul.mubr.bf16.gmra.mrb[0].mxu0 %v1189
        %v3339 = vpop.f32.mrb[0].mxu0
        %v3340 = vadd.f32 %v828, %v3339
        %v3341 = vpop.f32.mrb[0].mxu0
        %v3342 = vadd.f32 %v832, %v3341
        %v3343 = vpop.f32.mrb[0].mxu0
        %v3344 = vadd.f32 %v828, %v3343
        %v3345 = vpop.f32.mrb[0].mxu0
        %v3346 = vadd.f32 %v832, %v3345
        %3347 = vmatprep.mubr.bf16.mxu0 %v1197
        %3348 = vmatmul.mubr.bf16.gmra.mrb[0].mxu0 %v1196
        %v3349 = vpop.f32.mrb[0].mxu0
        %v3350 = vadd.f32 %v828, %v3349
        %v3351 = vpop.f32.mrb[0].mxu0
        %v3352 = vadd.f32 %v832, %v3351
        %v3353 = vpop.f32.mrb[0].mxu0
        %v3354 = vadd.f32 %v828, %v3353
        %v3355 = vpop.f32.mrb[0].mxu0
        %v3356 = vadd.f32 %v832, %v3355
        %3357 = vmatprep.mubr.bf16.mxu0 %v1204
        %3358 = vmatmul.mubr.bf16.gmra.mrb[0].mxu0 %v1203
        %v3359 = vpop.f32.mrb[0].mxu0
        %v3360 = vadd.f32 %v828, %v3359
        %v3361 = vpop.f32.mrb[0].mxu0
        %v3362 = vadd.f32 %v832, %v3361
        %v3363 = vpop.f32.mrb[0].mxu0
        %v3364 = vadd.f32 %v828, %v3363
        %v3365 = vpop.f32.mrb[0].mxu0
        %v3366 = vadd.f32 %v832, %v3365
        %3367 = vmatprep.mubr.bf16.mxu0 %v1211
        %3368 = vmatmul.mubr.bf16.gmra.mrb[0].mxu0 %v1210
        %v3369 = vpop.f32.mrb[0].mxu0
        %v3370 = vadd.f32 %v828, %v3369
        %v3371 = vpop.f32.mrb[0].mxu0
        %v3372 = vadd.f32 %v832, %v3371
        %v3373 = vpop.f32.mrb[0].mxu0
        %v3374 = vadd.f32 %v828, %v3373
        %v3375 = vpop.f32.mrb[0].mxu0
        %v3376 = vadd.f32 %v832, %v3375
        %3377 = vmatprep.mubr.bf16.mxu0 %v1218
        %3378 = vmatmul.mubr.bf16.gmra.mrb[0].mxu0 %v1217
        %v3379 = vpop.f32.mrb[0].mxu0
        %v3380 = vadd.f32 %v828, %v3379
        %v3381 = vpop.f32.mrb[0].mxu0
        %v3382 = vadd.f32 %v832, %v3381
        %v3383 = vpop.f32.mrb[0].mxu0
        %v3384 = vadd.f32 %v828, %v3383
        %v3385 = vpop.f32.mrb[0].mxu0
        %v3386 = vadd.f32 %v832, %v3385
        %3387 = vmatprep.mubr.bf16.mxu0 %v1225
        %3388 = vmatmul.mubr.bf16.gmra.mrb[0].mxu0 %v1224
        %v3389 = vpop.f32.mrb[0].mxu0
        %v3390 = vadd.f32 %v828, %v3389
        %v3391 = vpop.f32.mrb[0].mxu0
        %v3392 = vadd.f32 %v832, %v3391
        %v3393 = vpop.f32.mrb[0].mxu0
        %v3394 = vadd.f32 %v828, %v3393
        %v3395 = vpop.f32.mrb[0].mxu0
        %v3396 = vadd.f32 %v832, %v3395
        %3397 = vmatprep.mubr.bf16.mxu0 %v1232
        %3398 = vmatmul.mubr.bf16.gmra.mrb[0].mxu0 %v1231
        %v3399 = vpop.f32.mrb[0].mxu0
        %v3400 = vadd.f32 %v828, %v3399
        %v3401 = vpop.f32.mrb[0].mxu0
        %v3402 = vadd.f32 %v832, %v3401
        %v3403 = vpop.f32.mrb[0].mxu0
        %v3404 = vadd.f32 %v828, %v3403
        %v3405 = vpop.f32.mrb[0].mxu0
        %v3406 = vadd.f32 %v832, %v3405
        %3407 = vmatprep.mubr.bf16.mxu0 %v1239
        %3408 = vmatmul.mubr.bf16.gmra.mrb[0].mxu0 %v1238
        %v3409 = vpop.f32.mrb[0].mxu0
        %v3410 = vadd.f32 %v828, %v3409
        %v3411 = vpop.f32.mrb[0].mxu0
        %v3412 = vadd.f32 %v832, %v3411
        %v3413 = vpop.f32.mrb[0].mxu0
        %v3414 = vadd.f32 %v828, %v3413
        %v3415 = vpop.f32.mrb[0].mxu0
        %v3416 = vadd.f32 %v832, %v3415
        %3417 = vmatprep.mubr.bf16.mxu0 %v1246
        %3418 = vmatmul.mubr.bf16.gmra.mrb[0].mxu0 %v1245
        %v3419 = vpop.f32.mrb[0].mxu0
        %v3420 = vadd.f32 %v828, %v3419
        %v3421 = vpop.f32.mrb[0].mxu0
        %v3422 = vadd.f32 %v832, %v3421
        %v3423 = vpop.f32.mrb[0].mxu0
        %v3424 = vadd.f32 %v828, %v3423
        %v3425 = vpop.f32.mrb[0].mxu0
        %v3426 = vadd.f32 %v832, %v3425
        %3427 = vmatprep.mubr.bf16.mxu0 %v1253
        %3428 = vmatmul.mubr.bf16.gmra.mrb[0].mxu0 %v1252
        %v3429 = vpop.f32.mrb[0].mxu0
        %v3430 = vadd.f32 %v828, %v3429
        %v3431 = vpop.f32.mrb[0].mxu0
        %v3432 = vadd.f32 %v832, %v3431
        %v3433 = vpop.f32.mrb[0].mxu0
        %v3434 = vadd.f32 %v828, %v3433
        %v3435 = vpop.f32.mrb[0].mxu0
        %v3436 = vadd.f32 %v832, %v3435
        %3437 = vmatprep.mubr.bf16.mxu0 %v1260
        %3438 = vmatmul.mubr.bf16.gmra.mrb[0].mxu0 %v1259
        %v3439 = vpop.f32.mrb[0].mxu0
        %v3440 = vadd.f32 %v828, %v3439
        %v3441 = vpop.f32.mrb[0].mxu0
        %v3442 = vadd.f32 %v832, %v3441
        %v3443 = vpop.f32.mrb[0].mxu0
        %v3444 = vadd.f32 %v828, %v3443
        %v3445 = vpop.f32.mrb[0].mxu0
        %v3446 = vadd.f32 %v832, %v3445
        %3447 = vmatprep.mubr.bf16.mxu0 %v1267
        %3448 = vmatmul.mubr.bf16.gmra.mrb[0].mxu0 %v1266
        %v3449 = vpop.f32.mrb[0].mxu0
        %v3450 = vadd.f32 %v828, %v3449
        %v3451 = vpop.f32.mrb[0].mxu0
        %v3452 = vadd.f32 %v832, %v3451
        %v3453 = vpop.f32.mrb[0].mxu0
        %v3454 = vadd.f32 %v828, %v3453
        %v3455 = vpop.f32.mrb[0].mxu0
        %v3456 = vadd.f32 %v832, %v3455
        %3457 = vmatprep.mubr.bf16.mxu0 %v1274
        %3458 = vmatmul.mubr.bf16.gmra.mrb[0].mxu0 %v1273
        %v3459 = vpop.f32.mrb[0].mxu0
        %v3460 = vadd.f32 %v828, %v3459
        %v3461 = vpop.f32.mrb[0].mxu0
        %v3462 = vadd.f32 %v832, %v3461
        %v3463 = vpop.f32.mrb[0].mxu0
        %v3464 = vadd.f32 %v828, %v3463
        %v3465 = vpop.f32.mrb[0].mxu0
        %v3466 = vadd.f32 %v832, %v3465
        %3467 = vmatprep.mubr.bf16.mxu0 %v1281
        %3468 = vmatmul.mubr.bf16.gmra.mrb[0].mxu0 %v1280
        %v3469 = vpop.f32.mrb[0].mxu0
        %v3470 = vadd.f32 %v828, %v3469
        %v3471 = vpop.f32.mrb[0].mxu0
        %v3472 = vadd.f32 %v832, %v3471
        %v3473 = vpop.f32.mrb[0].mxu0
        %v3474 = vadd.f32 %v828, %v3473
        %v3475 = vpop.f32.mrb[0].mxu0
        %v3476 = vadd.f32 %v832, %v3475
        %3477 = vmatprep.mubr.bf16.mxu0 %v1288
        %3478 = vmatmul.mubr.bf16.gmra.mrb[0].mxu0 %v1287
        %v3479 = vpop.f32.mrb[0].mxu0
        %v3480 = vadd.f32 %v828, %v3479
        %v3481 = vpop.f32.mrb[0].mxu0
        %v3482 = vadd.f32 %v832, %v3481
        %v3483 = vpop.f32.mrb[0].mxu0
        %v3484 = vadd.f32 %v828, %v3483
        %v3485 = vpop.f32.mrb[0].mxu0
        %v3486 = vadd.f32 %v832, %v3485
        %3487 = vmatprep.mubr.bf16.mxu0 %v1295
        %3488 = vmatmul.mubr.bf16.gmra.mrb[0].mxu0 %v1294
        %v3489 = vpop.f32.mrb[0].mxu0
        %v3490 = vadd.f32 %v828, %v3489
        %v3491 = vpop.f32.mrb[0].mxu0
        %v3492 = vadd.f32 %v832, %v3491
        %v3493 = vpop.f32.mrb[0].mxu0
        %v3494 = vadd.f32 %v828, %v3493
        %v3495 = vpop.f32.mrb[0].mxu0
        %v3496 = vadd.f32 %v832, %v3495
        %3497 = vdwg.mxu0
        %3498 = vmatprep.subr.bf16.mxu0 %v2152
        %3499 = vmatpush1.bf16.msra.mxu0 %v2151
        %3500 = vmatprep.subr.bf16.mxu0 %v2156
        %3501 = vmatpush1.bf16.msra.mxu0 %v2155
        %3502 = vmatprep.subr.bf16.mxu0 %v2160
        %3503 = vmatpush1.bf16.msra.mxu0 %v2159
        %3504 = vmatprep.subr.bf16.mxu0 %v2164
        %3505 = vmatpush1.bf16.msra.mxu0 %v2163
        %3506 = vmatprep.subr.bf16.mxu0 %v2168
        %3507 = vmatpush1.bf16.msra.mxu0 %v2167
        %3508 = vmatprep.subr.bf16.mxu0 %v2172
        %3509 = vmatpush1.bf16.msra.mxu0 %v2171
        %3510 = vmatprep.subr.bf16.mxu0 %v2176
        %3511 = vmatpush1.bf16.msra.mxu0 %v2175
        %3512 = vmatprep.subr.bf16.mxu0 %v2180
        %3513 = vmatpush1.bf16.msra.mxu0 %v2179
        %3514 = vmatprep.subr.bf16.mxu0 %v2184
        %3515 = vmatpush1.bf16.msra.mxu0 %v2183
        %3516 = vmatprep.subr.bf16.mxu0 %v2188
        %3517 = vmatpush1.bf16.msra.mxu0 %v2187
        %3518 = vmatprep.subr.bf16.mxu0 %v2192
        %3519 = vmatpush1.bf16.msra.mxu0 %v2191
        %3520 = vmatprep.subr.bf16.mxu0 %v2196
        %3521 = vmatpush1.bf16.msra.mxu0 %v2195
        %3522 = vmatprep.subr.bf16.mxu0 %v2200
        %3523 = vmatpush1.bf16.msra.mxu0 %v2199
        %3524 = vmatprep.subr.bf16.mxu0 %v2204
        %3525 = vmatpush1.bf16.msra.mxu0 %v2203
        %3526 = vmatprep.subr.bf16.mxu0 %v2208
        %3527 = vmatpush1.bf16.msra.mxu0 %v2207
        %3528 = vmatprep.subr.bf16.mxu0 %v2212
        %3529 = vmatpush1.bf16.msra.mxu0 %v2211
        %3530 = vmatprep.mubr.bf16.mxu0 %v1192
        %3531 = vmatmul.mubr.bf16.gmra.mrb[0].mxu0 %v1191
        %v3532 = vpop.f32.mrb[0].mxu0
        %v3533 = vadd.f32 %v3340, %v3532
        %v3534 = vpop.f32.mrb[0].mxu0
        %v3535 = vadd.f32 %v3342, %v3534
        %v3536 = vpop.f32.mrb[0].mxu0
        %v3537 = vadd.f32 %v3344, %v3536
        %v3538 = vpop.f32.mrb[0].mxu0
        %v3539 = vadd.f32 %v3346, %v3538
        %3540 = vmatprep.mubr.bf16.mxu0 %v1199
        %3541 = vmatmul.mubr.bf16.gmra.mrb[0].mxu0 %v1198
        %v3542 = vpop.f32.mrb[0].mxu0
        %v3543 = vadd.f32 %v3350, %v3542
        %v3544 = vpop.f32.mrb[0].mxu0
        %v3545 = vadd.f32 %v3352, %v3544
        %v3546 = vpop.f32.mrb[0].mxu0
        %v3547 = vadd.f32 %v3354, %v3546
        %v3548 = vpop.f32.mrb[0].mxu0
        %v3549 = vadd.f32 %v3356, %v3548
        %3550 = vmatprep.mubr.bf16.mxu0 %v1206
        %3551 = vmatmul.mubr.bf16.gmra.mrb[0].mxu0 %v1205
        %v3552 = vpop.f32.mrb[0].mxu0
        %v3553 = vadd.f32 %v3360, %v3552
        %v3554 = vpop.f32.mrb[0].mxu0
        %v3555 = vadd.f32 %v3362, %v3554
        %v3556 = vpop.f32.mrb[0].mxu0
        %v3557 = vadd.f32 %v3364, %v3556
        %v3558 = vpop.f32.mrb[0].mxu0
        %v3559 = vadd.f32 %v3366, %v3558
        %3560 = vmatprep.mubr.bf16.mxu0 %v1213
        %3561 = vmatmul.mubr.bf16.gmra.mrb[0].mxu0 %v1212
        %v3562 = vpop.f32.mrb[0].mxu0
        %v3563 = vadd.f32 %v3370, %v3562
        %v3564 = vpop.f32.mrb[0].mxu0
        %v3565 = vadd.f32 %v3372, %v3564
        %v3566 = vpop.f32.mrb[0].mxu0
        %v3567 = vadd.f32 %v3374, %v3566
        %v3568 = vpop.f32.mrb[0].mxu0
        %v3569 = vadd.f32 %v3376, %v3568
        %3570 = vmatprep.mubr.bf16.mxu0 %v1220
        %3571 = vmatmul.mubr.bf16.gmra.mrb[0].mxu0 %v1219
        %v3572 = vpop.f32.mrb[0].mxu0
        %v3573 = vadd.f32 %v3380, %v3572
        %v3574 = vpop.f32.mrb[0].mxu0
        %v3575 = vadd.f32 %v3382, %v3574
        %v3576 = vpop.f32.mrb[0].mxu0
        %v3577 = vadd.f32 %v3384, %v3576
        %v3578 = vpop.f32.mrb[0].mxu0
        %v3579 = vadd.f32 %v3386, %v3578
        %3580 = vmatprep.mubr.bf16.mxu0 %v1227
        %3581 = vmatmul.mubr.bf16.gmra.mrb[0].mxu0 %v1226
        %v3582 = vpop.f32.mrb[0].mxu0
        %v3583 = vadd.f32 %v3390, %v3582
        %v3584 = vpop.f32.mrb[0].mxu0
        %v3585 = vadd.f32 %v3392, %v3584
        %v3586 = vpop.f32.mrb[0].mxu0
        %v3587 = vadd.f32 %v3394, %v3586
        %v3588 = vpop.f32.mrb[0].mxu0
        %v3589 = vadd.f32 %v3396, %v3588
        %3590 = vmatprep.mubr.bf16.mxu0 %v1234
        %3591 = vmatmul.mubr.bf16.gmra.mrb[0].mxu0 %v1233
        %v3592 = vpop.f32.mrb[0].mxu0
        %v3593 = vadd.f32 %v3400, %v3592
        %v3594 = vpop.f32.mrb[0].mxu0
        %v3595 = vadd.f32 %v3402, %v3594
        %v3596 = vpop.f32.mrb[0].mxu0
        %v3597 = vadd.f32 %v3404, %v3596
        %v3598 = vpop.f32.mrb[0].mxu0
        %v3599 = vadd.f32 %v3406, %v3598
        %3600 = vmatprep.mubr.bf16.mxu0 %v1241
        %3601 = vmatmul.mubr.bf16.gmra.mrb[0].mxu0 %v1240
        %v3602 = vpop.f32.mrb[0].mxu0
        %v3603 = vadd.f32 %v3410, %v3602
        %v3604 = vpop.f32.mrb[0].mxu0
        %v3605 = vadd.f32 %v3412, %v3604
        %v3606 = vpop.f32.mrb[0].mxu0
        %v3607 = vadd.f32 %v3414, %v3606
        %v3608 = vpop.f32.mrb[0].mxu0
        %v3609 = vadd.f32 %v3416, %v3608
        %3610 = vmatprep.mubr.bf16.mxu0 %v1248
        %3611 = vmatmul.mubr.bf16.gmra.mrb[0].mxu0 %v1247
        %v3612 = vpop.f32.mrb[0].mxu0
        %v3613 = vadd.f32 %v3420, %v3612
        %v3614 = vpop.f32.mrb[0].mxu0
        %v3615 = vadd.f32 %v3422, %v3614
        %v3616 = vpop.f32.mrb[0].mxu0
        %v3617 = vadd.f32 %v3424, %v3616
        %v3618 = vpop.f32.mrb[0].mxu0
        %v3619 = vadd.f32 %v3426, %v3618
        %3620 = vmatprep.mubr.bf16.mxu0 %v1255
        %3621 = vmatmul.mubr.bf16.gmra.mrb[0].mxu0 %v1254
        %v3622 = vpop.f32.mrb[0].mxu0
        %v3623 = vadd.f32 %v3430, %v3622
        %v3624 = vpop.f32.mrb[0].mxu0
        %v3625 = vadd.f32 %v3432, %v3624
        %v3626 = vpop.f32.mrb[0].mxu0
        %v3627 = vadd.f32 %v3434, %v3626
        %v3628 = vpop.f32.mrb[0].mxu0
        %v3629 = vadd.f32 %v3436, %v3628
        %3630 = vmatprep.mubr.bf16.mxu0 %v1262
        %3631 = vmatmul.mubr.bf16.gmra.mrb[0].mxu0 %v1261
        %v3632 = vpop.f32.mrb[0].mxu0
        %v3633 = vadd.f32 %v3440, %v3632
        %v3634 = vpop.f32.mrb[0].mxu0
        %v3635 = vadd.f32 %v3442, %v3634
        %v3636 = vpop.f32.mrb[0].mxu0
        %v3637 = vadd.f32 %v3444, %v3636
        %v3638 = vpop.f32.mrb[0].mxu0
        %v3639 = vadd.f32 %v3446, %v3638
        %3640 = vmatprep.mubr.bf16.mxu0 %v1269
        %3641 = vmatmul.mubr.bf16.gmra.mrb[0].mxu0 %v1268
        %v3642 = vpop.f32.mrb[0].mxu0
        %v3643 = vadd.f32 %v3450, %v3642
        %v3644 = vpop.f32.mrb[0].mxu0
        %v3645 = vadd.f32 %v3452, %v3644
        %v3646 = vpop.f32.mrb[0].mxu0
        %v3647 = vadd.f32 %v3454, %v3646
        %v3648 = vpop.f32.mrb[0].mxu0
        %v3649 = vadd.f32 %v3456, %v3648
        %3650 = vmatprep.mubr.bf16.mxu0 %v1276
        %3651 = vmatmul.mubr.bf16.gmra.mrb[0].mxu0 %v1275
        %v3652 = vpop.f32.mrb[0].mxu0
        %v3653 = vadd.f32 %v3460, %v3652
        %v3654 = vpop.f32.mrb[0].mxu0
        %v3655 = vadd.f32 %v3462, %v3654
        %v3656 = vpop.f32.mrb[0].mxu0
        %v3657 = vadd.f32 %v3464, %v3656
        %v3658 = vpop.f32.mrb[0].mxu0
        %v3659 = vadd.f32 %v3466, %v3658
        %3660 = vmatprep.mubr.bf16.mxu0 %v1283
        %3661 = vmatmul.mubr.bf16.gmra.mrb[0].mxu0 %v1282
        %v3662 = vpop.f32.mrb[0].mxu0
        %v3663 = vadd.f32 %v3470, %v3662
        %v3664 = vpop.f32.mrb[0].mxu0
        %v3665 = vadd.f32 %v3472, %v3664
        %v3666 = vpop.f32.mrb[0].mxu0
        %v3667 = vadd.f32 %v3474, %v3666
        %v3668 = vpop.f32.mrb[0].mxu0
        %v3669 = vadd.f32 %v3476, %v3668
        %3670 = vmatprep.mubr.bf16.mxu0 %v1290
        %3671 = vmatmul.mubr.bf16.gmra.mrb[0].mxu0 %v1289
        %v3672 = vpop.f32.mrb[0].mxu0
        %v3673 = vadd.f32 %v3480, %v3672
        %v3674 = vpop.f32.mrb[0].mxu0
        %v3675 = vadd.f32 %v3482, %v3674
        %v3676 = vpop.f32.mrb[0].mxu0
        %v3677 = vadd.f32 %v3484, %v3676
        %v3678 = vpop.f32.mrb[0].mxu0
        %v3679 = vadd.f32 %v3486, %v3678
        %3680 = vmatprep.mubr.bf16.mxu0 %v1297
        %3681 = vmatmul.mubr.bf16.gmra.mrb[0].mxu0 %v1296
        %v3682 = vpop.f32.mrb[0].mxu0
        %v3683 = vadd.f32 %v3490, %v3682
        %v3684 = vpop.f32.mrb[0].mxu0
        %v3685 = vadd.f32 %v3492, %v3684
        %v3686 = vpop.f32.mrb[0].mxu0
        %v3687 = vadd.f32 %v3494, %v3686
        %v3688 = vpop.f32.mrb[0].mxu0
        %v3689 = vadd.f32 %v3496, %v3688
        %3690 = vdwg.mxu0
        %3691 = vmatprep.subr.bf16.mxu0 %v2216
        %3692 = vmatpush1.bf16.msra.mxu0 %v2215
        %3693 = vmatprep.subr.bf16.mxu0 %v2220
        %3694 = vmatpush1.bf16.msra.mxu0 %v2219
        %3695 = vmatprep.subr.bf16.mxu0 %v2224
        %3696 = vmatpush1.bf16.msra.mxu0 %v2223
        %3697 = vmatprep.subr.bf16.mxu0 %v2228
        %3698 = vmatpush1.bf16.msra.mxu0 %v2227
        %3699 = vmatprep.subr.bf16.mxu0 %v2232
        %3700 = vmatpush1.bf16.msra.mxu0 %v2231
        %3701 = vmatprep.subr.bf16.mxu0 %v2236
        %3702 = vmatpush1.bf16.msra.mxu0 %v2235
        %3703 = vmatprep.subr.bf16.mxu0 %v2240
        %3704 = vmatpush1.bf16.msra.mxu0 %v2239
        %3705 = vmatprep.subr.bf16.mxu0 %v2244
        %3706 = vmatpush1.bf16.msra.mxu0 %v2243
        %3707 = vmatprep.subr.bf16.mxu0 %v2248
        %3708 = vmatpush1.bf16.msra.mxu0 %v2247
        %3709 = vmatprep.subr.bf16.mxu0 %v2252
        %3710 = vmatpush1.bf16.msra.mxu0 %v2251
        %3711 = vmatprep.subr.bf16.mxu0 %v2256
        %3712 = vmatpush1.bf16.msra.mxu0 %v2255
        %3713 = vmatprep.subr.bf16.mxu0 %v2260
        %3714 = vmatpush1.bf16.msra.mxu0 %v2259
        %3715 = vmatprep.subr.bf16.mxu0 %v2264
        %3716 = vmatpush1.bf16.msra.mxu0 %v2263
        %3717 = vmatprep.subr.bf16.mxu0 %v2268
        %3718 = vmatpush1.bf16.msra.mxu0 %v2267
        %3719 = vmatprep.subr.bf16.mxu0 %v2272
        %3720 = vmatpush1.bf16.msra.mxu0 %v2271
        %3721 = vmatprep.subr.bf16.mxu0 %v2276
        %3722 = vmatpush1.bf16.msra.mxu0 %v2275
        %3723 = vmatprep.mubr.bf16.mxu0 %v1194
        %3724 = vmatmul.mubr.bf16.gmra.mrb[0].mxu0 %v1193
        %v3725 = vpop.f32.mrb[0].mxu0
        %v3726 = vadd.f32 %v3533, %v3725
        %v3727 = vpop.f32.mrb[0].mxu0
        %v3728 = vadd.f32 %v3535, %v3727
        %v3729 = vpop.f32.mrb[0].mxu0
        %v3730 = vadd.f32 %v3537, %v3729
        %v3731 = vpop.f32.mrb[0].mxu0
        %v3732 = vadd.f32 %v3539, %v3731
        %3733 = vmatprep.mubr.bf16.mxu0 %v1201
        %3734 = vmatmul.mubr.bf16.gmra.mrb[0].mxu0 %v1200
        %v3735 = vpop.f32.mrb[0].mxu0
        %v3736 = vadd.f32 %v3543, %v3735
        %v3737 = vpop.f32.mrb[0].mxu0
        %v3738 = vadd.f32 %v3545, %v3737
        %v3739 = vpop.f32.mrb[0].mxu0
        %v3740 = vadd.f32 %v3547, %v3739
        %v3741 = vpop.f32.mrb[0].mxu0
        %v3742 = vadd.f32 %v3549, %v3741
        %3743 = vmatprep.mubr.bf16.mxu0 %v1208
        %3744 = vmatmul.mubr.bf16.gmra.mrb[0].mxu0 %v1207
        %v3745 = vpop.f32.mrb[0].mxu0
        %v3746 = vadd.f32 %v3553, %v3745
        %v3747 = vpop.f32.mrb[0].mxu0
        %v3748 = vadd.f32 %v3555, %v3747
        %v3749 = vpop.f32.mrb[0].mxu0
        %v3750 = vadd.f32 %v3557, %v3749
        %v3751 = vpop.f32.mrb[0].mxu0
        %v3752 = vadd.f32 %v3559, %v3751
        %3753 = vmatprep.mubr.bf16.mxu0 %v1215
        %3754 = vmatmul.mubr.bf16.gmra.mrb[0].mxu0 %v1214
        %v3755 = vpop.f32.mrb[0].mxu0
        %v3756 = vadd.f32 %v3563, %v3755
        %v3757 = vpop.f32.mrb[0].mxu0
        %v3758 = vadd.f32 %v3565, %v3757
        %v3759 = vpop.f32.mrb[0].mxu0
        %v3760 = vadd.f32 %v3567, %v3759
        %v3761 = vpop.f32.mrb[0].mxu0
        %v3762 = vadd.f32 %v3569, %v3761
        %3763 = vmatprep.mubr.bf16.mxu0 %v1222
        %3764 = vmatmul.mubr.bf16.gmra.mrb[0].mxu0 %v1221
        %v3765 = vpop.f32.mrb[0].mxu0
        %v3766 = vadd.f32 %v3573, %v3765
        %v3767 = vpop.f32.mrb[0].mxu0
        %v3768 = vadd.f32 %v3575, %v3767
        %v3769 = vpop.f32.mrb[0].mxu0
        %v3770 = vadd.f32 %v3577, %v3769
        %v3771 = vpop.f32.mrb[0].mxu0
        %v3772 = vadd.f32 %v3579, %v3771
        %3773 = vmatprep.mubr.bf16.mxu0 %v1229
        %3774 = vmatmul.mubr.bf16.gmra.mrb[0].mxu0 %v1228
        %v3775 = vpop.f32.mrb[0].mxu0
        %v3776 = vadd.f32 %v3583, %v3775
        %v3777 = vpop.f32.mrb[0].mxu0
        %v3778 = vadd.f32 %v3585, %v3777
        %v3779 = vpop.f32.mrb[0].mxu0
        %v3780 = vadd.f32 %v3587, %v3779
        %v3781 = vpop.f32.mrb[0].mxu0
        %v3782 = vadd.f32 %v3589, %v3781
        %3783 = vmatprep.mubr.bf16.mxu0 %v1236
        %3784 = vmatmul.mubr.bf16.gmra.mrb[0].mxu0 %v1235
        %v3785 = vpop.f32.mrb[0].mxu0
        %v3786 = vadd.f32 %v3593, %v3785
        %v3787 = vpop.f32.mrb[0].mxu0
        %v3788 = vadd.f32 %v3595, %v3787
        %v3789 = vpop.f32.mrb[0].mxu0
        %v3790 = vadd.f32 %v3597, %v3789
        %v3791 = vpop.f32.mrb[0].mxu0
        %v3792 = vadd.f32 %v3599, %v3791
        %3793 = vmatprep.mubr.bf16.mxu0 %v1243
        %3794 = vmatmul.mubr.bf16.gmra.mrb[0].mxu0 %v1242
        %v3795 = vpop.f32.mrb[0].mxu0
        %v3796 = vadd.f32 %v3603, %v3795
        %v3797 = vpop.f32.mrb[0].mxu0
        %v3798 = vadd.f32 %v3605, %v3797
        %v3799 = vpop.f32.mrb[0].mxu0
        %v3800 = vadd.f32 %v3607, %v3799
        %v3801 = vpop.f32.mrb[0].mxu0
        %v3802 = vadd.f32 %v3609, %v3801
        %3803 = vmatprep.mubr.bf16.mxu0 %v1250
        %3804 = vmatmul.mubr.bf16.gmra.mrb[0].mxu0 %v1249
        %v3805 = vpop.f32.mrb[0].mxu0
        %v3806 = vadd.f32 %v3613, %v3805
        %v3807 = vpop.f32.mrb[0].mxu0
        %v3808 = vadd.f32 %v3615, %v3807
        %v3809 = vpop.f32.mrb[0].mxu0
        %v3810 = vadd.f32 %v3617, %v3809
        %v3811 = vpop.f32.mrb[0].mxu0
        %v3812 = vadd.f32 %v3619, %v3811
        %3813 = vmatprep.mubr.bf16.mxu0 %v1257
        %3814 = vmatmul.mubr.bf16.gmra.mrb[0].mxu0 %v1256
        %v3815 = vpop.f32.mrb[0].mxu0
        %v3816 = vadd.f32 %v3623, %v3815
        %v3817 = vpop.f32.mrb[0].mxu0
        %v3818 = vadd.f32 %v3625, %v3817
        %v3819 = vpop.f32.mrb[0].mxu0
        %v3820 = vadd.f32 %v3627, %v3819
        %v3821 = vpop.f32.mrb[0].mxu0
        %v3822 = vadd.f32 %v3629, %v3821
        %3823 = vmatprep.mubr.bf16.mxu0 %v1264
        %3824 = vmatmul.mubr.bf16.gmra.mrb[0].mxu0 %v1263
        %v3825 = vpop.f32.mrb[0].mxu0
        %v3826 = vadd.f32 %v3633, %v3825
        %v3827 = vpop.f32.mrb[0].mxu0
        %v3828 = vadd.f32 %v3635, %v3827
        %v3829 = vpop.f32.mrb[0].mxu0
        %v3830 = vadd.f32 %v3637, %v3829
        %v3831 = vpop.f32.mrb[0].mxu0
        %v3832 = vadd.f32 %v3639, %v3831
        %3833 = vmatprep.mubr.bf16.mxu0 %v1271
        %3834 = vmatmul.mubr.bf16.gmra.mrb[0].mxu0 %v1270
        %v3835 = vpop.f32.mrb[0].mxu0
        %v3836 = vadd.f32 %v3643, %v3835
        %v3837 = vpop.f32.mrb[0].mxu0
        %v3838 = vadd.f32 %v3645, %v3837
        %v3839 = vpop.f32.mrb[0].mxu0
        %v3840 = vadd.f32 %v3647, %v3839
        %v3841 = vpop.f32.mrb[0].mxu0
        %v3842 = vadd.f32 %v3649, %v3841
        %3843 = vmatprep.mubr.bf16.mxu0 %v1278
        %3844 = vmatmul.mubr.bf16.gmra.mrb[0].mxu0 %v1277
        %v3845 = vpop.f32.mrb[0].mxu0
        %v3846 = vadd.f32 %v3653, %v3845
        %v3847 = vpop.f32.mrb[0].mxu0
        %v3848 = vadd.f32 %v3655, %v3847
        %v3849 = vpop.f32.mrb[0].mxu0
        %v3850 = vadd.f32 %v3657, %v3849
        %v3851 = vpop.f32.mrb[0].mxu0
        %v3852 = vadd.f32 %v3659, %v3851
        %3853 = vmatprep.mubr.bf16.mxu0 %v1285
        %3854 = vmatmul.mubr.bf16.gmra.mrb[0].mxu0 %v1284
        %v3855 = vpop.f32.mrb[0].mxu0
        %v3856 = vadd.f32 %v3663, %v3855
        %v3857 = vpop.f32.mrb[0].mxu0
        %v3858 = vadd.f32 %v3665, %v3857
        %v3859 = vpop.f32.mrb[0].mxu0
        %v3860 = vadd.f32 %v3667, %v3859
        %v3861 = vpop.f32.mrb[0].mxu0
        %v3862 = vadd.f32 %v3669, %v3861
        %3863 = vmatprep.mubr.bf16.mxu0 %v1292
        %3864 = vmatmul.mubr.bf16.gmra.mrb[0].mxu0 %v1291
        %v3865 = vpop.f32.mrb[0].mxu0
        %v3866 = vadd.f32 %v3673, %v3865
        %v3867 = vpop.f32.mrb[0].mxu0
        %v3868 = vadd.f32 %v3675, %v3867
        %v3869 = vpop.f32.mrb[0].mxu0
        %v3870 = vadd.f32 %v3677, %v3869
        %v3871 = vpop.f32.mrb[0].mxu0
        %v3872 = vadd.f32 %v3679, %v3871
        %3873 = vmatprep.mubr.bf16.mxu0 %v1299
        %3874 = vmatmul.mubr.bf16.gmra.mrb[0].mxu0 %v1298
        %v3875 = vpop.f32.mrb[0].mxu0
        %v3876 = vadd.f32 %v3683, %v3875
        %v3877 = vpop.f32.mrb[0].mxu0
        %v3878 = vadd.f32 %v3685, %v3877
        %v3879 = vpop.f32.mrb[0].mxu0
        %v3880 = vadd.f32 %v3687, %v3879
        %v3881 = vpop.f32.mrb[0].mxu0
        %v3882 = vadd.f32 %v3689, %v3881
        %3883 = vdwg.mxu0
        %3884 = vmatprep.subr.bf16.mxu0 %v2280
        %3885 = vmatpush1.bf16.msra.mxu0 %v2279
        %3886 = vmatprep.subr.bf16.mxu0 %v2284
        %3887 = vmatpush1.bf16.msra.mxu0 %v2283
        %3888 = vmatprep.subr.bf16.mxu0 %v2288
        %3889 = vmatpush1.bf16.msra.mxu0 %v2287
        %3890 = vmatprep.subr.bf16.mxu0 %v2292
        %3891 = vmatpush1.bf16.msra.mxu0 %v2291
        %3892 = vmatprep.subr.bf16.mxu0 %v2296
        %3893 = vmatpush1.bf16.msra.mxu0 %v2295
        %3894 = vmatprep.subr.bf16.mxu0 %v2300
        %3895 = vmatpush1.bf16.msra.mxu0 %v2299
        %3896 = vmatprep.subr.bf16.mxu0 %v2304
        %3897 = vmatpush1.bf16.msra.mxu0 %v2303
        %3898 = vmatprep.subr.bf16.mxu0 %v2308
        %3899 = vmatpush1.bf16.msra.mxu0 %v2307
        %3900 = vmatprep.subr.bf16.mxu0 0
        %3901 = vmatpush1.bf16.msra.mxu0 0
        %3902 = vmatprep.subr.bf16.mxu0 0
        %3903 = vmatpush1.bf16.msra.mxu0 0
        %3904 = vmatprep.subr.bf16.mxu0 0
        %3905 = vmatpush1.bf16.msra.mxu0 0
        %3906 = vmatprep.subr.bf16.mxu0 0
        %3907 = vmatpush1.bf16.msra.mxu0 0
        %3908 = vmatprep.subr.bf16.mxu0 0
        %3909 = vmatpush1.bf16.msra.mxu0 0
        %3910 = vmatprep.subr.bf16.mxu0 0
        %3911 = vmatpush1.bf16.msra.mxu0 0
        %3912 = vmatprep.subr.bf16.mxu0 0
        %3913 = vmatpush1.bf16.msra.mxu0 0
        %3914 = vmatprep.subr.bf16.mxu0 0
        %3915 = vmatpush1.bf16.msra.mxu0 0
        %3916 = vmatprep.mubr.bf16.mxu0 0
        %3917 = vmatmul.mubr.bf16.gmra.mrb[0].mxu0 %v1195
        %v3918 = vpop.f32.mrb[0].mxu0
        %v3919 = vadd.f32 %v3726, %v3918
        %v3920 = vpop.f32.mrb[0].mxu0
        %v3921 = vadd.f32 %v3728, %v3920
        %v3922 = vpop.f32.mrb[0].mxu0
        %v3923 = vadd.f32 %v3730, %v3922
        %v3924 = vpop.f32.mrb[0].mxu0
        %v3925 = vadd.f32 %v3732, %v3924
        %3926 = vmatprep.mubr.bf16.mxu0 0
        %3927 = vmatmul.mubr.bf16.gmra.mrb[0].mxu0 %v1202
        %v3928 = vpop.f32.mrb[0].mxu0
        %v3929 = vadd.f32 %v3736, %v3928
        %v3930 = vpop.f32.mrb[0].mxu0
        %v3931 = vadd.f32 %v3738, %v3930
        %v3932 = vpop.f32.mrb[0].mxu0
        %v3933 = vadd.f32 %v3740, %v3932
        %v3934 = vpop.f32.mrb[0].mxu0
        %v3935 = vadd.f32 %v3742, %v3934
        %3936 = vmatprep.mubr.bf16.mxu0 0
        %3937 = vmatmul.mubr.bf16.gmra.mrb[0].mxu0 %v1209
        %v3938 = vpop.f32.mrb[0].mxu0
        %v3939 = vadd.f32 %v3746, %v3938
        %v3940 = vpop.f32.mrb[0].mxu0
        %v3941 = vadd.f32 %v3748, %v3940
        %v3942 = vpop.f32.mrb[0].mxu0
        %v3943 = vadd.f32 %v3750, %v3942
        %v3944 = vpop.f32.mrb[0].mxu0
        %v3945 = vadd.f32 %v3752, %v3944
        %3946 = vmatprep.mubr.bf16.mxu0 0
        %3947 = vmatmul.mubr.bf16.gmra.mrb[0].mxu0 %v1216
        %v3948 = vpop.f32.mrb[0].mxu0
        %v3949 = vadd.f32 %v3756, %v3948
        %v3950 = vpop.f32.mrb[0].mxu0
        %v3951 = vadd.f32 %v3758, %v3950
        %v3952 = vpop.f32.mrb[0].mxu0
        %v3953 = vadd.f32 %v3760, %v3952
        %v3954 = vpop.f32.mrb[0].mxu0
        %v3955 = vadd.f32 %v3762, %v3954
        %3956 = vmatprep.mubr.bf16.mxu0 0
        %3957 = vmatmul.mubr.bf16.gmra.mrb[0].mxu0 %v1223
        %v3958 = vpop.f32.mrb[0].mxu0
        %v3959 = vadd.f32 %v3766, %v3958
        %v3960 = vpop.f32.mrb[0].mxu0
        %v3961 = vadd.f32 %v3768, %v3960
        %v3962 = vpop.f32.mrb[0].mxu0
        %v3963 = vadd.f32 %v3770, %v3962
        %v3964 = vpop.f32.mrb[0].mxu0
        %v3965 = vadd.f32 %v3772, %v3964
        %3966 = vmatprep.mubr.bf16.mxu0 0
        %3967 = vmatmul.mubr.bf16.gmra.mrb[0].mxu0 %v1230
        %v3968 = vpop.f32.mrb[0].mxu0
        %v3969 = vadd.f32 %v3776, %v3968
        %v3970 = vpop.f32.mrb[0].mxu0
        %v3971 = vadd.f32 %v3778, %v3970
        %v3972 = vpop.f32.mrb[0].mxu0
        %v3973 = vadd.f32 %v3780, %v3972
        %v3974 = vpop.f32.mrb[0].mxu0
        %v3975 = vadd.f32 %v3782, %v3974
        %3976 = vmatprep.mubr.bf16.mxu0 0
        %3977 = vmatmul.mubr.bf16.gmra.mrb[0].mxu0 %v1237
        %v3978 = vpop.f32.mrb[0].mxu0
        %v3979 = vadd.f32 %v3786, %v3978
        %v3980 = vpop.f32.mrb[0].mxu0
        %v3981 = vadd.f32 %v3788, %v3980
        %v3982 = vpop.f32.mrb[0].mxu0
        %v3983 = vadd.f32 %v3790, %v3982
        %v3984 = vpop.f32.mrb[0].mxu0
        %v3985 = vadd.f32 %v3792, %v3984
        %3986 = vmatprep.mubr.bf16.mxu0 0
        %3987 = vmatmul.mubr.bf16.gmra.mrb[0].mxu0 %v1244
        %v3988 = vpop.f32.mrb[0].mxu0
        %v3989 = vadd.f32 %v3796, %v3988
        %v3990 = vpop.f32.mrb[0].mxu0
        %v3991 = vadd.f32 %v3798, %v3990
        %v3992 = vpop.f32.mrb[0].mxu0
        %v3993 = vadd.f32 %v3800, %v3992
        %v3994 = vpop.f32.mrb[0].mxu0
        %v3995 = vadd.f32 %v3802, %v3994
        %3996 = vmatprep.mubr.bf16.mxu0 0
        %3997 = vmatmul.mubr.bf16.gmra.mrb[0].mxu0 %v1251
        %v3998 = vpop.f32.mrb[0].mxu0
        %v3999 = vadd.f32 %v3806, %v3998
        %v4000 = vpop.f32.mrb[0].mxu0
        %v4001 = vadd.f32 %v3808, %v4000
        %v4002 = vpop.f32.mrb[0].mxu0
        %v4003 = vadd.f32 %v3810, %v4002
        %v4004 = vpop.f32.mrb[0].mxu0
        %v4005 = vadd.f32 %v3812, %v4004
        %4006 = vmatprep.mubr.bf16.mxu0 0
        %4007 = vmatmul.mubr.bf16.gmra.mrb[0].mxu0 %v1258
        %v4008 = vpop.f32.mrb[0].mxu0
        %v4009 = vadd.f32 %v3816, %v4008
        %v4010 = vpop.f32.mrb[0].mxu0
        %v4011 = vadd.f32 %v3818, %v4010
        %v4012 = vpop.f32.mrb[0].mxu0
        %v4013 = vadd.f32 %v3820, %v4012
        %v4014 = vpop.f32.mrb[0].mxu0
        %v4015 = vadd.f32 %v3822, %v4014
        %4016 = vmatprep.mubr.bf16.mxu0 0
        %4017 = vmatmul.mubr.bf16.gmra.mrb[0].mxu0 %v1265
        %v4018 = vpop.f32.mrb[0].mxu0
        %v4019 = vadd.f32 %v3826, %v4018
        %v4020 = vpop.f32.mrb[0].mxu0
        %v4021 = vadd.f32 %v3828, %v4020
        %v4022 = vpop.f32.mrb[0].mxu0
        %v4023 = vadd.f32 %v3830, %v4022
        %v4024 = vpop.f32.mrb[0].mxu0
        %v4025 = vadd.f32 %v3832, %v4024
        %4026 = vmatprep.mubr.bf16.mxu0 0
        %4027 = vmatmul.mubr.bf16.gmra.mrb[0].mxu0 %v1272
        %v4028 = vpop.f32.mrb[0].mxu0
        %v4029 = vadd.f32 %v3836, %v4028
        %v4030 = vpop.f32.mrb[0].mxu0
        %v4031 = vadd.f32 %v3838, %v4030
        %v4032 = vpop.f32.mrb[0].mxu0
        %v4033 = vadd.f32 %v3840, %v4032
        %v4034 = vpop.f32.mrb[0].mxu0
        %v4035 = vadd.f32 %v3842, %v4034
        %4036 = vmatprep.mubr.bf16.mxu0 0
        %4037 = vmatmul.mubr.bf16.gmra.mrb[0].mxu0 %v1279
        %v4038 = vpop.f32.mrb[0].mxu0
        %v4039 = vadd.f32 %v3846, %v4038
        %v4040 = vpop.f32.mrb[0].mxu0
        %v4041 = vadd.f32 %v3848, %v4040
        %v4042 = vpop.f32.mrb[0].mxu0
        %v4043 = vadd.f32 %v3850, %v4042
        %v4044 = vpop.f32.mrb[0].mxu0
        %v4045 = vadd.f32 %v3852, %v4044
        %4046 = vmatprep.mubr.bf16.mxu0 0
        %4047 = vmatmul.mubr.bf16.gmra.mrb[0].mxu0 %v1286
        %v4048 = vpop.f32.mrb[0].mxu0
        %v4049 = vadd.f32 %v3856, %v4048
        %v4050 = vpop.f32.mrb[0].mxu0
        %v4051 = vadd.f32 %v3858, %v4050
        %v4052 = vpop.f32.mrb[0].mxu0
        %v4053 = vadd.f32 %v3860, %v4052
        %v4054 = vpop.f32.mrb[0].mxu0
        %v4055 = vadd.f32 %v3862, %v4054
        %4056 = vmatprep.mubr.bf16.mxu0 0
        %4057 = vmatmul.mubr.bf16.gmra.mrb[0].mxu0 %v1293
        %v4058 = vpop.f32.mrb[0].mxu0
        %v4059 = vadd.f32 %v3866, %v4058
        %v4060 = vpop.f32.mrb[0].mxu0
        %v4061 = vadd.f32 %v3868, %v4060
        %v4062 = vpop.f32.mrb[0].mxu0
        %v4063 = vadd.f32 %v3870, %v4062
        %v4064 = vpop.f32.mrb[0].mxu0
        %v4065 = vadd.f32 %v3872, %v4064
        %4066 = vmatprep.mubr.bf16.mxu0 0
        %4067 = vmatmul.mubr.bf16.gmra.mrb[0].mxu0 %v1300
        %v4068 = vpop.f32.mrb[0].mxu0
        %v4069 = vadd.f32 %v3876, %v4068
        %v4070 = vpop.f32.mrb[0].mxu0
        %v4071 = vadd.f32 %v3878, %v4070
        %v4072 = vpop.f32.mrb[0].mxu0
        %v4073 = vadd.f32 %v3880, %v4072
        %v4074 = vpop.f32.mrb[0].mxu0
        %v4075 = vadd.f32 %v3882, %v4074
        %4076 = vdwg.mxu0
        %v4077 = vmax.f32 %v3147, 0.0
        %v4078 = vmax.f32 %v3149, 0.0
        %v4079 = vmax.f32 %v3919, 0.0
        %v4080 = vmax.f32 %v3921, 0.0
        %v4081 = vmax.f32 %v3151, 0.0
        %v4082 = vmax.f32 %v3153, 0.0
        %v4083 = vmax.f32 %v3923, 0.0
        %v4084 = vmax.f32 %v3925, 0.0
        %v4085 = vmax.f32 %v3157, 0.0
        %v4086 = vmax.f32 %v3159, 0.0
        %v4087 = vmax.f32 %v3929, 0.0
        %v4088 = vmax.f32 %v3931, 0.0
        %v4089 = vmax.f32 %v3161, 0.0
        %v4090 = vmax.f32 %v3163, 0.0
        %v4091 = vmax.f32 %v3933, 0.0
        %v4092 = vmax.f32 %v3935, 0.0
        %v4093 = vmax.f32 %v3167, 0.0
        %v4094 = vmax.f32 %v3169, 0.0
        %v4095 = vmax.f32 %v3939, 0.0
        %v4096 = vmax.f32 %v3941, 0.0
        %v4097 = vmax.f32 %v3171, 0.0
        %v4098 = vmax.f32 %v3173, 0.0
        %v4099 = vmax.f32 %v3943, 0.0
        %v4100 = vmax.f32 %v3945, 0.0
        %v4101 = vmax.f32 %v3177, 0.0
        %v4102 = vmax.f32 %v3179, 0.0
        %v4103 = vmax.f32 %v3949, 0.0
        %v4104 = vmax.f32 %v3951, 0.0
        %v4105 = vmax.f32 %v3181, 0.0
        %v4106 = vmax.f32 %v3183, 0.0
        %v4107 = vmax.f32 %v3953, 0.0
        %v4108 = vmax.f32 %v3955, 0.0
        %v4109 = vmax.f32 %v3187, 0.0
        %v4110 = vmax.f32 %v3189, 0.0
        %v4111 = vmax.f32 %v3959, 0.0
        %v4112 = vmax.f32 %v3961, 0.0
        %v4113 = vmax.f32 %v3191, 0.0
        %v4114 = vmax.f32 %v3193, 0.0
        %v4115 = vmax.f32 %v3963, 0.0
        %v4116 = vmax.f32 %v3965, 0.0
        %v4117 = vmax.f32 %v3197, 0.0
        %v4118 = vmax.f32 %v3199, 0.0
        %v4119 = vmax.f32 %v3969, 0.0
        %v4120 = vmax.f32 %v3971, 0.0
        %v4121 = vmax.f32 %v3201, 0.0
        %v4122 = vmax.f32 %v3203, 0.0
        %v4123 = vmax.f32 %v3973, 0.0
        %v4124 = vmax.f32 %v3975, 0.0
        %v4125 = vmax.f32 %v3207, 0.0
        %v4126 = vmax.f32 %v3209, 0.0
        %v4127 = vmax.f32 %v3979, 0.0
        %v4128 = vmax.f32 %v3981, 0.0
        %v4129 = vmax.f32 %v3211, 0.0
        %v4130 = vmax.f32 %v3213, 0.0
        %v4131 = vmax.f32 %v3983, 0.0
        %v4132 = vmax.f32 %v3985, 0.0
        %v4133 = vmax.f32 %v3217, 0.0
        %v4134 = vmax.f32 %v3219, 0.0
        %v4135 = vmax.f32 %v3989, 0.0
        %v4136 = vmax.f32 %v3991, 0.0
        %v4137 = vmax.f32 %v3221, 0.0
        %v4138 = vmax.f32 %v3223, 0.0
        %v4139 = vmax.f32 %v3993, 0.0
        %v4140 = vmax.f32 %v3995, 0.0
        %v4141 = vmax.f32 %v3227, 0.0
        %v4142 = vmax.f32 %v3229, 0.0
        %v4143 = vmax.f32 %v3999, 0.0
        %v4144 = vmax.f32 %v4001, 0.0
        %v4145 = vmax.f32 %v3231, 0.0
        %v4146 = vmax.f32 %v3233, 0.0
        %v4147 = vmax.f32 %v4003, 0.0
        %v4148 = vmax.f32 %v4005, 0.0
        %v4149 = vmax.f32 %v3237, 0.0
        %v4150 = vmax.f32 %v3239, 0.0
        %v4151 = vmax.f32 %v4009, 0.0
        %v4152 = vmax.f32 %v4011, 0.0
        %v4153 = vmax.f32 %v3241, 0.0
        %v4154 = vmax.f32 %v3243, 0.0
        %v4155 = vmax.f32 %v4013, 0.0
        %v4156 = vmax.f32 %v4015, 0.0
        %v4157 = vmax.f32 %v3247, 0.0
        %v4158 = vmax.f32 %v3249, 0.0
        %v4159 = vmax.f32 %v4019, 0.0
        %v4160 = vmax.f32 %v4021, 0.0
        %v4161 = vmax.f32 %v3251, 0.0
        %v4162 = vmax.f32 %v3253, 0.0
        %v4163 = vmax.f32 %v4023, 0.0
        %v4164 = vmax.f32 %v4025, 0.0
        %v4165 = vmax.f32 %v3257, 0.0
        %v4166 = vmax.f32 %v3259, 0.0
        %v4167 = vmax.f32 %v4029, 0.0
        %v4168 = vmax.f32 %v4031, 0.0
        %v4169 = vmax.f32 %v3261, 0.0
        %v4170 = vmax.f32 %v3263, 0.0
        %v4171 = vmax.f32 %v4033, 0.0
        %v4172 = vmax.f32 %v4035, 0.0
        %v4173 = vmax.f32 %v3267, 0.0
        %v4174 = vmax.f32 %v3269, 0.0
        %v4175 = vmax.f32 %v4039, 0.0
        %v4176 = vmax.f32 %v4041, 0.0
        %v4177 = vmax.f32 %v3271, 0.0
        %v4178 = vmax.f32 %v3273, 0.0
        %v4179 = vmax.f32 %v4043, 0.0
        %v4180 = vmax.f32 %v4045, 0.0
        %v4181 = vmax.f32 %v3277, 0.0
        %v4182 = vmax.f32 %v3279, 0.0
        %v4183 = vmax.f32 %v4049, 0.0
        %v4184 = vmax.f32 %v4051, 0.0
        %v4185 = vmax.f32 %v3281, 0.0
        %v4186 = vmax.f32 %v3283, 0.0
        %v4187 = vmax.f32 %v4053, 0.0
        %v4188 = vmax.f32 %v4055, 0.0
        %v4189 = vmax.f32 %v3287, 0.0
        %v4190 = vmax.f32 %v3289, 0.0
        %v4191 = vmax.f32 %v4059, 0.0
        %v4192 = vmax.f32 %v4061, 0.0
        %v4193 = vmax.f32 %v3291, 0.0
        %v4194 = vmax.f32 %v3293, 0.0
        %v4195 = vmax.f32 %v4063, 0.0
        %v4196 = vmax.f32 %v4065, 0.0
        %v4197 = vmax.f32 %v3297, 0.0
        %v4198 = vmax.f32 %v3299, 0.0
        %v4199 = vmax.f32 %v4069, 0.0
        %v4200 = vmax.f32 %v4071, 0.0
        %v4201 = vmax.f32 %v3301, 0.0
        %v4202 = vmax.f32 %v3303, 0.0
        %v4203 = vmax.f32 %v4073, 0.0
        %v4204 = vmax.f32 %v4075, 0.0
        %v4205 = vpack.c.bf16 %v4081, %v4077
        %v4206 = vpack.c.bf16 %v4082, %v4078
        %v4207 = vpack.c.bf16 %v4083, %v4079
        %v4208 = vpack.c.bf16 %v4084, %v4080
        %v4209 = vpack.c.bf16 %v4089, %v4085
        %v4210 = vpack.c.bf16 %v4090, %v4086
        %v4211 = vpack.c.bf16 %v4091, %v4087
        %v4212 = vpack.c.bf16 %v4092, %v4088
        %v4213 = vpack.c.bf16 %v4097, %v4093
        %v4214 = vpack.c.bf16 %v4098, %v4094
        %v4215 = vpack.c.bf16 %v4099, %v4095
        %v4216 = vpack.c.bf16 %v4100, %v4096
        %v4217 = vpack.c.bf16 %v4105, %v4101
        %v4218 = vpack.c.bf16 %v4106, %v4102
        %v4219 = vpack.c.bf16 %v4107, %v4103
        %v4220 = vpack.c.bf16 %v4108, %v4104
        %v4221 = vpack.c.bf16 %v4113, %v4109
        %v4222 = vpack.c.bf16 %v4114, %v4110
        %v4223 = vpack.c.bf16 %v4115, %v4111
        %v4224 = vpack.c.bf16 %v4116, %v4112
        %v4225 = vpack.c.bf16 %v4121, %v4117
        %v4226 = vpack.c.bf16 %v4122, %v4118
        %v4227 = vpack.c.bf16 %v4123, %v4119
        %v4228 = vpack.c.bf16 %v4124, %v4120
        %v4229 = vpack.c.bf16 %v4129, %v4125
        %v4230 = vpack.c.bf16 %v4130, %v4126
        %v4231 = vpack.c.bf16 %v4131, %v4127
        %v4232 = vpack.c.bf16 %v4132, %v4128
        %v4233 = vpack.c.bf16 %v4137, %v4133
        %v4234 = vpack.c.bf16 %v4138, %v4134
        %v4235 = vpack.c.bf16 %v4139, %v4135
        %v4236 = vpack.c.bf16 %v4140, %v4136
        %v4237 = vpack.c.bf16 %v4145, %v4141
        %v4238 = vpack.c.bf16 %v4146, %v4142
        %v4239 = vpack.c.bf16 %v4147, %v4143
        %v4240 = vpack.c.bf16 %v4148, %v4144
        %v4241 = vpack.c.bf16 %v4153, %v4149
        %v4242 = vpack.c.bf16 %v4154, %v4150
        %v4243 = vpack.c.bf16 %v4155, %v4151
        %v4244 = vpack.c.bf16 %v4156, %v4152
        %v4245 = vpack.c.bf16 %v4161, %v4157
        %v4246 = vpack.c.bf16 %v4162, %v4158
        %v4247 = vpack.c.bf16 %v4163, %v4159
        %v4248 = vpack.c.bf16 %v4164, %v4160
        %v4249 = vpack.c.bf16 %v4169, %v4165
        %v4250 = vpack.c.bf16 %v4170, %v4166
        %v4251 = vpack.c.bf16 %v4171, %v4167
        %v4252 = vpack.c.bf16 %v4172, %v4168
        %v4253 = vpack.c.bf16 %v4177, %v4173
        %v4254 = vpack.c.bf16 %v4178, %v4174
        %v4255 = vpack.c.bf16 %v4179, %v4175
        %v4256 = vpack.c.bf16 %v4180, %v4176
        %v4257 = vpack.c.bf16 %v4185, %v4181
        %v4258 = vpack.c.bf16 %v4186, %v4182
        %v4259 = vpack.c.bf16 %v4187, %v4183
        %v4260 = vpack.c.bf16 %v4188, %v4184
        %v4261 = vpack.c.bf16 %v4193, %v4189
        %v4262 = vpack.c.bf16 %v4194, %v4190
        %v4263 = vpack.c.bf16 %v4195, %v4191
        %v4264 = vpack.c.bf16 %v4196, %v4192
        %v4265 = vpack.c.bf16 %v4201, %v4197
        %v4266 = vpack.c.bf16 %v4202, %v4198
        %v4267 = vpack.c.bf16 %v4203, %v4199
        %v4268 = vpack.c.bf16 %v4204, %v4200
        %v4269 = vld [vmem:[#allocation8] sm:$0xf]
        %v4270 = vld [vmem:[#allocation8 + $0x4] sm:$0xf]
        %v4271 = vld [vmem:[#allocation8 + $0x8] sm:$0xf]
        %v4272 = vld [vmem:[#allocation8 + $0xc] sm:$0xf]
        %v4273 = vld [vmem:[#allocation8 + $0x10] sm:$0xf]
        %v4274 = vld [vmem:[#allocation8 + $0x14] sm:$0xf]
        %v4275 = vld [vmem:[#allocation8 + $0x18] sm:$0xf]
        %v4276 = vld [vmem:[#allocation8 + $0x1c] sm:$0xf]
        %v4277 = vld [vmem:[#allocation8 + $0x20] sm:$0xf]
        %v4278 = vld [vmem:[#allocation8 + $0x24] sm:$0xf]
        %v4279 = vld [vmem:[#allocation8 + $0x28] sm:$0xf]
        %v4280 = vld [vmem:[#allocation8 + $0x2c] sm:$0xf]
        %v4281 = vld [vmem:[#allocation8 + $0x30] sm:$0xf]
        %v4282 = vld [vmem:[#allocation8 + $0x34] sm:$0xf]
        %v4283 = vld [vmem:[#allocation8 + $0x38] sm:$0xf]
        %v4284 = vld [vmem:[#allocation8 + $0x3c] sm:$0xf]
        %v4285 = vld [vmem:[#allocation8 + $0x40] sm:$0xf]
        %v4286 = vld [vmem:[#allocation8 + $0x44] sm:$0xf]
        %v4287 = vld [vmem:[#allocation8 + $0x48] sm:$0xf]
        %v4288 = vld [vmem:[#allocation8 + $0x4c] sm:$0xf]
        %v4289 = vld [vmem:[#allocation8 + $0x50] sm:$0xf]
        %v4290 = vld [vmem:[#allocation8 + $0x54] sm:$0xf]
        %v4291 = vld [vmem:[#allocation8 + $0x58] sm:$0xf]
        %v4292 = vld [vmem:[#allocation8 + $0x5c] sm:$0xf]
        %v4293 = vld [vmem:[#allocation8 + $0x60] sm:$0xf]
        %v4294 = vld [vmem:[#allocation8 + $0x64] sm:$0xf]
        %v4295 = vld [vmem:[#allocation8 + $0x68] sm:$0xf]
        %v4296 = vld [vmem:[#allocation8 + $0x6c] sm:$0xf]
        %v4297 = vld [vmem:[#allocation8 + $0x70] sm:$0xf]
        %v4298 = vld [vmem:[#allocation8 + $0x74] sm:$0xf]
        %v4299 = vld [vmem:[#allocation8 + $0x78] sm:$0xf]
        %v4300 = vld [vmem:[#allocation8 + $0x7c] sm:$0xf]
        %v4301 = vld [vmem:[#allocation8 + $0x80] sm:$0xf]
        %v4302 = vld [vmem:[#allocation8 + $0x84] sm:$0xf]
        %v4303 = vld [vmem:[#allocation8 + $0x88] sm:$0xf]
        %v4304 = vld [vmem:[#allocation8 + $0x8c] sm:$0xf]
        %v4305 = vld [vmem:[#allocation8 + $0x90] sm:$0xf]
        %v4306 = vld [vmem:[#allocation8 + $0x94] sm:$0xf]
        %v4307 = vld [vmem:[#allocation8 + $0x98] sm:$0xf]
        %v4308 = vld [vmem:[#allocation8 + $0x9c] sm:$0xf]
        %v4309 = vld [vmem:[#allocation8 + $0xa0] sm:$0xf]
        %v4310 = vld [vmem:[#allocation8 + $0xa4] sm:$0xf]
        %v4311 = vld [vmem:[#allocation8 + $0xa8] sm:$0xf]
        %v4312 = vld [vmem:[#allocation8 + $0xac] sm:$0xf]
        %v4313 = vld [vmem:[#allocation8 + $0xb0] sm:$0xf]
        %v4314 = vld [vmem:[#allocation8 + $0xb4] sm:$0xf]
        %v4315 = vld [vmem:[#allocation8 + $0xb8] sm:$0xf]
        %v4316 = vld [vmem:[#allocation8 + $0xbc] sm:$0xf]
        %v4317 = vld [vmem:[#allocation8 + $0xc0] sm:$0xf]
        %v4318 = vld [vmem:[#allocation8 + $0xc4] sm:$0xf]
        %v4319 = vld [vmem:[#allocation8 + $0xc8] sm:$0xf]
        %v4320 = vld [vmem:[#allocation8 + $0xcc] sm:$0xf]
        %v4321 = vld [vmem:[#allocation8 + $0xd0] sm:$0xf]
        %v4322 = vld [vmem:[#allocation8 + $0xd4] sm:$0xf]
        %v4323 = vld [vmem:[#allocation8 + $0xd8] sm:$0xf]
        %v4324 = vld [vmem:[#allocation8 + $0xdc] sm:$0xf]
        %v4325 = vld [vmem:[#allocation8 + $0xe0] sm:$0xf]
        %v4326 = vld [vmem:[#allocation8 + $0xe4] sm:$0xf]
        %v4327 = vld [vmem:[#allocation8 + $0xe8] sm:$0xf]
        %v4328 = vld [vmem:[#allocation8 + $0xec] sm:$0xf]
        %v4329 = vld [vmem:[#allocation8 + $0xf0] sm:$0xf]
        %v4330 = vld [vmem:[#allocation8 + $0xf4] sm:$0xf]
        %v4331 = vld [vmem:[#allocation8 + $0xf8] sm:$0xf]
        %v4332 = vld [vmem:[#allocation8 + $0xfc] sm:$0xf]
        %v4333 = vld [vmem:[#allocation10] sm:$0x1]
        %v4335 = vlaneseq
        %v4336 = vshrl.u32 %v4335, 7
        %v4337 = vsub.s32 0, %v4336
        %v4338 = vrot.slane %v4333, %v4337
        %v4404 = vunpack.c.l.b16 %v4269
        %v4405 = vunpack.c.l.b16 %v4270
        %v4406 = vunpack.c.l.b16 %v4271
        %v4407 = vunpack.c.l.b16 %v4272
        %v4408 = vunpack.c.l.b16 %v4273
        %v4409 = vunpack.c.l.b16 %v4274
        %v4410 = vunpack.c.l.b16 %v4275
        %v4411 = vunpack.c.l.b16 %v4276
        %v4412 = vunpack.c.l.b16 %v4277
        %v4413 = vunpack.c.l.b16 %v4278
        %v4414 = vunpack.c.l.b16 %v4279
        %v4415 = vunpack.c.l.b16 %v4280
        %v4416 = vunpack.c.l.b16 %v4281
        %v4417 = vunpack.c.l.b16 %v4282
        %v4418 = vunpack.c.l.b16 %v4283
        %v4419 = vunpack.c.l.b16 %v4284
        %v4420 = vunpack.c.l.b16 %v4285
        %v4421 = vunpack.c.l.b16 %v4286
        %v4422 = vunpack.c.l.b16 %v4287
        %v4423 = vunpack.c.l.b16 %v4288
        %v4424 = vunpack.c.l.b16 %v4289
        %v4425 = vunpack.c.l.b16 %v4290
        %v4426 = vunpack.c.l.b16 %v4291
        %v4427 = vunpack.c.l.b16 %v4292
        %v4428 = vunpack.c.l.b16 %v4293
        %v4429 = vunpack.c.l.b16 %v4294
        %v4430 = vunpack.c.l.b16 %v4295
        %v4431 = vunpack.c.l.b16 %v4296
        %v4432 = vunpack.c.l.b16 %v4297
        %v4433 = vunpack.c.l.b16 %v4298
        %v4434 = vunpack.c.l.b16 %v4299
        %v4435 = vunpack.c.l.b16 %v4300
        %v4436 = vunpack.c.l.b16 %v4301
        %v4437 = vunpack.c.l.b16 %v4302
        %v4438 = vunpack.c.l.b16 %v4303
        %v4439 = vunpack.c.l.b16 %v4304
        %v4440 = vunpack.c.l.b16 %v4305
        %v4441 = vunpack.c.l.b16 %v4306
        %v4442 = vunpack.c.l.b16 %v4307
        %v4443 = vunpack.c.l.b16 %v4308
        %v4444 = vunpack.c.l.b16 %v4309
        %v4445 = vunpack.c.l.b16 %v4310
        %v4446 = vunpack.c.l.b16 %v4311
        %v4447 = vunpack.c.l.b16 %v4312
        %v4448 = vunpack.c.l.b16 %v4313
        %v4449 = vunpack.c.l.b16 %v4314
        %v4450 = vunpack.c.l.b16 %v4315
        %v4451 = vunpack.c.l.b16 %v4316
        %v4452 = vunpack.c.l.b16 %v4317
        %v4453 = vunpack.c.l.b16 %v4318
        %v4454 = vunpack.c.l.b16 %v4319
        %v4455 = vunpack.c.l.b16 %v4320
        %v4456 = vunpack.c.l.b16 %v4321
        %v4457 = vunpack.c.l.b16 %v4322
        %v4458 = vunpack.c.l.b16 %v4323
        %v4459 = vunpack.c.l.b16 %v4324
        %v4460 = vunpack.c.l.b16 %v4325
        %v4461 = vunpack.c.l.b16 %v4326
        %v4462 = vunpack.c.l.b16 %v4327
        %v4463 = vunpack.c.l.b16 %v4328
        %v4464 = vunpack.c.l.b16 %v4329
        %v4465 = vunpack.c.l.b16 %v4330
        %v4466 = vunpack.c.l.b16 %v4331
        %v4467 = vunpack.c.l.b16 %v4332
        %v4468 = vpack.c.b16 %v4405, %v4404
        %v4469 = vpack.c.b16 %v4407, %v4406
        %v4470 = vpack.c.b16 %v4409, %v4408
        %v4471 = vpack.c.b16 %v4411, %v4410
        %v4472 = vpack.c.b16 %v4413, %v4412
        %v4473 = vpack.c.b16 %v4415, %v4414
        %v4474 = vpack.c.b16 %v4417, %v4416
        %v4475 = vpack.c.b16 %v4419, %v4418
        %v4476 = vpack.c.b16 %v4421, %v4420
        %v4477 = vpack.c.b16 %v4423, %v4422
        %v4478 = vpack.c.b16 %v4425, %v4424
        %v4479 = vpack.c.b16 %v4427, %v4426
        %v4480 = vpack.c.b16 %v4429, %v4428
        %v4481 = vpack.c.b16 %v4431, %v4430
        %v4482 = vpack.c.b16 %v4433, %v4432
        %v4483 = vpack.c.b16 %v4435, %v4434
        %v4484 = vpack.c.b16 %v4437, %v4436
        %v4485 = vpack.c.b16 %v4439, %v4438
        %v4486 = vpack.c.b16 %v4441, %v4440
        %v4487 = vpack.c.b16 %v4443, %v4442
        %v4488 = vpack.c.b16 %v4445, %v4444
        %v4489 = vpack.c.b16 %v4447, %v4446
        %v4490 = vpack.c.b16 %v4449, %v4448
        %v4491 = vpack.c.b16 %v4451, %v4450
        %v4492 = vpack.c.b16 %v4453, %v4452
        %v4493 = vpack.c.b16 %v4455, %v4454
        %v4494 = vpack.c.b16 %v4457, %v4456
        %v4495 = vpack.c.b16 %v4459, %v4458
        %v4496 = vpack.c.b16 %v4461, %v4460
        %v4497 = vpack.c.b16 %v4463, %v4462
        %v4498 = vpack.c.b16 %v4465, %v4464
        %v4499 = vpack.c.b16 %v4467, %v4466
        %4532 = vmatprep.subr.bf16.mxu0 0
        %4533 = vmatpush1.bf16.msra.mxu0 %v4468
        %4534 = vmatprep.subr.bf16.mxu0 0
        %4535 = vmatpush1.bf16.msra.mxu0 %v4469
        %4536 = vmatprep.subr.bf16.mxu0 0
        %4537 = vmatpush1.bf16.msra.mxu0 %v4470
        %4538 = vmatprep.subr.bf16.mxu0 0
        %4539 = vmatpush1.bf16.msra.mxu0 %v4471
        %4540 = vmatprep.subr.bf16.mxu0 0
        %4541 = vmatpush1.bf16.msra.mxu0 %v4472
        %4542 = vmatprep.subr.bf16.mxu0 0
        %4543 = vmatpush1.bf16.msra.mxu0 %v4473
        %4544 = vmatprep.subr.bf16.mxu0 0
        %4545 = vmatpush1.bf16.msra.mxu0 %v4474
        %4546 = vmatprep.subr.bf16.mxu0 0
        %4547 = vmatpush1.bf16.msra.mxu0 %v4475
        %4548 = vmatprep.subr.bf16.mxu0 0
        %4549 = vmatpush1.bf16.msra.mxu0 %v4476
        %4550 = vmatprep.subr.bf16.mxu0 0
        %4551 = vmatpush1.bf16.msra.mxu0 %v4477
        %4552 = vmatprep.subr.bf16.mxu0 0
        %4553 = vmatpush1.bf16.msra.mxu0 %v4478
        %4554 = vmatprep.subr.bf16.mxu0 0
        %4555 = vmatpush1.bf16.msra.mxu0 %v4479
        %4556 = vmatprep.subr.bf16.mxu0 0
        %4557 = vmatpush1.bf16.msra.mxu0 %v4480
        %4558 = vmatprep.subr.bf16.mxu0 0
        %4559 = vmatpush1.bf16.msra.mxu0 %v4481
        %4560 = vmatprep.subr.bf16.mxu0 0
        %4561 = vmatpush1.bf16.msra.mxu0 %v4482
        %4562 = vmatprep.subr.bf16.mxu0 0
        %4563 = vmatpush1.bf16.msra.mxu0 %v4483
        %4564 = vmatprep.mubr.bf16.mxu0 %v4206
        %4565 = vmatmul.mubr.bf16.gmra.mrb[0].mxu0 %v4205
        %v4566 = vpop.f32.mrb[0].mxu0
        %v4567 = vadd.f32 %v4338, %v4566
        %v4568 = vpop.f32.mrb[0].mxu0
        %v4569 = vpop.f32.mrb[0].mxu0
        %v4570 = vadd.f32 %v4338, %v4569
        %v4571 = vpop.f32.mrb[0].mxu0
        %4572 = vmatprep.mubr.bf16.mxu0 %v4210
        %4573 = vmatmul.mubr.bf16.gmra.mrb[0].mxu0 %v4209
        %v4574 = vpop.f32.mrb[0].mxu0
        %v4575 = vadd.f32 %v4338, %v4574
        %v4576 = vpop.f32.mrb[0].mxu0
        %v4577 = vpop.f32.mrb[0].mxu0
        %v4578 = vadd.f32 %v4338, %v4577
        %v4579 = vpop.f32.mrb[0].mxu0
        %4580 = vmatprep.mubr.bf16.mxu0 %v4214
        %4581 = vmatmul.mubr.bf16.gmra.mrb[0].mxu0 %v4213
        %v4582 = vpop.f32.mrb[0].mxu0
        %v4583 = vadd.f32 %v4338, %v4582
        %v4584 = vpop.f32.mrb[0].mxu0
        %v4585 = vpop.f32.mrb[0].mxu0
        %v4586 = vadd.f32 %v4338, %v4585
        %v4587 = vpop.f32.mrb[0].mxu0
        %4588 = vmatprep.mubr.bf16.mxu0 %v4218
        %4589 = vmatmul.mubr.bf16.gmra.mrb[0].mxu0 %v4217
        %v4590 = vpop.f32.mrb[0].mxu0
        %v4591 = vadd.f32 %v4338, %v4590
        %v4592 = vpop.f32.mrb[0].mxu0
        %v4593 = vpop.f32.mrb[0].mxu0
        %v4594 = vadd.f32 %v4338, %v4593
        %v4595 = vpop.f32.mrb[0].mxu0
        %4596 = vmatprep.mubr.bf16.mxu0 %v4222
        %4597 = vmatmul.mubr.bf16.gmra.mrb[0].mxu0 %v4221
        %v4598 = vpop.f32.mrb[0].mxu0
        %v4599 = vadd.f32 %v4338, %v4598
        %v4600 = vpop.f32.mrb[0].mxu0
        %v4601 = vpop.f32.mrb[0].mxu0
        %v4602 = vadd.f32 %v4338, %v4601
        %v4603 = vpop.f32.mrb[0].mxu0
        %4604 = vmatprep.mubr.bf16.mxu0 %v4226
        %4605 = vmatmul.mubr.bf16.gmra.mrb[0].mxu0 %v4225
        %v4606 = vpop.f32.mrb[0].mxu0
        %v4607 = vadd.f32 %v4338, %v4606
        %v4608 = vpop.f32.mrb[0].mxu0
        %v4609 = vpop.f32.mrb[0].mxu0
        %v4610 = vadd.f32 %v4338, %v4609
        %v4611 = vpop.f32.mrb[0].mxu0
        %4612 = vmatprep.mubr.bf16.mxu0 %v4230
        %4613 = vmatmul.mubr.bf16.gmra.mrb[0].mxu0 %v4229
        %v4614 = vpop.f32.mrb[0].mxu0
        %v4615 = vadd.f32 %v4338, %v4614
        %v4616 = vpop.f32.mrb[0].mxu0
        %v4617 = vpop.f32.mrb[0].mxu0
        %v4618 = vadd.f32 %v4338, %v4617
        %v4619 = vpop.f32.mrb[0].mxu0
        %4620 = vmatprep.mubr.bf16.mxu0 %v4234
        %4621 = vmatmul.mubr.bf16.gmra.mrb[0].mxu0 %v4233
        %v4622 = vpop.f32.mrb[0].mxu0
        %v4623 = vadd.f32 %v4338, %v4622
        %v4624 = vpop.f32.mrb[0].mxu0
        %v4625 = vpop.f32.mrb[0].mxu0
        %v4626 = vadd.f32 %v4338, %v4625
        %v4627 = vpop.f32.mrb[0].mxu0
        %4628 = vmatprep.mubr.bf16.mxu0 %v4238
        %4629 = vmatmul.mubr.bf16.gmra.mrb[0].mxu0 %v4237
        %v4630 = vpop.f32.mrb[0].mxu0
        %v4631 = vadd.f32 %v4338, %v4630
        %v4632 = vpop.f32.mrb[0].mxu0
        %v4633 = vpop.f32.mrb[0].mxu0
        %v4634 = vadd.f32 %v4338, %v4633
        %v4635 = vpop.f32.mrb[0].mxu0
        %4636 = vmatprep.mubr.bf16.mxu0 %v4242
        %4637 = vmatmul.mubr.bf16.gmra.mrb[0].mxu0 %v4241
        %v4638 = vpop.f32.mrb[0].mxu0
        %v4639 = vadd.f32 %v4338, %v4638
        %v4640 = vpop.f32.mrb[0].mxu0
        %v4641 = vpop.f32.mrb[0].mxu0
        %v4642 = vadd.f32 %v4338, %v4641
        %v4643 = vpop.f32.mrb[0].mxu0
        %4644 = vmatprep.mubr.bf16.mxu0 %v4246
        %4645 = vmatmul.mubr.bf16.gmra.mrb[0].mxu0 %v4245
        %v4646 = vpop.f32.mrb[0].mxu0
        %v4647 = vadd.f32 %v4338, %v4646
        %v4648 = vpop.f32.mrb[0].mxu0
        %v4649 = vpop.f32.mrb[0].mxu0
        %v4650 = vadd.f32 %v4338, %v4649
        %v4651 = vpop.f32.mrb[0].mxu0
        %4652 = vmatprep.mubr.bf16.mxu0 %v4250
        %4653 = vmatmul.mubr.bf16.gmra.mrb[0].mxu0 %v4249
        %v4654 = vpop.f32.mrb[0].mxu0
        %v4655 = vadd.f32 %v4338, %v4654
        %v4656 = vpop.f32.mrb[0].mxu0
        %v4657 = vpop.f32.mrb[0].mxu0
        %v4658 = vadd.f32 %v4338, %v4657
        %v4659 = vpop.f32.mrb[0].mxu0
        %4660 = vmatprep.mubr.bf16.mxu0 %v4254
        %4661 = vmatmul.mubr.bf16.gmra.mrb[0].mxu0 %v4253
        %v4662 = vpop.f32.mrb[0].mxu0
        %v4663 = vadd.f32 %v4338, %v4662
        %v4664 = vpop.f32.mrb[0].mxu0
        %v4665 = vpop.f32.mrb[0].mxu0
        %v4666 = vadd.f32 %v4338, %v4665
        %v4667 = vpop.f32.mrb[0].mxu0
        %4668 = vmatprep.mubr.bf16.mxu0 %v4258
        %4669 = vmatmul.mubr.bf16.gmra.mrb[0].mxu0 %v4257
        %v4670 = vpop.f32.mrb[0].mxu0
        %v4671 = vadd.f32 %v4338, %v4670
        %v4672 = vpop.f32.mrb[0].mxu0
        %v4673 = vpop.f32.mrb[0].mxu0
        %v4674 = vadd.f32 %v4338, %v4673
        %v4675 = vpop.f32.mrb[0].mxu0
        %4676 = vmatprep.mubr.bf16.mxu0 %v4262
        %4677 = vmatmul.mubr.bf16.gmra.mrb[0].mxu0 %v4261
        %v4678 = vpop.f32.mrb[0].mxu0
        %v4679 = vadd.f32 %v4338, %v4678
        %v4680 = vpop.f32.mrb[0].mxu0
        %v4681 = vpop.f32.mrb[0].mxu0
        %v4682 = vadd.f32 %v4338, %v4681
        %v4683 = vpop.f32.mrb[0].mxu0
        %4684 = vmatprep.mubr.bf16.mxu0 %v4266
        %4685 = vmatmul.mubr.bf16.gmra.mrb[0].mxu0 %v4265
        %v4686 = vpop.f32.mrb[0].mxu0
        %v4687 = vadd.f32 %v4338, %v4686
        %v4688 = vpop.f32.mrb[0].mxu0
        %v4689 = vpop.f32.mrb[0].mxu0
        %v4690 = vadd.f32 %v4338, %v4689
        %v4691 = vpop.f32.mrb[0].mxu0
        %4692 = vdwg.mxu0
        %4693 = vmatprep.subr.bf16.mxu0 0
        %4694 = vmatpush1.bf16.msra.mxu0 %v4484
        %4695 = vmatprep.subr.bf16.mxu0 0
        %4696 = vmatpush1.bf16.msra.mxu0 %v4485
        %4697 = vmatprep.subr.bf16.mxu0 0
        %4698 = vmatpush1.bf16.msra.mxu0 %v4486
        %4699 = vmatprep.subr.bf16.mxu0 0
        %4700 = vmatpush1.bf16.msra.mxu0 %v4487
        %4701 = vmatprep.subr.bf16.mxu0 0
        %4702 = vmatpush1.bf16.msra.mxu0 %v4488
        %4703 = vmatprep.subr.bf16.mxu0 0
        %4704 = vmatpush1.bf16.msra.mxu0 %v4489
        %4705 = vmatprep.subr.bf16.mxu0 0
        %4706 = vmatpush1.bf16.msra.mxu0 %v4490
        %4707 = vmatprep.subr.bf16.mxu0 0
        %4708 = vmatpush1.bf16.msra.mxu0 %v4491
        %4709 = vmatprep.subr.bf16.mxu0 0
        %4710 = vmatpush1.bf16.msra.mxu0 %v4492
        %4711 = vmatprep.subr.bf16.mxu0 0
        %4712 = vmatpush1.bf16.msra.mxu0 %v4493
        %4713 = vmatprep.subr.bf16.mxu0 0
        %4714 = vmatpush1.bf16.msra.mxu0 %v4494
        %4715 = vmatprep.subr.bf16.mxu0 0
        %4716 = vmatpush1.bf16.msra.mxu0 %v4495
        %4717 = vmatprep.subr.bf16.mxu0 0
        %4718 = vmatpush1.bf16.msra.mxu0 %v4496
        %4719 = vmatprep.subr.bf16.mxu0 0
        %4720 = vmatpush1.bf16.msra.mxu0 %v4497
        %4721 = vmatprep.subr.bf16.mxu0 0
        %4722 = vmatpush1.bf16.msra.mxu0 %v4498
        %4723 = vmatprep.subr.bf16.mxu0 0
        %4724 = vmatpush1.bf16.msra.mxu0 %v4499
        %4725 = vmatprep.mubr.bf16.mxu0 %v4208
        %4726 = vmatmul.mubr.bf16.gmra.mrb[0].mxu0 %v4207
        %v4727 = vpop.f32.mrb[0].mxu0
        %v4728 = vadd.f32 %v4567, %v4727
        %v4729 = vpop.f32.mrb[0].mxu0
        %v4730 = vpop.f32.mrb[0].mxu0
        %v4731 = vadd.f32 %v4570, %v4730
        %v4732 = vpop.f32.mrb[0].mxu0
        %4733 = vmatprep.mubr.bf16.mxu0 %v4212
        %4734 = vmatmul.mubr.bf16.gmra.mrb[0].mxu0 %v4211
        %v4735 = vpop.f32.mrb[0].mxu0
        %v4736 = vadd.f32 %v4575, %v4735
        %v4737 = vpop.f32.mrb[0].mxu0
        %v4738 = vpop.f32.mrb[0].mxu0
        %v4739 = vadd.f32 %v4578, %v4738
        %v4740 = vpop.f32.mrb[0].mxu0
        %4741 = vmatprep.mubr.bf16.mxu0 %v4216
        %4742 = vmatmul.mubr.bf16.gmra.mrb[0].mxu0 %v4215
        %v4743 = vpop.f32.mrb[0].mxu0
        %v4744 = vadd.f32 %v4583, %v4743
        %v4745 = vpop.f32.mrb[0].mxu0
        %v4746 = vpop.f32.mrb[0].mxu0
        %v4747 = vadd.f32 %v4586, %v4746
        %v4748 = vpop.f32.mrb[0].mxu0
        %4749 = vmatprep.mubr.bf16.mxu0 %v4220
        %4750 = vmatmul.mubr.bf16.gmra.mrb[0].mxu0 %v4219
        %v4751 = vpop.f32.mrb[0].mxu0
        %v4752 = vadd.f32 %v4591, %v4751
        %v4753 = vpop.f32.mrb[0].mxu0
        %v4754 = vpop.f32.mrb[0].mxu0
        %v4755 = vadd.f32 %v4594, %v4754
        %v4756 = vpop.f32.mrb[0].mxu0
        %4757 = vmatprep.mubr.bf16.mxu0 %v4224
        %4758 = vmatmul.mubr.bf16.gmra.mrb[0].mxu0 %v4223
        %v4759 = vpop.f32.mrb[0].mxu0
        %v4760 = vadd.f32 %v4599, %v4759
        %v4761 = vpop.f32.mrb[0].mxu0
        %v4762 = vpop.f32.mrb[0].mxu0
        %v4763 = vadd.f32 %v4602, %v4762
        %v4764 = vpop.f32.mrb[0].mxu0
        %4765 = vmatprep.mubr.bf16.mxu0 %v4228
        %4766 = vmatmul.mubr.bf16.gmra.mrb[0].mxu0 %v4227
        %v4767 = vpop.f32.mrb[0].mxu0
        %v4768 = vadd.f32 %v4607, %v4767
        %v4769 = vpop.f32.mrb[0].mxu0
        %v4770 = vpop.f32.mrb[0].mxu0
        %v4771 = vadd.f32 %v4610, %v4770
        %v4772 = vpop.f32.mrb[0].mxu0
        %4773 = vmatprep.mubr.bf16.mxu0 %v4232
        %4774 = vmatmul.mubr.bf16.gmra.mrb[0].mxu0 %v4231
        %v4775 = vpop.f32.mrb[0].mxu0
        %v4776 = vadd.f32 %v4615, %v4775
        %v4777 = vpop.f32.mrb[0].mxu0
        %v4778 = vpop.f32.mrb[0].mxu0
        %v4779 = vadd.f32 %v4618, %v4778
        %v4780 = vpop.f32.mrb[0].mxu0
        %4781 = vmatprep.mubr.bf16.mxu0 %v4236
        %4782 = vmatmul.mubr.bf16.gmra.mrb[0].mxu0 %v4235
        %v4783 = vpop.f32.mrb[0].mxu0
        %v4784 = vadd.f32 %v4623, %v4783
        %v4785 = vpop.f32.mrb[0].mxu0
        %v4786 = vpop.f32.mrb[0].mxu0
        %v4787 = vadd.f32 %v4626, %v4786
        %v4788 = vpop.f32.mrb[0].mxu0
        %4789 = vmatprep.mubr.bf16.mxu0 %v4240
        %4790 = vmatmul.mubr.bf16.gmra.mrb[0].mxu0 %v4239
        %v4791 = vpop.f32.mrb[0].mxu0
        %v4792 = vadd.f32 %v4631, %v4791
        %v4793 = vpop.f32.mrb[0].mxu0
        %v4794 = vpop.f32.mrb[0].mxu0
        %v4795 = vadd.f32 %v4634, %v4794
        %v4796 = vpop.f32.mrb[0].mxu0
        %4797 = vmatprep.mubr.bf16.mxu0 %v4244
        %4798 = vmatmul.mubr.bf16.gmra.mrb[0].mxu0 %v4243
        %v4799 = vpop.f32.mrb[0].mxu0
        %v4800 = vadd.f32 %v4639, %v4799
        %v4801 = vpop.f32.mrb[0].mxu0
        %v4802 = vpop.f32.mrb[0].mxu0
        %v4803 = vadd.f32 %v4642, %v4802
        %v4804 = vpop.f32.mrb[0].mxu0
        %4805 = vmatprep.mubr.bf16.mxu0 %v4248
        %4806 = vmatmul.mubr.bf16.gmra.mrb[0].mxu0 %v4247
        %v4807 = vpop.f32.mrb[0].mxu0
        %v4808 = vadd.f32 %v4647, %v4807
        %v4809 = vpop.f32.mrb[0].mxu0
        %v4810 = vpop.f32.mrb[0].mxu0
        %v4811 = vadd.f32 %v4650, %v4810
        %v4812 = vpop.f32.mrb[0].mxu0
        %4813 = vmatprep.mubr.bf16.mxu0 %v4252
        %4814 = vmatmul.mubr.bf16.gmra.mrb[0].mxu0 %v4251
        %v4815 = vpop.f32.mrb[0].mxu0
        %v4816 = vadd.f32 %v4655, %v4815
        %v4817 = vpop.f32.mrb[0].mxu0
        %v4818 = vpop.f32.mrb[0].mxu0
        %v4819 = vadd.f32 %v4658, %v4818
        %v4820 = vpop.f32.mrb[0].mxu0
        %4821 = vmatprep.mubr.bf16.mxu0 %v4256
        %4822 = vmatmul.mubr.bf16.gmra.mrb[0].mxu0 %v4255
        %v4823 = vpop.f32.mrb[0].mxu0
        %v4824 = vadd.f32 %v4663, %v4823
        %v4825 = vpop.f32.mrb[0].mxu0
        %v4826 = vpop.f32.mrb[0].mxu0
        %v4827 = vadd.f32 %v4666, %v4826
        %v4828 = vpop.f32.mrb[0].mxu0
        %4829 = vmatprep.mubr.bf16.mxu0 %v4260
        %4830 = vmatmul.mubr.bf16.gmra.mrb[0].mxu0 %v4259
        %v4831 = vpop.f32.mrb[0].mxu0
        %v4832 = vadd.f32 %v4671, %v4831
        %v4833 = vpop.f32.mrb[0].mxu0
        %v4834 = vpop.f32.mrb[0].mxu0
        %v4835 = vadd.f32 %v4674, %v4834
        %v4836 = vpop.f32.mrb[0].mxu0
        %4837 = vmatprep.mubr.bf16.mxu0 %v4264
        %4838 = vmatmul.mubr.bf16.gmra.mrb[0].mxu0 %v4263
        %v4839 = vpop.f32.mrb[0].mxu0
        %v4840 = vadd.f32 %v4679, %v4839
        %v4841 = vpop.f32.mrb[0].mxu0
        %v4842 = vpop.f32.mrb[0].mxu0
        %v4843 = vadd.f32 %v4682, %v4842
        %v4844 = vpop.f32.mrb[0].mxu0
        %4845 = vmatprep.mubr.bf16.mxu0 %v4268
        %4846 = vmatmul.mubr.bf16.gmra.mrb[0].mxu0 %v4267
        %v4847 = vpop.f32.mrb[0].mxu0
        %v4848 = vadd.f32 %v4687, %v4847
        %v4849 = vpop.f32.mrb[0].mxu0
        %v4850 = vpop.f32.mrb[0].mxu0
        %v4851 = vadd.f32 %v4690, %v4850
        %v4852 = vpop.f32.mrb[0].mxu0
        %4853 = vdwg.mxu0
        %v4854 = vmax.f32 %v4728, 0.0
        %v4855 = vmax.f32 %v4731, 0.0
        %v4856 = vmax.f32 %v4736, 0.0
        %v4857 = vmax.f32 %v4739, 0.0
        %v4858 = vmax.f32 %v4744, 0.0
        %v4859 = vmax.f32 %v4747, 0.0
        %v4860 = vmax.f32 %v4752, 0.0
        %v4861 = vmax.f32 %v4755, 0.0
        %v4862 = vmax.f32 %v4760, 0.0
        %v4863 = vmax.f32 %v4763, 0.0
        %v4864 = vmax.f32 %v4768, 0.0
        %v4865 = vmax.f32 %v4771, 0.0
        %v4866 = vmax.f32 %v4776, 0.0
        %v4867 = vmax.f32 %v4779, 0.0
        %v4868 = vmax.f32 %v4784, 0.0
        %v4869 = vmax.f32 %v4787, 0.0
        %v4870 = vmax.f32 %v4792, 0.0
        %v4871 = vmax.f32 %v4795, 0.0
        %v4872 = vmax.f32 %v4800, 0.0
        %v4873 = vmax.f32 %v4803, 0.0
        %v4874 = vmax.f32 %v4808, 0.0
        %v4875 = vmax.f32 %v4811, 0.0
        %v4876 = vmax.f32 %v4816, 0.0
        %v4877 = vmax.f32 %v4819, 0.0
        %v4878 = vmax.f32 %v4824, 0.0
        %v4879 = vmax.f32 %v4827, 0.0
        %v4880 = vmax.f32 %v4832, 0.0
        %v4881 = vmax.f32 %v4835, 0.0
        %v4882 = vmax.f32 %v4840, 0.0
        %v4883 = vmax.f32 %v4843, 0.0
        %v4884 = vmax.f32 %v4848, 0.0
        %v4885 = vmax.f32 %v4851, 0.0
        %v4886 = vpack.c.bf16 %v4855, %v4854
        %v4887 = vpack.c.bf16 %v4857, %v4856
        %v4888 = vpack.c.bf16 %v4859, %v4858
        %v4889 = vpack.c.bf16 %v4861, %v4860
        %v4890 = vpack.c.bf16 %v4863, %v4862
        %v4891 = vpack.c.bf16 %v4865, %v4864
        %v4892 = vpack.c.bf16 %v4867, %v4866
        %v4893 = vpack.c.bf16 %v4869, %v4868
        %v4894 = vpack.c.bf16 %v4871, %v4870
        %v4895 = vpack.c.bf16 %v4873, %v4872
        %v4896 = vpack.c.bf16 %v4875, %v4874
        %v4897 = vpack.c.bf16 %v4877, %v4876
        %v4898 = vpack.c.bf16 %v4879, %v4878
        %v4899 = vpack.c.bf16 %v4881, %v4880
        %v4900 = vpack.c.bf16 %v4883, %v4882
        %v4901 = vpack.c.bf16 %v4885, %v4884
        %v4902 = vld [vmem:[#allocation11] sm:$0xff]
        %v4903 = vld [vmem:[#allocation11 + $0x8] sm:$0xff]
        %v4904 = vld [vmem:[#allocation11 + $0x10] sm:$0xff]
        %v4905 = vld [vmem:[#allocation11 + $0x18] sm:$0xff]
        %v4906 = vld [vmem:[#allocation11 + $0x20] sm:$0xff]
        %v4907 = vld [vmem:[#allocation11 + $0x28] sm:$0xff]
        %v4908 = vld [vmem:[#allocation11 + $0x30] sm:$0xff]
        %v4909 = vld [vmem:[#allocation11 + $0x38] sm:$0xff]
        %v4910 = vld [vmem:[#allocation11 + $0x40] sm:$0xff]
        %v4911 = vld [vmem:[#allocation11 + $0x48] sm:$0xff]
        %v4912 = vld [vmem:[#allocation11 + $0x50] sm:$0xff]
        %v4913 = vld [vmem:[#allocation11 + $0x58] sm:$0xff]
        %v4914 = vld [vmem:[#allocation11 + $0x60] sm:$0xff]
        %v4915 = vld [vmem:[#allocation11 + $0x68] sm:$0xff]
        %v4916 = vld [vmem:[#allocation11 + $0x70] sm:$0xff]
        %v4917 = vld [vmem:[#allocation11 + $0x78] sm:$0xff]
        %v4918 = vld [vmem:[#allocation11 + $0x80] sm:$0xff]
        %v4919 = vld [vmem:[#allocation11 + $0x88] sm:$0xff]
        %v4920 = vld [vmem:[#allocation11 + $0x90] sm:$0xff]
        %v4921 = vld [vmem:[#allocation11 + $0x98] sm:$0xff]
        %v4922 = vld [vmem:[#allocation11 + $0xa0] sm:$0xff]
        %v4923 = vld [vmem:[#allocation11 + $0xa8] sm:$0xff]
        %v4924 = vld [vmem:[#allocation11 + $0xb0] sm:$0xff]
        %v4925 = vld [vmem:[#allocation11 + $0xb8] sm:$0xff]
        %v4926 = vld [vmem:[#allocation11 + $0xc0] sm:$0xff]
        %v4927 = vld [vmem:[#allocation11 + $0xc8] sm:$0xff]
        %v4928 = vld [vmem:[#allocation11 + $0xd0] sm:$0xff]
        %v4929 = vld [vmem:[#allocation11 + $0xd8] sm:$0xff]
        %v4930 = vld [vmem:[#allocation11 + $0xe0] sm:$0xff]
        %v4931 = vld [vmem:[#allocation11 + $0xe8] sm:$0xff]
        %v4932 = vld [vmem:[#allocation11 + $0xf0] sm:$0xff]
        %v4933 = vld [vmem:[#allocation11 + $0xf8] sm:$0xff]
        %v4934 = vld [vmem:[#allocation13] sm:$0xf]
        %v4936 = vlaneseq
        %v4937 = vshrl.u32 %v4936, 7
        %v4938 = vsub.s32 0, %v4937
        %v4939 = vrot.slane %v4934, %v4938
        %v4940 = vlaneseq
        %v4941 = vshrl.u32 %v4940, 7
        %v4942 = vsub.s32 1, %v4941
        %v4943 = vrot.slane %v4934, %v4942
        %v4944 = vlaneseq
        %v4945 = vshrl.u32 %v4944, 7
        %v4946 = vsub.s32 2, %v4945
        %v4947 = vrot.slane %v4934, %v4946
        %v4948 = vlaneseq
        %v4949 = vshrl.u32 %v4948, 7
        %v4950 = vsub.s32 3, %v4949
        %v4951 = vrot.slane %v4934, %v4950
        %v4988 = vunpack.c.l.b16 %v4902
        %v4989 = vunpack.c.h.b16 %v4902
        %v4990 = vunpack.c.l.b16 %v4903
        %v4991 = vunpack.c.h.b16 %v4903
        %v4992 = vunpack.c.l.b16 %v4904
        %v4993 = vunpack.c.h.b16 %v4904
        %v4994 = vunpack.c.l.b16 %v4905
        %v4995 = vunpack.c.h.b16 %v4905
        %v4996 = vunpack.c.l.b16 %v4906
        %v4997 = vunpack.c.h.b16 %v4906
        %v4998 = vunpack.c.l.b16 %v4907
        %v4999 = vunpack.c.h.b16 %v4907
        %v5000 = vunpack.c.l.b16 %v4908
        %v5001 = vunpack.c.h.b16 %v4908
        %v5002 = vunpack.c.l.b16 %v4909
        %v5003 = vunpack.c.h.b16 %v4909
        %v5004 = vunpack.c.l.b16 %v4910
        %v5005 = vunpack.c.h.b16 %v4910
        %v5006 = vunpack.c.l.b16 %v4911
        %v5007 = vunpack.c.h.b16 %v4911
        %v5008 = vunpack.c.l.b16 %v4912
        %v5009 = vunpack.c.h.b16 %v4912
        %v5010 = vunpack.c.l.b16 %v4913
        %v5011 = vunpack.c.h.b16 %v4913
        %v5012 = vunpack.c.l.b16 %v4914
        %v5013 = vunpack.c.h.b16 %v4914
        %v5014 = vunpack.c.l.b16 %v4915
        %v5015 = vunpack.c.h.b16 %v4915
        %v5016 = vunpack.c.l.b16 %v4916
        %v5017 = vunpack.c.h.b16 %v4916
        %v5018 = vunpack.c.l.b16 %v4917
        %v5019 = vunpack.c.h.b16 %v4917
        %v5020 = vunpack.c.l.b16 %v4918
        %v5021 = vunpack.c.h.b16 %v4918
        %v5022 = vunpack.c.l.b16 %v4919
        %v5023 = vunpack.c.h.b16 %v4919
        %v5024 = vunpack.c.l.b16 %v4920
        %v5025 = vunpack.c.h.b16 %v4920
        %v5026 = vunpack.c.l.b16 %v4921
        %v5027 = vunpack.c.h.b16 %v4921
        %v5028 = vunpack.c.l.b16 %v4922
        %v5029 = vunpack.c.h.b16 %v4922
        %v5030 = vunpack.c.l.b16 %v4923
        %v5031 = vunpack.c.h.b16 %v4923
        %v5032 = vunpack.c.l.b16 %v4924
        %v5033 = vunpack.c.h.b16 %v4924
        %v5034 = vunpack.c.l.b16 %v4925
        %v5035 = vunpack.c.h.b16 %v4925
        %v5036 = vunpack.c.l.b16 %v4926
        %v5037 = vunpack.c.h.b16 %v4926
        %v5038 = vunpack.c.l.b16 %v4927
        %v5039 = vunpack.c.h.b16 %v4927
        %v5040 = vunpack.c.l.b16 %v4928
        %v5041 = vunpack.c.h.b16 %v4928
        %v5042 = vunpack.c.l.b16 %v4929
        %v5043 = vunpack.c.h.b16 %v4929
        %v5044 = vunpack.c.l.b16 %v4930
        %v5045 = vunpack.c.h.b16 %v4930
        %v5046 = vunpack.c.l.b16 %v4931
        %v5047 = vunpack.c.h.b16 %v4931
        %v5048 = vunpack.c.l.b16 %v4932
        %v5049 = vunpack.c.h.b16 %v4932
        %v5050 = vunpack.c.l.b16 %v4933
        %v5051 = vunpack.c.h.b16 %v4933
        %v5052 = vpack.c.b16 %v4992, %v4988
        %v5053 = vpack.c.b16 %v4993, %v4989
        %v5054 = vpack.c.b16 %v4994, %v4990
        %v5055 = vpack.c.b16 %v4995, %v4991
        %v5056 = vpack.c.b16 %v5000, %v4996
        %v5057 = vpack.c.b16 %v5001, %v4997
        %v5058 = vpack.c.b16 %v5002, %v4998
        %v5059 = vpack.c.b16 %v5003, %v4999
        %v5060 = vpack.c.b16 %v5008, %v5004
        %v5061 = vpack.c.b16 %v5009, %v5005
        %v5062 = vpack.c.b16 %v5010, %v5006
        %v5063 = vpack.c.b16 %v5011, %v5007
        %v5064 = vpack.c.b16 %v5016, %v5012
        %v5065 = vpack.c.b16 %v5017, %v5013
        %v5066 = vpack.c.b16 %v5018, %v5014
        %v5067 = vpack.c.b16 %v5019, %v5015
        %v5068 = vpack.c.b16 %v5024, %v5020
        %v5069 = vpack.c.b16 %v5025, %v5021
        %v5070 = vpack.c.b16 %v5026, %v5022
        %v5071 = vpack.c.b16 %v5027, %v5023
        %v5072 = vpack.c.b16 %v5032, %v5028
        %v5073 = vpack.c.b16 %v5033, %v5029
        %v5074 = vpack.c.b16 %v5034, %v5030
        %v5075 = vpack.c.b16 %v5035, %v5031
        %v5076 = vpack.c.b16 %v5040, %v5036
        %v5077 = vpack.c.b16 %v5041, %v5037
        %v5078 = vpack.c.b16 %v5042, %v5038
        %v5079 = vpack.c.b16 %v5043, %v5039
        %v5080 = vpack.c.b16 %v5048, %v5044
        %v5081 = vpack.c.b16 %v5049, %v5045
        %v5082 = vpack.c.b16 %v5050, %v5046
        %v5083 = vpack.c.b16 %v5051, %v5047
        %5116 = vmatprep.subr.bf16.mxu0 %v5053
        %5117 = vmatpush1.bf16.msra.mxu0 %v5052
        %5118 = vmatprep.subr.bf16.mxu0 %v5057
        %5119 = vmatpush1.bf16.msra.mxu0 %v5056
        %5120 = vmatprep.subr.bf16.mxu0 %v5061
        %5121 = vmatpush1.bf16.msra.mxu0 %v5060
        %5122 = vmatprep.subr.bf16.mxu0 %v5065
        %5123 = vmatpush1.bf16.msra.mxu0 %v5064
        %5124 = vmatprep.subr.bf16.mxu0 %v5069
        %5125 = vmatpush1.bf16.msra.mxu0 %v5068
        %5126 = vmatprep.subr.bf16.mxu0 %v5073
        %5127 = vmatpush1.bf16.msra.mxu0 %v5072
        %5128 = vmatprep.subr.bf16.mxu0 %v5077
        %5129 = vmatpush1.bf16.msra.mxu0 %v5076
        %5130 = vmatprep.subr.bf16.mxu0 %v5081
        %5131 = vmatpush1.bf16.msra.mxu0 %v5080
        %5132 = vmatprep.subr.bf16.mxu0 0
        %5133 = vmatpush1.bf16.msra.mxu0 0
        %5134 = vmatprep.subr.bf16.mxu0 0
        %5135 = vmatpush1.bf16.msra.mxu0 0
        %5136 = vmatprep.subr.bf16.mxu0 0
        %5137 = vmatpush1.bf16.msra.mxu0 0
        %5138 = vmatprep.subr.bf16.mxu0 0
        %5139 = vmatpush1.bf16.msra.mxu0 0
        %5140 = vmatprep.subr.bf16.mxu0 0
        %5141 = vmatpush1.bf16.msra.mxu0 0
        %5142 = vmatprep.subr.bf16.mxu0 0
        %5143 = vmatpush1.bf16.msra.mxu0 0
        %5144 = vmatprep.subr.bf16.mxu0 0
        %5145 = vmatpush1.bf16.msra.mxu0 0
        %5146 = vmatprep.subr.bf16.mxu0 0
        %5147 = vmatpush1.bf16.msra.mxu0 0
        %5148 = vmatprep.mubr.bf16.mxu0 0
        %5149 = vmatmul.mubr.bf16.gmra.mrb[0].mxu0 %v4886
        %v5150 = vpop.f32.mrb[0].mxu0
        %v5151 = vadd.f32 %v4939, %v5150
        %v5152 = vpop.f32.mrb[0].mxu0
        %v5153 = vadd.f32 %v4943, %v5152
        %v5154 = vpop.f32.mrb[0].mxu0
        %v5155 = vadd.f32 %v4939, %v5154
        %v5156 = vpop.f32.mrb[0].mxu0
        %v5157 = vadd.f32 %v4943, %v5156
        %5158 = vmatprep.mubr.bf16.mxu0 0
        %5159 = vmatmul.mubr.bf16.gmra.mrb[0].mxu0 %v4887
        %v5160 = vpop.f32.mrb[0].mxu0
        %v5161 = vadd.f32 %v4939, %v5160
        %v5162 = vpop.f32.mrb[0].mxu0
        %v5163 = vadd.f32 %v4943, %v5162
        %v5164 = vpop.f32.mrb[0].mxu0
        %v5165 = vadd.f32 %v4939, %v5164
        %v5166 = vpop.f32.mrb[0].mxu0
        %v5167 = vadd.f32 %v4943, %v5166
        %5168 = vmatprep.mubr.bf16.mxu0 0
        %5169 = vmatmul.mubr.bf16.gmra.mrb[0].mxu0 %v4888
        %v5170 = vpop.f32.mrb[0].mxu0
        %v5171 = vadd.f32 %v4939, %v5170
        %v5172 = vpop.f32.mrb[0].mxu0
        %v5173 = vadd.f32 %v4943, %v5172
        %v5174 = vpop.f32.mrb[0].mxu0
        %v5175 = vadd.f32 %v4939, %v5174
        %v5176 = vpop.f32.mrb[0].mxu0
        %v5177 = vadd.f32 %v4943, %v5176
        %5178 = vmatprep.mubr.bf16.mxu0 0
        %5179 = vmatmul.mubr.bf16.gmra.mrb[0].mxu0 %v4889
        %v5180 = vpop.f32.mrb[0].mxu0
        %v5181 = vadd.f32 %v4939, %v5180
        %v5182 = vpop.f32.mrb[0].mxu0
        %v5183 = vadd.f32 %v4943, %v5182
        %v5184 = vpop.f32.mrb[0].mxu0
        %v5185 = vadd.f32 %v4939, %v5184
        %v5186 = vpop.f32.mrb[0].mxu0
        %v5187 = vadd.f32 %v4943, %v5186
        %5188 = vmatprep.mubr.bf16.mxu0 0
        %5189 = vmatmul.mubr.bf16.gmra.mrb[0].mxu0 %v4890
        %v5190 = vpop.f32.mrb[0].mxu0
        %v5191 = vadd.f32 %v4939, %v5190
        %v5192 = vpop.f32.mrb[0].mxu0
        %v5193 = vadd.f32 %v4943, %v5192
        %v5194 = vpop.f32.mrb[0].mxu0
        %v5195 = vadd.f32 %v4939, %v5194
        %v5196 = vpop.f32.mrb[0].mxu0
        %v5197 = vadd.f32 %v4943, %v5196
        %5198 = vmatprep.mubr.bf16.mxu0 0
        %5199 = vmatmul.mubr.bf16.gmra.mrb[0].mxu0 %v4891
        %v5200 = vpop.f32.mrb[0].mxu0
        %v5201 = vadd.f32 %v4939, %v5200
        %v5202 = vpop.f32.mrb[0].mxu0
        %v5203 = vadd.f32 %v4943, %v5202
        %v5204 = vpop.f32.mrb[0].mxu0
        %v5205 = vadd.f32 %v4939, %v5204
        %v5206 = vpop.f32.mrb[0].mxu0
        %v5207 = vadd.f32 %v4943, %v5206
        %5208 = vmatprep.mubr.bf16.mxu0 0
        %5209 = vmatmul.mubr.bf16.gmra.mrb[0].mxu0 %v4892
        %v5210 = vpop.f32.mrb[0].mxu0
        %v5211 = vadd.f32 %v4939, %v5210
        %v5212 = vpop.f32.mrb[0].mxu0
        %v5213 = vadd.f32 %v4943, %v5212
        %v5214 = vpop.f32.mrb[0].mxu0
        %v5215 = vadd.f32 %v4939, %v5214
        %v5216 = vpop.f32.mrb[0].mxu0
        %v5217 = vadd.f32 %v4943, %v5216
        %5218 = vmatprep.mubr.bf16.mxu0 0
        %5219 = vmatmul.mubr.bf16.gmra.mrb[0].mxu0 %v4893
        %v5220 = vpop.f32.mrb[0].mxu0
        %v5221 = vadd.f32 %v4939, %v5220
        %v5222 = vpop.f32.mrb[0].mxu0
        %v5223 = vadd.f32 %v4943, %v5222
        %v5224 = vpop.f32.mrb[0].mxu0
        %v5225 = vadd.f32 %v4939, %v5224
        %v5226 = vpop.f32.mrb[0].mxu0
        %v5227 = vadd.f32 %v4943, %v5226
        %5228 = vmatprep.mubr.bf16.mxu0 0
        %5229 = vmatmul.mubr.bf16.gmra.mrb[0].mxu0 %v4894
        %v5230 = vpop.f32.mrb[0].mxu0
        %v5231 = vadd.f32 %v4939, %v5230
        %v5232 = vpop.f32.mrb[0].mxu0
        %v5233 = vadd.f32 %v4943, %v5232
        %v5234 = vpop.f32.mrb[0].mxu0
        %v5235 = vadd.f32 %v4939, %v5234
        %v5236 = vpop.f32.mrb[0].mxu0
        %v5237 = vadd.f32 %v4943, %v5236
        %5238 = vmatprep.mubr.bf16.mxu0 0
        %5239 = vmatmul.mubr.bf16.gmra.mrb[0].mxu0 %v4895
        %v5240 = vpop.f32.mrb[0].mxu0
        %v5241 = vadd.f32 %v4939, %v5240
        %v5242 = vpop.f32.mrb[0].mxu0
        %v5243 = vadd.f32 %v4943, %v5242
        %v5244 = vpop.f32.mrb[0].mxu0
        %v5245 = vadd.f32 %v4939, %v5244
        %v5246 = vpop.f32.mrb[0].mxu0
        %v5247 = vadd.f32 %v4943, %v5246
        %5248 = vmatprep.mubr.bf16.mxu0 0
        %5249 = vmatmul.mubr.bf16.gmra.mrb[0].mxu0 %v4896
        %v5250 = vpop.f32.mrb[0].mxu0
        %v5251 = vadd.f32 %v4939, %v5250
        %v5252 = vpop.f32.mrb[0].mxu0
        %v5253 = vadd.f32 %v4943, %v5252
        %v5254 = vpop.f32.mrb[0].mxu0
        %v5255 = vadd.f32 %v4939, %v5254
        %v5256 = vpop.f32.mrb[0].mxu0
        %v5257 = vadd.f32 %v4943, %v5256
        %5258 = vmatprep.mubr.bf16.mxu0 0
        %5259 = vmatmul.mubr.bf16.gmra.mrb[0].mxu0 %v4897
        %v5260 = vpop.f32.mrb[0].mxu0
        %v5261 = vadd.f32 %v4939, %v5260
        %v5262 = vpop.f32.mrb[0].mxu0
        %v5263 = vadd.f32 %v4943, %v5262
        %v5264 = vpop.f32.mrb[0].mxu0
        %v5265 = vadd.f32 %v4939, %v5264
        %v5266 = vpop.f32.mrb[0].mxu0
        %v5267 = vadd.f32 %v4943, %v5266
        %5268 = vmatprep.mubr.bf16.mxu0 0
        %5269 = vmatmul.mubr.bf16.gmra.mrb[0].mxu0 %v4898
        %v5270 = vpop.f32.mrb[0].mxu0
        %v5271 = vadd.f32 %v4939, %v5270
        %v5272 = vpop.f32.mrb[0].mxu0
        %v5273 = vadd.f32 %v4943, %v5272
        %v5274 = vpop.f32.mrb[0].mxu0
        %v5275 = vadd.f32 %v4939, %v5274
        %v5276 = vpop.f32.mrb[0].mxu0
        %v5277 = vadd.f32 %v4943, %v5276
        %5278 = vmatprep.mubr.bf16.mxu0 0
        %5279 = vmatmul.mubr.bf16.gmra.mrb[0].mxu0 %v4899
        %v5280 = vpop.f32.mrb[0].mxu0
        %v5281 = vadd.f32 %v4939, %v5280
        %v5282 = vpop.f32.mrb[0].mxu0
        %v5283 = vadd.f32 %v4943, %v5282
        %v5284 = vpop.f32.mrb[0].mxu0
        %v5285 = vadd.f32 %v4939, %v5284
        %v5286 = vpop.f32.mrb[0].mxu0
        %v5287 = vadd.f32 %v4943, %v5286
        %5288 = vmatprep.mubr.bf16.mxu0 0
        %5289 = vmatmul.mubr.bf16.gmra.mrb[0].mxu0 %v4900
        %v5290 = vpop.f32.mrb[0].mxu0
        %v5291 = vadd.f32 %v4939, %v5290
        %v5292 = vpop.f32.mrb[0].mxu0
        %v5293 = vadd.f32 %v4943, %v5292
        %v5294 = vpop.f32.mrb[0].mxu0
        %v5295 = vadd.f32 %v4939, %v5294
        %v5296 = vpop.f32.mrb[0].mxu0
        %v5297 = vadd.f32 %v4943, %v5296
        %5298 = vmatprep.mubr.bf16.mxu0 0
        %5299 = vmatmul.mubr.bf16.gmra.mrb[0].mxu0 %v4901
        %v5300 = vpop.f32.mrb[0].mxu0
        %v5301 = vadd.f32 %v4939, %v5300
        %v5302 = vpop.f32.mrb[0].mxu0
        %v5303 = vadd.f32 %v4943, %v5302
        %v5304 = vpop.f32.mrb[0].mxu0
        %v5305 = vadd.f32 %v4939, %v5304
        %v5306 = vpop.f32.mrb[0].mxu0
        %v5307 = vadd.f32 %v4943, %v5306
        %5308 = vdwg.mxu0
        %5309 = vmatprep.subr.bf16.mxu0 %v5055
        %5310 = vmatpush1.bf16.msra.mxu0 %v5054
        %5311 = vmatprep.subr.bf16.mxu0 %v5059
        %5312 = vmatpush1.bf16.msra.mxu0 %v5058
        %5313 = vmatprep.subr.bf16.mxu0 %v5063
        %5314 = vmatpush1.bf16.msra.mxu0 %v5062
        %5315 = vmatprep.subr.bf16.mxu0 %v5067
        %5316 = vmatpush1.bf16.msra.mxu0 %v5066
        %5317 = vmatprep.subr.bf16.mxu0 %v5071
        %5318 = vmatpush1.bf16.msra.mxu0 %v5070
        %5319 = vmatprep.subr.bf16.mxu0 %v5075
        %5320 = vmatpush1.bf16.msra.mxu0 %v5074
        %5321 = vmatprep.subr.bf16.mxu0 %v5079
        %5322 = vmatpush1.bf16.msra.mxu0 %v5078
        %5323 = vmatprep.subr.bf16.mxu0 %v5083
        %5324 = vmatpush1.bf16.msra.mxu0 %v5082
        %5325 = vmatprep.subr.bf16.mxu0 0
        %5326 = vmatpush1.bf16.msra.mxu0 0
        %5327 = vmatprep.subr.bf16.mxu0 0
        %5328 = vmatpush1.bf16.msra.mxu0 0
        %5329 = vmatprep.subr.bf16.mxu0 0
        %5330 = vmatpush1.bf16.msra.mxu0 0
        %5331 = vmatprep.subr.bf16.mxu0 0
        %5332 = vmatpush1.bf16.msra.mxu0 0
        %5333 = vmatprep.subr.bf16.mxu0 0
        %5334 = vmatpush1.bf16.msra.mxu0 0
        %5335 = vmatprep.subr.bf16.mxu0 0
        %5336 = vmatpush1.bf16.msra.mxu0 0
        %5337 = vmatprep.subr.bf16.mxu0 0
        %5338 = vmatpush1.bf16.msra.mxu0 0
        %5339 = vmatprep.subr.bf16.mxu0 0
        %5340 = vmatpush1.bf16.msra.mxu0 0
        %5341 = vmatprep.mubr.bf16.mxu0 0
        %5342 = vmatmul.mubr.bf16.gmra.mrb[0].mxu0 %v4886
        %v5343 = vpop.f32.mrb[0].mxu0
        %v5344 = vadd.f32 %v4947, %v5343
        %v5345 = vpop.f32.mrb[0].mxu0
        %v5346 = vadd.f32 %v4951, %v5345
        %v5347 = vpop.f32.mrb[0].mxu0
        %v5348 = vadd.f32 %v4947, %v5347
        %v5349 = vpop.f32.mrb[0].mxu0
        %v5350 = vadd.f32 %v4951, %v5349
        %5351 = vmatprep.mubr.bf16.mxu0 0
        %5352 = vmatmul.mubr.bf16.gmra.mrb[0].mxu0 %v4887
        %v5353 = vpop.f32.mrb[0].mxu0
        %v5354 = vadd.f32 %v4947, %v5353
        %v5355 = vpop.f32.mrb[0].mxu0
        %v5356 = vadd.f32 %v4951, %v5355
        %v5357 = vpop.f32.mrb[0].mxu0
        %v5358 = vadd.f32 %v4947, %v5357
        %v5359 = vpop.f32.mrb[0].mxu0
        %v5360 = vadd.f32 %v4951, %v5359
        %5361 = vmatprep.mubr.bf16.mxu0 0
        %5362 = vmatmul.mubr.bf16.gmra.mrb[0].mxu0 %v4888
        %v5363 = vpop.f32.mrb[0].mxu0
        %v5364 = vadd.f32 %v4947, %v5363
        %v5365 = vpop.f32.mrb[0].mxu0
        %v5366 = vadd.f32 %v4951, %v5365
        %v5367 = vpop.f32.mrb[0].mxu0
        %v5368 = vadd.f32 %v4947, %v5367
        %v5369 = vpop.f32.mrb[0].mxu0
        %v5370 = vadd.f32 %v4951, %v5369
        %5371 = vmatprep.mubr.bf16.mxu0 0
        %5372 = vmatmul.mubr.bf16.gmra.mrb[0].mxu0 %v4889
        %v5373 = vpop.f32.mrb[0].mxu0
        %v5374 = vadd.f32 %v4947, %v5373
        %v5375 = vpop.f32.mrb[0].mxu0
        %v5376 = vadd.f32 %v4951, %v5375
        %v5377 = vpop.f32.mrb[0].mxu0
        %v5378 = vadd.f32 %v4947, %v5377
        %v5379 = vpop.f32.mrb[0].mxu0
        %v5380 = vadd.f32 %v4951, %v5379
        %5381 = vmatprep.mubr.bf16.mxu0 0
        %5382 = vmatmul.mubr.bf16.gmra.mrb[0].mxu0 %v4890
        %v5383 = vpop.f32.mrb[0].mxu0
        %v5384 = vadd.f32 %v4947, %v5383
        %v5385 = vpop.f32.mrb[0].mxu0
        %v5386 = vadd.f32 %v4951, %v5385
        %v5387 = vpop.f32.mrb[0].mxu0
        %v5388 = vadd.f32 %v4947, %v5387
        %v5389 = vpop.f32.mrb[0].mxu0
        %v5390 = vadd.f32 %v4951, %v5389
        %5391 = vmatprep.mubr.bf16.mxu0 0
        %5392 = vmatmul.mubr.bf16.gmra.mrb[0].mxu0 %v4891
        %v5393 = vpop.f32.mrb[0].mxu0
        %v5394 = vadd.f32 %v4947, %v5393
        %v5395 = vpop.f32.mrb[0].mxu0
        %v5396 = vadd.f32 %v4951, %v5395
        %v5397 = vpop.f32.mrb[0].mxu0
        %v5398 = vadd.f32 %v4947, %v5397
        %v5399 = vpop.f32.mrb[0].mxu0
        %v5400 = vadd.f32 %v4951, %v5399
        %5401 = vmatprep.mubr.bf16.mxu0 0
        %5402 = vmatmul.mubr.bf16.gmra.mrb[0].mxu0 %v4892
        %v5403 = vpop.f32.mrb[0].mxu0
        %v5404 = vadd.f32 %v4947, %v5403
        %v5405 = vpop.f32.mrb[0].mxu0
        %v5406 = vadd.f32 %v4951, %v5405
        %v5407 = vpop.f32.mrb[0].mxu0
        %v5408 = vadd.f32 %v4947, %v5407
        %v5409 = vpop.f32.mrb[0].mxu0
        %v5410 = vadd.f32 %v4951, %v5409
        %5411 = vmatprep.mubr.bf16.mxu0 0
        %5412 = vmatmul.mubr.bf16.gmra.mrb[0].mxu0 %v4893
        %v5413 = vpop.f32.mrb[0].mxu0
        %v5414 = vadd.f32 %v4947, %v5413
        %v5415 = vpop.f32.mrb[0].mxu0
        %v5416 = vadd.f32 %v4951, %v5415
        %v5417 = vpop.f32.mrb[0].mxu0
        %v5418 = vadd.f32 %v4947, %v5417
        %v5419 = vpop.f32.mrb[0].mxu0
        %v5420 = vadd.f32 %v4951, %v5419
        %5421 = vmatprep.mubr.bf16.mxu0 0
        %5422 = vmatmul.mubr.bf16.gmra.mrb[0].mxu0 %v4894
        %v5423 = vpop.f32.mrb[0].mxu0
        %v5424 = vadd.f32 %v4947, %v5423
        %v5425 = vpop.f32.mrb[0].mxu0
        %v5426 = vadd.f32 %v4951, %v5425
        %v5427 = vpop.f32.mrb[0].mxu0
        %v5428 = vadd.f32 %v4947, %v5427
        %v5429 = vpop.f32.mrb[0].mxu0
        %v5430 = vadd.f32 %v4951, %v5429
        %5431 = vmatprep.mubr.bf16.mxu0 0
        %5432 = vmatmul.mubr.bf16.gmra.mrb[0].mxu0 %v4895
        %v5433 = vpop.f32.mrb[0].mxu0
        %v5434 = vadd.f32 %v4947, %v5433
        %v5435 = vpop.f32.mrb[0].mxu0
        %v5436 = vadd.f32 %v4951, %v5435
        %v5437 = vpop.f32.mrb[0].mxu0
        %v5438 = vadd.f32 %v4947, %v5437
        %v5439 = vpop.f32.mrb[0].mxu0
        %v5440 = vadd.f32 %v4951, %v5439
        %5441 = vmatprep.mubr.bf16.mxu0 0
        %5442 = vmatmul.mubr.bf16.gmra.mrb[0].mxu0 %v4896
        %v5443 = vpop.f32.mrb[0].mxu0
        %v5444 = vadd.f32 %v4947, %v5443
        %v5445 = vpop.f32.mrb[0].mxu0
        %v5446 = vadd.f32 %v4951, %v5445
        %v5447 = vpop.f32.mrb[0].mxu0
        %v5448 = vadd.f32 %v4947, %v5447
        %v5449 = vpop.f32.mrb[0].mxu0
        %v5450 = vadd.f32 %v4951, %v5449
        %5451 = vmatprep.mubr.bf16.mxu0 0
        %5452 = vmatmul.mubr.bf16.gmra.mrb[0].mxu0 %v4897
        %v5453 = vpop.f32.mrb[0].mxu0
        %v5454 = vadd.f32 %v4947, %v5453
        %v5455 = vpop.f32.mrb[0].mxu0
        %v5456 = vadd.f32 %v4951, %v5455
        %v5457 = vpop.f32.mrb[0].mxu0
        %v5458 = vadd.f32 %v4947, %v5457
        %v5459 = vpop.f32.mrb[0].mxu0
        %v5460 = vadd.f32 %v4951, %v5459
        %5461 = vmatprep.mubr.bf16.mxu0 0
        %5462 = vmatmul.mubr.bf16.gmra.mrb[0].mxu0 %v4898
        %v5463 = vpop.f32.mrb[0].mxu0
        %v5464 = vadd.f32 %v4947, %v5463
        %v5465 = vpop.f32.mrb[0].mxu0
        %v5466 = vadd.f32 %v4951, %v5465
        %v5467 = vpop.f32.mrb[0].mxu0
        %v5468 = vadd.f32 %v4947, %v5467
        %v5469 = vpop.f32.mrb[0].mxu0
        %v5470 = vadd.f32 %v4951, %v5469
        %5471 = vmatprep.mubr.bf16.mxu0 0
        %5472 = vmatmul.mubr.bf16.gmra.mrb[0].mxu0 %v4899
        %v5473 = vpop.f32.mrb[0].mxu0
        %v5474 = vadd.f32 %v4947, %v5473
        %v5475 = vpop.f32.mrb[0].mxu0
        %v5476 = vadd.f32 %v4951, %v5475
        %v5477 = vpop.f32.mrb[0].mxu0
        %v5478 = vadd.f32 %v4947, %v5477
        %v5479 = vpop.f32.mrb[0].mxu0
        %v5480 = vadd.f32 %v4951, %v5479
        %5481 = vmatprep.mubr.bf16.mxu0 0
        %5482 = vmatmul.mubr.bf16.gmra.mrb[0].mxu0 %v4900
        %v5483 = vpop.f32.mrb[0].mxu0
        %v5484 = vadd.f32 %v4947, %v5483
        %v5485 = vpop.f32.mrb[0].mxu0
        %v5486 = vadd.f32 %v4951, %v5485
        %v5487 = vpop.f32.mrb[0].mxu0
        %v5488 = vadd.f32 %v4947, %v5487
        %v5489 = vpop.f32.mrb[0].mxu0
        %v5490 = vadd.f32 %v4951, %v5489
        %5491 = vmatprep.mubr.bf16.mxu0 0
        %5492 = vmatmul.mubr.bf16.gmra.mrb[0].mxu0 %v4901
        %v5493 = vpop.f32.mrb[0].mxu0
        %v5494 = vadd.f32 %v4947, %v5493
        %v5495 = vpop.f32.mrb[0].mxu0
        %v5496 = vadd.f32 %v4951, %v5495
        %v5497 = vpop.f32.mrb[0].mxu0
        %v5498 = vadd.f32 %v4947, %v5497
        %v5499 = vpop.f32.mrb[0].mxu0
        %v5500 = vadd.f32 %v4951, %v5499
        %5501 = vdwg.mxu0
        %v5502 = vmax.f32 %v5151, 0.0
        %v5503 = vmax.f32 %v5153, 0.0
        %v5504 = vmax.f32 %v5344, 0.0
        %v5505 = vmax.f32 %v5346, 0.0
        %v5506 = vmax.f32 %v5155, 0.0
        %v5507 = vmax.f32 %v5157, 0.0
        %v5508 = vmax.f32 %v5348, 0.0
        %v5509 = vmax.f32 %v5350, 0.0
        %v5510 = vmax.f32 %v5161, 0.0
        %v5511 = vmax.f32 %v5163, 0.0
        %v5512 = vmax.f32 %v5354, 0.0
        %v5513 = vmax.f32 %v5356, 0.0
        %v5514 = vmax.f32 %v5165, 0.0
        %v5515 = vmax.f32 %v5167, 0.0
        %v5516 = vmax.f32 %v5358, 0.0
        %v5517 = vmax.f32 %v5360, 0.0
        %v5518 = vmax.f32 %v5171, 0.0
        %v5519 = vmax.f32 %v5173, 0.0
        %v5520 = vmax.f32 %v5364, 0.0
        %v5521 = vmax.f32 %v5366, 0.0
        %v5522 = vmax.f32 %v5175, 0.0
        %v5523 = vmax.f32 %v5177, 0.0
        %v5524 = vmax.f32 %v5368, 0.0
        %v5525 = vmax.f32 %v5370, 0.0
        %v5526 = vmax.f32 %v5181, 0.0
        %v5527 = vmax.f32 %v5183, 0.0
        %v5528 = vmax.f32 %v5374, 0.0
        %v5529 = vmax.f32 %v5376, 0.0
        %v5530 = vmax.f32 %v5185, 0.0
        %v5531 = vmax.f32 %v5187, 0.0
        %v5532 = vmax.f32 %v5378, 0.0
        %v5533 = vmax.f32 %v5380, 0.0
        %v5534 = vmax.f32 %v5191, 0.0
        %v5535 = vmax.f32 %v5193, 0.0
        %v5536 = vmax.f32 %v5384, 0.0
        %v5537 = vmax.f32 %v5386, 0.0
        %v5538 = vmax.f32 %v5195, 0.0
        %v5539 = vmax.f32 %v5197, 0.0
        %v5540 = vmax.f32 %v5388, 0.0
        %v5541 = vmax.f32 %v5390, 0.0
        %v5542 = vmax.f32 %v5201, 0.0
        %v5543 = vmax.f32 %v5203, 0.0
        %v5544 = vmax.f32 %v5394, 0.0
        %v5545 = vmax.f32 %v5396, 0.0
        %v5546 = vmax.f32 %v5205, 0.0
        %v5547 = vmax.f32 %v5207, 0.0
        %v5548 = vmax.f32 %v5398, 0.0
        %v5549 = vmax.f32 %v5400, 0.0
        %v5550 = vmax.f32 %v5211, 0.0
        %v5551 = vmax.f32 %v5213, 0.0
        %v5552 = vmax.f32 %v5404, 0.0
        %v5553 = vmax.f32 %v5406, 0.0
        %v5554 = vmax.f32 %v5215, 0.0
        %v5555 = vmax.f32 %v5217, 0.0
        %v5556 = vmax.f32 %v5408, 0.0
        %v5557 = vmax.f32 %v5410, 0.0
        %v5558 = vmax.f32 %v5221, 0.0
        %v5559 = vmax.f32 %v5223, 0.0
        %v5560 = vmax.f32 %v5414, 0.0
        %v5561 = vmax.f32 %v5416, 0.0
        %v5562 = vmax.f32 %v5225, 0.0
        %v5563 = vmax.f32 %v5227, 0.0
        %v5564 = vmax.f32 %v5418, 0.0
        %v5565 = vmax.f32 %v5420, 0.0
        %v5566 = vmax.f32 %v5231, 0.0
        %v5567 = vmax.f32 %v5233, 0.0
        %v5568 = vmax.f32 %v5424, 0.0
        %v5569 = vmax.f32 %v5426, 0.0
        %v5570 = vmax.f32 %v5235, 0.0
        %v5571 = vmax.f32 %v5237, 0.0
        %v5572 = vmax.f32 %v5428, 0.0
        %v5573 = vmax.f32 %v5430, 0.0
        %v5574 = vmax.f32 %v5241, 0.0
        %v5575 = vmax.f32 %v5243, 0.0
        %v5576 = vmax.f32 %v5434, 0.0
        %v5577 = vmax.f32 %v5436, 0.0
        %v5578 = vmax.f32 %v5245, 0.0
        %v5579 = vmax.f32 %v5247, 0.0
        %v5580 = vmax.f32 %v5438, 0.0
        %v5581 = vmax.f32 %v5440, 0.0
        %v5582 = vmax.f32 %v5251, 0.0
        %v5583 = vmax.f32 %v5253, 0.0
        %v5584 = vmax.f32 %v5444, 0.0
        %v5585 = vmax.f32 %v5446, 0.0
        %v5586 = vmax.f32 %v5255, 0.0
        %v5587 = vmax.f32 %v5257, 0.0
        %v5588 = vmax.f32 %v5448, 0.0
        %v5589 = vmax.f32 %v5450, 0.0
        %v5590 = vmax.f32 %v5261, 0.0
        %v5591 = vmax.f32 %v5263, 0.0
        %v5592 = vmax.f32 %v5454, 0.0
        %v5593 = vmax.f32 %v5456, 0.0
        %v5594 = vmax.f32 %v5265, 0.0
        %v5595 = vmax.f32 %v5267, 0.0
        %v5596 = vmax.f32 %v5458, 0.0
        %v5597 = vmax.f32 %v5460, 0.0
        %v5598 = vmax.f32 %v5271, 0.0
        %v5599 = vmax.f32 %v5273, 0.0
        %v5600 = vmax.f32 %v5464, 0.0
        %v5601 = vmax.f32 %v5466, 0.0
        %v5602 = vmax.f32 %v5275, 0.0
        %v5603 = vmax.f32 %v5277, 0.0
        %v5604 = vmax.f32 %v5468, 0.0
        %v5605 = vmax.f32 %v5470, 0.0
        %v5606 = vmax.f32 %v5281, 0.0
        %v5607 = vmax.f32 %v5283, 0.0
        %v5608 = vmax.f32 %v5474, 0.0
        %v5609 = vmax.f32 %v5476, 0.0
        %v5610 = vmax.f32 %v5285, 0.0
        %v5611 = vmax.f32 %v5287, 0.0
        %v5612 = vmax.f32 %v5478, 0.0
        %v5613 = vmax.f32 %v5480, 0.0
        %v5614 = vmax.f32 %v5291, 0.0
        %v5615 = vmax.f32 %v5293, 0.0
        %v5616 = vmax.f32 %v5484, 0.0
        %v5617 = vmax.f32 %v5486, 0.0
        %v5618 = vmax.f32 %v5295, 0.0
        %v5619 = vmax.f32 %v5297, 0.0
        %v5620 = vmax.f32 %v5488, 0.0
        %v5621 = vmax.f32 %v5490, 0.0
        %v5622 = vmax.f32 %v5301, 0.0
        %v5623 = vmax.f32 %v5303, 0.0
        %v5624 = vmax.f32 %v5494, 0.0
        %v5625 = vmax.f32 %v5496, 0.0
        %v5626 = vmax.f32 %v5305, 0.0
        %v5627 = vmax.f32 %v5307, 0.0
        %v5628 = vmax.f32 %v5498, 0.0
        %v5629 = vmax.f32 %v5500, 0.0
        %v5630 = vpack.c.bf16 %v5506, %v5502
        %v5631 = vpack.c.bf16 %v5507, %v5503
        %v5632 = vpack.c.bf16 %v5508, %v5504
        %v5633 = vpack.c.bf16 %v5509, %v5505
        %v5634 = vpack.c.bf16 %v5514, %v5510
        %v5635 = vpack.c.bf16 %v5515, %v5511
        %v5636 = vpack.c.bf16 %v5516, %v5512
        %v5637 = vpack.c.bf16 %v5517, %v5513
        %v5638 = vpack.c.bf16 %v5522, %v5518
        %v5639 = vpack.c.bf16 %v5523, %v5519
        %v5640 = vpack.c.bf16 %v5524, %v5520
        %v5641 = vpack.c.bf16 %v5525, %v5521
        %v5642 = vpack.c.bf16 %v5530, %v5526
        %v5643 = vpack.c.bf16 %v5531, %v5527
        %v5644 = vpack.c.bf16 %v5532, %v5528
        %v5645 = vpack.c.bf16 %v5533, %v5529
        %v5646 = vpack.c.bf16 %v5538, %v5534
        %v5647 = vpack.c.bf16 %v5539, %v5535
        %v5648 = vpack.c.bf16 %v5540, %v5536
        %v5649 = vpack.c.bf16 %v5541, %v5537
        %v5650 = vpack.c.bf16 %v5546, %v5542
        %v5651 = vpack.c.bf16 %v5547, %v5543
        %v5652 = vpack.c.bf16 %v5548, %v5544
        %v5653 = vpack.c.bf16 %v5549, %v5545
        %v5654 = vpack.c.bf16 %v5554, %v5550
        %v5655 = vpack.c.bf16 %v5555, %v5551
        %v5656 = vpack.c.bf16 %v5556, %v5552
        %v5657 = vpack.c.bf16 %v5557, %v5553
        %v5658 = vpack.c.bf16 %v5562, %v5558
        %v5659 = vpack.c.bf16 %v5563, %v5559
        %v5660 = vpack.c.bf16 %v5564, %v5560
        %v5661 = vpack.c.bf16 %v5565, %v5561
        %v5662 = vpack.c.bf16 %v5570, %v5566
        %v5663 = vpack.c.bf16 %v5571, %v5567
        %v5664 = vpack.c.bf16 %v5572, %v5568
        %v5665 = vpack.c.bf16 %v5573, %v5569
        %v5666 = vpack.c.bf16 %v5578, %v5574
        %v5667 = vpack.c.bf16 %v5579, %v5575
        %v5668 = vpack.c.bf16 %v5580, %v5576
        %v5669 = vpack.c.bf16 %v5581, %v5577
        %v5670 = vpack.c.bf16 %v5586, %v5582
        %v5671 = vpack.c.bf16 %v5587, %v5583
        %v5672 = vpack.c.bf16 %v5588, %v5584
        %v5673 = vpack.c.bf16 %v5589, %v5585
        %v5674 = vpack.c.bf16 %v5594, %v5590
        %v5675 = vpack.c.bf16 %v5595, %v5591
        %v5676 = vpack.c.bf16 %v5596, %v5592
        %v5677 = vpack.c.bf16 %v5597, %v5593
        %v5678 = vpack.c.bf16 %v5602, %v5598
        %v5679 = vpack.c.bf16 %v5603, %v5599
        %v5680 = vpack.c.bf16 %v5604, %v5600
        %v5681 = vpack.c.bf16 %v5605, %v5601
        %v5682 = vpack.c.bf16 %v5610, %v5606
        %v5683 = vpack.c.bf16 %v5611, %v5607
        %v5684 = vpack.c.bf16 %v5612, %v5608
        %v5685 = vpack.c.bf16 %v5613, %v5609
        %v5686 = vpack.c.bf16 %v5618, %v5614
        %v5687 = vpack.c.bf16 %v5619, %v5615
        %v5688 = vpack.c.bf16 %v5620, %v5616
        %v5689 = vpack.c.bf16 %v5621, %v5617
        %v5690 = vpack.c.bf16 %v5626, %v5622
        %v5691 = vpack.c.bf16 %v5627, %v5623
        %v5692 = vpack.c.bf16 %v5628, %v5624
        %v5693 = vpack.c.bf16 %v5629, %v5625
        %v5694 = vld [vmem:[#allocation14] sm:$0xff]
        %v5695 = vld [vmem:[#allocation14 + $0x8] sm:$0xff]
        %v5696 = vld [vmem:[#allocation14 + $0x10] sm:$0xff]
        %v5697 = vld [vmem:[#allocation14 + $0x18] sm:$0xf]
        %v5698 = vld [vmem:[#allocation14 + $0x1c] sm:$0xff]
        %v5699 = vld [vmem:[#allocation14 + $0x24] sm:$0xff]
        %v5700 = vld [vmem:[#allocation14 + $0x2c] sm:$0xff]
        %v5701 = vld [vmem:[#allocation14 + $0x34] sm:$0xf]
        %v5702 = vld [vmem:[#allocation14 + $0x38] sm:$0xff]
        %v5703 = vld [vmem:[#allocation14 + $0x40] sm:$0xff]
        %v5704 = vld [vmem:[#allocation14 + $0x48] sm:$0xff]
        %v5705 = vld [vmem:[#allocation14 + $0x50] sm:$0xf]
        %v5706 = vld [vmem:[#allocation14 + $0x54] sm:$0xff]
        %v5707 = vld [vmem:[#allocation14 + $0x5c] sm:$0xff]
        %v5708 = vld [vmem:[#allocation14 + $0x64] sm:$0xff]
        %v5709 = vld [vmem:[#allocation14 + $0x6c] sm:$0xf]
        %v5710 = vld [vmem:[#allocation14 + $0x70] sm:$0xff]
        %v5711 = vld [vmem:[#allocation14 + $0x78] sm:$0xff]
        %v5712 = vld [vmem:[#allocation14 + $0x80] sm:$0xff]
        %v5713 = vld [vmem:[#allocation14 + $0x88] sm:$0xf]
        %v5714 = vld [vmem:[#allocation14 + $0x8c] sm:$0xff]
        %v5715 = vld [vmem:[#allocation14 + $0x94] sm:$0xff]
        %v5716 = vld [vmem:[#allocation14 + $0x9c] sm:$0xff]
        %v5717 = vld [vmem:[#allocation14 + $0xa4] sm:$0xf]
        %v5718 = vld [vmem:[#allocation14 + $0xa8] sm:$0xff]
        %v5719 = vld [vmem:[#allocation14 + $0xb0] sm:$0xff]
        %v5720 = vld [vmem:[#allocation14 + $0xb8] sm:$0xff]
        %v5721 = vld [vmem:[#allocation14 + $0xc0] sm:$0xf]
        %v5722 = vld [vmem:[#allocation14 + $0xc4] sm:$0xff]
        %v5723 = vld [vmem:[#allocation14 + $0xcc] sm:$0xff]
        %v5724 = vld [vmem:[#allocation14 + $0xd4] sm:$0xff]
        %v5725 = vld [vmem:[#allocation14 + $0xdc] sm:$0xf]
        %v5726 = vld [vmem:[#allocation14 + $0xe0] sm:$0xff]
        %v5727 = vld [vmem:[#allocation14 + $0xe8] sm:$0xff]
        %v5728 = vld [vmem:[#allocation14 + $0xf0] sm:$0xff]
        %v5729 = vld [vmem:[#allocation14 + $0xf8] sm:$0xf]
        %v5730 = vld [vmem:[#allocation14 + $0xfc] sm:$0xff]
        %v5731 = vld [vmem:[#allocation14 + $0x104] sm:$0xff]
        %v5732 = vld [vmem:[#allocation14 + $0x10c] sm:$0xff]
        %v5733 = vld [vmem:[#allocation14 + $0x114] sm:$0xf]
        %v5734 = vld [vmem:[#allocation14 + $0x118] sm:$0xff]
        %v5735 = vld [vmem:[#allocation14 + $0x120] sm:$0xff]
        %v5736 = vld [vmem:[#allocation14 + $0x128] sm:$0xff]
        %v5737 = vld [vmem:[#allocation14 + $0x130] sm:$0xf]
        %v5738 = vld [vmem:[#allocation14 + $0x134] sm:$0xff]
        %v5739 = vld [vmem:[#allocation14 + $0x13c] sm:$0xff]
        %v5740 = vld [vmem:[#allocation14 + $0x144] sm:$0xff]
        %v5741 = vld [vmem:[#allocation14 + $0x14c] sm:$0xf]
        %v5742 = vld [vmem:[#allocation14 + $0x150] sm:$0xff]
        %v5743 = vld [vmem:[#allocation14 + $0x158] sm:$0xff]
        %v5744 = vld [vmem:[#allocation14 + $0x160] sm:$0xff]
        %v5745 = vld [vmem:[#allocation14 + $0x168] sm:$0xf]
        %v5746 = vld [vmem:[#allocation14 + $0x16c] sm:$0xff]
        %v5747 = vld [vmem:[#allocation14 + $0x174] sm:$0xff]
        %v5748 = vld [vmem:[#allocation14 + $0x17c] sm:$0xff]
        %v5749 = vld [vmem:[#allocation14 + $0x184] sm:$0xf]
        %v5750 = vld [vmem:[#allocation14 + $0x188] sm:$0xff]
        %v5751 = vld [vmem:[#allocation14 + $0x190] sm:$0xff]
        %v5752 = vld [vmem:[#allocation14 + $0x198] sm:$0xff]
        %v5753 = vld [vmem:[#allocation14 + $0x1a0] sm:$0xf]
        %v5754 = vld [vmem:[#allocation14 + $0x1a4] sm:$0xff]
        %v5755 = vld [vmem:[#allocation14 + $0x1ac] sm:$0xff]
        %v5756 = vld [vmem:[#allocation14 + $0x1b4] sm:$0xff]
        %v5757 = vld [vmem:[#allocation14 + $0x1bc] sm:$0xf]
        %v5758 = vld [vmem:[#allocation14 + $0x1c0] sm:$0xff]
        %v5759 = vld [vmem:[#allocation14 + $0x1c8] sm:$0xff]
        %v5760 = vld [vmem:[#allocation14 + $0x1d0] sm:$0xff]
        %v5761 = vld [vmem:[#allocation14 + $0x1d8] sm:$0xf]
        %v5762 = vld [vmem:[#allocation14 + $0x1dc] sm:$0xff]
        %v5763 = vld [vmem:[#allocation14 + $0x1e4] sm:$0xff]
        %v5764 = vld [vmem:[#allocation14 + $0x1ec] sm:$0xff]
        %v5765 = vld [vmem:[#allocation14 + $0x1f4] sm:$0xf]
        %v5766 = vld [vmem:[#allocation14 + $0x1f8] sm:$0xff]
        %v5767 = vld [vmem:[#allocation14 + $0x200] sm:$0xff]
        %v5768 = vld [vmem:[#allocation14 + $0x208] sm:$0xff]
        %v5769 = vld [vmem:[#allocation14 + $0x210] sm:$0xf]
        %v5770 = vld [vmem:[#allocation14 + $0x214] sm:$0xff]
        %v5771 = vld [vmem:[#allocation14 + $0x21c] sm:$0xff]
        %v5772 = vld [vmem:[#allocation14 + $0x224] sm:$0xff]
        %v5773 = vld [vmem:[#allocation14 + $0x22c] sm:$0xf]
        %v5774 = vld [vmem:[#allocation14 + $0x230] sm:$0xff]
        %v5775 = vld [vmem:[#allocation14 + $0x238] sm:$0xff]
        %v5776 = vld [vmem:[#allocation14 + $0x240] sm:$0xff]
        %v5777 = vld [vmem:[#allocation14 + $0x248] sm:$0xf]
        %v5778 = vld [vmem:[#allocation14 + $0x24c] sm:$0xff]
        %v5779 = vld [vmem:[#allocation14 + $0x254] sm:$0xff]
        %v5780 = vld [vmem:[#allocation14 + $0x25c] sm:$0xff]
        %v5781 = vld [vmem:[#allocation14 + $0x264] sm:$0xf]
        %v5782 = vld [vmem:[#allocation14 + $0x268] sm:$0xff]
        %v5783 = vld [vmem:[#allocation14 + $0x270] sm:$0xff]
        %v5784 = vld [vmem:[#allocation14 + $0x278] sm:$0xff]
        %v5785 = vld [vmem:[#allocation14 + $0x280] sm:$0xf]
        %v5786 = vld [vmem:[#allocation14 + $0x284] sm:$0xff]
        %v5787 = vld [vmem:[#allocation14 + $0x28c] sm:$0xff]
        %v5788 = vld [vmem:[#allocation14 + $0x294] sm:$0xff]
        %v5789 = vld [vmem:[#allocation14 + $0x29c] sm:$0xf]
        %v5790 = vld [vmem:[#allocation14 + $0x2a0] sm:$0xff]
        %v5791 = vld [vmem:[#allocation14 + $0x2a8] sm:$0xff]
        %v5792 = vld [vmem:[#allocation14 + $0x2b0] sm:$0xff]
        %v5793 = vld [vmem:[#allocation14 + $0x2b8] sm:$0xf]
        %v5794 = vld [vmem:[#allocation14 + $0x2bc] sm:$0xff]
        %v5795 = vld [vmem:[#allocation14 + $0x2c4] sm:$0xff]
        %v5796 = vld [vmem:[#allocation14 + $0x2cc] sm:$0xff]
        %v5797 = vld [vmem:[#allocation14 + $0x2d4] sm:$0xf]
        %v5798 = vld [vmem:[#allocation14 + $0x2d8] sm:$0xff]
        %v5799 = vld [vmem:[#allocation14 + $0x2e0] sm:$0xff]
        %v5800 = vld [vmem:[#allocation14 + $0x2e8] sm:$0xff]
        %v5801 = vld [vmem:[#allocation14 + $0x2f0] sm:$0xf]
        %v5802 = vld [vmem:[#allocation14 + $0x2f4] sm:$0xff]
        %v5803 = vld [vmem:[#allocation14 + $0x2fc] sm:$0xff]
        %v5804 = vld [vmem:[#allocation14 + $0x304] sm:$0xff]
        %v5805 = vld [vmem:[#allocation14 + $0x30c] sm:$0xf]
        %v5806 = vld [vmem:[#allocation14 + $0x310] sm:$0xff]
        %v5807 = vld [vmem:[#allocation14 + $0x318] sm:$0xff]
        %v5808 = vld [vmem:[#allocation14 + $0x320] sm:$0xff]
        %v5809 = vld [vmem:[#allocation14 + $0x328] sm:$0xf]
        %v5810 = vld [vmem:[#allocation14 + $0x32c] sm:$0xff]
        %v5811 = vld [vmem:[#allocation14 + $0x334] sm:$0xff]
        %v5812 = vld [vmem:[#allocation14 + $0x33c] sm:$0xff]
        %v5813 = vld [vmem:[#allocation14 + $0x344] sm:$0xf]
        %v5814 = vld [vmem:[#allocation14 + $0x348] sm:$0xff]
        %v5815 = vld [vmem:[#allocation14 + $0x350] sm:$0xff]
        %v5816 = vld [vmem:[#allocation14 + $0x358] sm:$0xff]
        %v5817 = vld [vmem:[#allocation14 + $0x360] sm:$0xf]
        %v5818 = vld [vmem:[#allocation14 + $0x364] sm:$0xff]
        %v5819 = vld [vmem:[#allocation14 + $0x36c] sm:$0xff]
        %v5820 = vld [vmem:[#allocation14 + $0x374] sm:$0xff]
        %v5821 = vld [vmem:[#allocation14 + $0x37c] sm:$0xf]
        %v5822 = vld [vmem:[#allocation14 + $0x380] sm:$0xff]
        %v5823 = vld [vmem:[#allocation14 + $0x388] sm:$0xff]
        %v5824 = vld [vmem:[#allocation14 + $0x390] sm:$0xff]
        %v5825 = vld [vmem:[#allocation14 + $0x398] sm:$0xf]
        %v5826 = vld [vmem:[#allocation14 + $0x39c] sm:$0xff]
        %v5827 = vld [vmem:[#allocation14 + $0x3a4] sm:$0xff]
        %v5828 = vld [vmem:[#allocation14 + $0x3ac] sm:$0xff]
        %v5829 = vld [vmem:[#allocation14 + $0x3b4] sm:$0xf]
        %v5830 = vld [vmem:[#allocation14 + $0x3b8] sm:$0xff]
        %v5831 = vld [vmem:[#allocation14 + $0x3c0] sm:$0xff]
        %v5832 = vld [vmem:[#allocation14 + $0x3c8] sm:$0xff]
        %v5833 = vld [vmem:[#allocation14 + $0x3d0] sm:$0xf]
        %v5834 = vld [vmem:[#allocation14 + $0x3d4] sm:$0xff]
        %v5835 = vld [vmem:[#allocation14 + $0x3dc] sm:$0xff]
        %v5836 = vld [vmem:[#allocation14 + $0x3e4] sm:$0xff]
        %v5837 = vld [vmem:[#allocation14 + $0x3ec] sm:$0xf]
        %v5838 = vld [vmem:[#allocation14 + $0x3f0] sm:$0xff]
        %v5839 = vld [vmem:[#allocation14 + $0x3f8] sm:$0xff]
        %v5840 = vld [vmem:[#allocation14 + $0x400] sm:$0xff]
        %v5841 = vld [vmem:[#allocation14 + $0x408] sm:$0xf]
        %v5842 = vld [vmem:[#allocation14 + $0x40c] sm:$0xff]
        %v5843 = vld [vmem:[#allocation14 + $0x414] sm:$0xff]
        %v5844 = vld [vmem:[#allocation14 + $0x41c] sm:$0xff]
        %v5845 = vld [vmem:[#allocation14 + $0x424] sm:$0xf]
        %v5846 = vld [vmem:[#allocation14 + $0x428] sm:$0xff]
        %v5847 = vld [vmem:[#allocation14 + $0x430] sm:$0xff]
        %v5848 = vld [vmem:[#allocation14 + $0x438] sm:$0xff]
        %v5849 = vld [vmem:[#allocation14 + $0x440] sm:$0xf]
        %v5850 = vld [vmem:[#allocation14 + $0x444] sm:$0xff]
        %v5851 = vld [vmem:[#allocation14 + $0x44c] sm:$0xff]
        %v5852 = vld [vmem:[#allocation14 + $0x454] sm:$0xff]
        %v5853 = vld [vmem:[#allocation14 + $0x45c] sm:$0xf]
        %v5854 = vld [vmem:[#allocation14 + $0x460] sm:$0xff]
        %v5855 = vld [vmem:[#allocation14 + $0x468] sm:$0xff]
        %v5856 = vld [vmem:[#allocation14 + $0x470] sm:$0xff]
        %v5857 = vld [vmem:[#allocation14 + $0x478] sm:$0xf]
        %v5858 = vld [vmem:[#allocation14 + $0x47c] sm:$0xff]
        %v5859 = vld [vmem:[#allocation14 + $0x484] sm:$0xff]
        %v5860 = vld [vmem:[#allocation14 + $0x48c] sm:$0xff]
        %v5861 = vld [vmem:[#allocation14 + $0x494] sm:$0xf]
        %v5862 = vld [vmem:[#allocation14 + $0x498] sm:$0xff]
        %v5863 = vld [vmem:[#allocation14 + $0x4a0] sm:$0xff]
        %v5864 = vld [vmem:[#allocation14 + $0x4a8] sm:$0xff]
        %v5865 = vld [vmem:[#allocation14 + $0x4b0] sm:$0xf]
        %v5866 = vld [vmem:[#allocation14 + $0x4b4] sm:$0xff]
        %v5867 = vld [vmem:[#allocation14 + $0x4bc] sm:$0xff]
        %v5868 = vld [vmem:[#allocation14 + $0x4c4] sm:$0xff]
        %v5869 = vld [vmem:[#allocation14 + $0x4cc] sm:$0xf]
        %v5870 = vld [vmem:[#allocation14 + $0x4d0] sm:$0xff]
        %v5871 = vld [vmem:[#allocation14 + $0x4d8] sm:$0xff]
        %v5872 = vld [vmem:[#allocation14 + $0x4e0] sm:$0xff]
        %v5873 = vld [vmem:[#allocation14 + $0x4e8] sm:$0xf]
        %v5874 = vld [vmem:[#allocation14 + $0x4ec] sm:$0xff]
        %v5875 = vld [vmem:[#allocation14 + $0x4f4] sm:$0xff]
        %v5876 = vld [vmem:[#allocation14 + $0x4fc] sm:$0xff]
        %v5877 = vld [vmem:[#allocation14 + $0x504] sm:$0xf]
        %v5878 = vld [vmem:[#allocation14 + $0x508] sm:$0xff]
        %v5879 = vld [vmem:[#allocation14 + $0x510] sm:$0xff]
        %v5880 = vld [vmem:[#allocation14 + $0x518] sm:$0xff]
        %v5881 = vld [vmem:[#allocation14 + $0x520] sm:$0xf]
        %v5882 = vld [vmem:[#allocation14 + $0x524] sm:$0xff]
        %v5883 = vld [vmem:[#allocation14 + $0x52c] sm:$0xff]
        %v5884 = vld [vmem:[#allocation14 + $0x534] sm:$0xff]
        %v5885 = vld [vmem:[#allocation14 + $0x53c] sm:$0xf]
        %v5886 = vld [vmem:[#allocation14 + $0x540] sm:$0xff]
        %v5887 = vld [vmem:[#allocation14 + $0x548] sm:$0xff]
        %v5888 = vld [vmem:[#allocation14 + $0x550] sm:$0xff]
        %v5889 = vld [vmem:[#allocation14 + $0x558] sm:$0xf]
        %v5890 = vld [vmem:[#allocation14 + $0x55c] sm:$0xff]
        %v5891 = vld [vmem:[#allocation14 + $0x564] sm:$0xff]
        %v5892 = vld [vmem:[#allocation14 + $0x56c] sm:$0xff]
        %v5893 = vld [vmem:[#allocation14 + $0x574] sm:$0xf]
        %v5894 = vld [vmem:[#allocation14 + $0x578] sm:$0xff]
        %v5895 = vld [vmem:[#allocation14 + $0x580] sm:$0xff]
        %v5896 = vld [vmem:[#allocation14 + $0x588] sm:$0xff]
        %v5897 = vld [vmem:[#allocation14 + $0x590] sm:$0xf]
        %v5898 = vld [vmem:[#allocation14 + $0x594] sm:$0xff]
        %v5899 = vld [vmem:[#allocation14 + $0x59c] sm:$0xff]
        %v5900 = vld [vmem:[#allocation14 + $0x5a4] sm:$0xff]
        %v5901 = vld [vmem:[#allocation14 + $0x5ac] sm:$0xf]
        %v5902 = vld [vmem:[#allocation14 + $0x5b0] sm:$0xff]
        %v5903 = vld [vmem:[#allocation14 + $0x5b8] sm:$0xff]
        %v5904 = vld [vmem:[#allocation14 + $0x5c0] sm:$0xff]
        %v5905 = vld [vmem:[#allocation14 + $0x5c8] sm:$0xf]
        %v5906 = vld [vmem:[#allocation14 + $0x5cc] sm:$0xff]
        %v5907 = vld [vmem:[#allocation14 + $0x5d4] sm:$0xff]
        %v5908 = vld [vmem:[#allocation14 + $0x5dc] sm:$0xff]
        %v5909 = vld [vmem:[#allocation14 + $0x5e4] sm:$0xf]
        %v5910 = vld [vmem:[#allocation14 + $0x5e8] sm:$0xff]
        %v5911 = vld [vmem:[#allocation14 + $0x5f0] sm:$0xff]
        %v5912 = vld [vmem:[#allocation14 + $0x5f8] sm:$0xff]
        %v5913 = vld [vmem:[#allocation14 + $0x600] sm:$0xf]
        %v5914 = vld [vmem:[#allocation14 + $0x604] sm:$0xff]
        %v5915 = vld [vmem:[#allocation14 + $0x60c] sm:$0xff]
        %v5916 = vld [vmem:[#allocation14 + $0x614] sm:$0xff]
        %v5917 = vld [vmem:[#allocation14 + $0x61c] sm:$0xf]
        %v5918 = vld [vmem:[#allocation14 + $0x620] sm:$0xff]
        %v5919 = vld [vmem:[#allocation14 + $0x628] sm:$0xff]
        %v5920 = vld [vmem:[#allocation14 + $0x630] sm:$0xff]
        %v5921 = vld [vmem:[#allocation14 + $0x638] sm:$0xf]
        %v5922 = vld [vmem:[#allocation14 + $0x63c] sm:$0xff]
        %v5923 = vld [vmem:[#allocation14 + $0x644] sm:$0xff]
        %v5924 = vld [vmem:[#allocation14 + $0x64c] sm:$0xff]
        %v5925 = vld [vmem:[#allocation14 + $0x654] sm:$0xf]
        %v5926 = vld [vmem:[#allocation14 + $0x658] sm:$0xff]
        %v5927 = vld [vmem:[#allocation14 + $0x660] sm:$0xff]
        %v5928 = vld [vmem:[#allocation14 + $0x668] sm:$0xff]
        %v5929 = vld [vmem:[#allocation14 + $0x670] sm:$0xf]
        %v5930 = vld [vmem:[#allocation14 + $0x674] sm:$0xff]
        %v5931 = vld [vmem:[#allocation14 + $0x67c] sm:$0xff]
        %v5932 = vld [vmem:[#allocation14 + $0x684] sm:$0xff]
        %v5933 = vld [vmem:[#allocation14 + $0x68c] sm:$0xf]
        %v5934 = vld [vmem:[#allocation14 + $0x690] sm:$0xff]
        %v5935 = vld [vmem:[#allocation14 + $0x698] sm:$0xff]
        %v5936 = vld [vmem:[#allocation14 + $0x6a0] sm:$0xff]
        %v5937 = vld [vmem:[#allocation14 + $0x6a8] sm:$0xf]
        %v5938 = vld [vmem:[#allocation14 + $0x6ac] sm:$0xff]
        %v5939 = vld [vmem:[#allocation14 + $0x6b4] sm:$0xff]
        %v5940 = vld [vmem:[#allocation14 + $0x6bc] sm:$0xff]
        %v5941 = vld [vmem:[#allocation14 + $0x6c4] sm:$0xf]
        %v5942 = vld [vmem:[#allocation14 + $0x6c8] sm:$0xff]
        %v5943 = vld [vmem:[#allocation14 + $0x6d0] sm:$0xff]
        %v5944 = vld [vmem:[#allocation14 + $0x6d8] sm:$0xff]
        %v5945 = vld [vmem:[#allocation14 + $0x6e0] sm:$0xf]
        %v5946 = vld [vmem:[#allocation14 + $0x6e4] sm:$0xff]
        %v5947 = vld [vmem:[#allocation14 + $0x6ec] sm:$0xff]
        %v5948 = vld [vmem:[#allocation14 + $0x6f4] sm:$0xff]
        %v5949 = vld [vmem:[#allocation14 + $0x6fc] sm:$0xf]
        %v5950 = vld [vmem:[#allocation16] sm:$0xff]
        %v5952 = vlaneseq
        %v5953 = vshrl.u32 %v5952, 7
        %v5954 = vsub.s32 0, %v5953
        %v5955 = vrot.slane %v5950, %v5954
        %v5956 = vlaneseq
        %v5957 = vshrl.u32 %v5956, 7
        %v5958 = vsub.s32 1, %v5957
        %v5959 = vrot.slane %v5950, %v5958
        %v5960 = vlaneseq
        %v5961 = vshrl.u32 %v5960, 7
        %v5962 = vsub.s32 2, %v5961
        %v5963 = vrot.slane %v5950, %v5962
        %v5964 = vlaneseq
        %v5965 = vshrl.u32 %v5964, 7
        %v5966 = vsub.s32 3, %v5965
        %v5967 = vrot.slane %v5950, %v5966
        %v5968 = vlaneseq
        %v5969 = vshrl.u32 %v5968, 7
        %v5970 = vsub.s32 4, %v5969
        %v5971 = vrot.slane %v5950, %v5970
        %v5972 = vlaneseq
        %v5973 = vshrl.u32 %v5972, 7
        %v5974 = vsub.s32 5, %v5973
        %v5975 = vrot.slane %v5950, %v5974
        %v5976 = vlaneseq
        %v5977 = vshrl.u32 %v5976, 7
        %v5978 = vsub.s32 6, %v5977
        %v5979 = vrot.slane %v5950, %v5978
        %v6243 = vunpack.c.l.b16 %v5694
        %v6244 = vunpack.c.h.b16 %v5694
        %v6245 = vunpack.c.l.b16 %v5695
        %v6246 = vunpack.c.h.b16 %v5695
        %v6247 = vunpack.c.l.b16 %v5696
        %v6248 = vunpack.c.h.b16 %v5696
        %v6249 = vunpack.c.l.b16 %v5697
        %v6250 = vunpack.c.l.b16 %v5698
        %v6251 = vunpack.c.h.b16 %v5698
        %v6252 = vunpack.c.l.b16 %v5699
        %v6253 = vunpack.c.h.b16 %v5699
        %v6254 = vunpack.c.l.b16 %v5700
        %v6255 = vunpack.c.h.b16 %v5700
        %v6256 = vunpack.c.l.b16 %v5701
        %v6257 = vunpack.c.l.b16 %v5702
        %v6258 = vunpack.c.h.b16 %v5702
        %v6259 = vunpack.c.l.b16 %v5703
        %v6260 = vunpack.c.h.b16 %v5703
        %v6261 = vunpack.c.l.b16 %v5704
        %v6262 = vunpack.c.h.b16 %v5704
        %v6263 = vunpack.c.l.b16 %v5705
        %v6264 = vunpack.c.l.b16 %v5706
        %v6265 = vunpack.c.h.b16 %v5706
        %v6266 = vunpack.c.l.b16 %v5707
        %v6267 = vunpack.c.h.b16 %v5707
        %v6268 = vunpack.c.l.b16 %v5708
        %v6269 = vunpack.c.h.b16 %v5708
        %v6270 = vunpack.c.l.b16 %v5709
        %v6271 = vunpack.c.l.b16 %v5710
        %v6272 = vunpack.c.h.b16 %v5710
        %v6273 = vunpack.c.l.b16 %v5711
        %v6274 = vunpack.c.h.b16 %v5711
        %v6275 = vunpack.c.l.b16 %v5712
        %v6276 = vunpack.c.h.b16 %v5712
        %v6277 = vunpack.c.l.b16 %v5713
        %v6278 = vunpack.c.l.b16 %v5714
        %v6279 = vunpack.c.h.b16 %v5714
        %v6280 = vunpack.c.l.b16 %v5715
        %v6281 = vunpack.c.h.b16 %v5715
        %v6282 = vunpack.c.l.b16 %v5716
        %v6283 = vunpack.c.h.b16 %v5716
        %v6284 = vunpack.c.l.b16 %v5717
        %v6285 = vunpack.c.l.b16 %v5718
        %v6286 = vunpack.c.h.b16 %v5718
        %v6287 = vunpack.c.l.b16 %v5719
        %v6288 = vunpack.c.h.b16 %v5719
        %v6289 = vunpack.c.l.b16 %v5720
        %v6290 = vunpack.c.h.b16 %v5720
        %v6291 = vunpack.c.l.b16 %v5721
        %v6292 = vunpack.c.l.b16 %v5722
        %v6293 = vunpack.c.h.b16 %v5722
        %v6294 = vunpack.c.l.b16 %v5723
        %v6295 = vunpack.c.h.b16 %v5723
        %v6296 = vunpack.c.l.b16 %v5724
        %v6297 = vunpack.c.h.b16 %v5724
        %v6298 = vunpack.c.l.b16 %v5725
        %v6299 = vunpack.c.l.b16 %v5726
        %v6300 = vunpack.c.h.b16 %v5726
        %v6301 = vunpack.c.l.b16 %v5727
        %v6302 = vunpack.c.h.b16 %v5727
        %v6303 = vunpack.c.l.b16 %v5728
        %v6304 = vunpack.c.h.b16 %v5728
        %v6305 = vunpack.c.l.b16 %v5729
        %v6306 = vunpack.c.l.b16 %v5730
        %v6307 = vunpack.c.h.b16 %v5730
        %v6308 = vunpack.c.l.b16 %v5731
        %v6309 = vunpack.c.h.b16 %v5731
        %v6310 = vunpack.c.l.b16 %v5732
        %v6311 = vunpack.c.h.b16 %v5732
        %v6312 = vunpack.c.l.b16 %v5733
        %v6313 = vunpack.c.l.b16 %v5734
        %v6314 = vunpack.c.h.b16 %v5734
        %v6315 = vunpack.c.l.b16 %v5735
        %v6316 = vunpack.c.h.b16 %v5735
        %v6317 = vunpack.c.l.b16 %v5736
        %v6318 = vunpack.c.h.b16 %v5736
        %v6319 = vunpack.c.l.b16 %v5737
        %v6320 = vunpack.c.l.b16 %v5738
        %v6321 = vunpack.c.h.b16 %v5738
        %v6322 = vunpack.c.l.b16 %v5739
        %v6323 = vunpack.c.h.b16 %v5739
        %v6324 = vunpack.c.l.b16 %v5740
        %v6325 = vunpack.c.h.b16 %v5740
        %v6326 = vunpack.c.l.b16 %v5741
        %v6327 = vunpack.c.l.b16 %v5742
        %v6328 = vunpack.c.h.b16 %v5742
        %v6329 = vunpack.c.l.b16 %v5743
        %v6330 = vunpack.c.h.b16 %v5743
        %v6331 = vunpack.c.l.b16 %v5744
        %v6332 = vunpack.c.h.b16 %v5744
        %v6333 = vunpack.c.l.b16 %v5745
        %v6334 = vunpack.c.l.b16 %v5746
        %v6335 = vunpack.c.h.b16 %v5746
        %v6336 = vunpack.c.l.b16 %v5747
        %v6337 = vunpack.c.h.b16 %v5747
        %v6338 = vunpack.c.l.b16 %v5748
        %v6339 = vunpack.c.h.b16 %v5748
        %v6340 = vunpack.c.l.b16 %v5749
        %v6341 = vunpack.c.l.b16 %v5750
        %v6342 = vunpack.c.h.b16 %v5750
        %v6343 = vunpack.c.l.b16 %v5751
        %v6344 = vunpack.c.h.b16 %v5751
        %v6345 = vunpack.c.l.b16 %v5752
        %v6346 = vunpack.c.h.b16 %v5752
        %v6347 = vunpack.c.l.b16 %v5753
        %v6348 = vunpack.c.l.b16 %v5754
        %v6349 = vunpack.c.h.b16 %v5754
        %v6350 = vunpack.c.l.b16 %v5755
        %v6351 = vunpack.c.h.b16 %v5755
        %v6352 = vunpack.c.l.b16 %v5756
        %v6353 = vunpack.c.h.b16 %v5756
        %v6354 = vunpack.c.l.b16 %v5757
        %v6355 = vunpack.c.l.b16 %v5758
        %v6356 = vunpack.c.h.b16 %v5758
        %v6357 = vunpack.c.l.b16 %v5759
        %v6358 = vunpack.c.h.b16 %v5759
        %v6359 = vunpack.c.l.b16 %v5760
        %v6360 = vunpack.c.h.b16 %v5760
        %v6361 = vunpack.c.l.b16 %v5761
        %v6362 = vunpack.c.l.b16 %v5762
        %v6363 = vunpack.c.h.b16 %v5762
        %v6364 = vunpack.c.l.b16 %v5763
        %v6365 = vunpack.c.h.b16 %v5763
        %v6366 = vunpack.c.l.b16 %v5764
        %v6367 = vunpack.c.h.b16 %v5764
        %v6368 = vunpack.c.l.b16 %v5765
        %v6369 = vunpack.c.l.b16 %v5766
        %v6370 = vunpack.c.h.b16 %v5766
        %v6371 = vunpack.c.l.b16 %v5767
        %v6372 = vunpack.c.h.b16 %v5767
        %v6373 = vunpack.c.l.b16 %v5768
        %v6374 = vunpack.c.h.b16 %v5768
        %v6375 = vunpack.c.l.b16 %v5769
        %v6376 = vunpack.c.l.b16 %v5770
        %v6377 = vunpack.c.h.b16 %v5770
        %v6378 = vunpack.c.l.b16 %v5771
        %v6379 = vunpack.c.h.b16 %v5771
        %v6380 = vunpack.c.l.b16 %v5772
        %v6381 = vunpack.c.h.b16 %v5772
        %v6382 = vunpack.c.l.b16 %v5773
        %v6383 = vunpack.c.l.b16 %v5774
        %v6384 = vunpack.c.h.b16 %v5774
        %v6385 = vunpack.c.l.b16 %v5775
        %v6386 = vunpack.c.h.b16 %v5775
        %v6387 = vunpack.c.l.b16 %v5776
        %v6388 = vunpack.c.h.b16 %v5776
        %v6389 = vunpack.c.l.b16 %v5777
        %v6390 = vunpack.c.l.b16 %v5778
        %v6391 = vunpack.c.h.b16 %v5778
        %v6392 = vunpack.c.l.b16 %v5779
        %v6393 = vunpack.c.h.b16 %v5779
        %v6394 = vunpack.c.l.b16 %v5780
        %v6395 = vunpack.c.h.b16 %v5780
        %v6396 = vunpack.c.l.b16 %v5781
        %v6397 = vunpack.c.l.b16 %v5782
        %v6398 = vunpack.c.h.b16 %v5782
        %v6399 = vunpack.c.l.b16 %v5783
        %v6400 = vunpack.c.h.b16 %v5783
        %v6401 = vunpack.c.l.b16 %v5784
        %v6402 = vunpack.c.h.b16 %v5784
        %v6403 = vunpack.c.l.b16 %v5785
        %v6404 = vunpack.c.l.b16 %v5786
        %v6405 = vunpack.c.h.b16 %v5786
        %v6406 = vunpack.c.l.b16 %v5787
        %v6407 = vunpack.c.h.b16 %v5787
        %v6408 = vunpack.c.l.b16 %v5788
        %v6409 = vunpack.c.h.b16 %v5788
        %v6410 = vunpack.c.l.b16 %v5789
        %v6411 = vunpack.c.l.b16 %v5790
        %v6412 = vunpack.c.h.b16 %v5790
        %v6413 = vunpack.c.l.b16 %v5791
        %v6414 = vunpack.c.h.b16 %v5791
        %v6415 = vunpack.c.l.b16 %v5792
        %v6416 = vunpack.c.h.b16 %v5792
        %v6417 = vunpack.c.l.b16 %v5793
        %v6418 = vunpack.c.l.b16 %v5794
        %v6419 = vunpack.c.h.b16 %v5794
        %v6420 = vunpack.c.l.b16 %v5795
        %v6421 = vunpack.c.h.b16 %v5795
        %v6422 = vunpack.c.l.b16 %v5796
        %v6423 = vunpack.c.h.b16 %v5796
        %v6424 = vunpack.c.l.b16 %v5797
        %v6425 = vunpack.c.l.b16 %v5798
        %v6426 = vunpack.c.h.b16 %v5798
        %v6427 = vunpack.c.l.b16 %v5799
        %v6428 = vunpack.c.h.b16 %v5799
        %v6429 = vunpack.c.l.b16 %v5800
        %v6430 = vunpack.c.h.b16 %v5800
        %v6431 = vunpack.c.l.b16 %v5801
        %v6432 = vunpack.c.l.b16 %v5802
        %v6433 = vunpack.c.h.b16 %v5802
        %v6434 = vunpack.c.l.b16 %v5803
        %v6435 = vunpack.c.h.b16 %v5803
        %v6436 = vunpack.c.l.b16 %v5804
        %v6437 = vunpack.c.h.b16 %v5804
        %v6438 = vunpack.c.l.b16 %v5805
        %v6439 = vunpack.c.l.b16 %v5806
        %v6440 = vunpack.c.h.b16 %v5806
        %v6441 = vunpack.c.l.b16 %v5807
        %v6442 = vunpack.c.h.b16 %v5807
        %v6443 = vunpack.c.l.b16 %v5808
        %v6444 = vunpack.c.h.b16 %v5808
        %v6445 = vunpack.c.l.b16 %v5809
        %v6446 = vunpack.c.l.b16 %v5810
        %v6447 = vunpack.c.h.b16 %v5810
        %v6448 = vunpack.c.l.b16 %v5811
        %v6449 = vunpack.c.h.b16 %v5811
        %v6450 = vunpack.c.l.b16 %v5812
        %v6451 = vunpack.c.h.b16 %v5812
        %v6452 = vunpack.c.l.b16 %v5813
        %v6453 = vunpack.c.l.b16 %v5814
        %v6454 = vunpack.c.h.b16 %v5814
        %v6455 = vunpack.c.l.b16 %v5815
        %v6456 = vunpack.c.h.b16 %v5815
        %v6457 = vunpack.c.l.b16 %v5816
        %v6458 = vunpack.c.h.b16 %v5816
        %v6459 = vunpack.c.l.b16 %v5817
        %v6460 = vunpack.c.l.b16 %v5818
        %v6461 = vunpack.c.h.b16 %v5818
        %v6462 = vunpack.c.l.b16 %v5819
        %v6463 = vunpack.c.h.b16 %v5819
        %v6464 = vunpack.c.l.b16 %v5820
        %v6465 = vunpack.c.h.b16 %v5820
        %v6466 = vunpack.c.l.b16 %v5821
        %v6467 = vunpack.c.l.b16 %v5822
        %v6468 = vunpack.c.h.b16 %v5822
        %v6469 = vunpack.c.l.b16 %v5823
        %v6470 = vunpack.c.h.b16 %v5823
        %v6471 = vunpack.c.l.b16 %v5824
        %v6472 = vunpack.c.h.b16 %v5824
        %v6473 = vunpack.c.l.b16 %v5825
        %v6474 = vunpack.c.l.b16 %v5826
        %v6475 = vunpack.c.h.b16 %v5826
        %v6476 = vunpack.c.l.b16 %v5827
        %v6477 = vunpack.c.h.b16 %v5827
        %v6478 = vunpack.c.l.b16 %v5828
        %v6479 = vunpack.c.h.b16 %v5828
        %v6480 = vunpack.c.l.b16 %v5829
        %v6481 = vunpack.c.l.b16 %v5830
        %v6482 = vunpack.c.h.b16 %v5830
        %v6483 = vunpack.c.l.b16 %v5831
        %v6484 = vunpack.c.h.b16 %v5831
        %v6485 = vunpack.c.l.b16 %v5832
        %v6486 = vunpack.c.h.b16 %v5832
        %v6487 = vunpack.c.l.b16 %v5833
        %v6488 = vunpack.c.l.b16 %v5834
        %v6489 = vunpack.c.h.b16 %v5834
        %v6490 = vunpack.c.l.b16 %v5835
        %v6491 = vunpack.c.h.b16 %v5835
        %v6492 = vunpack.c.l.b16 %v5836
        %v6493 = vunpack.c.h.b16 %v5836
        %v6494 = vunpack.c.l.b16 %v5837
        %v6495 = vunpack.c.l.b16 %v5838
        %v6496 = vunpack.c.h.b16 %v5838
        %v6497 = vunpack.c.l.b16 %v5839
        %v6498 = vunpack.c.h.b16 %v5839
        %v6499 = vunpack.c.l.b16 %v5840
        %v6500 = vunpack.c.h.b16 %v5840
        %v6501 = vunpack.c.l.b16 %v5841
        %v6502 = vunpack.c.l.b16 %v5842
        %v6503 = vunpack.c.h.b16 %v5842
        %v6504 = vunpack.c.l.b16 %v5843
        %v6505 = vunpack.c.h.b16 %v5843
        %v6506 = vunpack.c.l.b16 %v5844
        %v6507 = vunpack.c.h.b16 %v5844
        %v6508 = vunpack.c.l.b16 %v5845
        %v6509 = vunpack.c.l.b16 %v5846
        %v6510 = vunpack.c.h.b16 %v5846
        %v6511 = vunpack.c.l.b16 %v5847
        %v6512 = vunpack.c.h.b16 %v5847
        %v6513 = vunpack.c.l.b16 %v5848
        %v6514 = vunpack.c.h.b16 %v5848
        %v6515 = vunpack.c.l.b16 %v5849
        %v6516 = vunpack.c.l.b16 %v5850
        %v6517 = vunpack.c.h.b16 %v5850
        %v6518 = vunpack.c.l.b16 %v5851
        %v6519 = vunpack.c.h.b16 %v5851
        %v6520 = vunpack.c.l.b16 %v5852
        %v6521 = vunpack.c.h.b16 %v5852
        %v6522 = vunpack.c.l.b16 %v5853
        %v6523 = vunpack.c.l.b16 %v5854
        %v6524 = vunpack.c.h.b16 %v5854
        %v6525 = vunpack.c.l.b16 %v5855
        %v6526 = vunpack.c.h.b16 %v5855
        %v6527 = vunpack.c.l.b16 %v5856
        %v6528 = vunpack.c.h.b16 %v5856
        %v6529 = vunpack.c.l.b16 %v5857
        %v6530 = vunpack.c.l.b16 %v5858
        %v6531 = vunpack.c.h.b16 %v5858
        %v6532 = vunpack.c.l.b16 %v5859
        %v6533 = vunpack.c.h.b16 %v5859
        %v6534 = vunpack.c.l.b16 %v5860
        %v6535 = vunpack.c.h.b16 %v5860
        %v6536 = vunpack.c.l.b16 %v5861
        %v6537 = vunpack.c.l.b16 %v5862
        %v6538 = vunpack.c.h.b16 %v5862
        %v6539 = vunpack.c.l.b16 %v5863
        %v6540 = vunpack.c.h.b16 %v5863
        %v6541 = vunpack.c.l.b16 %v5864
        %v6542 = vunpack.c.h.b16 %v5864
        %v6543 = vunpack.c.l.b16 %v5865
        %v6544 = vunpack.c.l.b16 %v5866
        %v6545 = vunpack.c.h.b16 %v5866
        %v6546 = vunpack.c.l.b16 %v5867
        %v6547 = vunpack.c.h.b16 %v5867
        %v6548 = vunpack.c.l.b16 %v5868
        %v6549 = vunpack.c.h.b16 %v5868
        %v6550 = vunpack.c.l.b16 %v5869
        %v6551 = vunpack.c.l.b16 %v5870
        %v6552 = vunpack.c.h.b16 %v5870
        %v6553 = vunpack.c.l.b16 %v5871
        %v6554 = vunpack.c.h.b16 %v5871
        %v6555 = vunpack.c.l.b16 %v5872
        %v6556 = vunpack.c.h.b16 %v5872
        %v6557 = vunpack.c.l.b16 %v5873
        %v6558 = vunpack.c.l.b16 %v5874
        %v6559 = vunpack.c.h.b16 %v5874
        %v6560 = vunpack.c.l.b16 %v5875
        %v6561 = vunpack.c.h.b16 %v5875
        %v6562 = vunpack.c.l.b16 %v5876
        %v6563 = vunpack.c.h.b16 %v5876
        %v6564 = vunpack.c.l.b16 %v5877
        %v6565 = vunpack.c.l.b16 %v5878
        %v6566 = vunpack.c.h.b16 %v5878
        %v6567 = vunpack.c.l.b16 %v5879
        %v6568 = vunpack.c.h.b16 %v5879
        %v6569 = vunpack.c.l.b16 %v5880
        %v6570 = vunpack.c.h.b16 %v5880
        %v6571 = vunpack.c.l.b16 %v5881
        %v6572 = vunpack.c.l.b16 %v5882
        %v6573 = vunpack.c.h.b16 %v5882
        %v6574 = vunpack.c.l.b16 %v5883
        %v6575 = vunpack.c.h.b16 %v5883
        %v6576 = vunpack.c.l.b16 %v5884
        %v6577 = vunpack.c.h.b16 %v5884
        %v6578 = vunpack.c.l.b16 %v5885
        %v6579 = vunpack.c.l.b16 %v5886
        %v6580 = vunpack.c.h.b16 %v5886
        %v6581 = vunpack.c.l.b16 %v5887
        %v6582 = vunpack.c.h.b16 %v5887
        %v6583 = vunpack.c.l.b16 %v5888
        %v6584 = vunpack.c.h.b16 %v5888
        %v6585 = vunpack.c.l.b16 %v5889
        %v6586 = vunpack.c.l.b16 %v5890
        %v6587 = vunpack.c.h.b16 %v5890
        %v6588 = vunpack.c.l.b16 %v5891
        %v6589 = vunpack.c.h.b16 %v5891
        %v6590 = vunpack.c.l.b16 %v5892
        %v6591 = vunpack.c.h.b16 %v5892
        %v6592 = vunpack.c.l.b16 %v5893
        %v6593 = vunpack.c.l.b16 %v5894
        %v6594 = vunpack.c.h.b16 %v5894
        %v6595 = vunpack.c.l.b16 %v5895
        %v6596 = vunpack.c.h.b16 %v5895
        %v6597 = vunpack.c.l.b16 %v5896
        %v6598 = vunpack.c.h.b16 %v5896
        %v6599 = vunpack.c.l.b16 %v5897
        %v6600 = vunpack.c.l.b16 %v5898
        %v6601 = vunpack.c.h.b16 %v5898
        %v6602 = vunpack.c.l.b16 %v5899
        %v6603 = vunpack.c.h.b16 %v5899
        %v6604 = vunpack.c.l.b16 %v5900
        %v6605 = vunpack.c.h.b16 %v5900
        %v6606 = vunpack.c.l.b16 %v5901
        %v6607 = vunpack.c.l.b16 %v5902
        %v6608 = vunpack.c.h.b16 %v5902
        %v6609 = vunpack.c.l.b16 %v5903
        %v6610 = vunpack.c.h.b16 %v5903
        %v6611 = vunpack.c.l.b16 %v5904
        %v6612 = vunpack.c.h.b16 %v5904
        %v6613 = vunpack.c.l.b16 %v5905
        %v6614 = vunpack.c.l.b16 %v5906
        %v6615 = vunpack.c.h.b16 %v5906
        %v6616 = vunpack.c.l.b16 %v5907
        %v6617 = vunpack.c.h.b16 %v5907
        %v6618 = vunpack.c.l.b16 %v5908
        %v6619 = vunpack.c.h.b16 %v5908
        %v6620 = vunpack.c.l.b16 %v5909
        %v6621 = vunpack.c.l.b16 %v5910
        %v6622 = vunpack.c.h.b16 %v5910
        %v6623 = vunpack.c.l.b16 %v5911
        %v6624 = vunpack.c.h.b16 %v5911
        %v6625 = vunpack.c.l.b16 %v5912
        %v6626 = vunpack.c.h.b16 %v5912
        %v6627 = vunpack.c.l.b16 %v5913
        %v6628 = vunpack.c.l.b16 %v5914
        %v6629 = vunpack.c.h.b16 %v5914
        %v6630 = vunpack.c.l.b16 %v5915
        %v6631 = vunpack.c.h.b16 %v5915
        %v6632 = vunpack.c.l.b16 %v5916
        %v6633 = vunpack.c.h.b16 %v5916
        %v6634 = vunpack.c.l.b16 %v5917
        %v6635 = vunpack.c.l.b16 %v5918
        %v6636 = vunpack.c.h.b16 %v5918
        %v6637 = vunpack.c.l.b16 %v5919
        %v6638 = vunpack.c.h.b16 %v5919
        %v6639 = vunpack.c.l.b16 %v5920
        %v6640 = vunpack.c.h.b16 %v5920
        %v6641 = vunpack.c.l.b16 %v5921
        %v6642 = vunpack.c.l.b16 %v5922
        %v6643 = vunpack.c.h.b16 %v5922
        %v6644 = vunpack.c.l.b16 %v5923
        %v6645 = vunpack.c.h.b16 %v5923
        %v6646 = vunpack.c.l.b16 %v5924
        %v6647 = vunpack.c.h.b16 %v5924
        %v6648 = vunpack.c.l.b16 %v5925
        %v6649 = vunpack.c.l.b16 %v5926
        %v6650 = vunpack.c.h.b16 %v5926
        %v6651 = vunpack.c.l.b16 %v5927
        %v6652 = vunpack.c.h.b16 %v5927
        %v6653 = vunpack.c.l.b16 %v5928
        %v6654 = vunpack.c.h.b16 %v5928
        %v6655 = vunpack.c.l.b16 %v5929
        %v6656 = vunpack.c.l.b16 %v5930
        %v6657 = vunpack.c.h.b16 %v5930
        %v6658 = vunpack.c.l.b16 %v5931
        %v6659 = vunpack.c.h.b16 %v5931
        %v6660 = vunpack.c.l.b16 %v5932
        %v6661 = vunpack.c.h.b16 %v5932
        %v6662 = vunpack.c.l.b16 %v5933
        %v6663 = vunpack.c.l.b16 %v5934
        %v6664 = vunpack.c.h.b16 %v5934
        %v6665 = vunpack.c.l.b16 %v5935
        %v6666 = vunpack.c.h.b16 %v5935
        %v6667 = vunpack.c.l.b16 %v5936
        %v6668 = vunpack.c.h.b16 %v5936
        %v6669 = vunpack.c.l.b16 %v5937
        %v6670 = vunpack.c.l.b16 %v5938
        %v6671 = vunpack.c.h.b16 %v5938
        %v6672 = vunpack.c.l.b16 %v5939
        %v6673 = vunpack.c.h.b16 %v5939
        %v6674 = vunpack.c.l.b16 %v5940
        %v6675 = vunpack.c.h.b16 %v5940
        %v6676 = vunpack.c.l.b16 %v5941
        %v6677 = vunpack.c.l.b16 %v5942
        %v6678 = vunpack.c.h.b16 %v5942
        %v6679 = vunpack.c.l.b16 %v5943
        %v6680 = vunpack.c.h.b16 %v5943
        %v6681 = vunpack.c.l.b16 %v5944
        %v6682 = vunpack.c.h.b16 %v5944
        %v6683 = vunpack.c.l.b16 %v5945
        %v6684 = vunpack.c.l.b16 %v5946
        %v6685 = vunpack.c.h.b16 %v5946
        %v6686 = vunpack.c.l.b16 %v5947
        %v6687 = vunpack.c.h.b16 %v5947
        %v6688 = vunpack.c.l.b16 %v5948
        %v6689 = vunpack.c.h.b16 %v5948
        %v6690 = vunpack.c.l.b16 %v5949
        %v6691 = vpack.c.b16 %v6250, %v6243
        %v6692 = vpack.c.b16 %v6251, %v6244
        %v6693 = vpack.c.b16 %v6252, %v6245
        %v6694 = vpack.c.b16 %v6253, %v6246
        %v6695 = vpack.c.b16 %v6254, %v6247
        %v6696 = vpack.c.b16 %v6255, %v6248
        %v6697 = vpack.c.b16 %v6256, %v6249
        %v6698 = vpack.c.b16 %v6264, %v6257
        %v6699 = vpack.c.b16 %v6265, %v6258
        %v6700 = vpack.c.b16 %v6266, %v6259
        %v6701 = vpack.c.b16 %v6267, %v6260
        %v6702 = vpack.c.b16 %v6268, %v6261
        %v6703 = vpack.c.b16 %v6269, %v6262
        %v6704 = vpack.c.b16 %v6270, %v6263
        %v6705 = vpack.c.b16 %v6278, %v6271
        %v6706 = vpack.c.b16 %v6279, %v6272
        %v6707 = vpack.c.b16 %v6280, %v6273
        %v6708 = vpack.c.b16 %v6281, %v6274
        %v6709 = vpack.c.b16 %v6282, %v6275
        %v6710 = vpack.c.b16 %v6283, %v6276
        %v6711 = vpack.c.b16 %v6284, %v6277
        %v6712 = vpack.c.b16 %v6292, %v6285
        %v6713 = vpack.c.b16 %v6293, %v6286
        %v6714 = vpack.c.b16 %v6294, %v6287
        %v6715 = vpack.c.b16 %v6295, %v6288
        %v6716 = vpack.c.b16 %v6296, %v6289
        %v6717 = vpack.c.b16 %v6297, %v6290
        %v6718 = vpack.c.b16 %v6298, %v6291
        %v6719 = vpack.c.b16 %v6306, %v6299
        %v6720 = vpack.c.b16 %v6307, %v6300
        %v6721 = vpack.c.b16 %v6308, %v6301
        %v6722 = vpack.c.b16 %v6309, %v6302
        %v6723 = vpack.c.b16 %v6310, %v6303
        %v6724 = vpack.c.b16 %v6311, %v6304
        %v6725 = vpack.c.b16 %v6312, %v6305
        %v6726 = vpack.c.b16 %v6320, %v6313
        %v6727 = vpack.c.b16 %v6321, %v6314
        %v6728 = vpack.c.b16 %v6322, %v6315
        %v6729 = vpack.c.b16 %v6323, %v6316
        %v6730 = vpack.c.b16 %v6324, %v6317
        %v6731 = vpack.c.b16 %v6325, %v6318
        %v6732 = vpack.c.b16 %v6326, %v6319
        %v6733 = vpack.c.b16 %v6334, %v6327
        %v6734 = vpack.c.b16 %v6335, %v6328
        %v6735 = vpack.c.b16 %v6336, %v6329
        %v6736 = vpack.c.b16 %v6337, %v6330
        %v6737 = vpack.c.b16 %v6338, %v6331
        %v6738 = vpack.c.b16 %v6339, %v6332
        %v6739 = vpack.c.b16 %v6340, %v6333
        %v6740 = vpack.c.b16 %v6348, %v6341
        %v6741 = vpack.c.b16 %v6349, %v6342
        %v6742 = vpack.c.b16 %v6350, %v6343
        %v6743 = vpack.c.b16 %v6351, %v6344
        %v6744 = vpack.c.b16 %v6352, %v6345
        %v6745 = vpack.c.b16 %v6353, %v6346
        %v6746 = vpack.c.b16 %v6354, %v6347
        %v6747 = vpack.c.b16 %v6362, %v6355
        %v6748 = vpack.c.b16 %v6363, %v6356
        %v6749 = vpack.c.b16 %v6364, %v6357
        %v6750 = vpack.c.b16 %v6365, %v6358
        %v6751 = vpack.c.b16 %v6366, %v6359
        %v6752 = vpack.c.b16 %v6367, %v6360
        %v6753 = vpack.c.b16 %v6368, %v6361
        %v6754 = vpack.c.b16 %v6376, %v6369
        %v6755 = vpack.c.b16 %v6377, %v6370
        %v6756 = vpack.c.b16 %v6378, %v6371
        %v6757 = vpack.c.b16 %v6379, %v6372
        %v6758 = vpack.c.b16 %v6380, %v6373
        %v6759 = vpack.c.b16 %v6381, %v6374
        %v6760 = vpack.c.b16 %v6382, %v6375
        %v6761 = vpack.c.b16 %v6390, %v6383
        %v6762 = vpack.c.b16 %v6391, %v6384
        %v6763 = vpack.c.b16 %v6392, %v6385
        %v6764 = vpack.c.b16 %v6393, %v6386
        %v6765 = vpack.c.b16 %v6394, %v6387
        %v6766 = vpack.c.b16 %v6395, %v6388
        %v6767 = vpack.c.b16 %v6396, %v6389
        %v6768 = vpack.c.b16 %v6404, %v6397
        %v6769 = vpack.c.b16 %v6405, %v6398
        %v6770 = vpack.c.b16 %v6406, %v6399
        %v6771 = vpack.c.b16 %v6407, %v6400
        %v6772 = vpack.c.b16 %v6408, %v6401
        %v6773 = vpack.c.b16 %v6409, %v6402
        %v6774 = vpack.c.b16 %v6410, %v6403
        %v6775 = vpack.c.b16 %v6418, %v6411
        %v6776 = vpack.c.b16 %v6419, %v6412
        %v6777 = vpack.c.b16 %v6420, %v6413
        %v6778 = vpack.c.b16 %v6421, %v6414
        %v6779 = vpack.c.b16 %v6422, %v6415
        %v6780 = vpack.c.b16 %v6423, %v6416
        %v6781 = vpack.c.b16 %v6424, %v6417
        %v6782 = vpack.c.b16 %v6432, %v6425
        %v6783 = vpack.c.b16 %v6433, %v6426
        %v6784 = vpack.c.b16 %v6434, %v6427
        %v6785 = vpack.c.b16 %v6435, %v6428
        %v6786 = vpack.c.b16 %v6436, %v6429
        %v6787 = vpack.c.b16 %v6437, %v6430
        %v6788 = vpack.c.b16 %v6438, %v6431
        %v6789 = vpack.c.b16 %v6446, %v6439
        %v6790 = vpack.c.b16 %v6447, %v6440
        %v6791 = vpack.c.b16 %v6448, %v6441
        %v6792 = vpack.c.b16 %v6449, %v6442
        %v6793 = vpack.c.b16 %v6450, %v6443
        %v6794 = vpack.c.b16 %v6451, %v6444
        %v6795 = vpack.c.b16 %v6452, %v6445
        %v6796 = vpack.c.b16 %v6460, %v6453
        %v6797 = vpack.c.b16 %v6461, %v6454
        %v6798 = vpack.c.b16 %v6462, %v6455
        %v6799 = vpack.c.b16 %v6463, %v6456
        %v6800 = vpack.c.b16 %v6464, %v6457
        %v6801 = vpack.c.b16 %v6465, %v6458
        %v6802 = vpack.c.b16 %v6466, %v6459
        %v6803 = vpack.c.b16 %v6474, %v6467
        %v6804 = vpack.c.b16 %v6475, %v6468
        %v6805 = vpack.c.b16 %v6476, %v6469
        %v6806 = vpack.c.b16 %v6477, %v6470
        %v6807 = vpack.c.b16 %v6478, %v6471
        %v6808 = vpack.c.b16 %v6479, %v6472
        %v6809 = vpack.c.b16 %v6480, %v6473
        %v6810 = vpack.c.b16 %v6488, %v6481
        %v6811 = vpack.c.b16 %v6489, %v6482
        %v6812 = vpack.c.b16 %v6490, %v6483
        %v6813 = vpack.c.b16 %v6491, %v6484
        %v6814 = vpack.c.b16 %v6492, %v6485
        %v6815 = vpack.c.b16 %v6493, %v6486
        %v6816 = vpack.c.b16 %v6494, %v6487
        %v6817 = vpack.c.b16 %v6502, %v6495
        %v6818 = vpack.c.b16 %v6503, %v6496
        %v6819 = vpack.c.b16 %v6504, %v6497
        %v6820 = vpack.c.b16 %v6505, %v6498
        %v6821 = vpack.c.b16 %v6506, %v6499
        %v6822 = vpack.c.b16 %v6507, %v6500
        %v6823 = vpack.c.b16 %v6508, %v6501
        %v6824 = vpack.c.b16 %v6516, %v6509
        %v6825 = vpack.c.b16 %v6517, %v6510
        %v6826 = vpack.c.b16 %v6518, %v6511
        %v6827 = vpack.c.b16 %v6519, %v6512
        %v6828 = vpack.c.b16 %v6520, %v6513
        %v6829 = vpack.c.b16 %v6521, %v6514
        %v6830 = vpack.c.b16 %v6522, %v6515
        %v6831 = vpack.c.b16 %v6530, %v6523
        %v6832 = vpack.c.b16 %v6531, %v6524
        %v6833 = vpack.c.b16 %v6532, %v6525
        %v6834 = vpack.c.b16 %v6533, %v6526
        %v6835 = vpack.c.b16 %v6534, %v6527
        %v6836 = vpack.c.b16 %v6535, %v6528
        %v6837 = vpack.c.b16 %v6536, %v6529
        %v6838 = vpack.c.b16 %v6544, %v6537
        %v6839 = vpack.c.b16 %v6545, %v6538
        %v6840 = vpack.c.b16 %v6546, %v6539
        %v6841 = vpack.c.b16 %v6547, %v6540
        %v6842 = vpack.c.b16 %v6548, %v6541
        %v6843 = vpack.c.b16 %v6549, %v6542
        %v6844 = vpack.c.b16 %v6550, %v6543
        %v6845 = vpack.c.b16 %v6558, %v6551
        %v6846 = vpack.c.b16 %v6559, %v6552
        %v6847 = vpack.c.b16 %v6560, %v6553
        %v6848 = vpack.c.b16 %v6561, %v6554
        %v6849 = vpack.c.b16 %v6562, %v6555
        %v6850 = vpack.c.b16 %v6563, %v6556
        %v6851 = vpack.c.b16 %v6564, %v6557
        %v6852 = vpack.c.b16 %v6572, %v6565
        %v6853 = vpack.c.b16 %v6573, %v6566
        %v6854 = vpack.c.b16 %v6574, %v6567
        %v6855 = vpack.c.b16 %v6575, %v6568
        %v6856 = vpack.c.b16 %v6576, %v6569
        %v6857 = vpack.c.b16 %v6577, %v6570
        %v6858 = vpack.c.b16 %v6578, %v6571
        %v6859 = vpack.c.b16 %v6586, %v6579
        %v6860 = vpack.c.b16 %v6587, %v6580
        %v6861 = vpack.c.b16 %v6588, %v6581
        %v6862 = vpack.c.b16 %v6589, %v6582
        %v6863 = vpack.c.b16 %v6590, %v6583
        %v6864 = vpack.c.b16 %v6591, %v6584
        %v6865 = vpack.c.b16 %v6592, %v6585
        %v6866 = vpack.c.b16 %v6600, %v6593
        %v6867 = vpack.c.b16 %v6601, %v6594
        %v6868 = vpack.c.b16 %v6602, %v6595
        %v6869 = vpack.c.b16 %v6603, %v6596
        %v6870 = vpack.c.b16 %v6604, %v6597
        %v6871 = vpack.c.b16 %v6605, %v6598
        %v6872 = vpack.c.b16 %v6606, %v6599
        %v6873 = vpack.c.b16 %v6614, %v6607
        %v6874 = vpack.c.b16 %v6615, %v6608
        %v6875 = vpack.c.b16 %v6616, %v6609
        %v6876 = vpack.c.b16 %v6617, %v6610
        %v6877 = vpack.c.b16 %v6618, %v6611
        %v6878 = vpack.c.b16 %v6619, %v6612
        %v6879 = vpack.c.b16 %v6620, %v6613
        %v6880 = vpack.c.b16 %v6628, %v6621
        %v6881 = vpack.c.b16 %v6629, %v6622
        %v6882 = vpack.c.b16 %v6630, %v6623
        %v6883 = vpack.c.b16 %v6631, %v6624
        %v6884 = vpack.c.b16 %v6632, %v6625
        %v6885 = vpack.c.b16 %v6633, %v6626
        %v6886 = vpack.c.b16 %v6634, %v6627
        %v6887 = vpack.c.b16 %v6642, %v6635
        %v6888 = vpack.c.b16 %v6643, %v6636
        %v6889 = vpack.c.b16 %v6644, %v6637
        %v6890 = vpack.c.b16 %v6645, %v6638
        %v6891 = vpack.c.b16 %v6646, %v6639
        %v6892 = vpack.c.b16 %v6647, %v6640
        %v6893 = vpack.c.b16 %v6648, %v6641
        %v6894 = vpack.c.b16 %v6656, %v6649
        %v6895 = vpack.c.b16 %v6657, %v6650
        %v6896 = vpack.c.b16 %v6658, %v6651
        %v6897 = vpack.c.b16 %v6659, %v6652
        %v6898 = vpack.c.b16 %v6660, %v6653
        %v6899 = vpack.c.b16 %v6661, %v6654
        %v6900 = vpack.c.b16 %v6662, %v6655
        %v6901 = vpack.c.b16 %v6670, %v6663
        %v6902 = vpack.c.b16 %v6671, %v6664
        %v6903 = vpack.c.b16 %v6672, %v6665
        %v6904 = vpack.c.b16 %v6673, %v6666
        %v6905 = vpack.c.b16 %v6674, %v6667
        %v6906 = vpack.c.b16 %v6675, %v6668
        %v6907 = vpack.c.b16 %v6676, %v6669
        %v6908 = vpack.c.b16 %v6684, %v6677
        %v6909 = vpack.c.b16 %v6685, %v6678
        %v6910 = vpack.c.b16 %v6686, %v6679
        %v6911 = vpack.c.b16 %v6687, %v6680
        %v6912 = vpack.c.b16 %v6688, %v6681
        %v6913 = vpack.c.b16 %v6689, %v6682
        %v6914 = vpack.c.b16 %v6690, %v6683
        %7139 = vmatprep.subr.bf16.mxu0 %v6692
        %7140 = vmatpush1.bf16.msra.mxu0 %v6691
        %7141 = vmatprep.subr.bf16.mxu0 %v6699
        %7142 = vmatpush1.bf16.msra.mxu0 %v6698
        %7143 = vmatprep.subr.bf16.mxu0 %v6706
        %7144 = vmatpush1.bf16.msra.mxu0 %v6705
        %7145 = vmatprep.subr.bf16.mxu0 %v6713
        %7146 = vmatpush1.bf16.msra.mxu0 %v6712
        %7147 = vmatprep.subr.bf16.mxu0 %v6720
        %7148 = vmatpush1.bf16.msra.mxu0 %v6719
        %7149 = vmatprep.subr.bf16.mxu0 %v6727
        %7150 = vmatpush1.bf16.msra.mxu0 %v6726
        %7151 = vmatprep.subr.bf16.mxu0 %v6734
        %7152 = vmatpush1.bf16.msra.mxu0 %v6733
        %7153 = vmatprep.subr.bf16.mxu0 %v6741
        %7154 = vmatpush1.bf16.msra.mxu0 %v6740
        %7155 = vmatprep.subr.bf16.mxu0 %v6748
        %7156 = vmatpush1.bf16.msra.mxu0 %v6747
        %7157 = vmatprep.subr.bf16.mxu0 %v6755
        %7158 = vmatpush1.bf16.msra.mxu0 %v6754
        %7159 = vmatprep.subr.bf16.mxu0 %v6762
        %7160 = vmatpush1.bf16.msra.mxu0 %v6761
        %7161 = vmatprep.subr.bf16.mxu0 %v6769
        %7162 = vmatpush1.bf16.msra.mxu0 %v6768
        %7163 = vmatprep.subr.bf16.mxu0 %v6776
        %7164 = vmatpush1.bf16.msra.mxu0 %v6775
        %7165 = vmatprep.subr.bf16.mxu0 %v6783
        %7166 = vmatpush1.bf16.msra.mxu0 %v6782
        %7167 = vmatprep.subr.bf16.mxu0 %v6790
        %7168 = vmatpush1.bf16.msra.mxu0 %v6789
        %7169 = vmatprep.subr.bf16.mxu0 %v6797
        %7170 = vmatpush1.bf16.msra.mxu0 %v6796
        %7171 = vmatprep.mubr.bf16.mxu0 %v5631
        %7172 = vmatmul.mubr.bf16.gmra.mrb[0].mxu0 %v5630
        %v7173 = vpop.f32.mrb[0].mxu0
        %v7174 = vadd.f32 %v5955, %v7173
        %v7175 = vpop.f32.mrb[0].mxu0
        %v7176 = vadd.f32 %v5959, %v7175
        %v7177 = vpop.f32.mrb[0].mxu0
        %v7178 = vadd.f32 %v5955, %v7177
        %v7179 = vpop.f32.mrb[0].mxu0
        %v7180 = vadd.f32 %v5959, %v7179
        %7181 = vmatprep.mubr.bf16.mxu0 %v5635
        %7182 = vmatmul.mubr.bf16.gmra.mrb[0].mxu0 %v5634
        %v7183 = vpop.f32.mrb[0].mxu0
        %v7184 = vadd.f32 %v5955, %v7183
        %v7185 = vpop.f32.mrb[0].mxu0
        %v7186 = vadd.f32 %v5959, %v7185
        %v7187 = vpop.f32.mrb[0].mxu0
        %v7188 = vadd.f32 %v5955, %v7187
        %v7189 = vpop.f32.mrb[0].mxu0
        %v7190 = vadd.f32 %v5959, %v7189
        %7191 = vmatprep.mubr.bf16.mxu0 %v5639
        %7192 = vmatmul.mubr.bf16.gmra.mrb[0].mxu0 %v5638
        %v7193 = vpop.f32.mrb[0].mxu0
        %v7194 = vadd.f32 %v5955, %v7193
        %v7195 = vpop.f32.mrb[0].mxu0
        %v7196 = vadd.f32 %v5959, %v7195
        %v7197 = vpop.f32.mrb[0].mxu0
        %v7198 = vadd.f32 %v5955, %v7197
        %v7199 = vpop.f32.mrb[0].mxu0
        %v7200 = vadd.f32 %v5959, %v7199
        %7201 = vmatprep.mubr.bf16.mxu0 %v5643
        %7202 = vmatmul.mubr.bf16.gmra.mrb[0].mxu0 %v5642
        %v7203 = vpop.f32.mrb[0].mxu0
        %v7204 = vadd.f32 %v5955, %v7203
        %v7205 = vpop.f32.mrb[0].mxu0
        %v7206 = vadd.f32 %v5959, %v7205
        %v7207 = vpop.f32.mrb[0].mxu0
        %v7208 = vadd.f32 %v5955, %v7207
        %v7209 = vpop.f32.mrb[0].mxu0
        %v7210 = vadd.f32 %v5959, %v7209
        %7211 = vmatprep.mubr.bf16.mxu0 %v5647
        %7212 = vmatmul.mubr.bf16.gmra.mrb[0].mxu0 %v5646
        %v7213 = vpop.f32.mrb[0].mxu0
        %v7214 = vadd.f32 %v5955, %v7213
        %v7215 = vpop.f32.mrb[0].mxu0
        %v7216 = vadd.f32 %v5959, %v7215
        %v7217 = vpop.f32.mrb[0].mxu0
        %v7218 = vadd.f32 %v5955, %v7217
        %v7219 = vpop.f32.mrb[0].mxu0
        %v7220 = vadd.f32 %v5959, %v7219
        %7221 = vmatprep.mubr.bf16.mxu0 %v5651
        %7222 = vmatmul.mubr.bf16.gmra.mrb[0].mxu0 %v5650
        %v7223 = vpop.f32.mrb[0].mxu0
        %v7224 = vadd.f32 %v5955, %v7223
        %v7225 = vpop.f32.mrb[0].mxu0
        %v7226 = vadd.f32 %v5959, %v7225
        %v7227 = vpop.f32.mrb[0].mxu0
        %v7228 = vadd.f32 %v5955, %v7227
        %v7229 = vpop.f32.mrb[0].mxu0
        %v7230 = vadd.f32 %v5959, %v7229
        %7231 = vmatprep.mubr.bf16.mxu0 %v5655
        %7232 = vmatmul.mubr.bf16.gmra.mrb[0].mxu0 %v5654
        %v7233 = vpop.f32.mrb[0].mxu0
        %v7234 = vadd.f32 %v5955, %v7233
        %v7235 = vpop.f32.mrb[0].mxu0
        %v7236 = vadd.f32 %v5959, %v7235
        %v7237 = vpop.f32.mrb[0].mxu0
        %v7238 = vadd.f32 %v5955, %v7237
        %v7239 = vpop.f32.mrb[0].mxu0
        %v7240 = vadd.f32 %v5959, %v7239
        %7241 = vmatprep.mubr.bf16.mxu0 %v5659
        %7242 = vmatmul.mubr.bf16.gmra.mrb[0].mxu0 %v5658
        %v7243 = vpop.f32.mrb[0].mxu0
        %v7244 = vadd.f32 %v5955, %v7243
        %v7245 = vpop.f32.mrb[0].mxu0
        %v7246 = vadd.f32 %v5959, %v7245
        %v7247 = vpop.f32.mrb[0].mxu0
        %v7248 = vadd.f32 %v5955, %v7247
        %v7249 = vpop.f32.mrb[0].mxu0
        %v7250 = vadd.f32 %v5959, %v7249
        %7251 = vmatprep.mubr.bf16.mxu0 %v5663
        %7252 = vmatmul.mubr.bf16.gmra.mrb[0].mxu0 %v5662
        %v7253 = vpop.f32.mrb[0].mxu0
        %v7254 = vadd.f32 %v5955, %v7253
        %v7255 = vpop.f32.mrb[0].mxu0
        %v7256 = vadd.f32 %v5959, %v7255
        %v7257 = vpop.f32.mrb[0].mxu0
        %v7258 = vadd.f32 %v5955, %v7257
        %v7259 = vpop.f32.mrb[0].mxu0
        %v7260 = vadd.f32 %v5959, %v7259
        %7261 = vmatprep.mubr.bf16.mxu0 %v5667
        %7262 = vmatmul.mubr.bf16.gmra.mrb[0].mxu0 %v5666
        %v7263 = vpop.f32.mrb[0].mxu0
        %v7264 = vadd.f32 %v5955, %v7263
        %v7265 = vpop.f32.mrb[0].mxu0
        %v7266 = vadd.f32 %v5959, %v7265
        %v7267 = vpop.f32.mrb[0].mxu0
        %v7268 = vadd.f32 %v5955, %v7267
        %v7269 = vpop.f32.mrb[0].mxu0
        %v7270 = vadd.f32 %v5959, %v7269
        %7271 = vmatprep.mubr.bf16.mxu0 %v5671
        %7272 = vmatmul.mubr.bf16.gmra.mrb[0].mxu0 %v5670
        %v7273 = vpop.f32.mrb[0].mxu0
        %v7274 = vadd.f32 %v5955, %v7273
        %v7275 = vpop.f32.mrb[0].mxu0
        %v7276 = vadd.f32 %v5959, %v7275
        %v7277 = vpop.f32.mrb[0].mxu0
        %v7278 = vadd.f32 %v5955, %v7277
        %v7279 = vpop.f32.mrb[0].mxu0
        %v7280 = vadd.f32 %v5959, %v7279
        %7281 = vmatprep.mubr.bf16.mxu0 %v5675
        %7282 = vmatmul.mubr.bf16.gmra.mrb[0].mxu0 %v5674
        %v7283 = vpop.f32.mrb[0].mxu0
        %v7284 = vadd.f32 %v5955, %v7283
        %v7285 = vpop.f32.mrb[0].mxu0
        %v7286 = vadd.f32 %v5959, %v7285
        %v7287 = vpop.f32.mrb[0].mxu0
        %v7288 = vadd.f32 %v5955, %v7287
        %v7289 = vpop.f32.mrb[0].mxu0
        %v7290 = vadd.f32 %v5959, %v7289
        %7291 = vmatprep.mubr.bf16.mxu0 %v5679
        %7292 = vmatmul.mubr.bf16.gmra.mrb[0].mxu0 %v5678
        %v7293 = vpop.f32.mrb[0].mxu0
        %v7294 = vadd.f32 %v5955, %v7293
        %v7295 = vpop.f32.mrb[0].mxu0
        %v7296 = vadd.f32 %v5959, %v7295
        %v7297 = vpop.f32.mrb[0].mxu0
        %v7298 = vadd.f32 %v5955, %v7297
        %v7299 = vpop.f32.mrb[0].mxu0
        %v7300 = vadd.f32 %v5959, %v7299
        %7301 = vmatprep.mubr.bf16.mxu0 %v5683
        %7302 = vmatmul.mubr.bf16.gmra.mrb[0].mxu0 %v5682
        %v7303 = vpop.f32.mrb[0].mxu0
        %v7304 = vadd.f32 %v5955, %v7303
        %v7305 = vpop.f32.mrb[0].mxu0
        %v7306 = vadd.f32 %v5959, %v7305
        %v7307 = vpop.f32.mrb[0].mxu0
        %v7308 = vadd.f32 %v5955, %v7307
        %v7309 = vpop.f32.mrb[0].mxu0
        %v7310 = vadd.f32 %v5959, %v7309
        %7311 = vmatprep.mubr.bf16.mxu0 %v5687
        %7312 = vmatmul.mubr.bf16.gmra.mrb[0].mxu0 %v5686
        %v7313 = vpop.f32.mrb[0].mxu0
        %v7314 = vadd.f32 %v5955, %v7313
        %v7315 = vpop.f32.mrb[0].mxu0
        %v7316 = vadd.f32 %v5959, %v7315
        %v7317 = vpop.f32.mrb[0].mxu0
        %v7318 = vadd.f32 %v5955, %v7317
        %v7319 = vpop.f32.mrb[0].mxu0
        %v7320 = vadd.f32 %v5959, %v7319
        %7321 = vmatprep.mubr.bf16.mxu0 %v5691
        %7322 = vmatmul.mubr.bf16.gmra.mrb[0].mxu0 %v5690
        %v7323 = vpop.f32.mrb[0].mxu0
        %v7324 = vadd.f32 %v5955, %v7323
        %v7325 = vpop.f32.mrb[0].mxu0
        %v7326 = vadd.f32 %v5959, %v7325
        %v7327 = vpop.f32.mrb[0].mxu0
        %v7328 = vadd.f32 %v5955, %v7327
        %v7329 = vpop.f32.mrb[0].mxu0
        %v7330 = vadd.f32 %v5959, %v7329
        %7331 = vdwg.mxu0
        %7332 = vmatprep.subr.bf16.mxu0 %v6804
        %7333 = vmatpush1.bf16.msra.mxu0 %v6803
        %7334 = vmatprep.subr.bf16.mxu0 %v6811
        %7335 = vmatpush1.bf16.msra.mxu0 %v6810
        %7336 = vmatprep.subr.bf16.mxu0 %v6818
        %7337 = vmatpush1.bf16.msra.mxu0 %v6817
        %7338 = vmatprep.subr.bf16.mxu0 %v6825
        %7339 = vmatpush1.bf16.msra.mxu0 %v6824
        %7340 = vmatprep.subr.bf16.mxu0 %v6832
        %7341 = vmatpush1.bf16.msra.mxu0 %v6831
        %7342 = vmatprep.subr.bf16.mxu0 %v6839
        %7343 = vmatpush1.bf16.msra.mxu0 %v6838
        %7344 = vmatprep.subr.bf16.mxu0 %v6846
        %7345 = vmatpush1.bf16.msra.mxu0 %v6845
        %7346 = vmatprep.subr.bf16.mxu0 %v6853
        %7347 = vmatpush1.bf16.msra.mxu0 %v6852
        %7348 = vmatprep.subr.bf16.mxu0 %v6860
        %7349 = vmatpush1.bf16.msra.mxu0 %v6859
        %7350 = vmatprep.subr.bf16.mxu0 %v6867
        %7351 = vmatpush1.bf16.msra.mxu0 %v6866
        %7352 = vmatprep.subr.bf16.mxu0 %v6874
        %7353 = vmatpush1.bf16.msra.mxu0 %v6873
        %7354 = vmatprep.subr.bf16.mxu0 %v6881
        %7355 = vmatpush1.bf16.msra.mxu0 %v6880
        %7356 = vmatprep.subr.bf16.mxu0 %v6888
        %7357 = vmatpush1.bf16.msra.mxu0 %v6887
        %7358 = vmatprep.subr.bf16.mxu0 %v6895
        %7359 = vmatpush1.bf16.msra.mxu0 %v6894
        %7360 = vmatprep.subr.bf16.mxu0 %v6902
        %7361 = vmatpush1.bf16.msra.mxu0 %v6901
        %7362 = vmatprep.subr.bf16.mxu0 %v6909
        %7363 = vmatpush1.bf16.msra.mxu0 %v6908
        %7364 = vmatprep.mubr.bf16.mxu0 %v5633
        %7365 = vmatmul.mubr.bf16.gmra.mrb[0].mxu0 %v5632
        %v7366 = vpop.f32.mrb[0].mxu0
        %v7367 = vadd.f32 %v7174, %v7366
        %v7368 = vpop.f32.mrb[0].mxu0
        %v7369 = vadd.f32 %v7176, %v7368
        %v7370 = vpop.f32.mrb[0].mxu0
        %v7371 = vadd.f32 %v7178, %v7370
        %v7372 = vpop.f32.mrb[0].mxu0
        %v7373 = vadd.f32 %v7180, %v7372
        %7374 = vmatprep.mubr.bf16.mxu0 %v5637
        %7375 = vmatmul.mubr.bf16.gmra.mrb[0].mxu0 %v5636
        %v7376 = vpop.f32.mrb[0].mxu0
        %v7377 = vadd.f32 %v7184, %v7376
        %v7378 = vpop.f32.mrb[0].mxu0
        %v7379 = vadd.f32 %v7186, %v7378
        %v7380 = vpop.f32.mrb[0].mxu0
        %v7381 = vadd.f32 %v7188, %v7380
        %v7382 = vpop.f32.mrb[0].mxu0
        %v7383 = vadd.f32 %v7190, %v7382
        %7384 = vmatprep.mubr.bf16.mxu0 %v5641
        %7385 = vmatmul.mubr.bf16.gmra.mrb[0].mxu0 %v5640
        %v7386 = vpop.f32.mrb[0].mxu0
        %v7387 = vadd.f32 %v7194, %v7386
        %v7388 = vpop.f32.mrb[0].mxu0
        %v7389 = vadd.f32 %v7196, %v7388
        %v7390 = vpop.f32.mrb[0].mxu0
        %v7391 = vadd.f32 %v7198, %v7390
        %v7392 = vpop.f32.mrb[0].mxu0
        %v7393 = vadd.f32 %v7200, %v7392
        %7394 = vmatprep.mubr.bf16.mxu0 %v5645
        %7395 = vmatmul.mubr.bf16.gmra.mrb[0].mxu0 %v5644
        %v7396 = vpop.f32.mrb[0].mxu0
        %v7397 = vadd.f32 %v7204, %v7396
        %v7398 = vpop.f32.mrb[0].mxu0
        %v7399 = vadd.f32 %v7206, %v7398
        %v7400 = vpop.f32.mrb[0].mxu0
        %v7401 = vadd.f32 %v7208, %v7400
        %v7402 = vpop.f32.mrb[0].mxu0
        %v7403 = vadd.f32 %v7210, %v7402
        %7404 = vmatprep.mubr.bf16.mxu0 %v5649
        %7405 = vmatmul.mubr.bf16.gmra.mrb[0].mxu0 %v5648
        %v7406 = vpop.f32.mrb[0].mxu0
        %v7407 = vadd.f32 %v7214, %v7406
        %v7408 = vpop.f32.mrb[0].mxu0
        %v7409 = vadd.f32 %v7216, %v7408
        %v7410 = vpop.f32.mrb[0].mxu0
        %v7411 = vadd.f32 %v7218, %v7410
        %v7412 = vpop.f32.mrb[0].mxu0
        %v7413 = vadd.f32 %v7220, %v7412
        %7414 = vmatprep.mubr.bf16.mxu0 %v5653
        %7415 = vmatmul.mubr.bf16.gmra.mrb[0].mxu0 %v5652
        %v7416 = vpop.f32.mrb[0].mxu0
        %v7417 = vadd.f32 %v7224, %v7416
        %v7418 = vpop.f32.mrb[0].mxu0
        %v7419 = vadd.f32 %v7226, %v7418
        %v7420 = vpop.f32.mrb[0].mxu0
        %v7421 = vadd.f32 %v7228, %v7420
        %v7422 = vpop.f32.mrb[0].mxu0
        %v7423 = vadd.f32 %v7230, %v7422
        %7424 = vmatprep.mubr.bf16.mxu0 %v5657
        %7425 = vmatmul.mubr.bf16.gmra.mrb[0].mxu0 %v5656
        %v7426 = vpop.f32.mrb[0].mxu0
        %v7427 = vadd.f32 %v7234, %v7426
        %v7428 = vpop.f32.mrb[0].mxu0
        %v7429 = vadd.f32 %v7236, %v7428
        %v7430 = vpop.f32.mrb[0].mxu0
        %v7431 = vadd.f32 %v7238, %v7430
        %v7432 = vpop.f32.mrb[0].mxu0
        %v7433 = vadd.f32 %v7240, %v7432
        %7434 = vmatprep.mubr.bf16.mxu0 %v5661
        %7435 = vmatmul.mubr.bf16.gmra.mrb[0].mxu0 %v5660
        %v7436 = vpop.f32.mrb[0].mxu0
        %v7437 = vadd.f32 %v7244, %v7436
        %v7438 = vpop.f32.mrb[0].mxu0
        %v7439 = vadd.f32 %v7246, %v7438
        %v7440 = vpop.f32.mrb[0].mxu0
        %v7441 = vadd.f32 %v7248, %v7440
        %v7442 = vpop.f32.mrb[0].mxu0
        %v7443 = vadd.f32 %v7250, %v7442
        %7444 = vmatprep.mubr.bf16.mxu0 %v5665
        %7445 = vmatmul.mubr.bf16.gmra.mrb[0].mxu0 %v5664
        %v7446 = vpop.f32.mrb[0].mxu0
        %v7447 = vadd.f32 %v7254, %v7446
        %v7448 = vpop.f32.mrb[0].mxu0
        %v7449 = vadd.f32 %v7256, %v7448
        %v7450 = vpop.f32.mrb[0].mxu0
        %v7451 = vadd.f32 %v7258, %v7450
        %v7452 = vpop.f32.mrb[0].mxu0
        %v7453 = vadd.f32 %v7260, %v7452
        %7454 = vmatprep.mubr.bf16.mxu0 %v5669
        %7455 = vmatmul.mubr.bf16.gmra.mrb[0].mxu0 %v5668
        %v7456 = vpop.f32.mrb[0].mxu0
        %v7457 = vadd.f32 %v7264, %v7456
        %v7458 = vpop.f32.mrb[0].mxu0
        %v7459 = vadd.f32 %v7266, %v7458
        %v7460 = vpop.f32.mrb[0].mxu0
        %v7461 = vadd.f32 %v7268, %v7460
        %v7462 = vpop.f32.mrb[0].mxu0
        %v7463 = vadd.f32 %v7270, %v7462
        %7464 = vmatprep.mubr.bf16.mxu0 %v5673
        %7465 = vmatmul.mubr.bf16.gmra.mrb[0].mxu0 %v5672
        %v7466 = vpop.f32.mrb[0].mxu0
        %v7467 = vadd.f32 %v7274, %v7466
        %v7468 = vpop.f32.mrb[0].mxu0
        %v7469 = vadd.f32 %v7276, %v7468
        %v7470 = vpop.f32.mrb[0].mxu0
        %v7471 = vadd.f32 %v7278, %v7470
        %v7472 = vpop.f32.mrb[0].mxu0
        %v7473 = vadd.f32 %v7280, %v7472
        %7474 = vmatprep.mubr.bf16.mxu0 %v5677
        %7475 = vmatmul.mubr.bf16.gmra.mrb[0].mxu0 %v5676
        %v7476 = vpop.f32.mrb[0].mxu0
        %v7477 = vadd.f32 %v7284, %v7476
        %v7478 = vpop.f32.mrb[0].mxu0
        %v7479 = vadd.f32 %v7286, %v7478
        %v7480 = vpop.f32.mrb[0].mxu0
        %v7481 = vadd.f32 %v7288, %v7480
        %v7482 = vpop.f32.mrb[0].mxu0
        %v7483 = vadd.f32 %v7290, %v7482
        %7484 = vmatprep.mubr.bf16.mxu0 %v5681
        %7485 = vmatmul.mubr.bf16.gmra.mrb[0].mxu0 %v5680
        %v7486 = vpop.f32.mrb[0].mxu0
        %v7487 = vadd.f32 %v7294, %v7486
        %v7488 = vpop.f32.mrb[0].mxu0
        %v7489 = vadd.f32 %v7296, %v7488
        %v7490 = vpop.f32.mrb[0].mxu0
        %v7491 = vadd.f32 %v7298, %v7490
        %v7492 = vpop.f32.mrb[0].mxu0
        %v7493 = vadd.f32 %v7300, %v7492
        %7494 = vmatprep.mubr.bf16.mxu0 %v5685
        %7495 = vmatmul.mubr.bf16.gmra.mrb[0].mxu0 %v5684
        %v7496 = vpop.f32.mrb[0].mxu0
        %v7497 = vadd.f32 %v7304, %v7496
        %v7498 = vpop.f32.mrb[0].mxu0
        %v7499 = vadd.f32 %v7306, %v7498
        %v7500 = vpop.f32.mrb[0].mxu0
        %v7501 = vadd.f32 %v7308, %v7500
        %v7502 = vpop.f32.mrb[0].mxu0
        %v7503 = vadd.f32 %v7310, %v7502
        %7504 = vmatprep.mubr.bf16.mxu0 %v5689
        %7505 = vmatmul.mubr.bf16.gmra.mrb[0].mxu0 %v5688
        %v7506 = vpop.f32.mrb[0].mxu0
        %v7507 = vadd.f32 %v7314, %v7506
        %v7508 = vpop.f32.mrb[0].mxu0
        %v7509 = vadd.f32 %v7316, %v7508
        %v7510 = vpop.f32.mrb[0].mxu0
        %v7511 = vadd.f32 %v7318, %v7510
        %v7512 = vpop.f32.mrb[0].mxu0
        %v7513 = vadd.f32 %v7320, %v7512
        %7514 = vmatprep.mubr.bf16.mxu0 %v5693
        %7515 = vmatmul.mubr.bf16.gmra.mrb[0].mxu0 %v5692
        %v7516 = vpop.f32.mrb[0].mxu0
        %v7517 = vadd.f32 %v7324, %v7516
        %v7518 = vpop.f32.mrb[0].mxu0
        %v7519 = vadd.f32 %v7326, %v7518
        %v7520 = vpop.f32.mrb[0].mxu0
        %v7521 = vadd.f32 %v7328, %v7520
        %v7522 = vpop.f32.mrb[0].mxu0
        %v7523 = vadd.f32 %v7330, %v7522
        %7524 = vdwg.mxu0
        %7525 = vmatprep.subr.bf16.mxu0 %v6694
        %7526 = vmatpush1.bf16.msra.mxu0 %v6693
        %7527 = vmatprep.subr.bf16.mxu0 %v6701
        %7528 = vmatpush1.bf16.msra.mxu0 %v6700
        %7529 = vmatprep.subr.bf16.mxu0 %v6708
        %7530 = vmatpush1.bf16.msra.mxu0 %v6707
        %7531 = vmatprep.subr.bf16.mxu0 %v6715
        %7532 = vmatpush1.bf16.msra.mxu0 %v6714
        %7533 = vmatprep.subr.bf16.mxu0 %v6722
        %7534 = vmatpush1.bf16.msra.mxu0 %v6721
        %7535 = vmatprep.subr.bf16.mxu0 %v6729
        %7536 = vmatpush1.bf16.msra.mxu0 %v6728
        %7537 = vmatprep.subr.bf16.mxu0 %v6736
        %7538 = vmatpush1.bf16.msra.mxu0 %v6735
        %7539 = vmatprep.subr.bf16.mxu0 %v6743
        %7540 = vmatpush1.bf16.msra.mxu0 %v6742
        %7541 = vmatprep.subr.bf16.mxu0 %v6750
        %7542 = vmatpush1.bf16.msra.mxu0 %v6749
        %7543 = vmatprep.subr.bf16.mxu0 %v6757
        %7544 = vmatpush1.bf16.msra.mxu0 %v6756
        %7545 = vmatprep.subr.bf16.mxu0 %v6764
        %7546 = vmatpush1.bf16.msra.mxu0 %v6763
        %7547 = vmatprep.subr.bf16.mxu0 %v6771
        %7548 = vmatpush1.bf16.msra.mxu0 %v6770
        %7549 = vmatprep.subr.bf16.mxu0 %v6778
        %7550 = vmatpush1.bf16.msra.mxu0 %v6777
        %7551 = vmatprep.subr.bf16.mxu0 %v6785
        %7552 = vmatpush1.bf16.msra.mxu0 %v6784
        %7553 = vmatprep.subr.bf16.mxu0 %v6792
        %7554 = vmatpush1.bf16.msra.mxu0 %v6791
        %7555 = vmatprep.subr.bf16.mxu0 %v6799
        %7556 = vmatpush1.bf16.msra.mxu0 %v6798
        %7557 = vmatprep.mubr.bf16.mxu0 %v5631
        %7558 = vmatmul.mubr.bf16.gmra.mrb[0].mxu0 %v5630
        %v7559 = vpop.f32.mrb[0].mxu0
        %v7560 = vadd.f32 %v5963, %v7559
        %v7561 = vpop.f32.mrb[0].mxu0
        %v7562 = vadd.f32 %v5967, %v7561
        %v7563 = vpop.f32.mrb[0].mxu0
        %v7564 = vadd.f32 %v5963, %v7563
        %v7565 = vpop.f32.mrb[0].mxu0
        %v7566 = vadd.f32 %v5967, %v7565
        %7567 = vmatprep.mubr.bf16.mxu0 %v5635
        %7568 = vmatmul.mubr.bf16.gmra.mrb[0].mxu0 %v5634
        %v7569 = vpop.f32.mrb[0].mxu0
        %v7570 = vadd.f32 %v5963, %v7569
        %v7571 = vpop.f32.mrb[0].mxu0
        %v7572 = vadd.f32 %v5967, %v7571
        %v7573 = vpop.f32.mrb[0].mxu0
        %v7574 = vadd.f32 %v5963, %v7573
        %v7575 = vpop.f32.mrb[0].mxu0
        %v7576 = vadd.f32 %v5967, %v7575
        %7577 = vmatprep.mubr.bf16.mxu0 %v5639
        %7578 = vmatmul.mubr.bf16.gmra.mrb[0].mxu0 %v5638
        %v7579 = vpop.f32.mrb[0].mxu0
        %v7580 = vadd.f32 %v5963, %v7579
        %v7581 = vpop.f32.mrb[0].mxu0
        %v7582 = vadd.f32 %v5967, %v7581
        %v7583 = vpop.f32.mrb[0].mxu0
        %v7584 = vadd.f32 %v5963, %v7583
        %v7585 = vpop.f32.mrb[0].mxu0
        %v7586 = vadd.f32 %v5967, %v7585
        %7587 = vmatprep.mubr.bf16.mxu0 %v5643
        %7588 = vmatmul.mubr.bf16.gmra.mrb[0].mxu0 %v5642
        %v7589 = vpop.f32.mrb[0].mxu0
        %v7590 = vadd.f32 %v5963, %v7589
        %v7591 = vpop.f32.mrb[0].mxu0
        %v7592 = vadd.f32 %v5967, %v7591
        %v7593 = vpop.f32.mrb[0].mxu0
        %v7594 = vadd.f32 %v5963, %v7593
        %v7595 = vpop.f32.mrb[0].mxu0
        %v7596 = vadd.f32 %v5967, %v7595
        %7597 = vmatprep.mubr.bf16.mxu0 %v5647
        %7598 = vmatmul.mubr.bf16.gmra.mrb[0].mxu0 %v5646
        %v7599 = vpop.f32.mrb[0].mxu0
        %v7600 = vadd.f32 %v5963, %v7599
        %v7601 = vpop.f32.mrb[0].mxu0
        %v7602 = vadd.f32 %v5967, %v7601
        %v7603 = vpop.f32.mrb[0].mxu0
        %v7604 = vadd.f32 %v5963, %v7603
        %v7605 = vpop.f32.mrb[0].mxu0
        %v7606 = vadd.f32 %v5967, %v7605
        %7607 = vmatprep.mubr.bf16.mxu0 %v5651
        %7608 = vmatmul.mubr.bf16.gmra.mrb[0].mxu0 %v5650
        %v7609 = vpop.f32.mrb[0].mxu0
        %v7610 = vadd.f32 %v5963, %v7609
        %v7611 = vpop.f32.mrb[0].mxu0
        %v7612 = vadd.f32 %v5967, %v7611
        %v7613 = vpop.f32.mrb[0].mxu0
        %v7614 = vadd.f32 %v5963, %v7613
        %v7615 = vpop.f32.mrb[0].mxu0
        %v7616 = vadd.f32 %v5967, %v7615
        %7617 = vmatprep.mubr.bf16.mxu0 %v5655
        %7618 = vmatmul.mubr.bf16.gmra.mrb[0].mxu0 %v5654
        %v7619 = vpop.f32.mrb[0].mxu0
        %v7620 = vadd.f32 %v5963, %v7619
        %v7621 = vpop.f32.mrb[0].mxu0
        %v7622 = vadd.f32 %v5967, %v7621
        %v7623 = vpop.f32.mrb[0].mxu0
        %v7624 = vadd.f32 %v5963, %v7623
        %v7625 = vpop.f32.mrb[0].mxu0
        %v7626 = vadd.f32 %v5967, %v7625
        %7627 = vmatprep.mubr.bf16.mxu0 %v5659
        %7628 = vmatmul.mubr.bf16.gmra.mrb[0].mxu0 %v5658
        %v7629 = vpop.f32.mrb[0].mxu0
        %v7630 = vadd.f32 %v5963, %v7629
        %v7631 = vpop.f32.mrb[0].mxu0
        %v7632 = vadd.f32 %v5967, %v7631
        %v7633 = vpop.f32.mrb[0].mxu0
        %v7634 = vadd.f32 %v5963, %v7633
        %v7635 = vpop.f32.mrb[0].mxu0
        %v7636 = vadd.f32 %v5967, %v7635
        %7637 = vmatprep.mubr.bf16.mxu0 %v5663
        %7638 = vmatmul.mubr.bf16.gmra.mrb[0].mxu0 %v5662
        %v7639 = vpop.f32.mrb[0].mxu0
        %v7640 = vadd.f32 %v5963, %v7639
        %v7641 = vpop.f32.mrb[0].mxu0
        %v7642 = vadd.f32 %v5967, %v7641
        %v7643 = vpop.f32.mrb[0].mxu0
        %v7644 = vadd.f32 %v5963, %v7643
        %v7645 = vpop.f32.mrb[0].mxu0
        %v7646 = vadd.f32 %v5967, %v7645
        %7647 = vmatprep.mubr.bf16.mxu0 %v5667
        %7648 = vmatmul.mubr.bf16.gmra.mrb[0].mxu0 %v5666
        %v7649 = vpop.f32.mrb[0].mxu0
        %v7650 = vadd.f32 %v5963, %v7649
        %v7651 = vpop.f32.mrb[0].mxu0
        %v7652 = vadd.f32 %v5967, %v7651
        %v7653 = vpop.f32.mrb[0].mxu0
        %v7654 = vadd.f32 %v5963, %v7653
        %v7655 = vpop.f32.mrb[0].mxu0
        %v7656 = vadd.f32 %v5967, %v7655
        %7657 = vmatprep.mubr.bf16.mxu0 %v5671
        %7658 = vmatmul.mubr.bf16.gmra.mrb[0].mxu0 %v5670
        %v7659 = vpop.f32.mrb[0].mxu0
        %v7660 = vadd.f32 %v5963, %v7659
        %v7661 = vpop.f32.mrb[0].mxu0
        %v7662 = vadd.f32 %v5967, %v7661
        %v7663 = vpop.f32.mrb[0].mxu0
        %v7664 = vadd.f32 %v5963, %v7663
        %v7665 = vpop.f32.mrb[0].mxu0
        %v7666 = vadd.f32 %v5967, %v7665
        %7667 = vmatprep.mubr.bf16.mxu0 %v5675
        %7668 = vmatmul.mubr.bf16.gmra.mrb[0].mxu0 %v5674
        %v7669 = vpop.f32.mrb[0].mxu0
        %v7670 = vadd.f32 %v5963, %v7669
        %v7671 = vpop.f32.mrb[0].mxu0
        %v7672 = vadd.f32 %v5967, %v7671
        %v7673 = vpop.f32.mrb[0].mxu0
        %v7674 = vadd.f32 %v5963, %v7673
        %v7675 = vpop.f32.mrb[0].mxu0
        %v7676 = vadd.f32 %v5967, %v7675
        %7677 = vmatprep.mubr.bf16.mxu0 %v5679
        %7678 = vmatmul.mubr.bf16.gmra.mrb[0].mxu0 %v5678
        %v7679 = vpop.f32.mrb[0].mxu0
        %v7680 = vadd.f32 %v5963, %v7679
        %v7681 = vpop.f32.mrb[0].mxu0
        %v7682 = vadd.f32 %v5967, %v7681
        %v7683 = vpop.f32.mrb[0].mxu0
        %v7684 = vadd.f32 %v5963, %v7683
        %v7685 = vpop.f32.mrb[0].mxu0
        %v7686 = vadd.f32 %v5967, %v7685
        %7687 = vmatprep.mubr.bf16.mxu0 %v5683
        %7688 = vmatmul.mubr.bf16.gmra.mrb[0].mxu0 %v5682
        %v7689 = vpop.f32.mrb[0].mxu0
        %v7690 = vadd.f32 %v5963, %v7689
        %v7691 = vpop.f32.mrb[0].mxu0
        %v7692 = vadd.f32 %v5967, %v7691
        %v7693 = vpop.f32.mrb[0].mxu0
        %v7694 = vadd.f32 %v5963, %v7693
        %v7695 = vpop.f32.mrb[0].mxu0
        %v7696 = vadd.f32 %v5967, %v7695
        %7697 = vmatprep.mubr.bf16.mxu0 %v5687
        %7698 = vmatmul.mubr.bf16.gmra.mrb[0].mxu0 %v5686
        %v7699 = vpop.f32.mrb[0].mxu0
        %v7700 = vadd.f32 %v5963, %v7699
        %v7701 = vpop.f32.mrb[0].mxu0
        %v7702 = vadd.f32 %v5967, %v7701
        %v7703 = vpop.f32.mrb[0].mxu0
        %v7704 = vadd.f32 %v5963, %v7703
        %v7705 = vpop.f32.mrb[0].mxu0
        %v7706 = vadd.f32 %v5967, %v7705
        %7707 = vmatprep.mubr.bf16.mxu0 %v5691
        %7708 = vmatmul.mubr.bf16.gmra.mrb[0].mxu0 %v5690
        %v7709 = vpop.f32.mrb[0].mxu0
        %v7710 = vadd.f32 %v5963, %v7709
        %v7711 = vpop.f32.mrb[0].mxu0
        %v7712 = vadd.f32 %v5967, %v7711
        %v7713 = vpop.f32.mrb[0].mxu0
        %v7714 = vadd.f32 %v5963, %v7713
        %v7715 = vpop.f32.mrb[0].mxu0
        %v7716 = vadd.f32 %v5967, %v7715
        %7717 = vdwg.mxu0
        %7718 = vmatprep.subr.bf16.mxu0 %v6806
        %7719 = vmatpush1.bf16.msra.mxu0 %v6805
        %7720 = vmatprep.subr.bf16.mxu0 %v6813
        %7721 = vmatpush1.bf16.msra.mxu0 %v6812
        %7722 = vmatprep.subr.bf16.mxu0 %v6820
        %7723 = vmatpush1.bf16.msra.mxu0 %v6819
        %7724 = vmatprep.subr.bf16.mxu0 %v6827
        %7725 = vmatpush1.bf16.msra.mxu0 %v6826
        %7726 = vmatprep.subr.bf16.mxu0 %v6834
        %7727 = vmatpush1.bf16.msra.mxu0 %v6833
        %7728 = vmatprep.subr.bf16.mxu0 %v6841
        %7729 = vmatpush1.bf16.msra.mxu0 %v6840
        %7730 = vmatprep.subr.bf16.mxu0 %v6848
        %7731 = vmatpush1.bf16.msra.mxu0 %v6847
        %7732 = vmatprep.subr.bf16.mxu0 %v6855
        %7733 = vmatpush1.bf16.msra.mxu0 %v6854
        %7734 = vmatprep.subr.bf16.mxu0 %v6862
        %7735 = vmatpush1.bf16.msra.mxu0 %v6861
        %7736 = vmatprep.subr.bf16.mxu0 %v6869
        %7737 = vmatpush1.bf16.msra.mxu0 %v6868
        %7738 = vmatprep.subr.bf16.mxu0 %v6876
        %7739 = vmatpush1.bf16.msra.mxu0 %v6875
        %7740 = vmatprep.subr.bf16.mxu0 %v6883
        %7741 = vmatpush1.bf16.msra.mxu0 %v6882
        %7742 = vmatprep.subr.bf16.mxu0 %v6890
        %7743 = vmatpush1.bf16.msra.mxu0 %v6889
        %7744 = vmatprep.subr.bf16.mxu0 %v6897
        %7745 = vmatpush1.bf16.msra.mxu0 %v6896
        %7746 = vmatprep.subr.bf16.mxu0 %v6904
        %7747 = vmatpush1.bf16.msra.mxu0 %v6903
        %7748 = vmatprep.subr.bf16.mxu0 %v6911
        %7749 = vmatpush1.bf16.msra.mxu0 %v6910
        %7750 = vmatprep.mubr.bf16.mxu0 %v5633
        %7751 = vmatmul.mubr.bf16.gmra.mrb[0].mxu0 %v5632
        %v7752 = vpop.f32.mrb[0].mxu0
        %v7753 = vadd.f32 %v7560, %v7752
        %v7754 = vpop.f32.mrb[0].mxu0
        %v7755 = vadd.f32 %v7562, %v7754
        %v7756 = vpop.f32.mrb[0].mxu0
        %v7757 = vadd.f32 %v7564, %v7756
        %v7758 = vpop.f32.mrb[0].mxu0
        %v7759 = vadd.f32 %v7566, %v7758
        %7760 = vmatprep.mubr.bf16.mxu0 %v5637
        %7761 = vmatmul.mubr.bf16.gmra.mrb[0].mxu0 %v5636
        %v7762 = vpop.f32.mrb[0].mxu0
        %v7763 = vadd.f32 %v7570, %v7762
        %v7764 = vpop.f32.mrb[0].mxu0
        %v7765 = vadd.f32 %v7572, %v7764
        %v7766 = vpop.f32.mrb[0].mxu0
        %v7767 = vadd.f32 %v7574, %v7766
        %v7768 = vpop.f32.mrb[0].mxu0
        %v7769 = vadd.f32 %v7576, %v7768
        %7770 = vmatprep.mubr.bf16.mxu0 %v5641
        %7771 = vmatmul.mubr.bf16.gmra.mrb[0].mxu0 %v5640
        %v7772 = vpop.f32.mrb[0].mxu0
        %v7773 = vadd.f32 %v7580, %v7772
        %v7774 = vpop.f32.mrb[0].mxu0
        %v7775 = vadd.f32 %v7582, %v7774
        %v7776 = vpop.f32.mrb[0].mxu0
        %v7777 = vadd.f32 %v7584, %v7776
        %v7778 = vpop.f32.mrb[0].mxu0
        %v7779 = vadd.f32 %v7586, %v7778
        %7780 = vmatprep.mubr.bf16.mxu0 %v5645
        %7781 = vmatmul.mubr.bf16.gmra.mrb[0].mxu0 %v5644
        %v7782 = vpop.f32.mrb[0].mxu0
        %v7783 = vadd.f32 %v7590, %v7782
        %v7784 = vpop.f32.mrb[0].mxu0
        %v7785 = vadd.f32 %v7592, %v7784
        %v7786 = vpop.f32.mrb[0].mxu0
        %v7787 = vadd.f32 %v7594, %v7786
        %v7788 = vpop.f32.mrb[0].mxu0
        %v7789 = vadd.f32 %v7596, %v7788
        %7790 = vmatprep.mubr.bf16.mxu0 %v5649
        %7791 = vmatmul.mubr.bf16.gmra.mrb[0].mxu0 %v5648
        %v7792 = vpop.f32.mrb[0].mxu0
        %v7793 = vadd.f32 %v7600, %v7792
        %v7794 = vpop.f32.mrb[0].mxu0
        %v7795 = vadd.f32 %v7602, %v7794
        %v7796 = vpop.f32.mrb[0].mxu0
        %v7797 = vadd.f32 %v7604, %v7796
        %v7798 = vpop.f32.mrb[0].mxu0
        %v7799 = vadd.f32 %v7606, %v7798
        %7800 = vmatprep.mubr.bf16.mxu0 %v5653
        %7801 = vmatmul.mubr.bf16.gmra.mrb[0].mxu0 %v5652
        %v7802 = vpop.f32.mrb[0].mxu0
        %v7803 = vadd.f32 %v7610, %v7802
        %v7804 = vpop.f32.mrb[0].mxu0
        %v7805 = vadd.f32 %v7612, %v7804
        %v7806 = vpop.f32.mrb[0].mxu0
        %v7807 = vadd.f32 %v7614, %v7806
        %v7808 = vpop.f32.mrb[0].mxu0
        %v7809 = vadd.f32 %v7616, %v7808
        %7810 = vmatprep.mubr.bf16.mxu0 %v5657
        %7811 = vmatmul.mubr.bf16.gmra.mrb[0].mxu0 %v5656
        %v7812 = vpop.f32.mrb[0].mxu0
        %v7813 = vadd.f32 %v7620, %v7812
        %v7814 = vpop.f32.mrb[0].mxu0
        %v7815 = vadd.f32 %v7622, %v7814
        %v7816 = vpop.f32.mrb[0].mxu0
        %v7817 = vadd.f32 %v7624, %v7816
        %v7818 = vpop.f32.mrb[0].mxu0
        %v7819 = vadd.f32 %v7626, %v7818
        %7820 = vmatprep.mubr.bf16.mxu0 %v5661
        %7821 = vmatmul.mubr.bf16.gmra.mrb[0].mxu0 %v5660
        %v7822 = vpop.f32.mrb[0].mxu0
        %v7823 = vadd.f32 %v7630, %v7822
        %v7824 = vpop.f32.mrb[0].mxu0
        %v7825 = vadd.f32 %v7632, %v7824
        %v7826 = vpop.f32.mrb[0].mxu0
        %v7827 = vadd.f32 %v7634, %v7826
        %v7828 = vpop.f32.mrb[0].mxu0
        %v7829 = vadd.f32 %v7636, %v7828
        %7830 = vmatprep.mubr.bf16.mxu0 %v5665
        %7831 = vmatmul.mubr.bf16.gmra.mrb[0].mxu0 %v5664
        %v7832 = vpop.f32.mrb[0].mxu0
        %v7833 = vadd.f32 %v7640, %v7832
        %v7834 = vpop.f32.mrb[0].mxu0
        %v7835 = vadd.f32 %v7642, %v7834
        %v7836 = vpop.f32.mrb[0].mxu0
        %v7837 = vadd.f32 %v7644, %v7836
        %v7838 = vpop.f32.mrb[0].mxu0
        %v7839 = vadd.f32 %v7646, %v7838
        %7840 = vmatprep.mubr.bf16.mxu0 %v5669
        %7841 = vmatmul.mubr.bf16.gmra.mrb[0].mxu0 %v5668
        %v7842 = vpop.f32.mrb[0].mxu0
        %v7843 = vadd.f32 %v7650, %v7842
        %v7844 = vpop.f32.mrb[0].mxu0
        %v7845 = vadd.f32 %v7652, %v7844
        %v7846 = vpop.f32.mrb[0].mxu0
        %v7847 = vadd.f32 %v7654, %v7846
        %v7848 = vpop.f32.mrb[0].mxu0
        %v7849 = vadd.f32 %v7656, %v7848
        %7850 = vmatprep.mubr.bf16.mxu0 %v5673
        %7851 = vmatmul.mubr.bf16.gmra.mrb[0].mxu0 %v5672
        %v7852 = vpop.f32.mrb[0].mxu0
        %v7853 = vadd.f32 %v7660, %v7852
        %v7854 = vpop.f32.mrb[0].mxu0
        %v7855 = vadd.f32 %v7662, %v7854
        %v7856 = vpop.f32.mrb[0].mxu0
        %v7857 = vadd.f32 %v7664, %v7856
        %v7858 = vpop.f32.mrb[0].mxu0
        %v7859 = vadd.f32 %v7666, %v7858
        %7860 = vmatprep.mubr.bf16.mxu0 %v5677
        %7861 = vmatmul.mubr.bf16.gmra.mrb[0].mxu0 %v5676
        %v7862 = vpop.f32.mrb[0].mxu0
        %v7863 = vadd.f32 %v7670, %v7862
        %v7864 = vpop.f32.mrb[0].mxu0
        %v7865 = vadd.f32 %v7672, %v7864
        %v7866 = vpop.f32.mrb[0].mxu0
        %v7867 = vadd.f32 %v7674, %v7866
        %v7868 = vpop.f32.mrb[0].mxu0
        %v7869 = vadd.f32 %v7676, %v7868
        %7870 = vmatprep.mubr.bf16.mxu0 %v5681
        %7871 = vmatmul.mubr.bf16.gmra.mrb[0].mxu0 %v5680
        %v7872 = vpop.f32.mrb[0].mxu0
        %v7873 = vadd.f32 %v7680, %v7872
        %v7874 = vpop.f32.mrb[0].mxu0
        %v7875 = vadd.f32 %v7682, %v7874
        %v7876 = vpop.f32.mrb[0].mxu0
        %v7877 = vadd.f32 %v7684, %v7876
        %v7878 = vpop.f32.mrb[0].mxu0
        %v7879 = vadd.f32 %v7686, %v7878
        %7880 = vmatprep.mubr.bf16.mxu0 %v5685
        %7881 = vmatmul.mubr.bf16.gmra.mrb[0].mxu0 %v5684
        %v7882 = vpop.f32.mrb[0].mxu0
        %v7883 = vadd.f32 %v7690, %v7882
        %v7884 = vpop.f32.mrb[0].mxu0
        %v7885 = vadd.f32 %v7692, %v7884
        %v7886 = vpop.f32.mrb[0].mxu0
        %v7887 = vadd.f32 %v7694, %v7886
        %v7888 = vpop.f32.mrb[0].mxu0
        %v7889 = vadd.f32 %v7696, %v7888
        %7890 = vmatprep.mubr.bf16.mxu0 %v5689
        %7891 = vmatmul.mubr.bf16.gmra.mrb[0].mxu0 %v5688
        %v7892 = vpop.f32.mrb[0].mxu0
        %v7893 = vadd.f32 %v7700, %v7892
        %v7894 = vpop.f32.mrb[0].mxu0
        %v7895 = vadd.f32 %v7702, %v7894
        %v7896 = vpop.f32.mrb[0].mxu0
        %v7897 = vadd.f32 %v7704, %v7896
        %v7898 = vpop.f32.mrb[0].mxu0
        %v7899 = vadd.f32 %v7706, %v7898
        %7900 = vmatprep.mubr.bf16.mxu0 %v5693
        %7901 = vmatmul.mubr.bf16.gmra.mrb[0].mxu0 %v5692
        %v7902 = vpop.f32.mrb[0].mxu0
        %v7903 = vadd.f32 %v7710, %v7902
        %v7904 = vpop.f32.mrb[0].mxu0
        %v7905 = vadd.f32 %v7712, %v7904
        %v7906 = vpop.f32.mrb[0].mxu0
        %v7907 = vadd.f32 %v7714, %v7906
        %v7908 = vpop.f32.mrb[0].mxu0
        %v7909 = vadd.f32 %v7716, %v7908
        %7910 = vdwg.mxu0
        %7911 = vmatprep.subr.bf16.mxu0 %v6696
        %7912 = vmatpush1.bf16.msra.mxu0 %v6695
        %7913 = vmatprep.subr.bf16.mxu0 %v6703
        %7914 = vmatpush1.bf16.msra.mxu0 %v6702
        %7915 = vmatprep.subr.bf16.mxu0 %v6710
        %7916 = vmatpush1.bf16.msra.mxu0 %v6709
        %7917 = vmatprep.subr.bf16.mxu0 %v6717
        %7918 = vmatpush1.bf16.msra.mxu0 %v6716
        %7919 = vmatprep.subr.bf16.mxu0 %v6724
        %7920 = vmatpush1.bf16.msra.mxu0 %v6723
        %7921 = vmatprep.subr.bf16.mxu0 %v6731
        %7922 = vmatpush1.bf16.msra.mxu0 %v6730
        %7923 = vmatprep.subr.bf16.mxu0 %v6738
        %7924 = vmatpush1.bf16.msra.mxu0 %v6737
        %7925 = vmatprep.subr.bf16.mxu0 %v6745
        %7926 = vmatpush1.bf16.msra.mxu0 %v6744
        %7927 = vmatprep.subr.bf16.mxu0 %v6752
        %7928 = vmatpush1.bf16.msra.mxu0 %v6751
        %7929 = vmatprep.subr.bf16.mxu0 %v6759
        %7930 = vmatpush1.bf16.msra.mxu0 %v6758
        %7931 = vmatprep.subr.bf16.mxu0 %v6766
        %7932 = vmatpush1.bf16.msra.mxu0 %v6765
        %7933 = vmatprep.subr.bf16.mxu0 %v6773
        %7934 = vmatpush1.bf16.msra.mxu0 %v6772
        %7935 = vmatprep.subr.bf16.mxu0 %v6780
        %7936 = vmatpush1.bf16.msra.mxu0 %v6779
        %7937 = vmatprep.subr.bf16.mxu0 %v6787
        %7938 = vmatpush1.bf16.msra.mxu0 %v6786
        %7939 = vmatprep.subr.bf16.mxu0 %v6794
        %7940 = vmatpush1.bf16.msra.mxu0 %v6793
        %7941 = vmatprep.subr.bf16.mxu0 %v6801
        %7942 = vmatpush1.bf16.msra.mxu0 %v6800
        %7943 = vmatprep.mubr.bf16.mxu0 %v5631
        %7944 = vmatmul.mubr.bf16.gmra.mrb[0].mxu0 %v5630
        %v7945 = vpop.f32.mrb[0].mxu0
        %v7946 = vadd.f32 %v5971, %v7945
        %v7947 = vpop.f32.mrb[0].mxu0
        %v7948 = vadd.f32 %v5975, %v7947
        %v7949 = vpop.f32.mrb[0].mxu0
        %v7950 = vadd.f32 %v5971, %v7949
        %v7951 = vpop.f32.mrb[0].mxu0
        %v7952 = vadd.f32 %v5975, %v7951
        %7953 = vmatprep.mubr.bf16.mxu0 %v5635
        %7954 = vmatmul.mubr.bf16.gmra.mrb[0].mxu0 %v5634
        %v7955 = vpop.f32.mrb[0].mxu0
        %v7956 = vadd.f32 %v5971, %v7955
        %v7957 = vpop.f32.mrb[0].mxu0
        %v7958 = vadd.f32 %v5975, %v7957
        %v7959 = vpop.f32.mrb[0].mxu0
        %v7960 = vadd.f32 %v5971, %v7959
        %v7961 = vpop.f32.mrb[0].mxu0
        %v7962 = vadd.f32 %v5975, %v7961
        %7963 = vmatprep.mubr.bf16.mxu0 %v5639
        %7964 = vmatmul.mubr.bf16.gmra.mrb[0].mxu0 %v5638
        %v7965 = vpop.f32.mrb[0].mxu0
        %v7966 = vadd.f32 %v5971, %v7965
        %v7967 = vpop.f32.mrb[0].mxu0
        %v7968 = vadd.f32 %v5975, %v7967
        %v7969 = vpop.f32.mrb[0].mxu0
        %v7970 = vadd.f32 %v5971, %v7969
        %v7971 = vpop.f32.mrb[0].mxu0
        %v7972 = vadd.f32 %v5975, %v7971
        %7973 = vmatprep.mubr.bf16.mxu0 %v5643
        %7974 = vmatmul.mubr.bf16.gmra.mrb[0].mxu0 %v5642
        %v7975 = vpop.f32.mrb[0].mxu0
        %v7976 = vadd.f32 %v5971, %v7975
        %v7977 = vpop.f32.mrb[0].mxu0
        %v7978 = vadd.f32 %v5975, %v7977
        %v7979 = vpop.f32.mrb[0].mxu0
        %v7980 = vadd.f32 %v5971, %v7979
        %v7981 = vpop.f32.mrb[0].mxu0
        %v7982 = vadd.f32 %v5975, %v7981
        %7983 = vmatprep.mubr.bf16.mxu0 %v5647
        %7984 = vmatmul.mubr.bf16.gmra.mrb[0].mxu0 %v5646
        %v7985 = vpop.f32.mrb[0].mxu0
        %v7986 = vadd.f32 %v5971, %v7985
        %v7987 = vpop.f32.mrb[0].mxu0
        %v7988 = vadd.f32 %v5975, %v7987
        %v7989 = vpop.f32.mrb[0].mxu0
        %v7990 = vadd.f32 %v5971, %v7989
        %v7991 = vpop.f32.mrb[0].mxu0
        %v7992 = vadd.f32 %v5975, %v7991
        %7993 = vmatprep.mubr.bf16.mxu0 %v5651
        %7994 = vmatmul.mubr.bf16.gmra.mrb[0].mxu0 %v5650
        %v7995 = vpop.f32.mrb[0].mxu0
        %v7996 = vadd.f32 %v5971, %v7995
        %v7997 = vpop.f32.mrb[0].mxu0
        %v7998 = vadd.f32 %v5975, %v7997
        %v7999 = vpop.f32.mrb[0].mxu0
        %v8000 = vadd.f32 %v5971, %v7999
        %v8001 = vpop.f32.mrb[0].mxu0
        %v8002 = vadd.f32 %v5975, %v8001
        %8003 = vmatprep.mubr.bf16.mxu0 %v5655
        %8004 = vmatmul.mubr.bf16.gmra.mrb[0].mxu0 %v5654
        %v8005 = vpop.f32.mrb[0].mxu0
        %v8006 = vadd.f32 %v5971, %v8005
        %v8007 = vpop.f32.mrb[0].mxu0
        %v8008 = vadd.f32 %v5975, %v8007
        %v8009 = vpop.f32.mrb[0].mxu0
        %v8010 = vadd.f32 %v5971, %v8009
        %v8011 = vpop.f32.mrb[0].mxu0
        %v8012 = vadd.f32 %v5975, %v8011
        %8013 = vmatprep.mubr.bf16.mxu0 %v5659
        %8014 = vmatmul.mubr.bf16.gmra.mrb[0].mxu0 %v5658
        %v8015 = vpop.f32.mrb[0].mxu0
        %v8016 = vadd.f32 %v5971, %v8015
        %v8017 = vpop.f32.mrb[0].mxu0
        %v8018 = vadd.f32 %v5975, %v8017
        %v8019 = vpop.f32.mrb[0].mxu0
        %v8020 = vadd.f32 %v5971, %v8019
        %v8021 = vpop.f32.mrb[0].mxu0
        %v8022 = vadd.f32 %v5975, %v8021
        %8023 = vmatprep.mubr.bf16.mxu0 %v5663
        %8024 = vmatmul.mubr.bf16.gmra.mrb[0].mxu0 %v5662
        %v8025 = vpop.f32.mrb[0].mxu0
        %v8026 = vadd.f32 %v5971, %v8025
        %v8027 = vpop.f32.mrb[0].mxu0
        %v8028 = vadd.f32 %v5975, %v8027
        %v8029 = vpop.f32.mrb[0].mxu0
        %v8030 = vadd.f32 %v5971, %v8029
        %v8031 = vpop.f32.mrb[0].mxu0
        %v8032 = vadd.f32 %v5975, %v8031
        %8033 = vmatprep.mubr.bf16.mxu0 %v5667
        %8034 = vmatmul.mubr.bf16.gmra.mrb[0].mxu0 %v5666
        %v8035 = vpop.f32.mrb[0].mxu0
        %v8036 = vadd.f32 %v5971, %v8035
        %v8037 = vpop.f32.mrb[0].mxu0
        %v8038 = vadd.f32 %v5975, %v8037
        %v8039 = vpop.f32.mrb[0].mxu0
        %v8040 = vadd.f32 %v5971, %v8039
        %v8041 = vpop.f32.mrb[0].mxu0
        %v8042 = vadd.f32 %v5975, %v8041
        %8043 = vmatprep.mubr.bf16.mxu0 %v5671
        %8044 = vmatmul.mubr.bf16.gmra.mrb[0].mxu0 %v5670
        %v8045 = vpop.f32.mrb[0].mxu0
        %v8046 = vadd.f32 %v5971, %v8045
        %v8047 = vpop.f32.mrb[0].mxu0
        %v8048 = vadd.f32 %v5975, %v8047
        %v8049 = vpop.f32.mrb[0].mxu0
        %v8050 = vadd.f32 %v5971, %v8049
        %v8051 = vpop.f32.mrb[0].mxu0
        %v8052 = vadd.f32 %v5975, %v8051
        %8053 = vmatprep.mubr.bf16.mxu0 %v5675
        %8054 = vmatmul.mubr.bf16.gmra.mrb[0].mxu0 %v5674
        %v8055 = vpop.f32.mrb[0].mxu0
        %v8056 = vadd.f32 %v5971, %v8055
        %v8057 = vpop.f32.mrb[0].mxu0
        %v8058 = vadd.f32 %v5975, %v8057
        %v8059 = vpop.f32.mrb[0].mxu0
        %v8060 = vadd.f32 %v5971, %v8059
        %v8061 = vpop.f32.mrb[0].mxu0
        %v8062 = vadd.f32 %v5975, %v8061
        %8063 = vmatprep.mubr.bf16.mxu0 %v5679
        %8064 = vmatmul.mubr.bf16.gmra.mrb[0].mxu0 %v5678
        %v8065 = vpop.f32.mrb[0].mxu0
        %v8066 = vadd.f32 %v5971, %v8065
        %v8067 = vpop.f32.mrb[0].mxu0
        %v8068 = vadd.f32 %v5975, %v8067
        %v8069 = vpop.f32.mrb[0].mxu0
        %v8070 = vadd.f32 %v5971, %v8069
        %v8071 = vpop.f32.mrb[0].mxu0
        %v8072 = vadd.f32 %v5975, %v8071
        %8073 = vmatprep.mubr.bf16.mxu0 %v5683
        %8074 = vmatmul.mubr.bf16.gmra.mrb[0].mxu0 %v5682
        %v8075 = vpop.f32.mrb[0].mxu0
        %v8076 = vadd.f32 %v5971, %v8075
        %v8077 = vpop.f32.mrb[0].mxu0
        %v8078 = vadd.f32 %v5975, %v8077
        %v8079 = vpop.f32.mrb[0].mxu0
        %v8080 = vadd.f32 %v5971, %v8079
        %v8081 = vpop.f32.mrb[0].mxu0
        %v8082 = vadd.f32 %v5975, %v8081
        %8083 = vmatprep.mubr.bf16.mxu0 %v5687
        %8084 = vmatmul.mubr.bf16.gmra.mrb[0].mxu0 %v5686
        %v8085 = vpop.f32.mrb[0].mxu0
        %v8086 = vadd.f32 %v5971, %v8085
        %v8087 = vpop.f32.mrb[0].mxu0
        %v8088 = vadd.f32 %v5975, %v8087
        %v8089 = vpop.f32.mrb[0].mxu0
        %v8090 = vadd.f32 %v5971, %v8089
        %v8091 = vpop.f32.mrb[0].mxu0
        %v8092 = vadd.f32 %v5975, %v8091
        %8093 = vmatprep.mubr.bf16.mxu0 %v5691
        %8094 = vmatmul.mubr.bf16.gmra.mrb[0].mxu0 %v5690
        %v8095 = vpop.f32.mrb[0].mxu0
        %v8096 = vadd.f32 %v5971, %v8095
        %v8097 = vpop.f32.mrb[0].mxu0
        %v8098 = vadd.f32 %v5975, %v8097
        %v8099 = vpop.f32.mrb[0].mxu0
        %v8100 = vadd.f32 %v5971, %v8099
        %v8101 = vpop.f32.mrb[0].mxu0
        %v8102 = vadd.f32 %v5975, %v8101
        %8103 = vdwg.mxu0
        %8104 = vmatprep.subr.bf16.mxu0 %v6808
        %8105 = vmatpush1.bf16.msra.mxu0 %v6807
        %8106 = vmatprep.subr.bf16.mxu0 %v6815
        %8107 = vmatpush1.bf16.msra.mxu0 %v6814
        %8108 = vmatprep.subr.bf16.mxu0 %v6822
        %8109 = vmatpush1.bf16.msra.mxu0 %v6821
        %8110 = vmatprep.subr.bf16.mxu0 %v6829
        %8111 = vmatpush1.bf16.msra.mxu0 %v6828
        %8112 = vmatprep.subr.bf16.mxu0 %v6836
        %8113 = vmatpush1.bf16.msra.mxu0 %v6835
        %8114 = vmatprep.subr.bf16.mxu0 %v6843
        %8115 = vmatpush1.bf16.msra.mxu0 %v6842
        %8116 = vmatprep.subr.bf16.mxu0 %v6850
        %8117 = vmatpush1.bf16.msra.mxu0 %v6849
        %8118 = vmatprep.subr.bf16.mxu0 %v6857
        %8119 = vmatpush1.bf16.msra.mxu0 %v6856
        %8120 = vmatprep.subr.bf16.mxu0 %v6864
        %8121 = vmatpush1.bf16.msra.mxu0 %v6863
        %8122 = vmatprep.subr.bf16.mxu0 %v6871
        %8123 = vmatpush1.bf16.msra.mxu0 %v6870
        %8124 = vmatprep.subr.bf16.mxu0 %v6878
        %8125 = vmatpush1.bf16.msra.mxu0 %v6877
        %8126 = vmatprep.subr.bf16.mxu0 %v6885
        %8127 = vmatpush1.bf16.msra.mxu0 %v6884
        %8128 = vmatprep.subr.bf16.mxu0 %v6892
        %8129 = vmatpush1.bf16.msra.mxu0 %v6891
        %8130 = vmatprep.subr.bf16.mxu0 %v6899
        %8131 = vmatpush1.bf16.msra.mxu0 %v6898
        %8132 = vmatprep.subr.bf16.mxu0 %v6906
        %8133 = vmatpush1.bf16.msra.mxu0 %v6905
        %8134 = vmatprep.subr.bf16.mxu0 %v6913
        %8135 = vmatpush1.bf16.msra.mxu0 %v6912
        %8136 = vmatprep.mubr.bf16.mxu0 %v5633
        %8137 = vmatmul.mubr.bf16.gmra.mrb[0].mxu0 %v5632
        %v8138 = vpop.f32.mrb[0].mxu0
        %v8139 = vadd.f32 %v7946, %v8138
        %v8140 = vpop.f32.mrb[0].mxu0
        %v8141 = vadd.f32 %v7948, %v8140
        %v8142 = vpop.f32.mrb[0].mxu0
        %v8143 = vadd.f32 %v7950, %v8142
        %v8144 = vpop.f32.mrb[0].mxu0
        %v8145 = vadd.f32 %v7952, %v8144
        %8146 = vmatprep.mubr.bf16.mxu0 %v5637
        %8147 = vmatmul.mubr.bf16.gmra.mrb[0].mxu0 %v5636
        %v8148 = vpop.f32.mrb[0].mxu0
        %v8149 = vadd.f32 %v7956, %v8148
        %v8150 = vpop.f32.mrb[0].mxu0
        %v8151 = vadd.f32 %v7958, %v8150
        %v8152 = vpop.f32.mrb[0].mxu0
        %v8153 = vadd.f32 %v7960, %v8152
        %v8154 = vpop.f32.mrb[0].mxu0
        %v8155 = vadd.f32 %v7962, %v8154
        %8156 = vmatprep.mubr.bf16.mxu0 %v5641
        %8157 = vmatmul.mubr.bf16.gmra.mrb[0].mxu0 %v5640
        %v8158 = vpop.f32.mrb[0].mxu0
        %v8159 = vadd.f32 %v7966, %v8158
        %v8160 = vpop.f32.mrb[0].mxu0
        %v8161 = vadd.f32 %v7968, %v8160
        %v8162 = vpop.f32.mrb[0].mxu0
        %v8163 = vadd.f32 %v7970, %v8162
        %v8164 = vpop.f32.mrb[0].mxu0
        %v8165 = vadd.f32 %v7972, %v8164
        %8166 = vmatprep.mubr.bf16.mxu0 %v5645
        %8167 = vmatmul.mubr.bf16.gmra.mrb[0].mxu0 %v5644
        %v8168 = vpop.f32.mrb[0].mxu0
        %v8169 = vadd.f32 %v7976, %v8168
        %v8170 = vpop.f32.mrb[0].mxu0
        %v8171 = vadd.f32 %v7978, %v8170
        %v8172 = vpop.f32.mrb[0].mxu0
        %v8173 = vadd.f32 %v7980, %v8172
        %v8174 = vpop.f32.mrb[0].mxu0
        %v8175 = vadd.f32 %v7982, %v8174
        %8176 = vmatprep.mubr.bf16.mxu0 %v5649
        %8177 = vmatmul.mubr.bf16.gmra.mrb[0].mxu0 %v5648
        %v8178 = vpop.f32.mrb[0].mxu0
        %v8179 = vadd.f32 %v7986, %v8178
        %v8180 = vpop.f32.mrb[0].mxu0
        %v8181 = vadd.f32 %v7988, %v8180
        %v8182 = vpop.f32.mrb[0].mxu0
        %v8183 = vadd.f32 %v7990, %v8182
        %v8184 = vpop.f32.mrb[0].mxu0
        %v8185 = vadd.f32 %v7992, %v8184
        %8186 = vmatprep.mubr.bf16.mxu0 %v5653
        %8187 = vmatmul.mubr.bf16.gmra.mrb[0].mxu0 %v5652
        %v8188 = vpop.f32.mrb[0].mxu0
        %v8189 = vadd.f32 %v7996, %v8188
        %v8190 = vpop.f32.mrb[0].mxu0
        %v8191 = vadd.f32 %v7998, %v8190
        %v8192 = vpop.f32.mrb[0].mxu0
        %v8193 = vadd.f32 %v8000, %v8192
        %v8194 = vpop.f32.mrb[0].mxu0
        %v8195 = vadd.f32 %v8002, %v8194
        %8196 = vmatprep.mubr.bf16.mxu0 %v5657
        %8197 = vmatmul.mubr.bf16.gmra.mrb[0].mxu0 %v5656
        %v8198 = vpop.f32.mrb[0].mxu0
        %v8199 = vadd.f32 %v8006, %v8198
        %v8200 = vpop.f32.mrb[0].mxu0
        %v8201 = vadd.f32 %v8008, %v8200
        %v8202 = vpop.f32.mrb[0].mxu0
        %v8203 = vadd.f32 %v8010, %v8202
        %v8204 = vpop.f32.mrb[0].mxu0
        %v8205 = vadd.f32 %v8012, %v8204
        %8206 = vmatprep.mubr.bf16.mxu0 %v5661
        %8207 = vmatmul.mubr.bf16.gmra.mrb[0].mxu0 %v5660
        %v8208 = vpop.f32.mrb[0].mxu0
        %v8209 = vadd.f32 %v8016, %v8208
        %v8210 = vpop.f32.mrb[0].mxu0
        %v8211 = vadd.f32 %v8018, %v8210
        %v8212 = vpop.f32.mrb[0].mxu0
        %v8213 = vadd.f32 %v8020, %v8212
        %v8214 = vpop.f32.mrb[0].mxu0
        %v8215 = vadd.f32 %v8022, %v8214
        %8216 = vmatprep.mubr.bf16.mxu0 %v5665
        %8217 = vmatmul.mubr.bf16.gmra.mrb[0].mxu0 %v5664
        %v8218 = vpop.f32.mrb[0].mxu0
        %v8219 = vadd.f32 %v8026, %v8218
        %v8220 = vpop.f32.mrb[0].mxu0
        %v8221 = vadd.f32 %v8028, %v8220
        %v8222 = vpop.f32.mrb[0].mxu0
        %v8223 = vadd.f32 %v8030, %v8222
        %v8224 = vpop.f32.mrb[0].mxu0
        %v8225 = vadd.f32 %v8032, %v8224
        %8226 = vmatprep.mubr.bf16.mxu0 %v5669
        %8227 = vmatmul.mubr.bf16.gmra.mrb[0].mxu0 %v5668
        %v8228 = vpop.f32.mrb[0].mxu0
        %v8229 = vadd.f32 %v8036, %v8228
        %v8230 = vpop.f32.mrb[0].mxu0
        %v8231 = vadd.f32 %v8038, %v8230
        %v8232 = vpop.f32.mrb[0].mxu0
        %v8233 = vadd.f32 %v8040, %v8232
        %v8234 = vpop.f32.mrb[0].mxu0
        %v8235 = vadd.f32 %v8042, %v8234
        %8236 = vmatprep.mubr.bf16.mxu0 %v5673
        %8237 = vmatmul.mubr.bf16.gmra.mrb[0].mxu0 %v5672
        %v8238 = vpop.f32.mrb[0].mxu0
        %v8239 = vadd.f32 %v8046, %v8238
        %v8240 = vpop.f32.mrb[0].mxu0
        %v8241 = vadd.f32 %v8048, %v8240
        %v8242 = vpop.f32.mrb[0].mxu0
        %v8243 = vadd.f32 %v8050, %v8242
        %v8244 = vpop.f32.mrb[0].mxu0
        %v8245 = vadd.f32 %v8052, %v8244
        %8246 = vmatprep.mubr.bf16.mxu0 %v5677
        %8247 = vmatmul.mubr.bf16.gmra.mrb[0].mxu0 %v5676
        %v8248 = vpop.f32.mrb[0].mxu0
        %v8249 = vadd.f32 %v8056, %v8248
        %v8250 = vpop.f32.mrb[0].mxu0
        %v8251 = vadd.f32 %v8058, %v8250
        %v8252 = vpop.f32.mrb[0].mxu0
        %v8253 = vadd.f32 %v8060, %v8252
        %v8254 = vpop.f32.mrb[0].mxu0
        %v8255 = vadd.f32 %v8062, %v8254
        %8256 = vmatprep.mubr.bf16.mxu0 %v5681
        %8257 = vmatmul.mubr.bf16.gmra.mrb[0].mxu0 %v5680
        %v8258 = vpop.f32.mrb[0].mxu0
        %v8259 = vadd.f32 %v8066, %v8258
        %v8260 = vpop.f32.mrb[0].mxu0
        %v8261 = vadd.f32 %v8068, %v8260
        %v8262 = vpop.f32.mrb[0].mxu0
        %v8263 = vadd.f32 %v8070, %v8262
        %v8264 = vpop.f32.mrb[0].mxu0
        %v8265 = vadd.f32 %v8072, %v8264
        %8266 = vmatprep.mubr.bf16.mxu0 %v5685
        %8267 = vmatmul.mubr.bf16.gmra.mrb[0].mxu0 %v5684
        %v8268 = vpop.f32.mrb[0].mxu0
        %v8269 = vadd.f32 %v8076, %v8268
        %v8270 = vpop.f32.mrb[0].mxu0
        %v8271 = vadd.f32 %v8078, %v8270
        %v8272 = vpop.f32.mrb[0].mxu0
        %v8273 = vadd.f32 %v8080, %v8272
        %v8274 = vpop.f32.mrb[0].mxu0
        %v8275 = vadd.f32 %v8082, %v8274
        %8276 = vmatprep.mubr.bf16.mxu0 %v5689
        %8277 = vmatmul.mubr.bf16.gmra.mrb[0].mxu0 %v5688
        %v8278 = vpop.f32.mrb[0].mxu0
        %v8279 = vadd.f32 %v8086, %v8278
        %v8280 = vpop.f32.mrb[0].mxu0
        %v8281 = vadd.f32 %v8088, %v8280
        %v8282 = vpop.f32.mrb[0].mxu0
        %v8283 = vadd.f32 %v8090, %v8282
        %v8284 = vpop.f32.mrb[0].mxu0
        %v8285 = vadd.f32 %v8092, %v8284
        %8286 = vmatprep.mubr.bf16.mxu0 %v5693
        %8287 = vmatmul.mubr.bf16.gmra.mrb[0].mxu0 %v5692
        %v8288 = vpop.f32.mrb[0].mxu0
        %v8289 = vadd.f32 %v8096, %v8288
        %v8290 = vpop.f32.mrb[0].mxu0
        %v8291 = vadd.f32 %v8098, %v8290
        %v8292 = vpop.f32.mrb[0].mxu0
        %v8293 = vadd.f32 %v8100, %v8292
        %v8294 = vpop.f32.mrb[0].mxu0
        %v8295 = vadd.f32 %v8102, %v8294
        %8296 = vdwg.mxu0
        %8297 = vmatprep.subr.bf16.mxu0 0
        %8298 = vmatpush1.bf16.msra.mxu0 %v6697
        %8299 = vmatprep.subr.bf16.mxu0 0
        %8300 = vmatpush1.bf16.msra.mxu0 %v6704
        %8301 = vmatprep.subr.bf16.mxu0 0
        %8302 = vmatpush1.bf16.msra.mxu0 %v6711
        %8303 = vmatprep.subr.bf16.mxu0 0
        %8304 = vmatpush1.bf16.msra.mxu0 %v6718
        %8305 = vmatprep.subr.bf16.mxu0 0
        %8306 = vmatpush1.bf16.msra.mxu0 %v6725
        %8307 = vmatprep.subr.bf16.mxu0 0
        %8308 = vmatpush1.bf16.msra.mxu0 %v6732
        %8309 = vmatprep.subr.bf16.mxu0 0
        %8310 = vmatpush1.bf16.msra.mxu0 %v6739
        %8311 = vmatprep.subr.bf16.mxu0 0
        %8312 = vmatpush1.bf16.msra.mxu0 %v6746
        %8313 = vmatprep.subr.bf16.mxu0 0
        %8314 = vmatpush1.bf16.msra.mxu0 %v6753
        %8315 = vmatprep.subr.bf16.mxu0 0
        %8316 = vmatpush1.bf16.msra.mxu0 %v6760
        %8317 = vmatprep.subr.bf16.mxu0 0
        %8318 = vmatpush1.bf16.msra.mxu0 %v6767
        %8319 = vmatprep.subr.bf16.mxu0 0
        %8320 = vmatpush1.bf16.msra.mxu0 %v6774
        %8321 = vmatprep.subr.bf16.mxu0 0
        %8322 = vmatpush1.bf16.msra.mxu0 %v6781
        %8323 = vmatprep.subr.bf16.mxu0 0
        %8324 = vmatpush1.bf16.msra.mxu0 %v6788
        %8325 = vmatprep.subr.bf16.mxu0 0
        %8326 = vmatpush1.bf16.msra.mxu0 %v6795
        %8327 = vmatprep.subr.bf16.mxu0 0
        %8328 = vmatpush1.bf16.msra.mxu0 %v6802
        %8329 = vmatprep.mubr.bf16.mxu0 %v5631
        %8330 = vmatmul.mubr.bf16.gmra.mrb[0].mxu0 %v5630
        %v8331 = vpop.f32.mrb[0].mxu0
        %v8332 = vadd.f32 %v5979, %v8331
        %v8333 = vpop.f32.mrb[0].mxu0
        %v8334 = vpop.f32.mrb[0].mxu0
        %v8335 = vadd.f32 %v5979, %v8334
        %v8336 = vpop.f32.mrb[0].mxu0
        %8337 = vmatprep.mubr.bf16.mxu0 %v5635
        %8338 = vmatmul.mubr.bf16.gmra.mrb[0].mxu0 %v5634
        %v8339 = vpop.f32.mrb[0].mxu0
        %v8340 = vadd.f32 %v5979, %v8339
        %v8341 = vpop.f32.mrb[0].mxu0
        %v8342 = vpop.f32.mrb[0].mxu0
        %v8343 = vadd.f32 %v5979, %v8342
        %v8344 = vpop.f32.mrb[0].mxu0
        %8345 = vmatprep.mubr.bf16.mxu0 %v5639
        %8346 = vmatmul.mubr.bf16.gmra.mrb[0].mxu0 %v5638
        %v8347 = vpop.f32.mrb[0].mxu0
        %v8348 = vadd.f32 %v5979, %v8347
        %v8349 = vpop.f32.mrb[0].mxu0
        %v8350 = vpop.f32.mrb[0].mxu0
        %v8351 = vadd.f32 %v5979, %v8350
        %v8352 = vpop.f32.mrb[0].mxu0
        %8353 = vmatprep.mubr.bf16.mxu0 %v5643
        %8354 = vmatmul.mubr.bf16.gmra.mrb[0].mxu0 %v5642
        %v8355 = vpop.f32.mrb[0].mxu0
        %v8356 = vadd.f32 %v5979, %v8355
        %v8357 = vpop.f32.mrb[0].mxu0
        %v8358 = vpop.f32.mrb[0].mxu0
        %v8359 = vadd.f32 %v5979, %v8358
        %v8360 = vpop.f32.mrb[0].mxu0
        %8361 = vmatprep.mubr.bf16.mxu0 %v5647
        %8362 = vmatmul.mubr.bf16.gmra.mrb[0].mxu0 %v5646
        %v8363 = vpop.f32.mrb[0].mxu0
        %v8364 = vadd.f32 %v5979, %v8363
        %v8365 = vpop.f32.mrb[0].mxu0
        %v8366 = vpop.f32.mrb[0].mxu0
        %v8367 = vadd.f32 %v5979, %v8366
        %v8368 = vpop.f32.mrb[0].mxu0
        %8369 = vmatprep.mubr.bf16.mxu0 %v5651
        %8370 = vmatmul.mubr.bf16.gmra.mrb[0].mxu0 %v5650
        %v8371 = vpop.f32.mrb[0].mxu0
        %v8372 = vadd.f32 %v5979, %v8371
        %v8373 = vpop.f32.mrb[0].mxu0
        %v8374 = vpop.f32.mrb[0].mxu0
        %v8375 = vadd.f32 %v5979, %v8374
        %v8376 = vpop.f32.mrb[0].mxu0
        %8377 = vmatprep.mubr.bf16.mxu0 %v5655
        %8378 = vmatmul.mubr.bf16.gmra.mrb[0].mxu0 %v5654
        %v8379 = vpop.f32.mrb[0].mxu0
        %v8380 = vadd.f32 %v5979, %v8379
        %v8381 = vpop.f32.mrb[0].mxu0
        %v8382 = vpop.f32.mrb[0].mxu0
        %v8383 = vadd.f32 %v5979, %v8382
        %v8384 = vpop.f32.mrb[0].mxu0
        %8385 = vmatprep.mubr.bf16.mxu0 %v5659
        %8386 = vmatmul.mubr.bf16.gmra.mrb[0].mxu0 %v5658
        %v8387 = vpop.f32.mrb[0].mxu0
        %v8388 = vadd.f32 %v5979, %v8387
        %v8389 = vpop.f32.mrb[0].mxu0
        %v8390 = vpop.f32.mrb[0].mxu0
        %v8391 = vadd.f32 %v5979, %v8390
        %v8392 = vpop.f32.mrb[0].mxu0
        %8393 = vmatprep.mubr.bf16.mxu0 %v5663
        %8394 = vmatmul.mubr.bf16.gmra.mrb[0].mxu0 %v5662
        %v8395 = vpop.f32.mrb[0].mxu0
        %v8396 = vadd.f32 %v5979, %v8395
        %v8397 = vpop.f32.mrb[0].mxu0
        %v8398 = vpop.f32.mrb[0].mxu0
        %v8399 = vadd.f32 %v5979, %v8398
        %v8400 = vpop.f32.mrb[0].mxu0
        %8401 = vmatprep.mubr.bf16.mxu0 %v5667
        %8402 = vmatmul.mubr.bf16.gmra.mrb[0].mxu0 %v5666
        %v8403 = vpop.f32.mrb[0].mxu0
        %v8404 = vadd.f32 %v5979, %v8403
        %v8405 = vpop.f32.mrb[0].mxu0
        %v8406 = vpop.f32.mrb[0].mxu0
        %v8407 = vadd.f32 %v5979, %v8406
        %v8408 = vpop.f32.mrb[0].mxu0
        %8409 = vmatprep.mubr.bf16.mxu0 %v5671
        %8410 = vmatmul.mubr.bf16.gmra.mrb[0].mxu0 %v5670
        %v8411 = vpop.f32.mrb[0].mxu0
        %v8412 = vadd.f32 %v5979, %v8411
        %v8413 = vpop.f32.mrb[0].mxu0
        %v8414 = vpop.f32.mrb[0].mxu0
        %v8415 = vadd.f32 %v5979, %v8414
        %v8416 = vpop.f32.mrb[0].mxu0
        %8417 = vmatprep.mubr.bf16.mxu0 %v5675
        %8418 = vmatmul.mubr.bf16.gmra.mrb[0].mxu0 %v5674
        %v8419 = vpop.f32.mrb[0].mxu0
        %v8420 = vadd.f32 %v5979, %v8419
        %v8421 = vpop.f32.mrb[0].mxu0
        %v8422 = vpop.f32.mrb[0].mxu0
        %v8423 = vadd.f32 %v5979, %v8422
        %v8424 = vpop.f32.mrb[0].mxu0
        %8425 = vmatprep.mubr.bf16.mxu0 %v5679
        %8426 = vmatmul.mubr.bf16.gmra.mrb[0].mxu0 %v5678
        %v8427 = vpop.f32.mrb[0].mxu0
        %v8428 = vadd.f32 %v5979, %v8427
        %v8429 = vpop.f32.mrb[0].mxu0
        %v8430 = vpop.f32.mrb[0].mxu0
        %v8431 = vadd.f32 %v5979, %v8430
        %v8432 = vpop.f32.mrb[0].mxu0
        %8433 = vmatprep.mubr.bf16.mxu0 %v5683
        %8434 = vmatmul.mubr.bf16.gmra.mrb[0].mxu0 %v5682
        %v8435 = vpop.f32.mrb[0].mxu0
        %v8436 = vadd.f32 %v5979, %v8435
        %v8437 = vpop.f32.mrb[0].mxu0
        %v8438 = vpop.f32.mrb[0].mxu0
        %v8439 = vadd.f32 %v5979, %v8438
        %v8440 = vpop.f32.mrb[0].mxu0
        %8441 = vmatprep.mubr.bf16.mxu0 %v5687
        %8442 = vmatmul.mubr.bf16.gmra.mrb[0].mxu0 %v5686
        %v8443 = vpop.f32.mrb[0].mxu0
        %v8444 = vadd.f32 %v5979, %v8443
        %v8445 = vpop.f32.mrb[0].mxu0
        %v8446 = vpop.f32.mrb[0].mxu0
        %v8447 = vadd.f32 %v5979, %v8446
        %v8448 = vpop.f32.mrb[0].mxu0
        %8449 = vmatprep.mubr.bf16.mxu0 %v5691
        %8450 = vmatmul.mubr.bf16.gmra.mrb[0].mxu0 %v5690
        %v8451 = vpop.f32.mrb[0].mxu0
        %v8452 = vadd.f32 %v5979, %v8451
        %v8453 = vpop.f32.mrb[0].mxu0
        %v8454 = vpop.f32.mrb[0].mxu0
        %v8455 = vadd.f32 %v5979, %v8454
        %v8456 = vpop.f32.mrb[0].mxu0
        %8457 = vdwg.mxu0
        %8458 = vmatprep.subr.bf16.mxu0 0
        %8459 = vmatpush1.bf16.msra.mxu0 %v6809
        %8460 = vmatprep.subr.bf16.mxu0 0
        %8461 = vmatpush1.bf16.msra.mxu0 %v6816
        %8462 = vmatprep.subr.bf16.mxu0 0
        %8463 = vmatpush1.bf16.msra.mxu0 %v6823
        %8464 = vmatprep.subr.bf16.mxu0 0
        %8465 = vmatpush1.bf16.msra.mxu0 %v6830
        %8466 = vmatprep.subr.bf16.mxu0 0
        %8467 = vmatpush1.bf16.msra.mxu0 %v6837
        %8468 = vmatprep.subr.bf16.mxu0 0
        %8469 = vmatpush1.bf16.msra.mxu0 %v6844
        %8470 = vmatprep.subr.bf16.mxu0 0
        %8471 = vmatpush1.bf16.msra.mxu0 %v6851
        %8472 = vmatprep.subr.bf16.mxu0 0
        %8473 = vmatpush1.bf16.msra.mxu0 %v6858
        %8474 = vmatprep.subr.bf16.mxu0 0
        %8475 = vmatpush1.bf16.msra.mxu0 %v6865
        %8476 = vmatprep.subr.bf16.mxu0 0
        %8477 = vmatpush1.bf16.msra.mxu0 %v6872
        %8478 = vmatprep.subr.bf16.mxu0 0
        %8479 = vmatpush1.bf16.msra.mxu0 %v6879
        %8480 = vmatprep.subr.bf16.mxu0 0
        %8481 = vmatpush1.bf16.msra.mxu0 %v6886
        %8482 = vmatprep.subr.bf16.mxu0 0
        %8483 = vmatpush1.bf16.msra.mxu0 %v6893
        %8484 = vmatprep.subr.bf16.mxu0 0
        %8485 = vmatpush1.bf16.msra.mxu0 %v6900
        %8486 = vmatprep.subr.bf16.mxu0 0
        %8487 = vmatpush1.bf16.msra.mxu0 %v6907
        %8488 = vmatprep.subr.bf16.mxu0 0
        %8489 = vmatpush1.bf16.msra.mxu0 %v6914
        %8490 = vmatprep.mubr.bf16.mxu0 %v5633
        %8491 = vmatmul.mubr.bf16.gmra.mrb[0].mxu0 %v5632
        %v8492 = vpop.f32.mrb[0].mxu0
        %v8493 = vadd.f32 %v8332, %v8492
        %v8494 = vpop.f32.mrb[0].mxu0
        %v8495 = vpop.f32.mrb[0].mxu0
        %v8496 = vadd.f32 %v8335, %v8495
        %v8497 = vpop.f32.mrb[0].mxu0
        %8498 = vmatprep.mubr.bf16.mxu0 %v5637
        %8499 = vmatmul.mubr.bf16.gmra.mrb[0].mxu0 %v5636
        %v8500 = vpop.f32.mrb[0].mxu0
        %v8501 = vadd.f32 %v8340, %v8500
        %v8502 = vpop.f32.mrb[0].mxu0
        %v8503 = vpop.f32.mrb[0].mxu0
        %v8504 = vadd.f32 %v8343, %v8503
        %v8505 = vpop.f32.mrb[0].mxu0
        %8506 = vmatprep.mubr.bf16.mxu0 %v5641
        %8507 = vmatmul.mubr.bf16.gmra.mrb[0].mxu0 %v5640
        %v8508 = vpop.f32.mrb[0].mxu0
        %v8509 = vadd.f32 %v8348, %v8508
        %v8510 = vpop.f32.mrb[0].mxu0
        %v8511 = vpop.f32.mrb[0].mxu0
        %v8512 = vadd.f32 %v8351, %v8511
        %v8513 = vpop.f32.mrb[0].mxu0
        %8514 = vmatprep.mubr.bf16.mxu0 %v5645
        %8515 = vmatmul.mubr.bf16.gmra.mrb[0].mxu0 %v5644
        %v8516 = vpop.f32.mrb[0].mxu0
        %v8517 = vadd.f32 %v8356, %v8516
        %v8518 = vpop.f32.mrb[0].mxu0
        %v8519 = vpop.f32.mrb[0].mxu0
        %v8520 = vadd.f32 %v8359, %v8519
        %v8521 = vpop.f32.mrb[0].mxu0
        %8522 = vmatprep.mubr.bf16.mxu0 %v5649
        %8523 = vmatmul.mubr.bf16.gmra.mrb[0].mxu0 %v5648
        %v8524 = vpop.f32.mrb[0].mxu0
        %v8525 = vadd.f32 %v8364, %v8524
        %v8526 = vpop.f32.mrb[0].mxu0
        %v8527 = vpop.f32.mrb[0].mxu0
        %v8528 = vadd.f32 %v8367, %v8527
        %v8529 = vpop.f32.mrb[0].mxu0
        %8530 = vmatprep.mubr.bf16.mxu0 %v5653
        %8531 = vmatmul.mubr.bf16.gmra.mrb[0].mxu0 %v5652
        %v8532 = vpop.f32.mrb[0].mxu0
        %v8533 = vadd.f32 %v8372, %v8532
        %v8534 = vpop.f32.mrb[0].mxu0
        %v8535 = vpop.f32.mrb[0].mxu0
        %v8536 = vadd.f32 %v8375, %v8535
        %v8537 = vpop.f32.mrb[0].mxu0
        %8538 = vmatprep.mubr.bf16.mxu0 %v5657
        %8539 = vmatmul.mubr.bf16.gmra.mrb[0].mxu0 %v5656
        %v8540 = vpop.f32.mrb[0].mxu0
        %v8541 = vadd.f32 %v8380, %v8540
        %v8542 = vpop.f32.mrb[0].mxu0
        %v8543 = vpop.f32.mrb[0].mxu0
        %v8544 = vadd.f32 %v8383, %v8543
        %v8545 = vpop.f32.mrb[0].mxu0
        %8546 = vmatprep.mubr.bf16.mxu0 %v5661
        %8547 = vmatmul.mubr.bf16.gmra.mrb[0].mxu0 %v5660
        %v8548 = vpop.f32.mrb[0].mxu0
        %v8549 = vadd.f32 %v8388, %v8548
        %v8550 = vpop.f32.mrb[0].mxu0
        %v8551 = vpop.f32.mrb[0].mxu0
        %v8552 = vadd.f32 %v8391, %v8551
        %v8553 = vpop.f32.mrb[0].mxu0
        %8554 = vmatprep.mubr.bf16.mxu0 %v5665
        %8555 = vmatmul.mubr.bf16.gmra.mrb[0].mxu0 %v5664
        %v8556 = vpop.f32.mrb[0].mxu0
        %v8557 = vadd.f32 %v8396, %v8556
        %v8558 = vpop.f32.mrb[0].mxu0
        %v8559 = vpop.f32.mrb[0].mxu0
        %v8560 = vadd.f32 %v8399, %v8559
        %v8561 = vpop.f32.mrb[0].mxu0
        %8562 = vmatprep.mubr.bf16.mxu0 %v5669
        %8563 = vmatmul.mubr.bf16.gmra.mrb[0].mxu0 %v5668
        %v8564 = vpop.f32.mrb[0].mxu0
        %v8565 = vadd.f32 %v8404, %v8564
        %v8566 = vpop.f32.mrb[0].mxu0
        %v8567 = vpop.f32.mrb[0].mxu0
        %v8568 = vadd.f32 %v8407, %v8567
        %v8569 = vpop.f32.mrb[0].mxu0
        %8570 = vmatprep.mubr.bf16.mxu0 %v5673
        %8571 = vmatmul.mubr.bf16.gmra.mrb[0].mxu0 %v5672
        %v8572 = vpop.f32.mrb[0].mxu0
        %v8573 = vadd.f32 %v8412, %v8572
        %v8574 = vpop.f32.mrb[0].mxu0
        %v8575 = vpop.f32.mrb[0].mxu0
        %v8576 = vadd.f32 %v8415, %v8575
        %v8577 = vpop.f32.mrb[0].mxu0
        %8578 = vmatprep.mubr.bf16.mxu0 %v5677
        %8579 = vmatmul.mubr.bf16.gmra.mrb[0].mxu0 %v5676
        %v8580 = vpop.f32.mrb[0].mxu0
        %v8581 = vadd.f32 %v8420, %v8580
        %v8582 = vpop.f32.mrb[0].mxu0
        %v8583 = vpop.f32.mrb[0].mxu0
        %v8584 = vadd.f32 %v8423, %v8583
        %v8585 = vpop.f32.mrb[0].mxu0
        %8586 = vmatprep.mubr.bf16.mxu0 %v5681
        %8587 = vmatmul.mubr.bf16.gmra.mrb[0].mxu0 %v5680
        %v8588 = vpop.f32.mrb[0].mxu0
        %v8589 = vadd.f32 %v8428, %v8588
        %v8590 = vpop.f32.mrb[0].mxu0
        %v8591 = vpop.f32.mrb[0].mxu0
        %v8592 = vadd.f32 %v8431, %v8591
        %v8593 = vpop.f32.mrb[0].mxu0
        %8594 = vmatprep.mubr.bf16.mxu0 %v5685
        %8595 = vmatmul.mubr.bf16.gmra.mrb[0].mxu0 %v5684
        %v8596 = vpop.f32.mrb[0].mxu0
        %v8597 = vadd.f32 %v8436, %v8596
        %v8598 = vpop.f32.mrb[0].mxu0
        %v8599 = vpop.f32.mrb[0].mxu0
        %v8600 = vadd.f32 %v8439, %v8599
        %v8601 = vpop.f32.mrb[0].mxu0
        %8602 = vmatprep.mubr.bf16.mxu0 %v5689
        %8603 = vmatmul.mubr.bf16.gmra.mrb[0].mxu0 %v5688
        %v8604 = vpop.f32.mrb[0].mxu0
        %v8605 = vadd.f32 %v8444, %v8604
        %v8606 = vpop.f32.mrb[0].mxu0
        %v8607 = vpop.f32.mrb[0].mxu0
        %v8608 = vadd.f32 %v8447, %v8607
        %v8609 = vpop.f32.mrb[0].mxu0
        %8610 = vmatprep.mubr.bf16.mxu0 %v5693
        %8611 = vmatmul.mubr.bf16.gmra.mrb[0].mxu0 %v5692
        %v8612 = vpop.f32.mrb[0].mxu0
        %v8613 = vadd.f32 %v8452, %v8612
        %v8614 = vpop.f32.mrb[0].mxu0
        %v8615 = vpop.f32.mrb[0].mxu0
        %v8616 = vadd.f32 %v8455, %v8615
        %v8617 = vpop.f32.mrb[0].mxu0
        %8618 = vdwg.mxu0
        %v8619 = vxor.u32 %v7367, 2147483648
        %v8620 = vxor.u32 %v7369, 2147483648
        %v8621 = vxor.u32 %v7753, 2147483648
        %v8622 = vxor.u32 %v7755, 2147483648
        %v8623 = vxor.u32 %v8139, 2147483648
        %v8624 = vxor.u32 %v8141, 2147483648
        %v8625 = vxor.u32 %v8493, 2147483648
        %v8626 = vxor.u32 %v7371, 2147483648
        %v8627 = vxor.u32 %v7373, 2147483648
        %v8628 = vxor.u32 %v7757, 2147483648
        %v8629 = vxor.u32 %v7759, 2147483648
        %v8630 = vxor.u32 %v8143, 2147483648
        %v8631 = vxor.u32 %v8145, 2147483648
        %v8632 = vxor.u32 %v8496, 2147483648
        %v8633 = vxor.u32 %v7377, 2147483648
        %v8634 = vxor.u32 %v7379, 2147483648
        %v8635 = vxor.u32 %v7763, 2147483648
        %v8636 = vxor.u32 %v7765, 2147483648
        %v8637 = vxor.u32 %v8149, 2147483648
        %v8638 = vxor.u32 %v8151, 2147483648
        %v8639 = vxor.u32 %v8501, 2147483648
        %v8640 = vxor.u32 %v7381, 2147483648
        %v8641 = vxor.u32 %v7383, 2147483648
        %v8642 = vxor.u32 %v7767, 2147483648
        %v8643 = vxor.u32 %v7769, 2147483648
        %v8644 = vxor.u32 %v8153, 2147483648
        %v8645 = vxor.u32 %v8155, 2147483648
        %v8646 = vxor.u32 %v8504, 2147483648
        %v8647 = vxor.u32 %v7387, 2147483648
        %v8648 = vxor.u32 %v7389, 2147483648
        %v8649 = vxor.u32 %v7773, 2147483648
        %v8650 = vxor.u32 %v7775, 2147483648
        %v8651 = vxor.u32 %v8159, 2147483648
        %v8652 = vxor.u32 %v8161, 2147483648
        %v8653 = vxor.u32 %v8509, 2147483648
        %v8654 = vxor.u32 %v7391, 2147483648
        %v8655 = vxor.u32 %v7393, 2147483648
        %v8656 = vxor.u32 %v7777, 2147483648
        %v8657 = vxor.u32 %v7779, 2147483648
        %v8658 = vxor.u32 %v8163, 2147483648
        %v8659 = vxor.u32 %v8165, 2147483648
        %v8660 = vxor.u32 %v8512, 2147483648
        %v8661 = vxor.u32 %v7397, 2147483648
        %v8662 = vxor.u32 %v7399, 2147483648
        %v8663 = vxor.u32 %v7783, 2147483648
        %v8664 = vxor.u32 %v7785, 2147483648
        %v8665 = vxor.u32 %v8169, 2147483648
        %v8666 = vxor.u32 %v8171, 2147483648
        %v8667 = vxor.u32 %v8517, 2147483648
        %v8668 = vxor.u32 %v7401, 2147483648
        %v8669 = vxor.u32 %v7403, 2147483648
        %v8670 = vxor.u32 %v7787, 2147483648
        %v8671 = vxor.u32 %v7789, 2147483648
        %v8672 = vxor.u32 %v8173, 2147483648
        %v8673 = vxor.u32 %v8175, 2147483648
        %v8674 = vxor.u32 %v8520, 2147483648
        %v8675 = vxor.u32 %v7407, 2147483648
        %v8676 = vxor.u32 %v7409, 2147483648
        %v8677 = vxor.u32 %v7793, 2147483648
        %v8678 = vxor.u32 %v7795, 2147483648
        %v8679 = vxor.u32 %v8179, 2147483648
        %v8680 = vxor.u32 %v8181, 2147483648
        %v8681 = vxor.u32 %v8525, 2147483648
        %v8682 = vxor.u32 %v7411, 2147483648
        %v8683 = vxor.u32 %v7413, 2147483648
        %v8684 = vxor.u32 %v7797, 2147483648
        %v8685 = vxor.u32 %v7799, 2147483648
        %v8686 = vxor.u32 %v8183, 2147483648
        %v8687 = vxor.u32 %v8185, 2147483648
        %v8688 = vxor.u32 %v8528, 2147483648
        %v8689 = vxor.u32 %v7417, 2147483648
        %v8690 = vxor.u32 %v7419, 2147483648
        %v8691 = vxor.u32 %v7803, 2147483648
        %v8692 = vxor.u32 %v7805, 2147483648
        %v8693 = vxor.u32 %v8189, 2147483648
        %v8694 = vxor.u32 %v8191, 2147483648
        %v8695 = vxor.u32 %v8533, 2147483648
        %v8696 = vxor.u32 %v7421, 2147483648
        %v8697 = vxor.u32 %v7423, 2147483648
        %v8698 = vxor.u32 %v7807, 2147483648
        %v8699 = vxor.u32 %v7809, 2147483648
        %v8700 = vxor.u32 %v8193, 2147483648
        %v8701 = vxor.u32 %v8195, 2147483648
        %v8702 = vxor.u32 %v8536, 2147483648
        %v8703 = vxor.u32 %v7427, 2147483648
        %v8704 = vxor.u32 %v7429, 2147483648
        %v8705 = vxor.u32 %v7813, 2147483648
        %v8706 = vxor.u32 %v7815, 2147483648
        %v8707 = vxor.u32 %v8199, 2147483648
        %v8708 = vxor.u32 %v8201, 2147483648
        %v8709 = vxor.u32 %v8541, 2147483648
        %v8710 = vxor.u32 %v7431, 2147483648
        %v8711 = vxor.u32 %v7433, 2147483648
        %v8712 = vxor.u32 %v7817, 2147483648
        %v8713 = vxor.u32 %v7819, 2147483648
        %v8714 = vxor.u32 %v8203, 2147483648
        %v8715 = vxor.u32 %v8205, 2147483648
        %v8716 = vxor.u32 %v8544, 2147483648
        %v8717 = vxor.u32 %v7437, 2147483648
        %v8718 = vxor.u32 %v7439, 2147483648
        %v8719 = vxor.u32 %v7823, 2147483648
        %v8720 = vxor.u32 %v7825, 2147483648
        %v8721 = vxor.u32 %v8209, 2147483648
        %v8722 = vxor.u32 %v8211, 2147483648
        %v8723 = vxor.u32 %v8549, 2147483648
        %v8724 = vxor.u32 %v7441, 2147483648
        %v8725 = vxor.u32 %v7443, 2147483648
        %v8726 = vxor.u32 %v7827, 2147483648
        %v8727 = vxor.u32 %v7829, 2147483648
        %v8728 = vxor.u32 %v8213, 2147483648
        %v8729 = vxor.u32 %v8215, 2147483648
        %v8730 = vxor.u32 %v8552, 2147483648
        %v8731 = vxor.u32 %v7447, 2147483648
        %v8732 = vxor.u32 %v7449, 2147483648
        %v8733 = vxor.u32 %v7833, 2147483648
        %v8734 = vxor.u32 %v7835, 2147483648
        %v8735 = vxor.u32 %v8219, 2147483648
        %v8736 = vxor.u32 %v8221, 2147483648
        %v8737 = vxor.u32 %v8557, 2147483648
        %v8738 = vxor.u32 %v7451, 2147483648
        %v8739 = vxor.u32 %v7453, 2147483648
        %v8740 = vxor.u32 %v7837, 2147483648
        %v8741 = vxor.u32 %v7839, 2147483648
        %v8742 = vxor.u32 %v8223, 2147483648
        %v8743 = vxor.u32 %v8225, 2147483648
        %v8744 = vxor.u32 %v8560, 2147483648
        %v8745 = vxor.u32 %v7457, 2147483648
        %v8746 = vxor.u32 %v7459, 2147483648
        %v8747 = vxor.u32 %v7843, 2147483648
        %v8748 = vxor.u32 %v7845, 2147483648
        %v8749 = vxor.u32 %v8229, 2147483648
        %v8750 = vxor.u32 %v8231, 2147483648
        %v8751 = vxor.u32 %v8565, 2147483648
        %v8752 = vxor.u32 %v7461, 2147483648
        %v8753 = vxor.u32 %v7463, 2147483648
        %v8754 = vxor.u32 %v7847, 2147483648
        %v8755 = vxor.u32 %v7849, 2147483648
        %v8756 = vxor.u32 %v8233, 2147483648
        %v8757 = vxor.u32 %v8235, 2147483648
        %v8758 = vxor.u32 %v8568, 2147483648
        %v8759 = vxor.u32 %v7467, 2147483648
        %v8760 = vxor.u32 %v7469, 2147483648
        %v8761 = vxor.u32 %v7853, 2147483648
        %v8762 = vxor.u32 %v7855, 2147483648
        %v8763 = vxor.u32 %v8239, 2147483648
        %v8764 = vxor.u32 %v8241, 2147483648
        %v8765 = vxor.u32 %v8573, 2147483648
        %v8766 = vxor.u32 %v7471, 2147483648
        %v8767 = vxor.u32 %v7473, 2147483648
        %v8768 = vxor.u32 %v7857, 2147483648
        %v8769 = vxor.u32 %v7859, 2147483648
        %v8770 = vxor.u32 %v8243, 2147483648
        %v8771 = vxor.u32 %v8245, 2147483648
        %v8772 = vxor.u32 %v8576, 2147483648
        %v8773 = vxor.u32 %v7477, 2147483648
        %v8774 = vxor.u32 %v7479, 2147483648
        %v8775 = vxor.u32 %v7863, 2147483648
        %v8776 = vxor.u32 %v7865, 2147483648
        %v8777 = vxor.u32 %v8249, 2147483648
        %v8778 = vxor.u32 %v8251, 2147483648
        %v8779 = vxor.u32 %v8581, 2147483648
        %v8780 = vxor.u32 %v7481, 2147483648
        %v8781 = vxor.u32 %v7483, 2147483648
        %v8782 = vxor.u32 %v7867, 2147483648
        %v8783 = vxor.u32 %v7869, 2147483648
        %v8784 = vxor.u32 %v8253, 2147483648
        %v8785 = vxor.u32 %v8255, 2147483648
        %v8786 = vxor.u32 %v8584, 2147483648
        %v8787 = vxor.u32 %v7487, 2147483648
        %v8788 = vxor.u32 %v7489, 2147483648
        %v8789 = vxor.u32 %v7873, 2147483648
        %v8790 = vxor.u32 %v7875, 2147483648
        %v8791 = vxor.u32 %v8259, 2147483648
        %v8792 = vxor.u32 %v8261, 2147483648
        %v8793 = vxor.u32 %v8589, 2147483648
        %v8794 = vxor.u32 %v7491, 2147483648
        %v8795 = vxor.u32 %v7493, 2147483648
        %v8796 = vxor.u32 %v7877, 2147483648
        %v8797 = vxor.u32 %v7879, 2147483648
        %v8798 = vxor.u32 %v8263, 2147483648
        %v8799 = vxor.u32 %v8265, 2147483648
        %v8800 = vxor.u32 %v8592, 2147483648
        %v8801 = vxor.u32 %v7497, 2147483648
        %v8802 = vxor.u32 %v7499, 2147483648
        %v8803 = vxor.u32 %v7883, 2147483648
        %v8804 = vxor.u32 %v7885, 2147483648
        %v8805 = vxor.u32 %v8269, 2147483648
        %v8806 = vxor.u32 %v8271, 2147483648
        %v8807 = vxor.u32 %v8597, 2147483648
        %v8808 = vxor.u32 %v7501, 2147483648
        %v8809 = vxor.u32 %v7503, 2147483648
        %v8810 = vxor.u32 %v7887, 2147483648
        %v8811 = vxor.u32 %v7889, 2147483648
        %v8812 = vxor.u32 %v8273, 2147483648
        %v8813 = vxor.u32 %v8275, 2147483648
        %v8814 = vxor.u32 %v8600, 2147483648
        %v8815 = vxor.u32 %v7507, 2147483648
        %v8816 = vxor.u32 %v7509, 2147483648
        %v8817 = vxor.u32 %v7893, 2147483648
        %v8818 = vxor.u32 %v7895, 2147483648
        %v8819 = vxor.u32 %v8279, 2147483648
        %v8820 = vxor.u32 %v8281, 2147483648
        %v8821 = vxor.u32 %v8605, 2147483648
        %v8822 = vxor.u32 %v7511, 2147483648
        %v8823 = vxor.u32 %v7513, 2147483648
        %v8824 = vxor.u32 %v7897, 2147483648
        %v8825 = vxor.u32 %v7899, 2147483648
        %v8826 = vxor.u32 %v8283, 2147483648
        %v8827 = vxor.u32 %v8285, 2147483648
        %v8828 = vxor.u32 %v8608, 2147483648
        %v8829 = vxor.u32 %v7517, 2147483648
        %v8830 = vxor.u32 %v7519, 2147483648
        %v8831 = vxor.u32 %v7903, 2147483648
        %v8832 = vxor.u32 %v7905, 2147483648
        %v8833 = vxor.u32 %v8289, 2147483648
        %v8834 = vxor.u32 %v8291, 2147483648
        %v8835 = vxor.u32 %v8613, 2147483648
        %v8836 = vxor.u32 %v7521, 2147483648
        %v8837 = vxor.u32 %v7523, 2147483648
        %v8838 = vxor.u32 %v7907, 2147483648
        %v8839 = vxor.u32 %v7909, 2147483648
        %v8840 = vxor.u32 %v8293, 2147483648
        %v8841 = vxor.u32 %v8295, 2147483648
        %v8842 = vxor.u32 %v8616, 2147483648
        %v8843 = vmul.f32 %v8619, 1.442695
        %v8844 = vpow.pop %v8843
        %v8845 = vmul.f32 %v8620, 1.442695
        %v8846 = vpow.pop %v8845
        %v8847 = vmul.f32 %v8621, 1.442695
        %v8848 = vpow.pop %v8847
        %v8849 = vmul.f32 %v8622, 1.442695
        %v8850 = vpow.pop %v8849
        %v8851 = vmul.f32 %v8623, 1.442695
        %v8852 = vpow.pop %v8851
        %v8853 = vmul.f32 %v8624, 1.442695
        %v8854 = vpow.pop %v8853
        %v8855 = vmul.f32 %v8625, 1.442695
        %v8856 = vpow.pop %v8855
        %v8857 = vmul.f32 %v8626, 1.442695
        %v8858 = vpow.pop %v8857
        %v8859 = vmul.f32 %v8627, 1.442695
        %v8860 = vpow.pop %v8859
        %v8861 = vmul.f32 %v8628, 1.442695
        %v8862 = vpow.pop %v8861
        %v8863 = vmul.f32 %v8629, 1.442695
        %v8864 = vpow.pop %v8863
        %v8865 = vmul.f32 %v8630, 1.442695
        %v8866 = vpow.pop %v8865
        %v8867 = vmul.f32 %v8631, 1.442695
        %v8868 = vpow.pop %v8867
        %v8869 = vmul.f32 %v8632, 1.442695
        %v8870 = vpow.pop %v8869
        %v8871 = vmul.f32 %v8633, 1.442695
        %v8872 = vpow.pop %v8871
        %v8873 = vmul.f32 %v8634, 1.442695
        %v8874 = vpow.pop %v8873
        %v8875 = vmul.f32 %v8635, 1.442695
        %v8876 = vpow.pop %v8875
        %v8877 = vmul.f32 %v8636, 1.442695
        %v8878 = vpow.pop %v8877
        %v8879 = vmul.f32 %v8637, 1.442695
        %v8880 = vpow.pop %v8879
        %v8881 = vmul.f32 %v8638, 1.442695
        %v8882 = vpow.pop %v8881
        %v8883 = vmul.f32 %v8639, 1.442695
        %v8884 = vpow.pop %v8883
        %v8885 = vmul.f32 %v8640, 1.442695
        %v8886 = vpow.pop %v8885
        %v8887 = vmul.f32 %v8641, 1.442695
        %v8888 = vpow.pop %v8887
        %v8889 = vmul.f32 %v8642, 1.442695
        %v8890 = vpow.pop %v8889
        %v8891 = vmul.f32 %v8643, 1.442695
        %v8892 = vpow.pop %v8891
        %v8893 = vmul.f32 %v8644, 1.442695
        %v8894 = vpow.pop %v8893
        %v8895 = vmul.f32 %v8645, 1.442695
        %v8896 = vpow.pop %v8895
        %v8897 = vmul.f32 %v8646, 1.442695
        %v8898 = vpow.pop %v8897
        %v8899 = vmul.f32 %v8647, 1.442695
        %v8900 = vpow.pop %v8899
        %v8901 = vmul.f32 %v8648, 1.442695
        %v8902 = vpow.pop %v8901
        %v8903 = vmul.f32 %v8649, 1.442695
        %v8904 = vpow.pop %v8903
        %v8905 = vmul.f32 %v8650, 1.442695
        %v8906 = vpow.pop %v8905
        %v8907 = vmul.f32 %v8651, 1.442695
        %v8908 = vpow.pop %v8907
        %v8909 = vmul.f32 %v8652, 1.442695
        %v8910 = vpow.pop %v8909
        %v8911 = vmul.f32 %v8653, 1.442695
        %v8912 = vpow.pop %v8911
        %v8913 = vmul.f32 %v8654, 1.442695
        %v8914 = vpow.pop %v8913
        %v8915 = vmul.f32 %v8655, 1.442695
        %v8916 = vpow.pop %v8915
        %v8917 = vmul.f32 %v8656, 1.442695
        %v8918 = vpow.pop %v8917
        %v8919 = vmul.f32 %v8657, 1.442695
        %v8920 = vpow.pop %v8919
        %v8921 = vmul.f32 %v8658, 1.442695
        %v8922 = vpow.pop %v8921
        %v8923 = vmul.f32 %v8659, 1.442695
        %v8924 = vpow.pop %v8923
        %v8925 = vmul.f32 %v8660, 1.442695
        %v8926 = vpow.pop %v8925
        %v8927 = vmul.f32 %v8661, 1.442695
        %v8928 = vpow.pop %v8927
        %v8929 = vmul.f32 %v8662, 1.442695
        %v8930 = vpow.pop %v8929
        %v8931 = vmul.f32 %v8663, 1.442695
        %v8932 = vpow.pop %v8931
        %v8933 = vmul.f32 %v8664, 1.442695
        %v8934 = vpow.pop %v8933
        %v8935 = vmul.f32 %v8665, 1.442695
        %v8936 = vpow.pop %v8935
        %v8937 = vmul.f32 %v8666, 1.442695
        %v8938 = vpow.pop %v8937
        %v8939 = vmul.f32 %v8667, 1.442695
        %v8940 = vpow.pop %v8939
        %v8941 = vmul.f32 %v8668, 1.442695
        %v8942 = vpow.pop %v8941
        %v8943 = vmul.f32 %v8669, 1.442695
        %v8944 = vpow.pop %v8943
        %v8945 = vmul.f32 %v8670, 1.442695
        %v8946 = vpow.pop %v8945
        %v8947 = vmul.f32 %v8671, 1.442695
        %v8948 = vpow.pop %v8947
        %v8949 = vmul.f32 %v8672, 1.442695
        %v8950 = vpow.pop %v8949
        %v8951 = vmul.f32 %v8673, 1.442695
        %v8952 = vpow.pop %v8951
        %v8953 = vmul.f32 %v8674, 1.442695
        %v8954 = vpow.pop %v8953
        %v8955 = vmul.f32 %v8675, 1.442695
        %v8956 = vpow.pop %v8955
        %v8957 = vmul.f32 %v8676, 1.442695
        %v8958 = vpow.pop %v8957
        %v8959 = vmul.f32 %v8677, 1.442695
        %v8960 = vpow.pop %v8959
        %v8961 = vmul.f32 %v8678, 1.442695
        %v8962 = vpow.pop %v8961
        %v8963 = vmul.f32 %v8679, 1.442695
        %v8964 = vpow.pop %v8963
        %v8965 = vmul.f32 %v8680, 1.442695
        %v8966 = vpow.pop %v8965
        %v8967 = vmul.f32 %v8681, 1.442695
        %v8968 = vpow.pop %v8967
        %v8969 = vmul.f32 %v8682, 1.442695
        %v8970 = vpow.pop %v8969
        %v8971 = vmul.f32 %v8683, 1.442695
        %v8972 = vpow.pop %v8971
        %v8973 = vmul.f32 %v8684, 1.442695
        %v8974 = vpow.pop %v8973
        %v8975 = vmul.f32 %v8685, 1.442695
        %v8976 = vpow.pop %v8975
        %v8977 = vmul.f32 %v8686, 1.442695
        %v8978 = vpow.pop %v8977
        %v8979 = vmul.f32 %v8687, 1.442695
        %v8980 = vpow.pop %v8979
        %v8981 = vmul.f32 %v8688, 1.442695
        %v8982 = vpow.pop %v8981
        %v8983 = vmul.f32 %v8689, 1.442695
        %v8984 = vpow.pop %v8983
        %v8985 = vmul.f32 %v8690, 1.442695
        %v8986 = vpow.pop %v8985
        %v8987 = vmul.f32 %v8691, 1.442695
        %v8988 = vpow.pop %v8987
        %v8989 = vmul.f32 %v8692, 1.442695
        %v8990 = vpow.pop %v8989
        %v8991 = vmul.f32 %v8693, 1.442695
        %v8992 = vpow.pop %v8991
        %v8993 = vmul.f32 %v8694, 1.442695
        %v8994 = vpow.pop %v8993
        %v8995 = vmul.f32 %v8695, 1.442695
        %v8996 = vpow.pop %v8995
        %v8997 = vmul.f32 %v8696, 1.442695
        %v8998 = vpow.pop %v8997
        %v8999 = vmul.f32 %v8697, 1.442695
        %v9000 = vpow.pop %v8999
        %v9001 = vmul.f32 %v8698, 1.442695
        %v9002 = vpow.pop %v9001
        %v9003 = vmul.f32 %v8699, 1.442695
        %v9004 = vpow.pop %v9003
        %v9005 = vmul.f32 %v8700, 1.442695
        %v9006 = vpow.pop %v9005
        %v9007 = vmul.f32 %v8701, 1.442695
        %v9008 = vpow.pop %v9007
        %v9009 = vmul.f32 %v8702, 1.442695
        %v9010 = vpow.pop %v9009
        %v9011 = vmul.f32 %v8703, 1.442695
        %v9012 = vpow.pop %v9011
        %v9013 = vmul.f32 %v8704, 1.442695
        %v9014 = vpow.pop %v9013
        %v9015 = vmul.f32 %v8705, 1.442695
        %v9016 = vpow.pop %v9015
        %v9017 = vmul.f32 %v8706, 1.442695
        %v9018 = vpow.pop %v9017
        %v9019 = vmul.f32 %v8707, 1.442695
        %v9020 = vpow.pop %v9019
        %v9021 = vmul.f32 %v8708, 1.442695
        %v9022 = vpow.pop %v9021
        %v9023 = vmul.f32 %v8709, 1.442695
        %v9024 = vpow.pop %v9023
        %v9025 = vmul.f32 %v8710, 1.442695
        %v9026 = vpow.pop %v9025
        %v9027 = vmul.f32 %v8711, 1.442695
        %v9028 = vpow.pop %v9027
        %v9029 = vmul.f32 %v8712, 1.442695
        %v9030 = vpow.pop %v9029
        %v9031 = vmul.f32 %v8713, 1.442695
        %v9032 = vpow.pop %v9031
        %v9033 = vmul.f32 %v8714, 1.442695
        %v9034 = vpow.pop %v9033
        %v9035 = vmul.f32 %v8715, 1.442695
        %v9036 = vpow.pop %v9035
        %v9037 = vmul.f32 %v8716, 1.442695
        %v9038 = vpow.pop %v9037
        %v9039 = vmul.f32 %v8717, 1.442695
        %v9040 = vpow.pop %v9039
        %v9041 = vmul.f32 %v8718, 1.442695
        %v9042 = vpow.pop %v9041
        %v9043 = vmul.f32 %v8719, 1.442695
        %v9044 = vpow.pop %v9043
        %v9045 = vmul.f32 %v8720, 1.442695
        %v9046 = vpow.pop %v9045
        %v9047 = vmul.f32 %v8721, 1.442695
        %v9048 = vpow.pop %v9047
        %v9049 = vmul.f32 %v8722, 1.442695
        %v9050 = vpow.pop %v9049
        %v9051 = vmul.f32 %v8723, 1.442695
        %v9052 = vpow.pop %v9051
        %v9053 = vmul.f32 %v8724, 1.442695
        %v9054 = vpow.pop %v9053
        %v9055 = vmul.f32 %v8725, 1.442695
        %v9056 = vpow.pop %v9055
        %v9057 = vmul.f32 %v8726, 1.442695
        %v9058 = vpow.pop %v9057
        %v9059 = vmul.f32 %v8727, 1.442695
        %v9060 = vpow.pop %v9059
        %v9061 = vmul.f32 %v8728, 1.442695
        %v9062 = vpow.pop %v9061
        %v9063 = vmul.f32 %v8729, 1.442695
        %v9064 = vpow.pop %v9063
        %v9065 = vmul.f32 %v8730, 1.442695
        %v9066 = vpow.pop %v9065
        %v9067 = vmul.f32 %v8731, 1.442695
        %v9068 = vpow.pop %v9067
        %v9069 = vmul.f32 %v8732, 1.442695
        %v9070 = vpow.pop %v9069
        %v9071 = vmul.f32 %v8733, 1.442695
        %v9072 = vpow.pop %v9071
        %v9073 = vmul.f32 %v8734, 1.442695
        %v9074 = vpow.pop %v9073
        %v9075 = vmul.f32 %v8735, 1.442695
        %v9076 = vpow.pop %v9075
        %v9077 = vmul.f32 %v8736, 1.442695
        %v9078 = vpow.pop %v9077
        %v9079 = vmul.f32 %v8737, 1.442695
        %v9080 = vpow.pop %v9079
        %v9081 = vmul.f32 %v8738, 1.442695
        %v9082 = vpow.pop %v9081
        %v9083 = vmul.f32 %v8739, 1.442695
        %v9084 = vpow.pop %v9083
        %v9085 = vmul.f32 %v8740, 1.442695
        %v9086 = vpow.pop %v9085
        %v9087 = vmul.f32 %v8741, 1.442695
        %v9088 = vpow.pop %v9087
        %v9089 = vmul.f32 %v8742, 1.442695
        %v9090 = vpow.pop %v9089
        %v9091 = vmul.f32 %v8743, 1.442695
        %v9092 = vpow.pop %v9091
        %v9093 = vmul.f32 %v8744, 1.442695
        %v9094 = vpow.pop %v9093
        %v9095 = vmul.f32 %v8745, 1.442695
        %v9096 = vpow.pop %v9095
        %v9097 = vmul.f32 %v8746, 1.442695
        %v9098 = vpow.pop %v9097
        %v9099 = vmul.f32 %v8747, 1.442695
        %v9100 = vpow.pop %v9099
        %v9101 = vmul.f32 %v8748, 1.442695
        %v9102 = vpow.pop %v9101
        %v9103 = vmul.f32 %v8749, 1.442695
        %v9104 = vpow.pop %v9103
        %v9105 = vmul.f32 %v8750, 1.442695
        %v9106 = vpow.pop %v9105
        %v9107 = vmul.f32 %v8751, 1.442695
        %v9108 = vpow.pop %v9107
        %v9109 = vmul.f32 %v8752, 1.442695
        %v9110 = vpow.pop %v9109
        %v9111 = vmul.f32 %v8753, 1.442695
        %v9112 = vpow.pop %v9111
        %v9113 = vmul.f32 %v8754, 1.442695
        %v9114 = vpow.pop %v9113
        %v9115 = vmul.f32 %v8755, 1.442695
        %v9116 = vpow.pop %v9115
        %v9117 = vmul.f32 %v8756, 1.442695
        %v9118 = vpow.pop %v9117
        %v9119 = vmul.f32 %v8757, 1.442695
        %v9120 = vpow.pop %v9119
        %v9121 = vmul.f32 %v8758, 1.442695
        %v9122 = vpow.pop %v9121
        %v9123 = vmul.f32 %v8759, 1.442695
        %v9124 = vpow.pop %v9123
        %v9125 = vmul.f32 %v8760, 1.442695
        %v9126 = vpow.pop %v9125
        %v9127 = vmul.f32 %v8761, 1.442695
        %v9128 = vpow.pop %v9127
        %v9129 = vmul.f32 %v8762, 1.442695
        %v9130 = vpow.pop %v9129
        %v9131 = vmul.f32 %v8763, 1.442695
        %v9132 = vpow.pop %v9131
        %v9133 = vmul.f32 %v8764, 1.442695
        %v9134 = vpow.pop %v9133
        %v9135 = vmul.f32 %v8765, 1.442695
        %v9136 = vpow.pop %v9135
        %v9137 = vmul.f32 %v8766, 1.442695
        %v9138 = vpow.pop %v9137
        %v9139 = vmul.f32 %v8767, 1.442695
        %v9140 = vpow.pop %v9139
        %v9141 = vmul.f32 %v8768, 1.442695
        %v9142 = vpow.pop %v9141
        %v9143 = vmul.f32 %v8769, 1.442695
        %v9144 = vpow.pop %v9143
        %v9145 = vmul.f32 %v8770, 1.442695
        %v9146 = vpow.pop %v9145
        %v9147 = vmul.f32 %v8771, 1.442695
        %v9148 = vpow.pop %v9147
        %v9149 = vmul.f32 %v8772, 1.442695
        %v9150 = vpow.pop %v9149
        %v9151 = vmul.f32 %v8773, 1.442695
        %v9152 = vpow.pop %v9151
        %v9153 = vmul.f32 %v8774, 1.442695
        %v9154 = vpow.pop %v9153
        %v9155 = vmul.f32 %v8775, 1.442695
        %v9156 = vpow.pop %v9155
        %v9157 = vmul.f32 %v8776, 1.442695
        %v9158 = vpow.pop %v9157
        %v9159 = vmul.f32 %v8777, 1.442695
        %v9160 = vpow.pop %v9159
        %v9161 = vmul.f32 %v8778, 1.442695
        %v9162 = vpow.pop %v9161
        %v9163 = vmul.f32 %v8779, 1.442695
        %v9164 = vpow.pop %v9163
        %v9165 = vmul.f32 %v8780, 1.442695
        %v9166 = vpow.pop %v9165
        %v9167 = vmul.f32 %v8781, 1.442695
        %v9168 = vpow.pop %v9167
        %v9169 = vmul.f32 %v8782, 1.442695
        %v9170 = vpow.pop %v9169
        %v9171 = vmul.f32 %v8783, 1.442695
        %v9172 = vpow.pop %v9171
        %v9173 = vmul.f32 %v8784, 1.442695
        %v9174 = vpow.pop %v9173
        %v9175 = vmul.f32 %v8785, 1.442695
        %v9176 = vpow.pop %v9175
        %v9177 = vmul.f32 %v8786, 1.442695
        %v9178 = vpow.pop %v9177
        %v9179 = vmul.f32 %v8787, 1.442695
        %v9180 = vpow.pop %v9179
        %v9181 = vmul.f32 %v8788, 1.442695
        %v9182 = vpow.pop %v9181
        %v9183 = vmul.f32 %v8789, 1.442695
        %v9184 = vpow.pop %v9183
        %v9185 = vmul.f32 %v8790, 1.442695
        %v9186 = vpow.pop %v9185
        %v9187 = vmul.f32 %v8791, 1.442695
        %v9188 = vpow.pop %v9187
        %v9189 = vmul.f32 %v8792, 1.442695
        %v9190 = vpow.pop %v9189
        %v9191 = vmul.f32 %v8793, 1.442695
        %v9192 = vpow.pop %v9191
        %v9193 = vmul.f32 %v8794, 1.442695
        %v9194 = vpow.pop %v9193
        %v9195 = vmul.f32 %v8795, 1.442695
        %v9196 = vpow.pop %v9195
        %v9197 = vmul.f32 %v8796, 1.442695
        %v9198 = vpow.pop %v9197
        %v9199 = vmul.f32 %v8797, 1.442695
        %v9200 = vpow.pop %v9199
        %v9201 = vmul.f32 %v8798, 1.442695
        %v9202 = vpow.pop %v9201
        %v9203 = vmul.f32 %v8799, 1.442695
        %v9204 = vpow.pop %v9203
        %v9205 = vmul.f32 %v8800, 1.442695
        %v9206 = vpow.pop %v9205
        %v9207 = vmul.f32 %v8801, 1.442695
        %v9208 = vpow.pop %v9207
        %v9209 = vmul.f32 %v8802, 1.442695
        %v9210 = vpow.pop %v9209
        %v9211 = vmul.f32 %v8803, 1.442695
        %v9212 = vpow.pop %v9211
        %v9213 = vmul.f32 %v8804, 1.442695
        %v9214 = vpow.pop %v9213
        %v9215 = vmul.f32 %v8805, 1.442695
        %v9216 = vpow.pop %v9215
        %v9217 = vmul.f32 %v8806, 1.442695
        %v9218 = vpow.pop %v9217
        %v9219 = vmul.f32 %v8807, 1.442695
        %v9220 = vpow.pop %v9219
        %v9221 = vmul.f32 %v8808, 1.442695
        %v9222 = vpow.pop %v9221
        %v9223 = vmul.f32 %v8809, 1.442695
        %v9224 = vpow.pop %v9223
        %v9225 = vmul.f32 %v8810, 1.442695
        %v9226 = vpow.pop %v9225
        %v9227 = vmul.f32 %v8811, 1.442695
        %v9228 = vpow.pop %v9227
        %v9229 = vmul.f32 %v8812, 1.442695
        %v9230 = vpow.pop %v9229
        %v9231 = vmul.f32 %v8813, 1.442695
        %v9232 = vpow.pop %v9231
        %v9233 = vmul.f32 %v8814, 1.442695
        %v9234 = vpow.pop %v9233
        %v9235 = vmul.f32 %v8815, 1.442695
        %v9236 = vpow.pop %v9235
        %v9237 = vmul.f32 %v8816, 1.442695
        %v9238 = vpow.pop %v9237
        %v9239 = vmul.f32 %v8817, 1.442695
        %v9240 = vpow.pop %v9239
        %v9241 = vmul.f32 %v8818, 1.442695
        %v9242 = vpow.pop %v9241
        %v9243 = vmul.f32 %v8819, 1.442695
        %v9244 = vpow.pop %v9243
        %v9245 = vmul.f32 %v8820, 1.442695
        %v9246 = vpow.pop %v9245
        %v9247 = vmul.f32 %v8821, 1.442695
        %v9248 = vpow.pop %v9247
        %v9249 = vmul.f32 %v8822, 1.442695
        %v9250 = vpow.pop %v9249
        %v9251 = vmul.f32 %v8823, 1.442695
        %v9252 = vpow.pop %v9251
        %v9253 = vmul.f32 %v8824, 1.442695
        %v9254 = vpow.pop %v9253
        %v9255 = vmul.f32 %v8825, 1.442695
        %v9256 = vpow.pop %v9255
        %v9257 = vmul.f32 %v8826, 1.442695
        %v9258 = vpow.pop %v9257
        %v9259 = vmul.f32 %v8827, 1.442695
        %v9260 = vpow.pop %v9259
        %v9261 = vmul.f32 %v8828, 1.442695
        %v9262 = vpow.pop %v9261
        %v9263 = vmul.f32 %v8829, 1.442695
        %v9264 = vpow.pop %v9263
        %v9265 = vmul.f32 %v8830, 1.442695
        %v9266 = vpow.pop %v9265
        %v9267 = vmul.f32 %v8831, 1.442695
        %v9268 = vpow.pop %v9267
        %v9269 = vmul.f32 %v8832, 1.442695
        %v9270 = vpow.pop %v9269
        %v9271 = vmul.f32 %v8833, 1.442695
        %v9272 = vpow.pop %v9271
        %v9273 = vmul.f32 %v8834, 1.442695
        %v9274 = vpow.pop %v9273
        %v9275 = vmul.f32 %v8835, 1.442695
        %v9276 = vpow.pop %v9275
        %v9277 = vmul.f32 %v8836, 1.442695
        %v9278 = vpow.pop %v9277
        %v9279 = vmul.f32 %v8837, 1.442695
        %v9280 = vpow.pop %v9279
        %v9281 = vmul.f32 %v8838, 1.442695
        %v9282 = vpow.pop %v9281
        %v9283 = vmul.f32 %v8839, 1.442695
        %v9284 = vpow.pop %v9283
        %v9285 = vmul.f32 %v8840, 1.442695
        %v9286 = vpow.pop %v9285
        %v9287 = vmul.f32 %v8841, 1.442695
        %v9288 = vpow.pop %v9287
        %v9289 = vmul.f32 %v8842, 1.442695
        %v9290 = vpow.pop %v9289
        %v9291 = vadd.f32 %v8844, 1.0
        %v9292 = vadd.f32 %v8846, 1.0
        %v9293 = vadd.f32 %v8848, 1.0
        %v9294 = vadd.f32 %v8850, 1.0
        %v9295 = vadd.f32 %v8852, 1.0
        %v9296 = vadd.f32 %v8854, 1.0
        %v9297 = vadd.f32 %v8856, 1.0
        %v9298 = vadd.f32 %v8858, 1.0
        %v9299 = vadd.f32 %v8860, 1.0
        %v9300 = vadd.f32 %v8862, 1.0
        %v9301 = vadd.f32 %v8864, 1.0
        %v9302 = vadd.f32 %v8866, 1.0
        %v9303 = vadd.f32 %v8868, 1.0
        %v9304 = vadd.f32 %v8870, 1.0
        %v9305 = vadd.f32 %v8872, 1.0
        %v9306 = vadd.f32 %v8874, 1.0
        %v9307 = vadd.f32 %v8876, 1.0
        %v9308 = vadd.f32 %v8878, 1.0
        %v9309 = vadd.f32 %v8880, 1.0
        %v9310 = vadd.f32 %v8882, 1.0
        %v9311 = vadd.f32 %v8884, 1.0
        %v9312 = vadd.f32 %v8886, 1.0
        %v9313 = vadd.f32 %v8888, 1.0
        %v9314 = vadd.f32 %v8890, 1.0
        %v9315 = vadd.f32 %v8892, 1.0
        %v9316 = vadd.f32 %v8894, 1.0
        %v9317 = vadd.f32 %v8896, 1.0
        %v9318 = vadd.f32 %v8898, 1.0
        %v9319 = vadd.f32 %v8900, 1.0
        %v9320 = vadd.f32 %v8902, 1.0
        %v9321 = vadd.f32 %v8904, 1.0
        %v9322 = vadd.f32 %v8906, 1.0
        %v9323 = vadd.f32 %v8908, 1.0
        %v9324 = vadd.f32 %v8910, 1.0
        %v9325 = vadd.f32 %v8912, 1.0
        %v9326 = vadd.f32 %v8914, 1.0
        %v9327 = vadd.f32 %v8916, 1.0
        %v9328 = vadd.f32 %v8918, 1.0
        %v9329 = vadd.f32 %v8920, 1.0
        %v9330 = vadd.f32 %v8922, 1.0
        %v9331 = vadd.f32 %v8924, 1.0
        %v9332 = vadd.f32 %v8926, 1.0
        %v9333 = vadd.f32 %v8928, 1.0
        %v9334 = vadd.f32 %v8930, 1.0
        %v9335 = vadd.f32 %v8932, 1.0
        %v9336 = vadd.f32 %v8934, 1.0
        %v9337 = vadd.f32 %v8936, 1.0
        %v9338 = vadd.f32 %v8938, 1.0
        %v9339 = vadd.f32 %v8940, 1.0
        %v9340 = vadd.f32 %v8942, 1.0
        %v9341 = vadd.f32 %v8944, 1.0
        %v9342 = vadd.f32 %v8946, 1.0
        %v9343 = vadd.f32 %v8948, 1.0
        %v9344 = vadd.f32 %v8950, 1.0
        %v9345 = vadd.f32 %v8952, 1.0
        %v9346 = vadd.f32 %v8954, 1.0
        %v9347 = vadd.f32 %v8956, 1.0
        %v9348 = vadd.f32 %v8958, 1.0
        %v9349 = vadd.f32 %v8960, 1.0
        %v9350 = vadd.f32 %v8962, 1.0
        %v9351 = vadd.f32 %v8964, 1.0
        %v9352 = vadd.f32 %v8966, 1.0
        %v9353 = vadd.f32 %v8968, 1.0
        %v9354 = vadd.f32 %v8970, 1.0
        %v9355 = vadd.f32 %v8972, 1.0
        %v9356 = vadd.f32 %v8974, 1.0
        %v9357 = vadd.f32 %v8976, 1.0
        %v9358 = vadd.f32 %v8978, 1.0
        %v9359 = vadd.f32 %v8980, 1.0
        %v9360 = vadd.f32 %v8982, 1.0
        %v9361 = vadd.f32 %v8984, 1.0
        %v9362 = vadd.f32 %v8986, 1.0
        %v9363 = vadd.f32 %v8988, 1.0
        %v9364 = vadd.f32 %v8990, 1.0
        %v9365 = vadd.f32 %v8992, 1.0
        %v9366 = vadd.f32 %v8994, 1.0
        %v9367 = vadd.f32 %v8996, 1.0
        %v9368 = vadd.f32 %v8998, 1.0
        %v9369 = vadd.f32 %v9000, 1.0
        %v9370 = vadd.f32 %v9002, 1.0
        %v9371 = vadd.f32 %v9004, 1.0
        %v9372 = vadd.f32 %v9006, 1.0
        %v9373 = vadd.f32 %v9008, 1.0
        %v9374 = vadd.f32 %v9010, 1.0
        %v9375 = vadd.f32 %v9012, 1.0
        %v9376 = vadd.f32 %v9014, 1.0
        %v9377 = vadd.f32 %v9016, 1.0
        %v9378 = vadd.f32 %v9018, 1.0
        %v9379 = vadd.f32 %v9020, 1.0
        %v9380 = vadd.f32 %v9022, 1.0
        %v9381 = vadd.f32 %v9024, 1.0
        %v9382 = vadd.f32 %v9026, 1.0
        %v9383 = vadd.f32 %v9028, 1.0
        %v9384 = vadd.f32 %v9030, 1.0
        %v9385 = vadd.f32 %v9032, 1.0
        %v9386 = vadd.f32 %v9034, 1.0
        %v9387 = vadd.f32 %v9036, 1.0
        %v9388 = vadd.f32 %v9038, 1.0
        %v9389 = vadd.f32 %v9040, 1.0
        %v9390 = vadd.f32 %v9042, 1.0
        %v9391 = vadd.f32 %v9044, 1.0
        %v9392 = vadd.f32 %v9046, 1.0
        %v9393 = vadd.f32 %v9048, 1.0
        %v9394 = vadd.f32 %v9050, 1.0
        %v9395 = vadd.f32 %v9052, 1.0
        %v9396 = vadd.f32 %v9054, 1.0
        %v9397 = vadd.f32 %v9056, 1.0
        %v9398 = vadd.f32 %v9058, 1.0
        %v9399 = vadd.f32 %v9060, 1.0
        %v9400 = vadd.f32 %v9062, 1.0
        %v9401 = vadd.f32 %v9064, 1.0
        %v9402 = vadd.f32 %v9066, 1.0
        %v9403 = vadd.f32 %v9068, 1.0
        %v9404 = vadd.f32 %v9070, 1.0
        %v9405 = vadd.f32 %v9072, 1.0
        %v9406 = vadd.f32 %v9074, 1.0
        %v9407 = vadd.f32 %v9076, 1.0
        %v9408 = vadd.f32 %v9078, 1.0
        %v9409 = vadd.f32 %v9080, 1.0
        %v9410 = vadd.f32 %v9082, 1.0
        %v9411 = vadd.f32 %v9084, 1.0
        %v9412 = vadd.f32 %v9086, 1.0
        %v9413 = vadd.f32 %v9088, 1.0
        %v9414 = vadd.f32 %v9090, 1.0
        %v9415 = vadd.f32 %v9092, 1.0
        %v9416 = vadd.f32 %v9094, 1.0
        %v9417 = vadd.f32 %v9096, 1.0
        %v9418 = vadd.f32 %v9098, 1.0
        %v9419 = vadd.f32 %v9100, 1.0
        %v9420 = vadd.f32 %v9102, 1.0
        %v9421 = vadd.f32 %v9104, 1.0
        %v9422 = vadd.f32 %v9106, 1.0
        %v9423 = vadd.f32 %v9108, 1.0
        %v9424 = vadd.f32 %v9110, 1.0
        %v9425 = vadd.f32 %v9112, 1.0
        %v9426 = vadd.f32 %v9114, 1.0
        %v9427 = vadd.f32 %v9116, 1.0
        %v9428 = vadd.f32 %v9118, 1.0
        %v9429 = vadd.f32 %v9120, 1.0
        %v9430 = vadd.f32 %v9122, 1.0
        %v9431 = vadd.f32 %v9124, 1.0
        %v9432 = vadd.f32 %v9126, 1.0
        %v9433 = vadd.f32 %v9128, 1.0
        %v9434 = vadd.f32 %v9130, 1.0
        %v9435 = vadd.f32 %v9132, 1.0
        %v9436 = vadd.f32 %v9134, 1.0
        %v9437 = vadd.f32 %v9136, 1.0
        %v9438 = vadd.f32 %v9138, 1.0
        %v9439 = vadd.f32 %v9140, 1.0
        %v9440 = vadd.f32 %v9142, 1.0
        %v9441 = vadd.f32 %v9144, 1.0
        %v9442 = vadd.f32 %v9146, 1.0
        %v9443 = vadd.f32 %v9148, 1.0
        %v9444 = vadd.f32 %v9150, 1.0
        %v9445 = vadd.f32 %v9152, 1.0
        %v9446 = vadd.f32 %v9154, 1.0
        %v9447 = vadd.f32 %v9156, 1.0
        %v9448 = vadd.f32 %v9158, 1.0
        %v9449 = vadd.f32 %v9160, 1.0
        %v9450 = vadd.f32 %v9162, 1.0
        %v9451 = vadd.f32 %v9164, 1.0
        %v9452 = vadd.f32 %v9166, 1.0
        %v9453 = vadd.f32 %v9168, 1.0
        %v9454 = vadd.f32 %v9170, 1.0
        %v9455 = vadd.f32 %v9172, 1.0
        %v9456 = vadd.f32 %v9174, 1.0
        %v9457 = vadd.f32 %v9176, 1.0
        %v9458 = vadd.f32 %v9178, 1.0
        %v9459 = vadd.f32 %v9180, 1.0
        %v9460 = vadd.f32 %v9182, 1.0
        %v9461 = vadd.f32 %v9184, 1.0
        %v9462 = vadd.f32 %v9186, 1.0
        %v9463 = vadd.f32 %v9188, 1.0
        %v9464 = vadd.f32 %v9190, 1.0
        %v9465 = vadd.f32 %v9192, 1.0
        %v9466 = vadd.f32 %v9194, 1.0
        %v9467 = vadd.f32 %v9196, 1.0
        %v9468 = vadd.f32 %v9198, 1.0
        %v9469 = vadd.f32 %v9200, 1.0
        %v9470 = vadd.f32 %v9202, 1.0
        %v9471 = vadd.f32 %v9204, 1.0
        %v9472 = vadd.f32 %v9206, 1.0
        %v9473 = vadd.f32 %v9208, 1.0
        %v9474 = vadd.f32 %v9210, 1.0
        %v9475 = vadd.f32 %v9212, 1.0
        %v9476 = vadd.f32 %v9214, 1.0
        %v9477 = vadd.f32 %v9216, 1.0
        %v9478 = vadd.f32 %v9218, 1.0
        %v9479 = vadd.f32 %v9220, 1.0
        %v9480 = vadd.f32 %v9222, 1.0
        %v9481 = vadd.f32 %v9224, 1.0
        %v9482 = vadd.f32 %v9226, 1.0
        %v9483 = vadd.f32 %v9228, 1.0
        %v9484 = vadd.f32 %v9230, 1.0
        %v9485 = vadd.f32 %v9232, 1.0
        %v9486 = vadd.f32 %v9234, 1.0
        %v9487 = vadd.f32 %v9236, 1.0
        %v9488 = vadd.f32 %v9238, 1.0
        %v9489 = vadd.f32 %v9240, 1.0
        %v9490 = vadd.f32 %v9242, 1.0
        %v9491 = vadd.f32 %v9244, 1.0
        %v9492 = vadd.f32 %v9246, 1.0
        %v9493 = vadd.f32 %v9248, 1.0
        %v9494 = vadd.f32 %v9250, 1.0
        %v9495 = vadd.f32 %v9252, 1.0
        %v9496 = vadd.f32 %v9254, 1.0
        %v9497 = vadd.f32 %v9256, 1.0
        %v9498 = vadd.f32 %v9258, 1.0
        %v9499 = vadd.f32 %v9260, 1.0
        %v9500 = vadd.f32 %v9262, 1.0
        %v9501 = vadd.f32 %v9264, 1.0
        %v9502 = vadd.f32 %v9266, 1.0
        %v9503 = vadd.f32 %v9268, 1.0
        %v9504 = vadd.f32 %v9270, 1.0
        %v9505 = vadd.f32 %v9272, 1.0
        %v9506 = vadd.f32 %v9274, 1.0
        %v9507 = vadd.f32 %v9276, 1.0
        %v9508 = vadd.f32 %v9278, 1.0
        %v9509 = vadd.f32 %v9280, 1.0
        %v9510 = vadd.f32 %v9282, 1.0
        %v9511 = vadd.f32 %v9284, 1.0
        %v9512 = vadd.f32 %v9286, 1.0
        %v9513 = vadd.f32 %v9288, 1.0
        %v9514 = vadd.f32 %v9290, 1.0
        %v9515 = vrcp.pop %v9291
        %v9516 = vmul.f32 1.0, %v9515
        %v9517 = vrcp.pop %v9292
        %v9518 = vmul.f32 1.0, %v9517
        %v9519 = vrcp.pop %v9293
        %v9520 = vmul.f32 1.0, %v9519
        %v9521 = vrcp.pop %v9294
        %v9522 = vmul.f32 1.0, %v9521
        %v9523 = vrcp.pop %v9295
        %v9524 = vmul.f32 1.0, %v9523
        %v9525 = vrcp.pop %v9296
        %v9526 = vmul.f32 1.0, %v9525
        %v9527 = vrcp.pop %v9297
        %v9528 = vmul.f32 1.0, %v9527
        %v9529 = vrcp.pop %v9298
        %v9530 = vmul.f32 1.0, %v9529
        %v9531 = vrcp.pop %v9299
        %v9532 = vmul.f32 1.0, %v9531
        %v9533 = vrcp.pop %v9300
        %v9534 = vmul.f32 1.0, %v9533
        %v9535 = vrcp.pop %v9301
        %v9536 = vmul.f32 1.0, %v9535
        %v9537 = vrcp.pop %v9302
        %v9538 = vmul.f32 1.0, %v9537
        %v9539 = vrcp.pop %v9303
        %v9540 = vmul.f32 1.0, %v9539
        %v9541 = vrcp.pop %v9304
        %v9542 = vmul.f32 1.0, %v9541
        %v9543 = vrcp.pop %v9305
        %v9544 = vmul.f32 1.0, %v9543
        %v9545 = vrcp.pop %v9306
        %v9546 = vmul.f32 1.0, %v9545
        %v9547 = vrcp.pop %v9307
        %v9548 = vmul.f32 1.0, %v9547
        %v9549 = vrcp.pop %v9308
        %v9550 = vmul.f32 1.0, %v9549
        %v9551 = vrcp.pop %v9309
        %v9552 = vmul.f32 1.0, %v9551
        %v9553 = vrcp.pop %v9310
        %v9554 = vmul.f32 1.0, %v9553
        %v9555 = vrcp.pop %v9311
        %v9556 = vmul.f32 1.0, %v9555
        %v9557 = vrcp.pop %v9312
        %v9558 = vmul.f32 1.0, %v9557
        %v9559 = vrcp.pop %v9313
        %v9560 = vmul.f32 1.0, %v9559
        %v9561 = vrcp.pop %v9314
        %v9562 = vmul.f32 1.0, %v9561
        %v9563 = vrcp.pop %v9315
        %v9564 = vmul.f32 1.0, %v9563
        %v9565 = vrcp.pop %v9316
        %v9566 = vmul.f32 1.0, %v9565
        %v9567 = vrcp.pop %v9317
        %v9568 = vmul.f32 1.0, %v9567
        %v9569 = vrcp.pop %v9318
        %v9570 = vmul.f32 1.0, %v9569
        %v9571 = vrcp.pop %v9319
        %v9572 = vmul.f32 1.0, %v9571
        %v9573 = vrcp.pop %v9320
        %v9574 = vmul.f32 1.0, %v9573
        %v9575 = vrcp.pop %v9321
        %v9576 = vmul.f32 1.0, %v9575
        %v9577 = vrcp.pop %v9322
        %v9578 = vmul.f32 1.0, %v9577
        %v9579 = vrcp.pop %v9323
        %v9580 = vmul.f32 1.0, %v9579
        %v9581 = vrcp.pop %v9324
        %v9582 = vmul.f32 1.0, %v9581
        %v9583 = vrcp.pop %v9325
        %v9584 = vmul.f32 1.0, %v9583
        %v9585 = vrcp.pop %v9326
        %v9586 = vmul.f32 1.0, %v9585
        %v9587 = vrcp.pop %v9327
        %v9588 = vmul.f32 1.0, %v9587
        %v9589 = vrcp.pop %v9328
        %v9590 = vmul.f32 1.0, %v9589
        %v9591 = vrcp.pop %v9329
        %v9592 = vmul.f32 1.0, %v9591
        %v9593 = vrcp.pop %v9330
        %v9594 = vmul.f32 1.0, %v9593
        %v9595 = vrcp.pop %v9331
        %v9596 = vmul.f32 1.0, %v9595
        %v9597 = vrcp.pop %v9332
        %v9598 = vmul.f32 1.0, %v9597
        %v9599 = vrcp.pop %v9333
        %v9600 = vmul.f32 1.0, %v9599
        %v9601 = vrcp.pop %v9334
        %v9602 = vmul.f32 1.0, %v9601
        %v9603 = vrcp.pop %v9335
        %v9604 = vmul.f32 1.0, %v9603
        %v9605 = vrcp.pop %v9336
        %v9606 = vmul.f32 1.0, %v9605
        %v9607 = vrcp.pop %v9337
        %v9608 = vmul.f32 1.0, %v9607
        %v9609 = vrcp.pop %v9338
        %v9610 = vmul.f32 1.0, %v9609
        %v9611 = vrcp.pop %v9339
        %v9612 = vmul.f32 1.0, %v9611
        %v9613 = vrcp.pop %v9340
        %v9614 = vmul.f32 1.0, %v9613
        %v9615 = vrcp.pop %v9341
        %v9616 = vmul.f32 1.0, %v9615
        %v9617 = vrcp.pop %v9342
        %v9618 = vmul.f32 1.0, %v9617
        %v9619 = vrcp.pop %v9343
        %v9620 = vmul.f32 1.0, %v9619
        %v9621 = vrcp.pop %v9344
        %v9622 = vmul.f32 1.0, %v9621
        %v9623 = vrcp.pop %v9345
        %v9624 = vmul.f32 1.0, %v9623
        %v9625 = vrcp.pop %v9346
        %v9626 = vmul.f32 1.0, %v9625
        %v9627 = vrcp.pop %v9347
        %v9628 = vmul.f32 1.0, %v9627
        %v9629 = vrcp.pop %v9348
        %v9630 = vmul.f32 1.0, %v9629
        %v9631 = vrcp.pop %v9349
        %v9632 = vmul.f32 1.0, %v9631
        %v9633 = vrcp.pop %v9350
        %v9634 = vmul.f32 1.0, %v9633
        %v9635 = vrcp.pop %v9351
        %v9636 = vmul.f32 1.0, %v9635
        %v9637 = vrcp.pop %v9352
        %v9638 = vmul.f32 1.0, %v9637
        %v9639 = vrcp.pop %v9353
        %v9640 = vmul.f32 1.0, %v9639
        %v9641 = vrcp.pop %v9354
        %v9642 = vmul.f32 1.0, %v9641
        %v9643 = vrcp.pop %v9355
        %v9644 = vmul.f32 1.0, %v9643
        %v9645 = vrcp.pop %v9356
        %v9646 = vmul.f32 1.0, %v9645
        %v9647 = vrcp.pop %v9357
        %v9648 = vmul.f32 1.0, %v9647
        %v9649 = vrcp.pop %v9358
        %v9650 = vmul.f32 1.0, %v9649
        %v9651 = vrcp.pop %v9359
        %v9652 = vmul.f32 1.0, %v9651
        %v9653 = vrcp.pop %v9360
        %v9654 = vmul.f32 1.0, %v9653
        %v9655 = vrcp.pop %v9361
        %v9656 = vmul.f32 1.0, %v9655
        %v9657 = vrcp.pop %v9362
        %v9658 = vmul.f32 1.0, %v9657
        %v9659 = vrcp.pop %v9363
        %v9660 = vmul.f32 1.0, %v9659
        %v9661 = vrcp.pop %v9364
        %v9662 = vmul.f32 1.0, %v9661
        %v9663 = vrcp.pop %v9365
        %v9664 = vmul.f32 1.0, %v9663
        %v9665 = vrcp.pop %v9366
        %v9666 = vmul.f32 1.0, %v9665
        %v9667 = vrcp.pop %v9367
        %v9668 = vmul.f32 1.0, %v9667
        %v9669 = vrcp.pop %v9368
        %v9670 = vmul.f32 1.0, %v9669
        %v9671 = vrcp.pop %v9369
        %v9672 = vmul.f32 1.0, %v9671
        %v9673 = vrcp.pop %v9370
        %v9674 = vmul.f32 1.0, %v9673
        %v9675 = vrcp.pop %v9371
        %v9676 = vmul.f32 1.0, %v9675
        %v9677 = vrcp.pop %v9372
        %v9678 = vmul.f32 1.0, %v9677
        %v9679 = vrcp.pop %v9373
        %v9680 = vmul.f32 1.0, %v9679
        %v9681 = vrcp.pop %v9374
        %v9682 = vmul.f32 1.0, %v9681
        %v9683 = vrcp.pop %v9375
        %v9684 = vmul.f32 1.0, %v9683
        %v9685 = vrcp.pop %v9376
        %v9686 = vmul.f32 1.0, %v9685
        %v9687 = vrcp.pop %v9377
        %v9688 = vmul.f32 1.0, %v9687
        %v9689 = vrcp.pop %v9378
        %v9690 = vmul.f32 1.0, %v9689
        %v9691 = vrcp.pop %v9379
        %v9692 = vmul.f32 1.0, %v9691
        %v9693 = vrcp.pop %v9380
        %v9694 = vmul.f32 1.0, %v9693
        %v9695 = vrcp.pop %v9381
        %v9696 = vmul.f32 1.0, %v9695
        %v9697 = vrcp.pop %v9382
        %v9698 = vmul.f32 1.0, %v9697
        %v9699 = vrcp.pop %v9383
        %v9700 = vmul.f32 1.0, %v9699
        %v9701 = vrcp.pop %v9384
        %v9702 = vmul.f32 1.0, %v9701
        %v9703 = vrcp.pop %v9385
        %v9704 = vmul.f32 1.0, %v9703
        %v9705 = vrcp.pop %v9386
        %v9706 = vmul.f32 1.0, %v9705
        %v9707 = vrcp.pop %v9387
        %v9708 = vmul.f32 1.0, %v9707
        %v9709 = vrcp.pop %v9388
        %v9710 = vmul.f32 1.0, %v9709
        %v9711 = vrcp.pop %v9389
        %v9712 = vmul.f32 1.0, %v9711
        %v9713 = vrcp.pop %v9390
        %v9714 = vmul.f32 1.0, %v9713
        %v9715 = vrcp.pop %v9391
        %v9716 = vmul.f32 1.0, %v9715
        %v9717 = vrcp.pop %v9392
        %v9718 = vmul.f32 1.0, %v9717
        %v9719 = vrcp.pop %v9393
        %v9720 = vmul.f32 1.0, %v9719
        %v9721 = vrcp.pop %v9394
        %v9722 = vmul.f32 1.0, %v9721
        %v9723 = vrcp.pop %v9395
        %v9724 = vmul.f32 1.0, %v9723
        %v9725 = vrcp.pop %v9396
        %v9726 = vmul.f32 1.0, %v9725
        %v9727 = vrcp.pop %v9397
        %v9728 = vmul.f32 1.0, %v9727
        %v9729 = vrcp.pop %v9398
        %v9730 = vmul.f32 1.0, %v9729
        %v9731 = vrcp.pop %v9399
        %v9732 = vmul.f32 1.0, %v9731
        %v9733 = vrcp.pop %v9400
        %v9734 = vmul.f32 1.0, %v9733
        %v9735 = vrcp.pop %v9401
        %v9736 = vmul.f32 1.0, %v9735
        %v9737 = vrcp.pop %v9402
        %v9738 = vmul.f32 1.0, %v9737
        %v9739 = vrcp.pop %v9403
        %v9740 = vmul.f32 1.0, %v9739
        %v9741 = vrcp.pop %v9404
        %v9742 = vmul.f32 1.0, %v9741
        %v9743 = vrcp.pop %v9405
        %v9744 = vmul.f32 1.0, %v9743
        %v9745 = vrcp.pop %v9406
        %v9746 = vmul.f32 1.0, %v9745
        %v9747 = vrcp.pop %v9407
        %v9748 = vmul.f32 1.0, %v9747
        %v9749 = vrcp.pop %v9408
        %v9750 = vmul.f32 1.0, %v9749
        %v9751 = vrcp.pop %v9409
        %v9752 = vmul.f32 1.0, %v9751
        %v9753 = vrcp.pop %v9410
        %v9754 = vmul.f32 1.0, %v9753
        %v9755 = vrcp.pop %v9411
        %v9756 = vmul.f32 1.0, %v9755
        %v9757 = vrcp.pop %v9412
        %v9758 = vmul.f32 1.0, %v9757
        %v9759 = vrcp.pop %v9413
        %v9760 = vmul.f32 1.0, %v9759
        %v9761 = vrcp.pop %v9414
        %v9762 = vmul.f32 1.0, %v9761
        %v9763 = vrcp.pop %v9415
        %v9764 = vmul.f32 1.0, %v9763
        %v9765 = vrcp.pop %v9416
        %v9766 = vmul.f32 1.0, %v9765
        %v9767 = vrcp.pop %v9417
        %v9768 = vmul.f32 1.0, %v9767
        %v9769 = vrcp.pop %v9418
        %v9770 = vmul.f32 1.0, %v9769
        %v9771 = vrcp.pop %v9419
        %v9772 = vmul.f32 1.0, %v9771
        %v9773 = vrcp.pop %v9420
        %v9774 = vmul.f32 1.0, %v9773
        %v9775 = vrcp.pop %v9421
        %v9776 = vmul.f32 1.0, %v9775
        %v9777 = vrcp.pop %v9422
        %v9778 = vmul.f32 1.0, %v9777
        %v9779 = vrcp.pop %v9423
        %v9780 = vmul.f32 1.0, %v9779
        %v9781 = vrcp.pop %v9424
        %v9782 = vmul.f32 1.0, %v9781
        %v9783 = vrcp.pop %v9425
        %v9784 = vmul.f32 1.0, %v9783
        %v9785 = vrcp.pop %v9426
        %v9786 = vmul.f32 1.0, %v9785
        %v9787 = vrcp.pop %v9427
        %v9788 = vmul.f32 1.0, %v9787
        %v9789 = vrcp.pop %v9428
        %v9790 = vmul.f32 1.0, %v9789
        %v9791 = vrcp.pop %v9429
        %v9792 = vmul.f32 1.0, %v9791
        %v9793 = vrcp.pop %v9430
        %v9794 = vmul.f32 1.0, %v9793
        %v9795 = vrcp.pop %v9431
        %v9796 = vmul.f32 1.0, %v9795
        %v9797 = vrcp.pop %v9432
        %v9798 = vmul.f32 1.0, %v9797
        %v9799 = vrcp.pop %v9433
        %v9800 = vmul.f32 1.0, %v9799
        %v9801 = vrcp.pop %v9434
        %v9802 = vmul.f32 1.0, %v9801
        %v9803 = vrcp.pop %v9435
        %v9804 = vmul.f32 1.0, %v9803
        %v9805 = vrcp.pop %v9436
        %v9806 = vmul.f32 1.0, %v9805
        %v9807 = vrcp.pop %v9437
        %v9808 = vmul.f32 1.0, %v9807
        %v9809 = vrcp.pop %v9438
        %v9810 = vmul.f32 1.0, %v9809
        %v9811 = vrcp.pop %v9439
        %v9812 = vmul.f32 1.0, %v9811
        %v9813 = vrcp.pop %v9440
        %v9814 = vmul.f32 1.0, %v9813
        %v9815 = vrcp.pop %v9441
        %v9816 = vmul.f32 1.0, %v9815
        %v9817 = vrcp.pop %v9442
        %v9818 = vmul.f32 1.0, %v9817
        %v9819 = vrcp.pop %v9443
        %v9820 = vmul.f32 1.0, %v9819
        %v9821 = vrcp.pop %v9444
        %v9822 = vmul.f32 1.0, %v9821
        %v9823 = vrcp.pop %v9445
        %v9824 = vmul.f32 1.0, %v9823
        %v9825 = vrcp.pop %v9446
        %v9826 = vmul.f32 1.0, %v9825
        %v9827 = vrcp.pop %v9447
        %v9828 = vmul.f32 1.0, %v9827
        %v9829 = vrcp.pop %v9448
        %v9830 = vmul.f32 1.0, %v9829
        %v9831 = vrcp.pop %v9449
        %v9832 = vmul.f32 1.0, %v9831
        %v9833 = vrcp.pop %v9450
        %v9834 = vmul.f32 1.0, %v9833
        %v9835 = vrcp.pop %v9451
        %v9836 = vmul.f32 1.0, %v9835
        %v9837 = vrcp.pop %v9452
        %v9838 = vmul.f32 1.0, %v9837
        %v9839 = vrcp.pop %v9453
        %v9840 = vmul.f32 1.0, %v9839
        %v9841 = vrcp.pop %v9454
        %v9842 = vmul.f32 1.0, %v9841
        %v9843 = vrcp.pop %v9455
        %v9844 = vmul.f32 1.0, %v9843
        %v9845 = vrcp.pop %v9456
        %v9846 = vmul.f32 1.0, %v9845
        %v9847 = vrcp.pop %v9457
        %v9848 = vmul.f32 1.0, %v9847
        %v9849 = vrcp.pop %v9458
        %v9850 = vmul.f32 1.0, %v9849
        %v9851 = vrcp.pop %v9459
        %v9852 = vmul.f32 1.0, %v9851
        %v9853 = vrcp.pop %v9460
        %v9854 = vmul.f32 1.0, %v9853
        %v9855 = vrcp.pop %v9461
        %v9856 = vmul.f32 1.0, %v9855
        %v9857 = vrcp.pop %v9462
        %v9858 = vmul.f32 1.0, %v9857
        %v9859 = vrcp.pop %v9463
        %v9860 = vmul.f32 1.0, %v9859
        %v9861 = vrcp.pop %v9464
        %v9862 = vmul.f32 1.0, %v9861
        %v9863 = vrcp.pop %v9465
        %v9864 = vmul.f32 1.0, %v9863
        %v9865 = vrcp.pop %v9466
        %v9866 = vmul.f32 1.0, %v9865
        %v9867 = vrcp.pop %v9467
        %v9868 = vmul.f32 1.0, %v9867
        %v9869 = vrcp.pop %v9468
        %v9870 = vmul.f32 1.0, %v9869
        %v9871 = vrcp.pop %v9469
        %v9872 = vmul.f32 1.0, %v9871
        %v9873 = vrcp.pop %v9470
        %v9874 = vmul.f32 1.0, %v9873
        %v9875 = vrcp.pop %v9471
        %v9876 = vmul.f32 1.0, %v9875
        %v9877 = vrcp.pop %v9472
        %v9878 = vmul.f32 1.0, %v9877
        %v9879 = vrcp.pop %v9473
        %v9880 = vmul.f32 1.0, %v9879
        %v9881 = vrcp.pop %v9474
        %v9882 = vmul.f32 1.0, %v9881
        %v9883 = vrcp.pop %v9475
        %v9884 = vmul.f32 1.0, %v9883
        %v9885 = vrcp.pop %v9476
        %v9886 = vmul.f32 1.0, %v9885
        %v9887 = vrcp.pop %v9477
        %v9888 = vmul.f32 1.0, %v9887
        %v9889 = vrcp.pop %v9478
        %v9890 = vmul.f32 1.0, %v9889
        %v9891 = vrcp.pop %v9479
        %v9892 = vmul.f32 1.0, %v9891
        %v9893 = vrcp.pop %v9480
        %v9894 = vmul.f32 1.0, %v9893
        %v9895 = vrcp.pop %v9481
        %v9896 = vmul.f32 1.0, %v9895
        %v9897 = vrcp.pop %v9482
        %v9898 = vmul.f32 1.0, %v9897
        %v9899 = vrcp.pop %v9483
        %v9900 = vmul.f32 1.0, %v9899
        %v9901 = vrcp.pop %v9484
        %v9902 = vmul.f32 1.0, %v9901
        %v9903 = vrcp.pop %v9485
        %v9904 = vmul.f32 1.0, %v9903
        %v9905 = vrcp.pop %v9486
        %v9906 = vmul.f32 1.0, %v9905
        %v9907 = vrcp.pop %v9487
        %v9908 = vmul.f32 1.0, %v9907
        %v9909 = vrcp.pop %v9488
        %v9910 = vmul.f32 1.0, %v9909
        %v9911 = vrcp.pop %v9489
        %v9912 = vmul.f32 1.0, %v9911
        %v9913 = vrcp.pop %v9490
        %v9914 = vmul.f32 1.0, %v9913
        %v9915 = vrcp.pop %v9491
        %v9916 = vmul.f32 1.0, %v9915
        %v9917 = vrcp.pop %v9492
        %v9918 = vmul.f32 1.0, %v9917
        %v9919 = vrcp.pop %v9493
        %v9920 = vmul.f32 1.0, %v9919
        %v9921 = vrcp.pop %v9494
        %v9922 = vmul.f32 1.0, %v9921
        %v9923 = vrcp.pop %v9495
        %v9924 = vmul.f32 1.0, %v9923
        %v9925 = vrcp.pop %v9496
        %v9926 = vmul.f32 1.0, %v9925
        %v9927 = vrcp.pop %v9497
        %v9928 = vmul.f32 1.0, %v9927
        %v9929 = vrcp.pop %v9498
        %v9930 = vmul.f32 1.0, %v9929
        %v9931 = vrcp.pop %v9499
        %v9932 = vmul.f32 1.0, %v9931
        %v9933 = vrcp.pop %v9500
        %v9934 = vmul.f32 1.0, %v9933
        %v9935 = vrcp.pop %v9501
        %v9936 = vmul.f32 1.0, %v9935
        %v9937 = vrcp.pop %v9502
        %v9938 = vmul.f32 1.0, %v9937
        %v9939 = vrcp.pop %v9503
        %v9940 = vmul.f32 1.0, %v9939
        %v9941 = vrcp.pop %v9504
        %v9942 = vmul.f32 1.0, %v9941
        %v9943 = vrcp.pop %v9505
        %v9944 = vmul.f32 1.0, %v9943
        %v9945 = vrcp.pop %v9506
        %v9946 = vmul.f32 1.0, %v9945
        %v9947 = vrcp.pop %v9507
        %v9948 = vmul.f32 1.0, %v9947
        %v9949 = vrcp.pop %v9508
        %v9950 = vmul.f32 1.0, %v9949
        %v9951 = vrcp.pop %v9509
        %v9952 = vmul.f32 1.0, %v9951
        %v9953 = vrcp.pop %v9510
        %v9954 = vmul.f32 1.0, %v9953
        %v9955 = vrcp.pop %v9511
        %v9956 = vmul.f32 1.0, %v9955
        %v9957 = vrcp.pop %v9512
        %v9958 = vmul.f32 1.0, %v9957
        %v9959 = vrcp.pop %v9513
        %v9960 = vmul.f32 1.0, %v9959
        %v9961 = vrcp.pop %v9514
        %v9962 = vmul.f32 1.0, %v9961
        %9963 = vst [vmem:[%s459] sm:$0xff] %v9516
        %9964 = vst [vmem:[%s459 + $0x8] sm:$0xff] %v9518
        %9965 = vst [vmem:[%s459 + $0x10] sm:$0xff] %v9520
        %9966 = vst [vmem:[%s459 + $0x18] sm:$0xff] %v9522
        %9967 = vst [vmem:[%s459 + $0x20] sm:$0xff] %v9524
        %9968 = vst [vmem:[%s459 + $0x28] sm:$0xff] %v9526
        %9969 = vst [vmem:[%s459 + $0x30] sm:$0xff] %v9528
        %9970 = vst [vmem:[%s459 + $0x38] sm:$0xff] %v9530
        %9971 = vst [vmem:[%s459 + $0x40] sm:$0xff] %v9532
        %9972 = vst [vmem:[%s459 + $0x48] sm:$0xff] %v9534
        %9973 = vst [vmem:[%s459 + $0x50] sm:$0xff] %v9536
        %9974 = vst [vmem:[%s459 + $0x58] sm:$0xff] %v9538
        %9975 = vst [vmem:[%s459 + $0x60] sm:$0xff] %v9540
        %9976 = vst [vmem:[%s459 + $0x68] sm:$0xff] %v9542
        %9977 = vst [vmem:[%s459 + $0x70] sm:$0xff] %v9544
        %9978 = vst [vmem:[%s459 + $0x78] sm:$0xff] %v9546
        %9979 = vst [vmem:[%s459 + $0x80] sm:$0xff] %v9548
        %9980 = vst [vmem:[%s459 + $0x88] sm:$0xff] %v9550
        %9981 = vst [vmem:[%s459 + $0x90] sm:$0xff] %v9552
        %9982 = vst [vmem:[%s459 + $0x98] sm:$0xff] %v9554
        %9983 = vst [vmem:[%s459 + $0xa0] sm:$0xff] %v9556
        %9984 = vst [vmem:[%s459 + $0xa8] sm:$0xff] %v9558
        %9985 = vst [vmem:[%s459 + $0xb0] sm:$0xff] %v9560
        %9986 = vst [vmem:[%s459 + $0xb8] sm:$0xff] %v9562
        %9987 = vst [vmem:[%s459 + $0xc0] sm:$0xff] %v9564
        %9988 = vst [vmem:[%s459 + $0xc8] sm:$0xff] %v9566
        %9989 = vst [vmem:[%s459 + $0xd0] sm:$0xff] %v9568
        %9990 = vst [vmem:[%s459 + $0xd8] sm:$0xff] %v9570
        %9991 = vst [vmem:[%s459 + $0xe0] sm:$0xff] %v9572
        %9992 = vst [vmem:[%s459 + $0xe8] sm:$0xff] %v9574
        %9993 = vst [vmem:[%s459 + $0xf0] sm:$0xff] %v9576
        %9994 = vst [vmem:[%s459 + $0xf8] sm:$0xff] %v9578
        %9995 = vst [vmem:[%s459 + $0x100] sm:$0xff] %v9580
        %9996 = vst [vmem:[%s459 + $0x108] sm:$0xff] %v9582
        %9997 = vst [vmem:[%s459 + $0x110] sm:$0xff] %v9584
        %9998 = vst [vmem:[%s459 + $0x118] sm:$0xff] %v9586
        %9999 = vst [vmem:[%s459 + $0x120] sm:$0xff] %v9588
        %10000 = vst [vmem:[%s459 + $0x128] sm:$0xff] %v9590
        %10001 = vst [vmem:[%s459 + $0x130] sm:$0xff] %v9592
        %10002 = vst [vmem:[%s459 + $0x138] sm:$0xff] %v9594
        %10003 = vst [vmem:[%s459 + $0x140] sm:$0xff] %v9596
        %10004 = vst [vmem:[%s459 + $0x148] sm:$0xff] %v9598
        %10005 = vst [vmem:[%s459 + $0x150] sm:$0xff] %v9600
        %10006 = vst [vmem:[%s459 + $0x158] sm:$0xff] %v9602
        %10007 = vst [vmem:[%s459 + $0x160] sm:$0xff] %v9604
        %10008 = vst [vmem:[%s459 + $0x168] sm:$0xff] %v9606
        %10009 = vst [vmem:[%s459 + $0x170] sm:$0xff] %v9608
        %10010 = vst [vmem:[%s459 + $0x178] sm:$0xff] %v9610
        %10011 = vst [vmem:[%s459 + $0x180] sm:$0xff] %v9612
        %10012 = vst [vmem:[%s459 + $0x188] sm:$0xff] %v9614
        %10013 = vst [vmem:[%s459 + $0x190] sm:$0xff] %v9616
        %10014 = vst [vmem:[%s459 + $0x198] sm:$0xff] %v9618
        %10015 = vst [vmem:[%s459 + $0x1a0] sm:$0xff] %v9620
        %10016 = vst [vmem:[%s459 + $0x1a8] sm:$0xff] %v9622
        %10017 = vst [vmem:[%s459 + $0x1b0] sm:$0xff] %v9624
        %10018 = vst [vmem:[%s459 + $0x1b8] sm:$0xff] %v9626
        %10019 = vst [vmem:[%s459 + $0x1c0] sm:$0xff] %v9628
        %10020 = vst [vmem:[%s459 + $0x1c8] sm:$0xff] %v9630
        %10021 = vst [vmem:[%s459 + $0x1d0] sm:$0xff] %v9632
        %10022 = vst [vmem:[%s459 + $0x1d8] sm:$0xff] %v9634
        %10023 = vst [vmem:[%s459 + $0x1e0] sm:$0xff] %v9636
        %10024 = vst [vmem:[%s459 + $0x1e8] sm:$0xff] %v9638
        %10025 = vst [vmem:[%s459 + $0x1f0] sm:$0xff] %v9640
        %10026 = vst [vmem:[%s459 + $0x1f8] sm:$0xff] %v9642
        %10027 = vst [vmem:[%s459 + $0x200] sm:$0xff] %v9644
        %10028 = vst [vmem:[%s459 + $0x208] sm:$0xff] %v9646
        %10029 = vst [vmem:[%s459 + $0x210] sm:$0xff] %v9648
        %10030 = vst [vmem:[%s459 + $0x218] sm:$0xff] %v9650
        %10031 = vst [vmem:[%s459 + $0x220] sm:$0xff] %v9652
        %10032 = vst [vmem:[%s459 + $0x228] sm:$0xff] %v9654
        %10033 = vst [vmem:[%s459 + $0x230] sm:$0xff] %v9656
        %10034 = vst [vmem:[%s459 + $0x238] sm:$0xff] %v9658
        %10035 = vst [vmem:[%s459 + $0x240] sm:$0xff] %v9660
        %10036 = vst [vmem:[%s459 + $0x248] sm:$0xff] %v9662
        %10037 = vst [vmem:[%s459 + $0x250] sm:$0xff] %v9664
        %10038 = vst [vmem:[%s459 + $0x258] sm:$0xff] %v9666
        %10039 = vst [vmem:[%s459 + $0x260] sm:$0xff] %v9668
        %10040 = vst [vmem:[%s459 + $0x268] sm:$0xff] %v9670
        %10041 = vst [vmem:[%s459 + $0x270] sm:$0xff] %v9672
        %10042 = vst [vmem:[%s459 + $0x278] sm:$0xff] %v9674
        %10043 = vst [vmem:[%s459 + $0x280] sm:$0xff] %v9676
        %10044 = vst [vmem:[%s459 + $0x288] sm:$0xff] %v9678
        %10045 = vst [vmem:[%s459 + $0x290] sm:$0xff] %v9680
        %10046 = vst [vmem:[%s459 + $0x298] sm:$0xff] %v9682
        %10047 = vst [vmem:[%s459 + $0x2a0] sm:$0xff] %v9684
        %10048 = vst [vmem:[%s459 + $0x2a8] sm:$0xff] %v9686
        %10049 = vst [vmem:[%s459 + $0x2b0] sm:$0xff] %v9688
        %10050 = vst [vmem:[%s459 + $0x2b8] sm:$0xff] %v9690
        %10051 = vst [vmem:[%s459 + $0x2c0] sm:$0xff] %v9692
        %10052 = vst [vmem:[%s459 + $0x2c8] sm:$0xff] %v9694
        %10053 = vst [vmem:[%s459 + $0x2d0] sm:$0xff] %v9696
        %10054 = vst [vmem:[%s459 + $0x2d8] sm:$0xff] %v9698
        %10055 = vst [vmem:[%s459 + $0x2e0] sm:$0xff] %v9700
        %10056 = vst [vmem:[%s459 + $0x2e8] sm:$0xff] %v9702
        %10057 = vst [vmem:[%s459 + $0x2f0] sm:$0xff] %v9704
        %10058 = vst [vmem:[%s459 + $0x2f8] sm:$0xff] %v9706
        %10059 = vst [vmem:[%s459 + $0x300] sm:$0xff] %v9708
        %10060 = vst [vmem:[%s459 + $0x308] sm:$0xff] %v9710
        %10061 = vst [vmem:[%s459 + $0x310] sm:$0xff] %v9712
        %10062 = vst [vmem:[%s459 + $0x318] sm:$0xff] %v9714
        %10063 = vst [vmem:[%s459 + $0x320] sm:$0xff] %v9716
        %10064 = vst [vmem:[%s459 + $0x328] sm:$0xff] %v9718
        %10065 = vst [vmem:[%s459 + $0x330] sm:$0xff] %v9720
        %10066 = vst [vmem:[%s459 + $0x338] sm:$0xff] %v9722
        %10067 = vst [vmem:[%s459 + $0x340] sm:$0xff] %v9724
        %10068 = vst [vmem:[%s459 + $0x348] sm:$0xff] %v9726
        %10069 = vst [vmem:[%s459 + $0x350] sm:$0xff] %v9728
        %10070 = vst [vmem:[%s459 + $0x358] sm:$0xff] %v9730
        %10071 = vst [vmem:[%s459 + $0x360] sm:$0xff] %v9732
        %10072 = vst [vmem:[%s459 + $0x368] sm:$0xff] %v9734
        %10073 = vst [vmem:[%s459 + $0x370] sm:$0xff] %v9736
        %10074 = vst [vmem:[%s459 + $0x378] sm:$0xff] %v9738
        %10075 = vst [vmem:[%s459 + $0x380] sm:$0xff] %v9740
        %10076 = vst [vmem:[%s459 + $0x388] sm:$0xff] %v9742
        %10077 = vst [vmem:[%s459 + $0x390] sm:$0xff] %v9744
        %10078 = vst [vmem:[%s459 + $0x398] sm:$0xff] %v9746
        %10079 = vst [vmem:[%s459 + $0x3a0] sm:$0xff] %v9748
        %10080 = vst [vmem:[%s459 + $0x3a8] sm:$0xff] %v9750
        %10081 = vst [vmem:[%s459 + $0x3b0] sm:$0xff] %v9752
        %10082 = vst [vmem:[%s459 + $0x3b8] sm:$0xff] %v9754
        %10083 = vst [vmem:[%s459 + $0x3c0] sm:$0xff] %v9756
        %10084 = vst [vmem:[%s459 + $0x3c8] sm:$0xff] %v9758
        %10085 = vst [vmem:[%s459 + $0x3d0] sm:$0xff] %v9760
        %10086 = vst [vmem:[%s459 + $0x3d8] sm:$0xff] %v9762
        %10087 = vst [vmem:[%s459 + $0x3e0] sm:$0xff] %v9764
        %10088 = vst [vmem:[%s459 + $0x3e8] sm:$0xff] %v9766
        %10089 = vst [vmem:[%s459 + $0x3f0] sm:$0xff] %v9768
        %10090 = vst [vmem:[%s459 + $0x3f8] sm:$0xff] %v9770
        %10091 = vst [vmem:[%s459 + $0x400] sm:$0xff] %v9772
        %10092 = vst [vmem:[%s459 + $0x408] sm:$0xff] %v9774
        %10093 = vst [vmem:[%s459 + $0x410] sm:$0xff] %v9776
        %10094 = vst [vmem:[%s459 + $0x418] sm:$0xff] %v9778
        %10095 = vst [vmem:[%s459 + $0x420] sm:$0xff] %v9780
        %10096 = vst [vmem:[%s459 + $0x428] sm:$0xff] %v9782
        %10097 = vst [vmem:[%s459 + $0x430] sm:$0xff] %v9784
        %10098 = vst [vmem:[%s459 + $0x438] sm:$0xff] %v9786
        %10099 = vst [vmem:[%s459 + $0x440] sm:$0xff] %v9788
        %10100 = vst [vmem:[%s459 + $0x448] sm:$0xff] %v9790
        %10101 = vst [vmem:[%s459 + $0x450] sm:$0xff] %v9792
        %10102 = vst [vmem:[%s459 + $0x458] sm:$0xff] %v9794
        %10103 = vst [vmem:[%s459 + $0x460] sm:$0xff] %v9796
        %10104 = vst [vmem:[%s459 + $0x468] sm:$0xff] %v9798
        %10105 = vst [vmem:[%s459 + $0x470] sm:$0xff] %v9800
        %10106 = vst [vmem:[%s459 + $0x478] sm:$0xff] %v9802
        %10107 = vst [vmem:[%s459 + $0x480] sm:$0xff] %v9804
        %10108 = vst [vmem:[%s459 + $0x488] sm:$0xff] %v9806
        %10109 = vst [vmem:[%s459 + $0x490] sm:$0xff] %v9808
        %10110 = vst [vmem:[%s459 + $0x498] sm:$0xff] %v9810
        %10111 = vst [vmem:[%s459 + $0x4a0] sm:$0xff] %v9812
        %10112 = vst [vmem:[%s459 + $0x4a8] sm:$0xff] %v9814
        %10113 = vst [vmem:[%s459 + $0x4b0] sm:$0xff] %v9816
        %10114 = vst [vmem:[%s459 + $0x4b8] sm:$0xff] %v9818
        %10115 = vst [vmem:[%s459 + $0x4c0] sm:$0xff] %v9820
        %10116 = vst [vmem:[%s459 + $0x4c8] sm:$0xff] %v9822
        %10117 = vst [vmem:[%s459 + $0x4d0] sm:$0xff] %v9824
        %10118 = vst [vmem:[%s459 + $0x4d8] sm:$0xff] %v9826
        %10119 = vst [vmem:[%s459 + $0x4e0] sm:$0xff] %v9828
        %10120 = vst [vmem:[%s459 + $0x4e8] sm:$0xff] %v9830
        %10121 = vst [vmem:[%s459 + $0x4f0] sm:$0xff] %v9832
        %10122 = vst [vmem:[%s459 + $0x4f8] sm:$0xff] %v9834
        %10123 = vst [vmem:[%s459 + $0x500] sm:$0xff] %v9836
        %10124 = vst [vmem:[%s459 + $0x508] sm:$0xff] %v9838
        %10125 = vst [vmem:[%s459 + $0x510] sm:$0xff] %v9840
        %10126 = vst [vmem:[%s459 + $0x518] sm:$0xff] %v9842
        %10127 = vst [vmem:[%s459 + $0x520] sm:$0xff] %v9844
        %10128 = vst [vmem:[%s459 + $0x528] sm:$0xff] %v9846
        %10129 = vst [vmem:[%s459 + $0x530] sm:$0xff] %v9848
        %10130 = vst [vmem:[%s459 + $0x538] sm:$0xff] %v9850
        %10131 = vst [vmem:[%s459 + $0x540] sm:$0xff] %v9852
        %10132 = vst [vmem:[%s459 + $0x548] sm:$0xff] %v9854
        %10133 = vst [vmem:[%s459 + $0x550] sm:$0xff] %v9856
        %10134 = vst [vmem:[%s459 + $0x558] sm:$0xff] %v9858
        %10135 = vst [vmem:[%s459 + $0x560] sm:$0xff] %v9860
        %10136 = vst [vmem:[%s459 + $0x568] sm:$0xff] %v9862
        %10137 = vst [vmem:[%s459 + $0x570] sm:$0xff] %v9864
        %10138 = vst [vmem:[%s459 + $0x578] sm:$0xff] %v9866
        %10139 = vst [vmem:[%s459 + $0x580] sm:$0xff] %v9868
        %10140 = vst [vmem:[%s459 + $0x588] sm:$0xff] %v9870
        %10141 = vst [vmem:[%s459 + $0x590] sm:$0xff] %v9872
        %10142 = vst [vmem:[%s459 + $0x598] sm:$0xff] %v9874
        %10143 = vst [vmem:[%s459 + $0x5a0] sm:$0xff] %v9876
        %10144 = vst [vmem:[%s459 + $0x5a8] sm:$0xff] %v9878
        %10145 = vst [vmem:[%s459 + $0x5b0] sm:$0xff] %v9880
        %10146 = vst [vmem:[%s459 + $0x5b8] sm:$0xff] %v9882
        %10147 = vst [vmem:[%s459 + $0x5c0] sm:$0xff] %v9884
        %10148 = vst [vmem:[%s459 + $0x5c8] sm:$0xff] %v9886
        %10149 = vst [vmem:[%s459 + $0x5d0] sm:$0xff] %v9888
        %10150 = vst [vmem:[%s459 + $0x5d8] sm:$0xff] %v9890
        %10151 = vst [vmem:[%s459 + $0x5e0] sm:$0xff] %v9892
        %10152 = vst [vmem:[%s459 + $0x5e8] sm:$0xff] %v9894
        %10153 = vst [vmem:[%s459 + $0x5f0] sm:$0xff] %v9896
        %10154 = vst [vmem:[%s459 + $0x5f8] sm:$0xff] %v9898
        %10155 = vst [vmem:[%s459 + $0x600] sm:$0xff] %v9900
        %10156 = vst [vmem:[%s459 + $0x608] sm:$0xff] %v9902
        %10157 = vst [vmem:[%s459 + $0x610] sm:$0xff] %v9904
        %10158 = vst [vmem:[%s459 + $0x618] sm:$0xff] %v9906
        %10159 = vst [vmem:[%s459 + $0x620] sm:$0xff] %v9908
        %10160 = vst [vmem:[%s459 + $0x628] sm:$0xff] %v9910
        %10161 = vst [vmem:[%s459 + $0x630] sm:$0xff] %v9912
        %10162 = vst [vmem:[%s459 + $0x638] sm:$0xff] %v9914
        %10163 = vst [vmem:[%s459 + $0x640] sm:$0xff] %v9916
        %10164 = vst [vmem:[%s459 + $0x648] sm:$0xff] %v9918
        %10165 = vst [vmem:[%s459 + $0x650] sm:$0xff] %v9920
        %10166 = vst [vmem:[%s459 + $0x658] sm:$0xff] %v9922
        %10167 = vst [vmem:[%s459 + $0x660] sm:$0xff] %v9924
        %10168 = vst [vmem:[%s459 + $0x668] sm:$0xff] %v9926
        %10169 = vst [vmem:[%s459 + $0x670] sm:$0xff] %v9928
        %10170 = vst [vmem:[%s459 + $0x678] sm:$0xff] %v9930
        %10171 = vst [vmem:[%s459 + $0x680] sm:$0xff] %v9932
        %10172 = vst [vmem:[%s459 + $0x688] sm:$0xff] %v9934
        %10173 = vst [vmem:[%s459 + $0x690] sm:$0xff] %v9936
        %10174 = vst [vmem:[%s459 + $0x698] sm:$0xff] %v9938
        %10175 = vst [vmem:[%s459 + $0x6a0] sm:$0xff] %v9940
        %10176 = vst [vmem:[%s459 + $0x6a8] sm:$0xff] %v9942
        %10177 = vst [vmem:[%s459 + $0x6b0] sm:$0xff] %v9944
        %10178 = vst [vmem:[%s459 + $0x6b8] sm:$0xff] %v9946
        %10179 = vst [vmem:[%s459 + $0x6c0] sm:$0xff] %v9948
        %10180 = vst [vmem:[%s459 + $0x6c8] sm:$0xff] %v9950
        %10181 = vst [vmem:[%s459 + $0x6d0] sm:$0xff] %v9952
        %10182 = vst [vmem:[%s459 + $0x6d8] sm:$0xff] %v9954
        %10183 = vst [vmem:[%s459 + $0x6e0] sm:$0xff] %v9956
        %10184 = vst [vmem:[%s459 + $0x6e8] sm:$0xff] %v9958
        %10185 = vst [vmem:[%s459 + $0x6f0] sm:$0xff] %v9960
        %10186 = vst [vmem:[%s459 + $0x6f8] sm:$0xff] %v9962
        %s10187 = sand.u32 %s232, 1
        %s10188 = scalar_lea.sflag [#allocation4], %s10187
        %s10189 = sand.u32 %s232, 1
        %s10190 = smul.addr %s10189, 1792
        %s10191 = scalar_lea.vmem [#allocation17], %s10190
        // Predicated region
        $region93: #{autoencoder_forward.1} parent=55 // pred_check
          %p10192 = pneg %p242
        $region94: #{autoencoder_forward.1} parent=55 // pred_check_branch
          %10194 = sbr.rel (%p10192) target = $region96
        $region95: #{autoencoder_forward.1} parent=55 // pred_region
          %s10195 = smul.u32 32, %s30
          %s10197 = ssub.s32 28672, 28672
          %10198 = vsyncadd %s10188, %s10197
          %s10199 = smul.addr %s10195, 7
          %s10200 = smul.addr %s10199, 128
          %s10201 = scalar_lea.hbm %s9, %s10200
          %s10202 = sshll.u32 %s10191, 4
          %s10203 = int_to_ptr.vmem [resolvable:$true] %s10202
          %10208 = dma.vmem_to_hbm [thread:$0]  %s10203, 28672, %s10201, %s10188, 896, 896, 56
        $region96: #{autoencoder_forward.1} parent=55 // pred_fallthru
          _
      $region56: #{autoencoder_forward.1} parent=5 // pred_fallthru
        _
      %p10209 = scmp.le.s32.totalorder 2, %s25
      // Predicated region
      $region97: #{autoencoder_forward.1} parent=5 // pred_check
        %p10210 = pneg %p10209
      $region98: #{autoencoder_forward.1} parent=5 // pred_check_branch
        %10212 = sbr.rel (%p10210) target = $region100
      $region99: #{autoencoder_forward.1} parent=5 // pred_region
        %s10213 = ssub.s32 %s25, 2
        // Predicated region
        $region101: #{autoencoder_forward.1} parent=99 // pred_check
          %p10214 = pneg %p248
        $region102: #{autoencoder_forward.1} parent=99 // pred_check_branch
          %10216 = sbr.rel (%p10214) target = $region104
        $region103: #{autoencoder_forward.1} parent=99 // pred_region
          %s10217 = sand.u32 %s233, 1
          %s10218 = scalar_lea.sflag [#allocation4], %s10217
          %s10219 = sand.u32 %s233, 1
          %s10220 = smul.addr %s10219, 1792
          %s10221 = scalar_lea.vmem [#allocation17], %s10220
          %10222 = dma.done %s10218, 28672
        $region104: #{autoencoder_forward.1} parent=99 // pred_fallthru
          _
      $region100: #{autoencoder_forward.1} parent=5 // pred_fallthru
        _
    $region6: #{autoencoder_forward.1} parent=1 // loop_footer
      %s29 = sadd.s32 1, %s25
    $region7: #{autoencoder_forward.1} parent=1 // loop_footer_branch
      %24 = sbr.rel target = $region3
    $region8: #{autoencoder_forward.1} parent=1 // loop_exit
      _
    %10223 = vsyncpa [#allocation3], 1
    %s10224 = scalar_lea.sflag [#allocation3], 1
    %10225 = vsyncpa %s10224, 1
    %10226 = vsyncpa [#allocation6], 1
    %10227 = vsyncpa [#allocation9], 1
    %10228 = vsyncpa [#allocation12], 1
    %10229 = vsyncpa [#allocation15], 1
    %10230 = vsyncpa [#allocation4], 1
    %s10231 = scalar_lea.sflag [#allocation4], 1
    %10232 = vsyncpa %s10231, 1

</llo_original>
